<compile_context>
chip_gen: v5e
topology: v5e:2x2
jax: 0.10.0
libtpu: 0.0.40
codegen_flags: <defaults>
</compile_context>

<pallas_src>
import functools

import jax
import jax.numpy as jnp
from jax.experimental import pallas as pl
from jax.experimental.pallas import tpu as pltpu

_EPS = 1e-5
_LANE = 128


def _round_up(x, m):
    return (x + m - 1) // m * m


def _double_conv_kernel(x_ref, w1_ref, b1_ref, g1_ref, bt1_ref,
                        w2_ref, b2_ref, g2_ref, bt2_ref,
                        o_ref,
                        xpad_ref, ypad_ref, slab1_ref, slab2_ref,
                        *, c1_real, c2_real):
    """Fused DoubleConv for ONE image (channel axes pre-padded to 128 lanes).

    x_ref     : (1, H, W, Cinp)   bf16 input tile (Cinp = pad128(Cin))
    w1_ref    : (9*Cinp, C1p)     bf16 conv1 weights, tap-major im2col layout
    b1/g1/bt1 : (1, C1p)          f32 conv1 bias / GN gamma / GN beta
    w2_ref    : (9*C1p, C2p)      bf16 conv2 weights
    b2/g2/bt2 : (1, C2p)          f32
    o_ref     : (1, H, W, C2p)    output tile (lane-dense; padded channels = 0)
    xpad_ref  : (H+2, W+2, Cinp)  f32 scratch: zero-padded stage-1 input
    ypad_ref  : (H+2, W+2, C1p)   f32 scratch: zero-padded stage-2 input
    slab1_ref : (H*W, 9*Cinp)     bf16 im2col slab, stage 1
    slab2_ref : (H*W, 9*C1p)      bf16 im2col slab, stage 2
    """
    H, W = o_ref.shape[1], o_ref.shape[2]

    def zero_halo(pad_ref):
        # Only the 1-pixel halo must be zero; the interior (all channels, since
        # the wrapper pre-pads the channel axis) is fully overwritten every
        # grid step.  Zeroing just the halo removes the two full (H+2)(W+2)C
        # fill passes per image while staying correct regardless of how the
        # batch axis is scheduled across TensorCores.
        c = pad_ref.shape[-1]
        pad_ref[pl.ds(0, 1), :, :] = jnp.zeros((1, W + 2, c), pad_ref.dtype)
        pad_ref[pl.ds(H + 1, 1), :, :] = jnp.zeros((1, W + 2, c), pad_ref.dtype)
        pad_ref[pl.ds(1, H), pl.ds(0, 1), :] = jnp.zeros((H, 1, c), pad_ref.dtype)
        pad_ref[pl.ds(1, H), pl.ds(W + 1, 1), :] = jnp.zeros((H, 1, c), pad_ref.dtype)

    def im2col(pad_ref, slab_ref):
        # Gather the 9 shifted windows once into a lane-aligned bf16 slab so
        # the conv becomes a single (H*W, 9*C) x (9*C, Cout) MXU matmul.
        pad = pad_ref[...]
        c = pad.shape[-1]
        for t in range(9):
            ky, kx = t // 3, t % 3
            win = pad[ky:ky + H, kx:kx + W, :].reshape(H * W, c)
            slab_ref[:, pl.ds(t * c, c)] = win.astype(slab_ref.dtype)

    def conv_gn_relu(slab_ref, w_ref, b_ref, g_ref, bt_ref, n_real):
        # One big MXU matmul (bf16 operands, f32 accumulation); bias in f32.
        a = jnp.dot(slab_ref[...], w_ref[...],
                    preferred_element_type=jnp.float32)
        a = a + b_ref[...]
        # GroupNorm(num_groups=1): stats over the n_real = H*W*C_real live
        # elements.  Padded channels are exactly zero (zero weight columns and
        # zero bias), so they do not perturb the sums.
        inv_n = 1.0 / float(n_real)
        mean = jnp.sum(a) * inv_n
        var = jnp.maximum(jnp.sum(a * a) * inv_n - mean * mean, 0.0)
        inv_std = jax.lax.rsqrt(var + _EPS)
        # Fold the affine transform: y = a * scale + shift (2 VPU ops, not 4).
        scale = g_ref[...] * inv_std                 # (1, Cp)
        shift = bt_ref[...] - mean * scale           # (1, Cp)
        return jnp.maximum(a * scale + shift, 0.0)

    zero_halo(xpad_ref)
    zero_halo(ypad_ref)

    # ---- stage 1: halo in VMEM, im2col, one matmul, GN + ReLU -------------
    xpad_ref[pl.ds(1, H), pl.ds(1, W), :] = x_ref[0].astype(jnp.float32)
    im2col(xpad_ref, slab1_ref)
    y1 = conv_gn_relu(slab1_ref, w1_ref, b1_ref, g1_ref, bt1_ref,
                      H * W * c1_real)

    # ---- stage 2: intermediate activation never leaves VMEM ---------------
    ypad_ref[pl.ds(1, H), pl.ds(1, W), :] = y1.reshape(H, W, ypad_ref.shape[-1])
    im2col(ypad_ref, slab2_ref)
    y2 = conv_gn_relu(slab2_ref, w2_ref, b2_ref, g2_ref, bt2_ref,
                      H * W * c2_real)

    # Lane-dense (multiple-of-128-wide) output store; padded channels are zero
    # and get sliced off in the wrapper.
    o_ref[0] = y2.reshape(H, W, o_ref.shape[-1]).astype(o_ref.dtype)
    # TODO(synk): for large H*W on v7x (64 MiB VMEM), switch to a row-tiled
    # grid=(N, H//tH) with 1-row halos and a two-pass GroupNorm (sum/sumsq
    # accumulated across row tiles), which also gives a second parallel grid
    # axis so both TensorCores stay busy at small batch.


def double_conv_nhwc(x, p1, p2):
    """Fused DoubleConv on NHWC input. p1/p2 = (w HWIO, bias, gamma, beta)."""
    N, H, W, Cin = x.shape
    w1, b1, g1, bt1 = p1
    w2, b2, g2, bt2 = p2
    C1, C2 = w1.shape[-1], w2.shape[-1]

    # Lane-dense channel layout: pad every channel axis to a multiple of 128.
    Cinp = _round_up(Cin, _LANE)
    C1p = _round_up(C1, _LANE)
    C2p = _round_up(C2, _LANE)

    f32 = jnp.float32
    xp = jnp.pad(x.astype(f32), ((0, 0), (0, 0), (0, 0), (0, Cinp - Cin))
                 ).astype(jnp.bfloat16)                      # bf16 MXU operand
    w1p = jnp.pad(w1.astype(f32),
                  ((0, 0), (0, 0), (0, Cinp - Cin), (0, C1p - C1))
                  ).reshape(9 * Cinp, C1p).astype(jnp.bfloat16)
    w2p = jnp.pad(w2.astype(f32),
                  ((0, 0), (0, 0), (0, C1p - C1), (0, C2p - C2))
                  ).reshape(9 * C1p, C2p).astype(jnp.bfloat16)

    def padvec(v, c, cp):
        return jnp.pad(v.reshape(c).astype(f32), (0, cp - c)).reshape(1, cp)

    b1p, g1p, bt1p = (padvec(v, C1, C1p) for v in (b1, g1, bt1))
    b2p, g2p, bt2p = (padvec(v, C2, C2p) for v in (b2, g2, bt2))

    kernel = functools.partial(_double_conv_kernel, c1_real=C1, c2_real=C2)

    # VMEM budget: halo scratches + im2col slabs + double-buffered I/O blocks
    # + weights, with 2x headroom (v5e's scoped default is only 16 MiB).
    est = ((H + 2) * (W + 2) * (Cinp + C1p) * 4          # f32 halo scratches
           + H * W * 9 * (Cinp + C1p) * 2                # bf16 im2col slabs
           + 2 * H * W * Cinp * 2 + 2 * H * W * C2p * 4  # in/out blocks (x2)
           + (9 * Cinp * C1p + 9 * C1p * C2p) * 2)       # bf16 weights
    vmem_limit = int(min(max(2 * est, 32 * 2**20), 64 * 2**20))

    full2 = lambda n: (0, 0)
    out = pl.pallas_call(
        kernel,
        out_shape=jax.ShapeDtypeStruct((N, H, W, C2p), x.dtype),
        grid=(N,),
        in_specs=[
            pl.BlockSpec((1, H, W, Cinp), lambda n: (n, 0, 0, 0)),
            pl.BlockSpec((9 * Cinp, C1p), full2),
            pl.BlockSpec((1, C1p), full2),
            pl.BlockSpec((1, C1p), full2),
            pl.BlockSpec((1, C1p), full2),
            pl.BlockSpec((9 * C1p, C2p), full2),
            pl.BlockSpec((1, C2p), full2),
            pl.BlockSpec((1, C2p), full2),
            pl.BlockSpec((1, C2p), full2),
        ],
        out_specs=pl.BlockSpec((1, H, W, C2p), lambda n: (n, 0, 0, 0)),
        scratch_shapes=[
            pltpu.VMEM((H + 2, W + 2, Cinp), jnp.float32),
            pltpu.VMEM((H + 2, W + 2, C1p), jnp.float32),
            pltpu.VMEM((H * W, 9 * Cinp), jnp.bfloat16),
            pltpu.VMEM((H * W, 9 * C1p), jnp.bfloat16),
        ],
        compiler_params=pltpu.CompilerParams(
            dimension_semantics=("parallel",),      # batch axis is independent
            vmem_limit_bytes=vmem_limit),
    )(xp, w1p, b1p, g1p, bt1p, w2p, b2p, g2p, bt2p)

    return out[..., :C2]   # drop padded channels (always zero)


def double_conv(x_nchw, params):
    """DoubleConv forward. x_nchw: (N, Cin, H, W) like PyTorch; returns NCHW."""
    x = jnp.transpose(x_nchw, (0, 2, 3, 1))      # NCHW -> NHWC
    y = double_conv_nhwc(x, params[0], params[1])
    return jnp.transpose(y, (0, 3, 1, 2))        # back to NCHW


# ---------------------------------------------------------------------------
# Pure-JAX reference (correctness sanity check).  Stage inputs and conv
# weights are rounded to bf16 to match the kernel's MXU operand precision
# (accumulation, GroupNorm and ReLU stay in f32, like the kernel).
def _ref_stage(x, w, b, g, bt):
    y = jax.lax.conv_general_dilated(
        x, w, window_strides=(1, 1), padding='SAME',
        dimension_numbers=('NHWC', 'HWIO', 'NHWC'))
    y = y + b.reshape(1, 1, 1, -1)
    mean = jnp.mean(y, axis=(1, 2, 3), keepdims=True)
    var = jnp.var(y, axis=(1, 2, 3), keepdims=True)
    y = (y - mean) * jax.lax.rsqrt(var + _EPS)
    y = y * g.reshape(1, 1, 1, -1) + bt.reshape(1, 1, 1, -1)
    return jnp.maximum(y, 0.0)


def _ref_double_conv(x_nchw, params):
    bf = lambda a: a.astype(jnp.bfloat16).astype(jnp.float32)
    x = jnp.transpose(x_nchw, (0, 2, 3, 1))
    for (w, b, g, bt) in params:
        x = _ref_stage(bf(x), bf(w), b, g, bt)
    return jnp.transpose(x, (0, 3, 1, 2))


if __name__ == "__main__":
    N, Cin, Cout, H, W = 2, 4, 8, 16, 16

    key = jax.random.PRNGKey(0)
    ks = jax.random.split(key, 9)

    # Deterministic synthetic parameters (shapes follow the PyTorch module).
    w1 = 0.1 * jax.random.normal(ks[0], (3, 3, Cin, Cout), jnp.float32)
    b1 = 0.1 * jax.random.normal(ks[1], (Cout,), jnp.float32)
    g1 = 1.0 + 0.1 * jax.random.normal(ks[2], (Cout,), jnp.float32)
    bt1 = 0.1 * jax.random.normal(ks[3], (Cout,), jnp.float32)

    w2 = 0.1 * jax.random.normal(ks[4], (3, 3, Cout, Cout), jnp.float32)
    b2 = 0.1 * jax.random.normal(ks[5], (Cout,), jnp.float32)
    g2 = 1.0 + 0.1 * jax.random.normal(ks[6], (Cout,), jnp.float32)
    bt2 = 0.1 * jax.random.normal(ks[7], (Cout,), jnp.float32)

    params = [(w1, b1, g1, bt1), (w2, b2, g2, bt2)]

    x = jax.random.normal(ks[8], (N, Cin, H, W), jnp.float32)  # NCHW like PyTorch

    out = jax.block_until_ready(double_conv(x, params))
    assert out.shape == (N, Cout, H, W)

    ref = jax.block_until_ready(_ref_double_conv(x, params))
    max_err = float(jnp.max(jnp.abs(out - ref)))
    if max_err > 2e-2:
        raise AssertionError(f"mismatch vs reference: max abs err = {max_err}")

    print("KERNEL_OK")
</pallas_src>

<mosaic_0001>
module attributes {stable_mosaic.version = 11 : i64} {
  func.func @_double_conv_kernel(%arg0: i32, %arg1: memref<1x16x16x128xbf16, #tpu.memory_space<vmem>>, %arg2: memref<1152x128xbf16, #tpu.memory_space<vmem>>, %arg3: memref<1x128xf32, #tpu.memory_space<vmem>>, %arg4: memref<1x128xf32, #tpu.memory_space<vmem>>, %arg5: memref<1x128xf32, #tpu.memory_space<vmem>>, %arg6: memref<1152x128xbf16, #tpu.memory_space<vmem>>, %arg7: memref<1x128xf32, #tpu.memory_space<vmem>>, %arg8: memref<1x128xf32, #tpu.memory_space<vmem>>, %arg9: memref<1x128xf32, #tpu.memory_space<vmem>>, %arg10: memref<1x16x16x128xf32, #tpu.memory_space<vmem>>, %arg11: memref<18x18x128xf32, #tpu.memory_space<vmem>>, %arg12: memref<18x18x128xf32, #tpu.memory_space<vmem>>, %arg13: memref<256x1152xbf16, #tpu.memory_space<vmem>>, %arg14: memref<256x1152xbf16, #tpu.memory_space<vmem>>) attributes {dimension_semantics = [#tpu.dimension_semantics<parallel>], iteration_bounds = array<i64: 2>, scalar_prefetch = 0 : i64, scratch_operands = 4 : i64, tpu.core_type = #tpu.core_type<tc>, window_params = [{transform_indices = @transform_0, window_bounds = array<i64: 1, 16, 16, 128>}, {pipeline_mode = #tpu.pipeline_mode<synchronous>, transform_indices = @transform_1, window_bounds = array<i64: 1152, 128>}, {pipeline_mode = #tpu.pipeline_mode<synchronous>, transform_indices = @transform_2, window_bounds = array<i64: 1, 128>}, {pipeline_mode = #tpu.pipeline_mode<synchronous>, transform_indices = @transform_3, window_bounds = array<i64: 1, 128>}, {pipeline_mode = #tpu.pipeline_mode<synchronous>, transform_indices = @transform_4, window_bounds = array<i64: 1, 128>}, {pipeline_mode = #tpu.pipeline_mode<synchronous>, transform_indices = @transform_5, window_bounds = array<i64: 1152, 128>}, {pipeline_mode = #tpu.pipeline_mode<synchronous>, transform_indices = @transform_6, window_bounds = array<i64: 1, 128>}, {pipeline_mode = #tpu.pipeline_mode<synchronous>, transform_indices = @transform_7, window_bounds = array<i64: 1, 128>}, {pipeline_mode = #tpu.pipeline_mode<synchronous>, transform_indices = @transform_8, window_bounds = array<i64: 1, 128>}, {transform_indices = @transform_9, window_bounds = array<i64: 1, 16, 16, 128>}]} {
    %cst = arith.constant 0.000000e+00 : f32
    %0 = vector.broadcast %cst : f32 to vector<1x18x128xf32>
    %c0 = arith.constant 0 : index
    %c0_0 = arith.constant 0 : index
    %c0_1 = arith.constant 0 : index
    %1 = vector.load %arg11[%c0, %c0_0, %c0_1] : memref<18x18x128xf32, #tpu.memory_space<vmem>>, vector<1x18x128xf32>
    tpu.vector_store %arg11[%c0, %c0_0, %c0_1], %0 {strides = array<i32>} : memref<18x18x128xf32, #tpu.memory_space<vmem>>, vector<1x18x128xf32>,
    %cst_2 = arith.constant 0.000000e+00 : f32
    %2 = vector.broadcast %cst_2 : f32 to vector<1x18x128xf32>
    %c17 = arith.constant 17 : index
    %c0_3 = arith.constant 0 : index
    %c0_4 = arith.constant 0 : index
    %3 = vector.load %arg11[%c17, %c0_3, %c0_4] : memref<18x18x128xf32, #tpu.memory_space<vmem>>, vector<1x18x128xf32>
    tpu.vector_store %arg11[%c17, %c0_3, %c0_4], %2 {strides = array<i32>} : memref<18x18x128xf32, #tpu.memory_space<vmem>>, vector<1x18x128xf32>,
    %cst_5 = arith.constant 0.000000e+00 : f32
    %4 = vector.broadcast %cst_5 : f32 to vector<16x1x128xf32>
    %c1 = arith.constant 1 : index
    %c0_6 = arith.constant 0 : index
    %c0_7 = arith.constant 0 : index
    %5 = vector.load %arg11[%c1, %c0_6, %c0_7] : memref<18x18x128xf32, #tpu.memory_space<vmem>>, vector<16x1x128xf32>
    tpu.vector_store %arg11[%c1, %c0_6, %c0_7], %4 {strides = array<i32>} : memref<18x18x128xf32, #tpu.memory_space<vmem>>, vector<16x1x128xf32>,
    %cst_8 = arith.constant 0.000000e+00 : f32
    %6 = vector.broadcast %cst_8 : f32 to vector<16x1x128xf32>
    %c1_9 = arith.constant 1 : index
    %c17_10 = arith.constant 17 : index
    %c0_11 = arith.constant 0 : index
    %7 = vector.load %arg11[%c1_9, %c17_10, %c0_11] : memref<18x18x128xf32, #tpu.memory_space<vmem>>, vector<16x1x128xf32>
    tpu.vector_store %arg11[%c1_9, %c17_10, %c0_11], %6 {strides = array<i32>} : memref<18x18x128xf32, #tpu.memory_space<vmem>>, vector<16x1x128xf32>,
    %cst_12 = arith.constant 0.000000e+00 : f32
    %8 = vector.broadcast %cst_12 : f32 to vector<1x18x128xf32>
    %c0_13 = arith.constant 0 : index
    %c0_14 = arith.constant 0 : index
    %c0_15 = arith.constant 0 : index
    %9 = vector.load %arg12[%c0_13, %c0_14, %c0_15] : memref<18x18x128xf32, #tpu.memory_space<vmem>>, vector<1x18x128xf32>
    tpu.vector_store %arg12[%c0_13, %c0_14, %c0_15], %8 {strides = array<i32>} : memref<18x18x128xf32, #tpu.memory_space<vmem>>, vector<1x18x128xf32>,
    %cst_16 = arith.constant 0.000000e+00 : f32
    %10 = vector.broadcast %cst_16 : f32 to vector<1x18x128xf32>
    %c17_17 = arith.constant 17 : index
    %c0_18 = arith.constant 0 : index
    %c0_19 = arith.constant 0 : index
    %11 = vector.load %arg12[%c17_17, %c0_18, %c0_19] : memref<18x18x128xf32, #tpu.memory_space<vmem>>, vector<1x18x128xf32>
    tpu.vector_store %arg12[%c17_17, %c0_18, %c0_19], %10 {strides = array<i32>} : memref<18x18x128xf32, #tpu.memory_space<vmem>>, vector<1x18x128xf32>,
    %cst_20 = arith.constant 0.000000e+00 : f32
    %12 = vector.broadcast %cst_20 : f32 to vector<16x1x128xf32>
    %c1_21 = arith.constant 1 : index
    %c0_22 = arith.constant 0 : index
    %c0_23 = arith.constant 0 : index
    %13 = vector.load %arg12[%c1_21, %c0_22, %c0_23] : memref<18x18x128xf32, #tpu.memory_space<vmem>>, vector<16x1x128xf32>
    tpu.vector_store %arg12[%c1_21, %c0_22, %c0_23], %12 {strides = array<i32>} : memref<18x18x128xf32, #tpu.memory_space<vmem>>, vector<16x1x128xf32>,
    %cst_24 = arith.constant 0.000000e+00 : f32
    %14 = vector.broadcast %cst_24 : f32 to vector<16x1x128xf32>
    %c1_25 = arith.constant 1 : index
    %c17_26 = arith.constant 17 : index
    %c0_27 = arith.constant 0 : index
    %15 = vector.load %arg12[%c1_25, %c17_26, %c0_27] : memref<18x18x128xf32, #tpu.memory_space<vmem>>, vector<16x1x128xf32>
    tpu.vector_store %arg12[%c1_25, %c17_26, %c0_27], %14 {strides = array<i32>} : memref<18x18x128xf32, #tpu.memory_space<vmem>>, vector<16x1x128xf32>,
    %c0_28 = arith.constant 0 : index
    %c0_29 = arith.constant 0 : index
    %c0_30 = arith.constant 0 : index
    %c0_31 = arith.constant 0 : index
    %16 = vector.load %arg1[%c0_28, %c0_29, %c0_30, %c0_31] : memref<1x16x16x128xbf16, #tpu.memory_space<vmem>>, vector<1x16x16x128xbf16>
    %17 = vector.shape_cast %16 : vector<1x16x16x128xbf16> to vector<16x16x128xbf16>
    %18 = arith.extf %17 : vector<16x16x128xbf16> to vector<16x16x128xf32>
    %c1_32 = arith.constant 1 : index
    %c1_33 = arith.constant 1 : index
    %c0_34 = arith.constant 0 : index
    %19 = vector.load %arg11[%c1_32, %c1_33, %c0_34] : memref<18x18x128xf32, #tpu.memory_space<vmem>>, vector<16x16x128xf32>
    tpu.vector_store %arg11[%c1_32, %c1_33, %c0_34], %18 {strides = array<i32>} : memref<18x18x128xf32, #tpu.memory_space<vmem>>, vector<16x16x128xf32>,
    %c0_35 = arith.constant 0 : index
    %c0_36 = arith.constant 0 : index
    %c0_37 = arith.constant 0 : index
    %20 = vector.load %arg11[%c0_35, %c0_36, %c0_37] : memref<18x18x128xf32, #tpu.memory_space<vmem>>, vector<18x18x128xf32>
    %21 = vector.extract_strided_slice %20 {offsets = [0, 0, 0], sizes = [16, 16, 128], strides = [1, 1, 1]} : vector<18x18x128xf32> to vector<16x16x128xf32>
    %22 = vector.shape_cast %21 : vector<16x16x128xf32> to vector<256x128xf32>
    %23 = arith.truncf %22 : vector<256x128xf32> to vector<256x128xbf16>
    %c0_38 = arith.constant 0 : index
    %c0_39 = arith.constant 0 : index
    %24 = vector.load %arg13[%c0_38, %c0_39] : memref<256x1152xbf16, #tpu.memory_space<vmem>>, vector<256x128xbf16>
    tpu.vector_store %arg13[%c0_38, %c0_39], %23 {strides = array<i32>} : memref<256x1152xbf16, #tpu.memory_space<vmem>>, vector<256x128xbf16>,
    %25 = vector.extract_strided_slice %20 {offsets = [0, 1, 0], sizes = [16, 16, 128], strides = [1, 1, 1]} : vector<18x18x128xf32> to vector<16x16x128xf32>
    %26 = vector.shape_cast %25 : vector<16x16x128xf32> to vector<256x128xf32>
    %27 = arith.truncf %26 : vector<256x128xf32> to vector<256x128xbf16>
    %c0_40 = arith.constant 0 : index
    %c128 = arith.constant 128 : index
    %28 = vector.load %arg13[%c0_40, %c128] : memref<256x1152xbf16, #tpu.memory_space<vmem>>, vector<256x128xbf16>
    tpu.vector_store %arg13[%c0_40, %c128], %27 {strides = array<i32>} : memref<256x1152xbf16, #tpu.memory_space<vmem>>, vector<256x128xbf16>,
    %29 = vector.extract_strided_slice %20 {offsets = [0, 2, 0], sizes = [16, 16, 128], strides = [1, 1, 1]} : vector<18x18x128xf32> to vector<16x16x128xf32>
    %30 = vector.shape_cast %29 : vector<16x16x128xf32> to vector<256x128xf32>
    %31 = arith.truncf %30 : vector<256x128xf32> to vector<256x128xbf16>
    %c0_41 = arith.constant 0 : index
    %c256 = arith.constant 256 : index
    %32 = vector.load %arg13[%c0_41, %c256] : memref<256x1152xbf16, #tpu.memory_space<vmem>>, vector<256x128xbf16>
    tpu.vector_store %arg13[%c0_41, %c256], %31 {strides = array<i32>} : memref<256x1152xbf16, #tpu.memory_space<vmem>>, vector<256x128xbf16>,
    %33 = vector.extract_strided_slice %20 {offsets = [1, 0, 0], sizes = [16, 16, 128], strides = [1, 1, 1]} : vector<18x18x128xf32> to vector<16x16x128xf32>
    %34 = vector.shape_cast %33 : vector<16x16x128xf32> to vector<256x128xf32>
    %35 = arith.truncf %34 : vector<256x128xf32> to vector<256x128xbf16>
    %c0_42 = arith.constant 0 : index
    %c384 = arith.constant 384 : index
    %36 = vector.load %arg13[%c0_42, %c384] : memref<256x1152xbf16, #tpu.memory_space<vmem>>, vector<256x128xbf16>
    tpu.vector_store %arg13[%c0_42, %c384], %35 {strides = array<i32>} : memref<256x1152xbf16, #tpu.memory_space<vmem>>, vector<256x128xbf16>,
    %37 = vector.extract_strided_slice %20 {offsets = [1, 1, 0], sizes = [16, 16, 128], strides = [1, 1, 1]} : vector<18x18x128xf32> to vector<16x16x128xf32>
    %38 = vector.shape_cast %37 : vector<16x16x128xf32> to vector<256x128xf32>
    %39 = arith.truncf %38 : vector<256x128xf32> to vector<256x128xbf16>
    %c0_43 = arith.constant 0 : index
    %c512 = arith.constant 512 : index
    %40 = vector.load %arg13[%c0_43, %c512] : memref<256x1152xbf16, #tpu.memory_space<vmem>>, vector<256x128xbf16>
    tpu.vector_store %arg13[%c0_43, %c512], %39 {strides = array<i32>} : memref<256x1152xbf16, #tpu.memory_space<vmem>>, vector<256x128xbf16>,
    %41 = vector.extract_strided_slice %20 {offsets = [1, 2, 0], sizes = [16, 16, 128], strides = [1, 1, 1]} : vector<18x18x128xf32> to vector<16x16x128xf32>
    %42 = vector.shape_cast %41 : vector<16x16x128xf32> to vector<256x128xf32>
    %43 = arith.truncf %42 : vector<256x128xf32> to vector<256x128xbf16>
    %c0_44 = arith.constant 0 : index
    %c640 = arith.constant 640 : index
    %44 = vector.load %arg13[%c0_44, %c640] : memref<256x1152xbf16, #tpu.memory_space<vmem>>, vector<256x128xbf16>
    tpu.vector_store %arg13[%c0_44, %c640], %43 {strides = array<i32>} : memref<256x1152xbf16, #tpu.memory_space<vmem>>, vector<256x128xbf16>,
    %45 = vector.extract_strided_slice %20 {offsets = [2, 0, 0], sizes = [16, 16, 128], strides = [1, 1, 1]} : vector<18x18x128xf32> to vector<16x16x128xf32>
    %46 = vector.shape_cast %45 : vector<16x16x128xf32> to vector<256x128xf32>
    %47 = arith.truncf %46 : vector<256x128xf32> to vector<256x128xbf16>
    %c0_45 = arith.constant 0 : index
    %c768 = arith.constant 768 : index
    %48 = vector.load %arg13[%c0_45, %c768] : memref<256x1152xbf16, #tpu.memory_space<vmem>>, vector<256x128xbf16>
    tpu.vector_store %arg13[%c0_45, %c768], %47 {strides = array<i32>} : memref<256x1152xbf16, #tpu.memory_space<vmem>>, vector<256x128xbf16>,
    %49 = vector.extract_strided_slice %20 {offsets = [2, 1, 0], sizes = [16, 16, 128], strides = [1, 1, 1]} : vector<18x18x128xf32> to vector<16x16x128xf32>
    %50 = vector.shape_cast %49 : vector<16x16x128xf32> to vector<256x128xf32>
    %51 = arith.truncf %50 : vector<256x128xf32> to vector<256x128xbf16>
    %c0_46 = arith.constant 0 : index
    %c896 = arith.constant 896 : index
    %52 = vector.load %arg13[%c0_46, %c896] : memref<256x1152xbf16, #tpu.memory_space<vmem>>, vector<256x128xbf16>
    tpu.vector_store %arg13[%c0_46, %c896], %51 {strides = array<i32>} : memref<256x1152xbf16, #tpu.memory_space<vmem>>, vector<256x128xbf16>,
    %53 = vector.extract_strided_slice %20 {offsets = [2, 2, 0], sizes = [16, 16, 128], strides = [1, 1, 1]} : vector<18x18x128xf32> to vector<16x16x128xf32>
    %54 = vector.shape_cast %53 : vector<16x16x128xf32> to vector<256x128xf32>
    %55 = arith.truncf %54 : vector<256x128xf32> to vector<256x128xbf16>
    %c0_47 = arith.constant 0 : index
    %c1024 = arith.constant 1024 : index
    %56 = vector.load %arg13[%c0_47, %c1024] : memref<256x1152xbf16, #tpu.memory_space<vmem>>, vector<256x128xbf16>
    tpu.vector_store %arg13[%c0_47, %c1024], %55 {strides = array<i32>} : memref<256x1152xbf16, #tpu.memory_space<vmem>>, vector<256x128xbf16>,
    %c0_48 = arith.constant 0 : index
    %c0_49 = arith.constant 0 : index
    %57 = vector.load %arg13[%c0_48, %c0_49] : memref<256x1152xbf16, #tpu.memory_space<vmem>>, vector<256x1152xbf16>
    %c0_50 = arith.constant 0 : index
    %c0_51 = arith.constant 0 : index
    %58 = vector.load %arg2[%c0_50, %c0_51] : memref<1152x128xbf16, #tpu.memory_space<vmem>>, vector<1152x128xbf16>
    %cst_52 = arith.constant dense<0.000000e+00> : vector<256x128xf32>
    %59 = tpu.matmul %57, %58, %cst_52 {dimension_numbers = #tpu.dot_dimension_numbers<[1], [0], [0], [1], [0, 0, 1, 1], [], []>} : vector<256x1152xbf16>, vector<1152x128xbf16>, vector<256x128xf32> -> vector<256x128xf32>
    %c0_53 = arith.constant 0 : index
    %c0_54 = arith.constant 0 : index
    %60 = vector.load %arg3[%c0_53, %c0_54] : memref<1x128xf32, #tpu.memory_space<vmem>>, vector<1x128xf32>
    %61 = vector.broadcast %60 : vector<1x128xf32> to vector<256x128xf32>
    %62 = arith.addf %59, %61 : vector<256x128xf32>
    %63 = vector.shape_cast %62 : vector<256x128xf32> to vector<1x256x128xf32>
    %cst_55 = arith.constant dense<0.000000e+00> : vector<1xf32>
    %64 = vector.multi_reduction <add>, %63, %cst_55 [1, 2] : vector<1x256x128xf32> to vector<1xf32>
    %65 = vector.shape_cast %64 : vector<1xf32> to vector<1x1x1xf32>
    %66 = vector.extract %65[0, 0, 0] : f32 from vector<1x1x1xf32>
    %cst_56 = arith.constant 4.8828125E-4 : f32
    %67 = arith.mulf %66, %cst_56 : f32
    %68 = arith.mulf %62, %62 : vector<256x128xf32>
    %69 = vector.shape_cast %68 : vector<256x128xf32> to vector<1x256x128xf32>
    %cst_57 = arith.constant dense<0.000000e+00> : vector<1xf32>
    %70 = vector.multi_reduction <add>, %69, %cst_57 [1, 2] : vector<1x256x128xf32> to vector<1xf32>
    %71 = vector.shape_cast %70 : vector<1xf32> to vector<1x1x1xf32>
    %72 = vector.extract %71[0, 0, 0] : f32 from vector<1x1x1xf32>
    %cst_58 = arith.constant 4.8828125E-4 : f32
    %73 = arith.mulf %72, %cst_58 : f32
    %74 = arith.mulf %67, %67 : f32
    %75 = arith.subf %73, %74 : f32
    %cst_59 = arith.constant 0.000000e+00 : f32
    %76 = arith.maximumf %75, %cst_59 : f32
    %cst_60 = arith.constant 9.99999974E-6 : f32
    %77 = arith.addf %76, %cst_60 : f32
    %78 = math.rsqrt %77 : f32
    %c0_61 = arith.constant 0 : index
    %c0_62 = arith.constant 0 : index
    %79 = vector.load %arg4[%c0_61, %c0_62] : memref<1x128xf32, #tpu.memory_space<vmem>>, vector<1x128xf32>
    %80 = vector.broadcast %78 : f32 to vector<1x128xf32>
    %81 = arith.mulf %79, %80 : vector<1x128xf32>
    %c0_63 = arith.constant 0 : index
    %c0_64 = arith.constant 0 : index
    %82 = vector.load %arg5[%c0_63, %c0_64] : memref<1x128xf32, #tpu.memory_space<vmem>>, vector<1x128xf32>
    %83 = vector.broadcast %67 : f32 to vector<1x128xf32>
    %84 = arith.mulf %83, %81 : vector<1x128xf32>
    %85 = arith.subf %82, %84 : vector<1x128xf32>
    %86 = vector.broadcast %81 : vector<1x128xf32> to vector<256x128xf32>
    %87 = arith.mulf %62, %86 : vector<256x128xf32>
    %88 = vector.broadcast %85 : vector<1x128xf32> to vector<256x128xf32>
    %89 = arith.addf %87, %88 : vector<256x128xf32>
    %cst_65 = arith.constant 0.000000e+00 : f32
    %90 = vector.broadcast %cst_65 : f32 to vector<256x128xf32>
    %91 = arith.maximumf %89, %90 : vector<256x128xf32>
    %92 = vector.shape_cast %91 : vector<256x128xf32> to vector<16x16x128xf32>
    %c1_66 = arith.constant 1 : index
    %c1_67 = arith.constant 1 : index
    %c0_68 = arith.constant 0 : index
    %93 = vector.load %arg12[%c1_66, %c1_67, %c0_68] : memref<18x18x128xf32, #tpu.memory_space<vmem>>, vector<16x16x128xf32>
    tpu.vector_store %arg12[%c1_66, %c1_67, %c0_68], %92 {strides = array<i32>} : memref<18x18x128xf32, #tpu.memory_space<vmem>>, vector<16x16x128xf32>,
    %c0_69 = arith.constant 0 : index
    %c0_70 = arith.constant 0 : index
    %c0_71 = arith.constant 0 : index
    %94 = vector.load %arg12[%c0_69, %c0_70, %c0_71] : memref<18x18x128xf32, #tpu.memory_space<vmem>>, vector<18x18x128xf32>
    %95 = vector.extract_strided_slice %94 {offsets = [0, 0, 0], sizes = [16, 16, 128], strides = [1, 1, 1]} : vector<18x18x128xf32> to vector<16x16x128xf32>
    %96 = vector.shape_cast %95 : vector<16x16x128xf32> to vector<256x128xf32>
    %97 = arith.truncf %96 : vector<256x128xf32> to vector<256x128xbf16>
    %c0_72 = arith.constant 0 : index
    %c0_73 = arith.constant 0 : index
    %98 = vector.load %arg14[%c0_72, %c0_73] : memref<256x1152xbf16, #tpu.memory_space<vmem>>, vector<256x128xbf16>
    tpu.vector_store %arg14[%c0_72, %c0_73], %97 {strides = array<i32>} : memref<256x1152xbf16, #tpu.memory_space<vmem>>, vector<256x128xbf16>,
    %99 = vector.extract_strided_slice %94 {offsets = [0, 1, 0], sizes = [16, 16, 128], strides = [1, 1, 1]} : vector<18x18x128xf32> to vector<16x16x128xf32>
    %100 = vector.shape_cast %99 : vector<16x16x128xf32> to vector<256x128xf32>
    %101 = arith.truncf %100 : vector<256x128xf32> to vector<256x128xbf16>
    %c0_74 = arith.constant 0 : index
    %c128_75 = arith.constant 128 : index
    %102 = vector.load %arg14[%c0_74, %c128_75] : memref<256x1152xbf16, #tpu.memory_space<vmem>>, vector<256x128xbf16>
    tpu.vector_store %arg14[%c0_74, %c128_75], %101 {strides = array<i32>} : memref<256x1152xbf16, #tpu.memory_space<vmem>>, vector<256x128xbf16>,
    %103 = vector.extract_strided_slice %94 {offsets = [0, 2, 0], sizes = [16, 16, 128], strides = [1, 1, 1]} : vector<18x18x128xf32> to vector<16x16x128xf32>
    %104 = vector.shape_cast %103 : vector<16x16x128xf32> to vector<256x128xf32>
    %105 = arith.truncf %104 : vector<256x128xf32> to vector<256x128xbf16>
    %c0_76 = arith.constant 0 : index
    %c256_77 = arith.constant 256 : index
    %106 = vector.load %arg14[%c0_76, %c256_77] : memref<256x1152xbf16, #tpu.memory_space<vmem>>, vector<256x128xbf16>
    tpu.vector_store %arg14[%c0_76, %c256_77], %105 {strides = array<i32>} : memref<256x1152xbf16, #tpu.memory_space<vmem>>, vector<256x128xbf16>,
    %107 = vector.extract_strided_slice %94 {offsets = [1, 0, 0], sizes = [16, 16, 128], strides = [1, 1, 1]} : vector<18x18x128xf32> to vector<16x16x128xf32>
    %108 = vector.shape_cast %107 : vector<16x16x128xf32> to vector<256x128xf32>
    %109 = arith.truncf %108 : vector<256x128xf32> to vector<256x128xbf16>
    %c0_78 = arith.constant 0 : index
    %c384_79 = arith.constant 384 : index
    %110 = vector.load %arg14[%c0_78, %c384_79] : memref<256x1152xbf16, #tpu.memory_space<vmem>>, vector<256x128xbf16>
    tpu.vector_store %arg14[%c0_78, %c384_79], %109 {strides = array<i32>} : memref<256x1152xbf16, #tpu.memory_space<vmem>>, vector<256x128xbf16>,
    %111 = vector.extract_strided_slice %94 {offsets = [1, 1, 0], sizes = [16, 16, 128], strides = [1, 1, 1]} : vector<18x18x128xf32> to vector<16x16x128xf32>
    %112 = vector.shape_cast %111 : vector<16x16x128xf32> to vector<256x128xf32>
    %113 = arith.truncf %112 : vector<256x128xf32> to vector<256x128xbf16>
    %c0_80 = arith.constant 0 : index
    %c512_81 = arith.constant 512 : index
    %114 = vector.load %arg14[%c0_80, %c512_81] : memref<256x1152xbf16, #tpu.memory_space<vmem>>, vector<256x128xbf16>
    tpu.vector_store %arg14[%c0_80, %c512_81], %113 {strides = array<i32>} : memref<256x1152xbf16, #tpu.memory_space<vmem>>, vector<256x128xbf16>,
    %115 = vector.extract_strided_slice %94 {offsets = [1, 2, 0], sizes = [16, 16, 128], strides = [1, 1, 1]} : vector<18x18x128xf32> to vector<16x16x128xf32>
    %116 = vector.shape_cast %115 : vector<16x16x128xf32> to vector<256x128xf32>
    %117 = arith.truncf %116 : vector<256x128xf32> to vector<256x128xbf16>
    %c0_82 = arith.constant 0 : index
    %c640_83 = arith.constant 640 : index
    %118 = vector.load %arg14[%c0_82, %c640_83] : memref<256x1152xbf16, #tpu.memory_space<vmem>>, vector<256x128xbf16>
    tpu.vector_store %arg14[%c0_82, %c640_83], %117 {strides = array<i32>} : memref<256x1152xbf16, #tpu.memory_space<vmem>>, vector<256x128xbf16>,
    %119 = vector.extract_strided_slice %94 {offsets = [2, 0, 0], sizes = [16, 16, 128], strides = [1, 1, 1]} : vector<18x18x128xf32> to vector<16x16x128xf32>
    %120 = vector.shape_cast %119 : vector<16x16x128xf32> to vector<256x128xf32>
    %121 = arith.truncf %120 : vector<256x128xf32> to vector<256x128xbf16>
    %c0_84 = arith.constant 0 : index
    %c768_85 = arith.constant 768 : index
    %122 = vector.load %arg14[%c0_84, %c768_85] : memref<256x1152xbf16, #tpu.memory_space<vmem>>, vector<256x128xbf16>
    tpu.vector_store %arg14[%c0_84, %c768_85], %121 {strides = array<i32>} : memref<256x1152xbf16, #tpu.memory_space<vmem>>, vector<256x128xbf16>,
    %123 = vector.extract_strided_slice %94 {offsets = [2, 1, 0], sizes = [16, 16, 128], strides = [1, 1, 1]} : vector<18x18x128xf32> to vector<16x16x128xf32>
    %124 = vector.shape_cast %123 : vector<16x16x128xf32> to vector<256x128xf32>
    %125 = arith.truncf %124 : vector<256x128xf32> to vector<256x128xbf16>
    %c0_86 = arith.constant 0 : index
    %c896_87 = arith.constant 896 : index
    %126 = vector.load %arg14[%c0_86, %c896_87] : memref<256x1152xbf16, #tpu.memory_space<vmem>>, vector<256x128xbf16>
    tpu.vector_store %arg14[%c0_86, %c896_87], %125 {strides = array<i32>} : memref<256x1152xbf16, #tpu.memory_space<vmem>>, vector<256x128xbf16>,
    %127 = vector.extract_strided_slice %94 {offsets = [2, 2, 0], sizes = [16, 16, 128], strides = [1, 1, 1]} : vector<18x18x128xf32> to vector<16x16x128xf32>
    %128 = vector.shape_cast %127 : vector<16x16x128xf32> to vector<256x128xf32>
    %129 = arith.truncf %128 : vector<256x128xf32> to vector<256x128xbf16>
    %c0_88 = arith.constant 0 : index
    %c1024_89 = arith.constant 1024 : index
    %130 = vector.load %arg14[%c0_88, %c1024_89] : memref<256x1152xbf16, #tpu.memory_space<vmem>>, vector<256x128xbf16>
    tpu.vector_store %arg14[%c0_88, %c1024_89], %129 {strides = array<i32>} : memref<256x1152xbf16, #tpu.memory_space<vmem>>, vector<256x128xbf16>,
    %c0_90 = arith.constant 0 : index
    %c0_91 = arith.constant 0 : index
    %131 = vector.load %arg14[%c0_90, %c0_91] : memref<256x1152xbf16, #tpu.memory_space<vmem>>, vector<256x1152xbf16>
    %c0_92 = arith.constant 0 : index
    %c0_93 = arith.constant 0 : index
    %132 = vector.load %arg6[%c0_92, %c0_93] : memref<1152x128xbf16, #tpu.memory_space<vmem>>, vector<1152x128xbf16>
    %cst_94 = arith.constant dense<0.000000e+00> : vector<256x128xf32>
    %133 = tpu.matmul %131, %132, %cst_94 {dimension_numbers = #tpu.dot_dimension_numbers<[1], [0], [0], [1], [0, 0, 1, 1], [], []>} : vector<256x1152xbf16>, vector<1152x128xbf16>, vector<256x128xf32> -> vector<256x128xf32>
    %c0_95 = arith.constant 0 : index
    %c0_96 = arith.constant 0 : index
    %134 = vector.load %arg7[%c0_95, %c0_96] : memref<1x128xf32, #tpu.memory_space<vmem>>, vector<1x128xf32>
    %135 = vector.broadcast %134 : vector<1x128xf32> to vector<256x128xf32>
    %136 = arith.addf %133, %135 : vector<256x128xf32>
    %137 = vector.shape_cast %136 : vector<256x128xf32> to vector<1x256x128xf32>
    %cst_97 = arith.constant dense<0.000000e+00> : vector<1xf32>
    %138 = vector.multi_reduction <add>, %137, %cst_97 [1, 2] : vector<1x256x128xf32> to vector<1xf32>
    %139 = vector.shape_cast %138 : vector<1xf32> to vector<1x1x1xf32>
    %140 = vector.extract %139[0, 0, 0] : f32 from vector<1x1x1xf32>
    %cst_98 = arith.constant 4.8828125E-4 : f32
    %141 = arith.mulf %140, %cst_98 : f32
    %142 = arith.mulf %136, %136 : vector<256x128xf32>
    %143 = vector.shape_cast %142 : vector<256x128xf32> to vector<1x256x128xf32>
    %cst_99 = arith.constant dense<0.000000e+00> : vector<1xf32>
    %144 = vector.multi_reduction <add>, %143, %cst_99 [1, 2] : vector<1x256x128xf32> to vector<1xf32>
    %145 = vector.shape_cast %144 : vector<1xf32> to vector<1x1x1xf32>
    %146 = vector.extract %145[0, 0, 0] : f32 from vector<1x1x1xf32>
    %cst_100 = arith.constant 4.8828125E-4 : f32
    %147 = arith.mulf %146, %cst_100 : f32
    %148 = arith.mulf %141, %141 : f32
    %149 = arith.subf %147, %148 : f32
    %cst_101 = arith.constant 0.000000e+00 : f32
    %150 = arith.maximumf %149, %cst_101 : f32
    %cst_102 = arith.constant 9.99999974E-6 : f32
    %151 = arith.addf %150, %cst_102 : f32
    %152 = math.rsqrt %151 : f32
    %c0_103 = arith.constant 0 : index
    %c0_104 = arith.constant 0 : index
    %153 = vector.load %arg8[%c0_103, %c0_104] : memref<1x128xf32, #tpu.memory_space<vmem>>, vector<1x128xf32>
    %154 = vector.broadcast %152 : f32 to vector<1x128xf32>
    %155 = arith.mulf %153, %154 : vector<1x128xf32>
    %c0_105 = arith.constant 0 : index
    %c0_106 = arith.constant 0 : index
    %156 = vector.load %arg9[%c0_105, %c0_106] : memref<1x128xf32, #tpu.memory_space<vmem>>, vector<1x128xf32>
    %157 = vector.broadcast %141 : f32 to vector<1x128xf32>
    %158 = arith.mulf %157, %155 : vector<1x128xf32>
    %159 = arith.subf %156, %158 : vector<1x128xf32>
    %160 = vector.broadcast %155 : vector<1x128xf32> to vector<256x128xf32>
    %161 = arith.mulf %136, %160 : vector<256x128xf32>
    %162 = vector.broadcast %159 : vector<1x128xf32> to vector<256x128xf32>
    %163 = arith.addf %161, %162 : vector<256x128xf32>
    %cst_107 = arith.constant 0.000000e+00 : f32
    %164 = vector.broadcast %cst_107 : f32 to vector<256x128xf32>
    %165 = arith.maximumf %163, %164 : vector<256x128xf32>
    %166 = vector.shape_cast %165 : vector<256x128xf32> to vector<16x16x128xf32>
    %c0_108 = arith.constant 0 : index
    %c0_109 = arith.constant 0 : index
    %c0_110 = arith.constant 0 : index
    %c0_111 = arith.constant 0 : index
    %167 = vector.load %arg10[%c0_108, %c0_109, %c0_110, %c0_111] : memref<1x16x16x128xf32, #tpu.memory_space<vmem>>, vector<1x16x16x128xf32>
    %168 = vector.shape_cast %167 : vector<1x16x16x128xf32> to vector<16x16x128xf32>
    %169 = vector.shape_cast %166 : vector<16x16x128xf32> to vector<1x16x16x128xf32>
    tpu.vector_store %arg10[%c0_108, %c0_109, %c0_110, %c0_111], %169 {strides = array<i32>} : memref<1x16x16x128xf32, #tpu.memory_space<vmem>>, vector<1x16x16x128xf32>,
    return
  }
  func.func @transform_0(%arg0: i32) -> (i32, i32, i32, i32) {
    %c0_i32 = arith.constant 0 : i32
    %c0_i32_0 = arith.constant 0 : i32
    %c0_i32_1 = arith.constant 0 : i32
    %c0_i32_2 = arith.constant 0 : i32
    return %arg0, %c0_i32, %c0_i32_0, %c0_i32_1 : i32, i32, i32, i32
  }
  func.func @transform_1(%arg0: i32) -> (i32, i32) {
    %c0_i32 = arith.constant 0 : i32
    %c0_i32_0 = arith.constant 0 : i32
    %c0_i32_1 = arith.constant 0 : i32
    return %c0_i32, %c0_i32_0 : i32, i32
  }
  func.func @transform_2(%arg0: i32) -> (i32, i32) {
    %c0_i32 = arith.constant 0 : i32
    %c0_i32_0 = arith.constant 0 : i32
    %c0_i32_1 = arith.constant 0 : i32
    return %c0_i32, %c0_i32_0 : i32, i32
  }
  func.func @transform_3(%arg0: i32) -> (i32, i32) {
    %c0_i32 = arith.constant 0 : i32
    %c0_i32_0 = arith.constant 0 : i32
    %c0_i32_1 = arith.constant 0 : i32
    return %c0_i32, %c0_i32_0 : i32, i32
  }
  func.func @transform_4(%arg0: i32) -> (i32, i32) {
    %c0_i32 = arith.constant 0 : i32
    %c0_i32_0 = arith.constant 0 : i32
    %c0_i32_1 = arith.constant 0 : i32
    return %c0_i32, %c0_i32_0 : i32, i32
  }
  func.func @transform_5(%arg0: i32) -> (i32, i32) {
    %c0_i32 = arith.constant 0 : i32
    %c0_i32_0 = arith.constant 0 : i32
    %c0_i32_1 = arith.constant 0 : i32
    return %c0_i32, %c0_i32_0 : i32, i32
  }
  func.func @transform_6(%arg0: i32) -> (i32, i32) {
    %c0_i32 = arith.constant 0 : i32
    %c0_i32_0 = arith.constant 0 : i32
    %c0_i32_1 = arith.constant 0 : i32
    return %c0_i32, %c0_i32_0 : i32, i32
  }
  func.func @transform_7(%arg0: i32) -> (i32, i32) {
    %c0_i32 = arith.constant 0 : i32
    %c0_i32_0 = arith.constant 0 : i32
    %c0_i32_1 = arith.constant 0 : i32
    return %c0_i32, %c0_i32_0 : i32, i32
  }
  func.func @transform_8(%arg0: i32) -> (i32, i32) {
    %c0_i32 = arith.constant 0 : i32
    %c0_i32_0 = arith.constant 0 : i32
    %c0_i32_1 = arith.constant 0 : i32
    return %c0_i32, %c0_i32_0 : i32, i32
  }
  func.func @transform_9(%arg0: i32) -> (i32, i32, i32, i32) {
    %c0_i32 = arith.constant 0 : i32
    %c0_i32_0 = arith.constant 0 : i32
    %c0_i32_1 = arith.constant 0 : i32
    %c0_i32_2 = arith.constant 0 : i32
    return %arg0, %c0_i32, %c0_i32_0, %c0_i32_1 : i32, i32, i32, i32
  }
}

</mosaic_0001>

<llo_original>
// kernel: tpu_custom_call.1
$region0: #{tpu_custom_call.1}
  #allocation0 [shape = 'u32[]', space=smem, size = 0x4, offset = 0x4, fixed_abs, tag = 'smem constant byte address 0x4 - core index']
  #allocation1 [shape = 'u32[72,128]{1,0:T(1,128)}', space=vmem, size = 0x9000, scoped, tag = 'internal scratch']
  #allocation2 [shape = 'f32[18,18,128]{2,1,0:T(8,128)}', space=vmem, size = 0x36000, scoped, tag = 'scratch operand']
  #allocation3 [shape = 'f32[18,18,128]{2,1,0:T(8,128)}', space=vmem, size = 0x36000, scoped, tag = 'scratch operand']
  #allocation4 [shape = 'bf16[256,1152]{1,0:T(8,128)(2,1)}', space=vmem, size = 0x90000, scoped, tag = 'scratch operand']
  #allocation5 [shape = 'bf16[256,1152]{1,0:T(8,128)(2,1)}', space=vmem, size = 0x90000, scoped, tag = 'scratch operand']
  %s0 = inlined_call_operand.hbm [shape: bf16[2,16,16,128], index: 0, kind: input, shape index: {}]
  %s1 = inlined_call_operand.hbm [shape: bf16[1152,128], index: 1, kind: input, shape index: {}]
  %s2 = inlined_call_operand.vmem [shape: f32[1,128], index: 2, kind: input, shape index: {}]
  %s3 = inlined_call_operand.vmem [shape: f32[1,128], index: 3, kind: input, shape index: {}]
  %s4 = inlined_call_operand.vmem [shape: f32[1,128], index: 4, kind: input, shape index: {}]
  %s5 = inlined_call_operand.hbm [shape: bf16[1152,128], index: 5, kind: input, shape index: {}]
  %s6 = inlined_call_operand.vmem [shape: f32[1,128], index: 6, kind: input, shape index: {}]
  %s7 = inlined_call_operand.vmem [shape: f32[1,128], index: 7, kind: input, shape index: {}]
  %s8 = inlined_call_operand.vmem [shape: f32[1,128], index: 8, kind: input, shape index: {}]
  %s9 = inlined_call_operand.hbm [shape: f32[2,16,16,128], index: 9, kind: output, shape index: {}]
  %s10 = sld [smem:[#allocation0]]
  $region81: #{tpu_custom_call.1} parent=0
    _
  %s12 = ssub.s32 1, %s10
  %s13 = scalar_select 0, %s12, %s10
  $region1: #{tpu_custom_call.1} parent=0
    #allocation6 [shape = 'u8[131072]{0}', space=vmem, size = 0x20000, scoped, tag = 'input window, operand 0']
    #allocation7 [shape = 's32[2]{0}', space=sflag, size = 0x8, scoped, tag = 'scoped memory for tpu_custom_call.1']
    #allocation8 [shape = 's32[2]{0}', space=sflag, size = 0x8, scoped, tag = 'scoped memory for tpu_custom_call.1']
    #allocation9 [shape = 'u8[294912]{0}', space=vmem, size = 0x48000, scoped, tag = 'input window, operand 1, single buffered']
    #allocation10 [shape = 's32[1]{0}', space=sflag, size = 0x4, scoped, tag = 'scoped memory for tpu_custom_call.1']
    #allocation11 [shape = 'u8[294912]{0}', space=vmem, size = 0x48000, scoped, tag = 'input window, operand 5, single buffered']
    #allocation12 [shape = 'u8[262144]{0}', space=vmem, size = 0x40000, scoped, tag = 'output window, operand 0']
    %14 = vsyncpa [#allocation7], 0
    %s15 = scalar_lea.sflag [#allocation7], 1
    %16 = vsyncpa %s15, 0
    %17 = vsyncpa [#allocation10], 0
    %18 = vsyncpa [#allocation8], 0
    %s19 = scalar_lea.sflag [#allocation8], 1
    %20 = vsyncpa %s19, 0
    loop: start=0, step=1, limit=4
    $region2: #{tpu_custom_call.1} parent=1 // loop_pre_header
      _
    $region3: #{tpu_custom_call.1} parent=1 // loop_header
      %s22 = sphi 0, %s26
      %p23 = scmp.ge.s32.totalorder %s22, 4
      %s32 = sphi 0, %s34
      %s35 = sphi 0, %s32
      %s36 = sphi 0, %s35
      %s52 = sphi 0, %s36
      %s56 = sphi 0, %s56
      %s58 = sphi 0, %s56
      %s59 = sphi 0, %s58
      %s73 = sphi 0, %s59
      %s77 = sphi 0, %s77
      %s79 = sphi 0, %s77
      %s80 = sphi 0, %s79
      %s94 = sphi 0, %s80
      %s98 = sphi 0, %s98
      %s100 = sphi 0, %s98
      %s101 = sphi 0, %s100
      %s115 = sphi 0, %s101
      %s119 = sphi 0, %s119
      %s121 = sphi 0, %s119
      %s122 = sphi 0, %s121
      %s136 = sphi 0, %s122
      %s140 = sphi 0, %s140
      %s142 = sphi 0, %s140
      %s143 = sphi 0, %s142
      %s157 = sphi 0, %s143
      %s161 = sphi 0, %s161
      %s163 = sphi 0, %s161
      %s164 = sphi 0, %s163
      %s178 = sphi 0, %s164
      %s182 = sphi 0, %s182
      %s184 = sphi 0, %s182
      %s185 = sphi 0, %s184
      %s199 = sphi 0, %s185
      %s203 = sphi 0, %s203
      %s205 = sphi 0, %s203
      %s206 = sphi 0, %s205
      %s220 = sphi 0, %s206
      %s226 = sphi 0, %s228
      %s229 = sphi 0, %s226
      %s230 = sphi 0, %s229
      %s246 = sphi 0, %s230
    $region4: #{tpu_custom_call.1} parent=1 // loop_header_branch
      %25 = sbr.rel (%p23) target = $region8
    $region5: #{tpu_custom_call.1} parent=1 // loop_body
      %s27 = ssub.s32 %s22, 1
      %s28 = ssub.s32 %s22, 2
      %s29 = sadd.s32 %s22, 1
      %s30 = ssub.s32 %s22, %s29
      %p31 = scmp.eq.s32.totalorder %s30, 0
      %s33 = sadd.s32 %s32, 1
      %s34 = scalar_select %p31, %s32, %s33
      %p37 = pneg %p31
      %p38 = scmp.eq.s32.totalorder %s22, 1
      %p39 = por %p37, %p38
      %p40 = scmp.ne.s32.totalorder %s32, %s35
      %p41 = scmp.eq.s32.totalorder %s22, 0
      %p42 = por %p40, %p41
      %p43 = scmp.ne.s32.totalorder %s32, %s35
      %p44 = scmp.eq.s32.totalorder %s27, 1
      %p45 = por %p43, %p44
      %p46 = scmp.ne.s32.totalorder %s35, %s36
      %p47 = scmp.eq.s32.totalorder %s27, 0
      %p48 = por %p46, %p47
      %p49 = scmp.ne.s32.totalorder %s35, %s36
      %p50 = scmp.eq.s32.totalorder %s28, 1
      %p51 = por %p49, %p50
      %p53 = scmp.ne.s32.totalorder %s36, %s52
      %p54 = scmp.eq.s32.totalorder %s28, 0
      %p55 = por %p53, %p54
      %s57 = sadd.s32 %s56, 1
      %p60 = scmp.eq.s32.totalorder %s22, 1
      %p61 = scmp.ne.s32.totalorder %s56, %s58
      %p62 = scmp.eq.s32.totalorder %s22, 0
      %p63 = por %p61, %p62
      %p64 = scmp.ne.s32.totalorder %s56, %s58
      %p65 = scmp.eq.s32.totalorder %s27, 1
      %p66 = por %p64, %p65
      %p67 = scmp.ne.s32.totalorder %s58, %s59
      %p68 = scmp.eq.s32.totalorder %s27, 0
      %p69 = por %p67, %p68
      %p70 = scmp.ne.s32.totalorder %s58, %s59
      %p71 = scmp.eq.s32.totalorder %s28, 1
      %p72 = por %p70, %p71
      %p74 = scmp.ne.s32.totalorder %s59, %s73
      %p75 = scmp.eq.s32.totalorder %s28, 0
      %p76 = por %p74, %p75
      %s78 = sadd.s32 %s77, 1
      %p81 = scmp.eq.s32.totalorder %s22, 1
      %p82 = scmp.ne.s32.totalorder %s77, %s79
      %p83 = scmp.eq.s32.totalorder %s22, 0
      %p84 = por %p82, %p83
      %p85 = scmp.ne.s32.totalorder %s77, %s79
      %p86 = scmp.eq.s32.totalorder %s27, 1
      %p87 = por %p85, %p86
      %p88 = scmp.ne.s32.totalorder %s79, %s80
      %p89 = scmp.eq.s32.totalorder %s27, 0
      %p90 = por %p88, %p89
      %p91 = scmp.ne.s32.totalorder %s79, %s80
      %p92 = scmp.eq.s32.totalorder %s28, 1
      %p93 = por %p91, %p92
      %p95 = scmp.ne.s32.totalorder %s80, %s94
      %p96 = scmp.eq.s32.totalorder %s28, 0
      %p97 = por %p95, %p96
      %s99 = sadd.s32 %s98, 1
      %p102 = scmp.eq.s32.totalorder %s22, 1
      %p103 = scmp.ne.s32.totalorder %s98, %s100
      %p104 = scmp.eq.s32.totalorder %s22, 0
      %p105 = por %p103, %p104
      %p106 = scmp.ne.s32.totalorder %s98, %s100
      %p107 = scmp.eq.s32.totalorder %s27, 1
      %p108 = por %p106, %p107
      %p109 = scmp.ne.s32.totalorder %s100, %s101
      %p110 = scmp.eq.s32.totalorder %s27, 0
      %p111 = por %p109, %p110
      %p112 = scmp.ne.s32.totalorder %s100, %s101
      %p113 = scmp.eq.s32.totalorder %s28, 1
      %p114 = por %p112, %p113
      %p116 = scmp.ne.s32.totalorder %s101, %s115
      %p117 = scmp.eq.s32.totalorder %s28, 0
      %p118 = por %p116, %p117
      %s120 = sadd.s32 %s119, 1
      %p123 = scmp.eq.s32.totalorder %s22, 1
      %p124 = scmp.ne.s32.totalorder %s119, %s121
      %p125 = scmp.eq.s32.totalorder %s22, 0
      %p126 = por %p124, %p125
      %p127 = scmp.ne.s32.totalorder %s119, %s121
      %p128 = scmp.eq.s32.totalorder %s27, 1
      %p129 = por %p127, %p128
      %p130 = scmp.ne.s32.totalorder %s121, %s122
      %p131 = scmp.eq.s32.totalorder %s27, 0
      %p132 = por %p130, %p131
      %p133 = scmp.ne.s32.totalorder %s121, %s122
      %p134 = scmp.eq.s32.totalorder %s28, 1
      %p135 = por %p133, %p134
      %p137 = scmp.ne.s32.totalorder %s122, %s136
      %p138 = scmp.eq.s32.totalorder %s28, 0
      %p139 = por %p137, %p138
      %s141 = sadd.s32 %s140, 1
      %p144 = scmp.eq.s32.totalorder %s22, 1
      %p145 = scmp.ne.s32.totalorder %s140, %s142
      %p146 = scmp.eq.s32.totalorder %s22, 0
      %p147 = por %p145, %p146
      %p148 = scmp.ne.s32.totalorder %s140, %s142
      %p149 = scmp.eq.s32.totalorder %s27, 1
      %p150 = por %p148, %p149
      %p151 = scmp.ne.s32.totalorder %s142, %s143
      %p152 = scmp.eq.s32.totalorder %s27, 0
      %p153 = por %p151, %p152
      %p154 = scmp.ne.s32.totalorder %s142, %s143
      %p155 = scmp.eq.s32.totalorder %s28, 1
      %p156 = por %p154, %p155
      %p158 = scmp.ne.s32.totalorder %s143, %s157
      %p159 = scmp.eq.s32.totalorder %s28, 0
      %p160 = por %p158, %p159
      %s162 = sadd.s32 %s161, 1
      %p165 = scmp.eq.s32.totalorder %s22, 1
      %p166 = scmp.ne.s32.totalorder %s161, %s163
      %p167 = scmp.eq.s32.totalorder %s22, 0
      %p168 = por %p166, %p167
      %p169 = scmp.ne.s32.totalorder %s161, %s163
      %p170 = scmp.eq.s32.totalorder %s27, 1
      %p171 = por %p169, %p170
      %p172 = scmp.ne.s32.totalorder %s163, %s164
      %p173 = scmp.eq.s32.totalorder %s27, 0
      %p174 = por %p172, %p173
      %p175 = scmp.ne.s32.totalorder %s163, %s164
      %p176 = scmp.eq.s32.totalorder %s28, 1
      %p177 = por %p175, %p176
      %p179 = scmp.ne.s32.totalorder %s164, %s178
      %p180 = scmp.eq.s32.totalorder %s28, 0
      %p181 = por %p179, %p180
      %s183 = sadd.s32 %s182, 1
      %p186 = scmp.eq.s32.totalorder %s22, 1
      %p187 = scmp.ne.s32.totalorder %s182, %s184
      %p188 = scmp.eq.s32.totalorder %s22, 0
      %p189 = por %p187, %p188
      %p190 = scmp.ne.s32.totalorder %s182, %s184
      %p191 = scmp.eq.s32.totalorder %s27, 1
      %p192 = por %p190, %p191
      %p193 = scmp.ne.s32.totalorder %s184, %s185
      %p194 = scmp.eq.s32.totalorder %s27, 0
      %p195 = por %p193, %p194
      %p196 = scmp.ne.s32.totalorder %s184, %s185
      %p197 = scmp.eq.s32.totalorder %s28, 1
      %p198 = por %p196, %p197
      %p200 = scmp.ne.s32.totalorder %s185, %s199
      %p201 = scmp.eq.s32.totalorder %s28, 0
      %p202 = por %p200, %p201
      %s204 = sadd.s32 %s203, 1
      %p207 = scmp.eq.s32.totalorder %s22, 1
      %p208 = scmp.ne.s32.totalorder %s203, %s205
      %p209 = scmp.eq.s32.totalorder %s22, 0
      %p210 = por %p208, %p209
      %p211 = scmp.ne.s32.totalorder %s203, %s205
      %p212 = scmp.eq.s32.totalorder %s27, 1
      %p213 = por %p211, %p212
      %p214 = scmp.ne.s32.totalorder %s205, %s206
      %p215 = scmp.eq.s32.totalorder %s27, 0
      %p216 = por %p214, %p215
      %p217 = scmp.ne.s32.totalorder %s205, %s206
      %p218 = scmp.eq.s32.totalorder %s28, 1
      %p219 = por %p217, %p218
      %p221 = scmp.ne.s32.totalorder %s206, %s220
      %p222 = scmp.eq.s32.totalorder %s28, 0
      %p223 = por %p221, %p222
      %s224 = ssub.s32 %s22, %s29
      %p225 = scmp.eq.s32.totalorder %s224, 0
      %s227 = sadd.s32 %s226, 1
      %s228 = scalar_select %p225, %s226, %s227
      %p231 = pneg %p225
      %p232 = scmp.eq.s32.totalorder %s22, 1
      %p233 = por %p231, %p232
      %p234 = scmp.ne.s32.totalorder %s226, %s229
      %p235 = scmp.eq.s32.totalorder %s22, 0
      %p236 = por %p234, %p235
      %p237 = scmp.ne.s32.totalorder %s226, %s229
      %p238 = scmp.eq.s32.totalorder %s27, 1
      %p239 = por %p237, %p238
      %p240 = scmp.ne.s32.totalorder %s229, %s230
      %p241 = scmp.eq.s32.totalorder %s27, 0
      %p242 = por %p240, %p241
      %p243 = scmp.ne.s32.totalorder %s229, %s230
      %p244 = scmp.eq.s32.totalorder %s28, 1
      %p245 = por %p243, %p244
      %p247 = scmp.ne.s32.totalorder %s230, %s246
      %p248 = scmp.eq.s32.totalorder %s28, 0
      %p249 = por %p247, %p248
      %p250 = scmp.le.s32.totalorder 1, %s22
      %p251 = scmp.lt.s32.totalorder %s22, 3
      %p252 = pnand %p250, %p251
      %p253 = pneg %p252
      // Predicated region
      $region9: #{tpu_custom_call.1} parent=5 // pred_check
        _
      $region10: #{tpu_custom_call.1} parent=5 // pred_check_branch
        %255 = sbr.rel (%p252) target = $region12
      $region11: #{tpu_custom_call.1} parent=5 // pred_region
        %s256 = ssub.s32 %s22, 1
        // Predicated region
        $region13: #{tpu_custom_call.1} parent=11 // pred_check
          %p257 = pneg %p69
        $region14: #{tpu_custom_call.1} parent=11 // pred_check_branch
          %259 = sbr.rel (%p257) target = $region16
        $region15: #{tpu_custom_call.1} parent=11 // pred_region
          %261 = vsyncadd [#allocation10], 0
          %s262 = sshll.u32 %s1, 4
          %s263 = int_to_ptr.hbm [resolvable:$true] %s262
          %s264 = sshll.u32 [#allocation9], 4
          %s265 = int_to_ptr.vmem [resolvable:$true] %s264
          %270 = dma.hbm_to_vmem [thread:$0]  %s263, 9216, %s265, [#allocation10], 64, 64, 4
        $region16: #{tpu_custom_call.1} parent=11 // pred_fallthru
          _
        // Predicated region
        $region17: #{tpu_custom_call.1} parent=11 // pred_check
          %p271 = pneg %p90
        $region18: #{tpu_custom_call.1} parent=11 // pred_check_branch
          %273 = sbr.rel (%p271) target = $region20
        $region19: #{tpu_custom_call.1} parent=11 // pred_region
          _
        $region20: #{tpu_custom_call.1} parent=11 // pred_fallthru
          _
        // Predicated region
        $region21: #{tpu_custom_call.1} parent=11 // pred_check
          %p274 = pneg %p111
        $region22: #{tpu_custom_call.1} parent=11 // pred_check_branch
          %276 = sbr.rel (%p274) target = $region24
        $region23: #{tpu_custom_call.1} parent=11 // pred_region
          _
        $region24: #{tpu_custom_call.1} parent=11 // pred_fallthru
          _
        // Predicated region
        $region25: #{tpu_custom_call.1} parent=11 // pred_check
          %p277 = pneg %p132
        $region26: #{tpu_custom_call.1} parent=11 // pred_check_branch
          %279 = sbr.rel (%p277) target = $region28
        $region27: #{tpu_custom_call.1} parent=11 // pred_region
          _
        $region28: #{tpu_custom_call.1} parent=11 // pred_fallthru
          _
        // Predicated region
        $region29: #{tpu_custom_call.1} parent=11 // pred_check
          %p280 = pneg %p153
        $region30: #{tpu_custom_call.1} parent=11 // pred_check_branch
          %282 = sbr.rel (%p280) target = $region32
        $region31: #{tpu_custom_call.1} parent=11 // pred_region
          %284 = vsyncadd [#allocation10], 0
          %s285 = sshll.u32 %s5, 4
          %s286 = int_to_ptr.hbm [resolvable:$true] %s285
          %s287 = sshll.u32 [#allocation11], 4
          %s288 = int_to_ptr.vmem [resolvable:$true] %s287
          %293 = dma.hbm_to_vmem [thread:$0]  %s286, 9216, %s288, [#allocation10], 64, 64, 4
        $region32: #{tpu_custom_call.1} parent=11 // pred_fallthru
          _
        // Predicated region
        $region33: #{tpu_custom_call.1} parent=11 // pred_check
          %p294 = pneg %p174
        $region34: #{tpu_custom_call.1} parent=11 // pred_check_branch
          %296 = sbr.rel (%p294) target = $region36
        $region35: #{tpu_custom_call.1} parent=11 // pred_region
          _
        $region36: #{tpu_custom_call.1} parent=11 // pred_fallthru
          _
        // Predicated region
        $region37: #{tpu_custom_call.1} parent=11 // pred_check
          %p297 = pneg %p195
        $region38: #{tpu_custom_call.1} parent=11 // pred_check_branch
          %299 = sbr.rel (%p297) target = $region40
        $region39: #{tpu_custom_call.1} parent=11 // pred_region
          _
        $region40: #{tpu_custom_call.1} parent=11 // pred_fallthru
          _
        // Predicated region
        $region41: #{tpu_custom_call.1} parent=11 // pred_check
          %p300 = pneg %p216
        $region42: #{tpu_custom_call.1} parent=11 // pred_check_branch
          %302 = sbr.rel (%p300) target = $region44
        $region43: #{tpu_custom_call.1} parent=11 // pred_region
          _
        $region44: #{tpu_custom_call.1} parent=11 // pred_fallthru
          _
      $region12: #{tpu_custom_call.1} parent=5 // pred_fallthru
        _
      %p303 = scmp.lt.s32.totalorder %s22, 2
      // Predicated region
      $region45: #{tpu_custom_call.1} parent=5 // pred_check
        %p304 = pneg %p303
      $region46: #{tpu_custom_call.1} parent=5 // pred_check_branch
        %306 = sbr.rel (%p304) target = $region48
      $region47: #{tpu_custom_call.1} parent=5 // pred_region
        // Predicated region
        $region49: #{tpu_custom_call.1} parent=47 // pred_check
          %p307 = pneg %p42
        $region50: #{tpu_custom_call.1} parent=47 // pred_check_branch
          %309 = sbr.rel (%p307) target = $region52
        $region51: #{tpu_custom_call.1} parent=47 // pred_region
          %s310 = sand.u32 %s32, 1
          %s311 = scalar_lea.sflag [#allocation7], %s310
          %s312 = sand.u32 %s32, 1
          %s313 = smul.addr %s312, 128
          %s314 = scalar_lea.vmem [#allocation6], %s313
          %316 = vsyncadd %s311, 0
          %s317 = smul.addr %s22, 32
          %s318 = smul.addr %s317, 4
          %s319 = scalar_lea.hbm %s0, %s318
          %s320 = sshll.u32 %s319, 4
          %s321 = int_to_ptr.hbm [resolvable:$true] %s320
          %s322 = sshll.u32 %s314, 4
          %s323 = int_to_ptr.vmem [resolvable:$true] %s322
          %328 = dma.hbm_to_vmem [thread:$0]  %s321, 2048, %s323, %s311, 64, 64, 4
        $region52: #{tpu_custom_call.1} parent=47 // pred_fallthru
          _
      $region48: #{tpu_custom_call.1} parent=5 // pred_fallthru
        _
      %p329 = scmp.le.s32.totalorder 1, %s22
      %p330 = scmp.lt.s32.totalorder %s22, 3
      %p331 = pnand %p329, %p330
      %p332 = pneg %p331
      // Predicated region
      $region53: #{tpu_custom_call.1} parent=5 // pred_check
        _
      $region54: #{tpu_custom_call.1} parent=5 // pred_check_branch
        %334 = sbr.rel (%p331) target = $region56
      $region55: #{tpu_custom_call.1} parent=5 // pred_region
        %s335 = ssub.s32 %s22, 1
        %s336 = sand.u32 %s35, 1
        %s337 = scalar_lea.sflag [#allocation7], %s336
        %s338 = sand.u32 %s35, 1
        %s339 = smul.addr %s338, 128
        %s340 = scalar_lea.vmem [#allocation6], %s339
        // Predicated region
        $region57: #{tpu_custom_call.1} parent=55 // pred_check
          %p341 = pneg %p48
        $region58: #{tpu_custom_call.1} parent=55 // pred_check_branch
          %343 = sbr.rel (%p341) target = $region60
        $region59: #{tpu_custom_call.1} parent=55 // pred_region
          %345 = dma.done %s337, 2048
        $region60: #{tpu_custom_call.1} parent=55 // pred_fallthru
          _
        // Predicated region
        $region61: #{tpu_custom_call.1} parent=55 // pred_check
          %p346 = pneg %p69
        $region62: #{tpu_custom_call.1} parent=55 // pred_check_branch
          %348 = sbr.rel (%p346) target = $region64
        $region63: #{tpu_custom_call.1} parent=55 // pred_region
          %350 = dma.done [#allocation10], 9216
        $region64: #{tpu_custom_call.1} parent=55 // pred_fallthru
          _
        // Predicated region
        $region65: #{tpu_custom_call.1} parent=55 // pred_check
          %p351 = pneg %p153
        $region66: #{tpu_custom_call.1} parent=55 // pred_check_branch
          %353 = sbr.rel (%p351) target = $region68
        $region67: #{tpu_custom_call.1} parent=55 // pred_region
          %355 = dma.done [#allocation10], 9216
        $region68: #{tpu_custom_call.1} parent=55 // pred_fallthru
          _
        %s356 = sand.u32 %s35, 1
        %s357 = scalar_lea.sflag [#allocation7], %s356
        %s358 = sand.u32 %s35, 1
        %s359 = smul.addr %s358, 128
        %s360 = scalar_lea.vmem [#allocation6], %s359
        %p361 = pneg %p48
        %p362 = pneg %p45
        %p363 = pneg %p69
        %p364 = pneg %p66
        %p365 = pneg %p90
        %p366 = pneg %p87
        %p367 = pneg %p111
        %p368 = pneg %p108
        %p369 = pneg %p132
        %p370 = pneg %p129
        %p371 = pneg %p153
        %p372 = pneg %p150
        %p373 = pneg %p174
        %p374 = pneg %p171
        %p375 = pneg %p195
        %p376 = pneg %p192
        %p377 = pneg %p216
        %p378 = pneg %p213
        %p379 = pneg %p242
        %p380 = pneg %p239
        %s381 = sand.u32 %s229, 1
        %s382 = scalar_lea.sflag [#allocation8], %s381
        %s383 = sand.u32 %s229, 1
        %s384 = smul.addr %s383, 256
        %s385 = scalar_lea.vmem [#allocation12], %s384
        %386 = vst [vmem:[#allocation2] sm:$0xff] 0.0
        %387 = vst [vmem:[#allocation2 + $0x8] sm:$0xff] 0.0
        %388 = vst [vmem:[#allocation2 + $0x10] sm:$0x3] 0.0
        %s389 = scalar_lea.vmem [#allocation2], 408
        %390 = vst [vmem:[%s389] sm:$0xff] 0.0
        %391 = vst [vmem:[%s389 + $0x8] sm:$0xff] 0.0
        %392 = vst [vmem:[%s389 + $0x10] sm:$0x3] 0.0
        %s393 = scalar_lea.vmem [#allocation2], 24
        %394 = vst [vmem:[%s393] sm:$0x1] 0.0
        %395 = vst [vmem:[%s393 + $0x18] sm:$0x1] 0.0
        %396 = vst [vmem:[%s393 + $0x30] sm:$0x1] 0.0
        %397 = vst [vmem:[%s393 + $0x48] sm:$0x1] 0.0
        %398 = vst [vmem:[%s393 + $0x60] sm:$0x1] 0.0
        %399 = vst [vmem:[%s393 + $0x78] sm:$0x1] 0.0
        %400 = vst [vmem:[%s393 + $0x90] sm:$0x1] 0.0
        %401 = vst [vmem:[%s393 + $0xa8] sm:$0x1] 0.0
        %402 = vst [vmem:[%s393 + $0xc0] sm:$0x1] 0.0
        %403 = vst [vmem:[%s393 + $0xd8] sm:$0x1] 0.0
        %404 = vst [vmem:[%s393 + $0xf0] sm:$0x1] 0.0
        %405 = vst [vmem:[%s393 + $0x108] sm:$0x1] 0.0
        %406 = vst [vmem:[%s393 + $0x120] sm:$0x1] 0.0
        %407 = vst [vmem:[%s393 + $0x138] sm:$0x1] 0.0
        %408 = vst [vmem:[%s393 + $0x150] sm:$0x1] 0.0
        %409 = vst [vmem:[%s393 + $0x168] sm:$0x1] 0.0
        %410 = vst [vmem:[%s393 + $0x11] sm:$0x1] 0.0
        %411 = vst [vmem:[%s393 + $0x29] sm:$0x1] 0.0
        %412 = vst [vmem:[%s393 + $0x41] sm:$0x1] 0.0
        %413 = vst [vmem:[%s393 + $0x59] sm:$0x1] 0.0
        %414 = vst [vmem:[%s393 + $0x71] sm:$0x1] 0.0
        %415 = vst [vmem:[%s393 + $0x89] sm:$0x1] 0.0
        %416 = vst [vmem:[%s393 + $0xa1] sm:$0x1] 0.0
        %417 = vst [vmem:[%s393 + $0xb9] sm:$0x1] 0.0
        %418 = vst [vmem:[%s393 + $0xd1] sm:$0x1] 0.0
        %419 = vst [vmem:[%s393 + $0xe9] sm:$0x1] 0.0
        %420 = vst [vmem:[%s393 + $0x101] sm:$0x1] 0.0
        %421 = vst [vmem:[%s393 + $0x119] sm:$0x1] 0.0
        %422 = vst [vmem:[%s393 + $0x131] sm:$0x1] 0.0
        %423 = vst [vmem:[%s393 + $0x149] sm:$0x1] 0.0
        %424 = vst [vmem:[%s393 + $0x161] sm:$0x1] 0.0
        %425 = vst [vmem:[%s393 + $0x179] sm:$0x1] 0.0
        %426 = vst [vmem:[#allocation3] sm:$0xff] 0.0
        %427 = vst [vmem:[#allocation3 + $0x8] sm:$0xff] 0.0
        %428 = vst [vmem:[#allocation3 + $0x10] sm:$0x3] 0.0
        %s429 = scalar_lea.vmem [#allocation3], 408
        %430 = vst [vmem:[%s429] sm:$0xff] 0.0
        %431 = vst [vmem:[%s429 + $0x8] sm:$0xff] 0.0
        %432 = vst [vmem:[%s429 + $0x10] sm:$0x3] 0.0
        %s433 = scalar_lea.vmem [#allocation3], 24
        %434 = vst [vmem:[%s433] sm:$0x1] 0.0
        %435 = vst [vmem:[%s433 + $0x18] sm:$0x1] 0.0
        %436 = vst [vmem:[%s433 + $0x30] sm:$0x1] 0.0
        %437 = vst [vmem:[%s433 + $0x48] sm:$0x1] 0.0
        %438 = vst [vmem:[%s433 + $0x60] sm:$0x1] 0.0
        %439 = vst [vmem:[%s433 + $0x78] sm:$0x1] 0.0
        %440 = vst [vmem:[%s433 + $0x90] sm:$0x1] 0.0
        %441 = vst [vmem:[%s433 + $0xa8] sm:$0x1] 0.0
        %442 = vst [vmem:[%s433 + $0xc0] sm:$0x1] 0.0
        %443 = vst [vmem:[%s433 + $0xd8] sm:$0x1] 0.0
        %444 = vst [vmem:[%s433 + $0xf0] sm:$0x1] 0.0
        %445 = vst [vmem:[%s433 + $0x108] sm:$0x1] 0.0
        %446 = vst [vmem:[%s433 + $0x120] sm:$0x1] 0.0
        %447 = vst [vmem:[%s433 + $0x138] sm:$0x1] 0.0
        %448 = vst [vmem:[%s433 + $0x150] sm:$0x1] 0.0
        %449 = vst [vmem:[%s433 + $0x168] sm:$0x1] 0.0
        %450 = vst [vmem:[%s433 + $0x11] sm:$0x1] 0.0
        %451 = vst [vmem:[%s433 + $0x29] sm:$0x1] 0.0
        %452 = vst [vmem:[%s433 + $0x41] sm:$0x1] 0.0
        %453 = vst [vmem:[%s433 + $0x59] sm:$0x1] 0.0
        %454 = vst [vmem:[%s433 + $0x71] sm:$0x1] 0.0
        %455 = vst [vmem:[%s433 + $0x89] sm:$0x1] 0.0
        %456 = vst [vmem:[%s433 + $0xa1] sm:$0x1] 0.0
        %457 = vst [vmem:[%s433 + $0xb9] sm:$0x1] 0.0
        %458 = vst [vmem:[%s433 + $0xd1] sm:$0x1] 0.0
        %459 = vst [vmem:[%s433 + $0xe9] sm:$0x1] 0.0
        %460 = vst [vmem:[%s433 + $0x101] sm:$0x1] 0.0
        %461 = vst [vmem:[%s433 + $0x119] sm:$0x1] 0.0
        %462 = vst [vmem:[%s433 + $0x131] sm:$0x1] 0.0
        %463 = vst [vmem:[%s433 + $0x149] sm:$0x1] 0.0
        %464 = vst [vmem:[%s433 + $0x161] sm:$0x1] 0.0
        %465 = vst [vmem:[%s433 + $0x179] sm:$0x1] 0.0
        %v466 = vld [vmem:[%s340] sm:$0xf]
        %v467 = vld [vmem:[%s340 + $0x4] sm:$0xf]
        %v468 = vld [vmem:[%s340 + $0x8] sm:$0xf]
        %v469 = vld [vmem:[%s340 + $0xc] sm:$0xf]
        %v470 = vld [vmem:[%s340 + $0x10] sm:$0xf]
        %v471 = vld [vmem:[%s340 + $0x14] sm:$0xf]
        %v472 = vld [vmem:[%s340 + $0x18] sm:$0xf]
        %v473 = vld [vmem:[%s340 + $0x1c] sm:$0xf]
        %v474 = vld [vmem:[%s340 + $0x20] sm:$0xf]
        %v475 = vld [vmem:[%s340 + $0x24] sm:$0xf]
        %v476 = vld [vmem:[%s340 + $0x28] sm:$0xf]
        %v477 = vld [vmem:[%s340 + $0x2c] sm:$0xf]
        %v478 = vld [vmem:[%s340 + $0x30] sm:$0xf]
        %v479 = vld [vmem:[%s340 + $0x34] sm:$0xf]
        %v480 = vld [vmem:[%s340 + $0x38] sm:$0xf]
        %v481 = vld [vmem:[%s340 + $0x3c] sm:$0xf]
        %v482 = vld [vmem:[%s340 + $0x40] sm:$0xf]
        %v483 = vld [vmem:[%s340 + $0x44] sm:$0xf]
        %v484 = vld [vmem:[%s340 + $0x48] sm:$0xf]
        %v485 = vld [vmem:[%s340 + $0x4c] sm:$0xf]
        %v486 = vld [vmem:[%s340 + $0x50] sm:$0xf]
        %v487 = vld [vmem:[%s340 + $0x54] sm:$0xf]
        %v488 = vld [vmem:[%s340 + $0x58] sm:$0xf]
        %v489 = vld [vmem:[%s340 + $0x5c] sm:$0xf]
        %v490 = vld [vmem:[%s340 + $0x60] sm:$0xf]
        %v491 = vld [vmem:[%s340 + $0x64] sm:$0xf]
        %v492 = vld [vmem:[%s340 + $0x68] sm:$0xf]
        %v493 = vld [vmem:[%s340 + $0x6c] sm:$0xf]
        %v494 = vld [vmem:[%s340 + $0x70] sm:$0xf]
        %v495 = vld [vmem:[%s340 + $0x74] sm:$0xf]
        %v496 = vld [vmem:[%s340 + $0x78] sm:$0xf]
        %v497 = vld [vmem:[%s340 + $0x7c] sm:$0xf]
        %v498 = vunpack.c.l.bf16 %v466
        %v499 = vunpack.c.l.bf16 %v467
        %v500 = vunpack.c.l.bf16 %v468
        %v501 = vunpack.c.l.bf16 %v469
        %v502 = vunpack.c.l.bf16 %v470
        %v503 = vunpack.c.l.bf16 %v471
        %v504 = vunpack.c.l.bf16 %v472
        %v505 = vunpack.c.l.bf16 %v473
        %v506 = vunpack.c.l.bf16 %v474
        %v507 = vunpack.c.l.bf16 %v475
        %v508 = vunpack.c.l.bf16 %v476
        %v509 = vunpack.c.l.bf16 %v477
        %v510 = vunpack.c.l.bf16 %v478
        %v511 = vunpack.c.l.bf16 %v479
        %v512 = vunpack.c.l.bf16 %v480
        %v513 = vunpack.c.l.bf16 %v481
        %v514 = vunpack.c.l.bf16 %v482
        %v515 = vunpack.c.l.bf16 %v483
        %v516 = vunpack.c.l.bf16 %v484
        %v517 = vunpack.c.l.bf16 %v485
        %v518 = vunpack.c.l.bf16 %v486
        %v519 = vunpack.c.l.bf16 %v487
        %v520 = vunpack.c.l.bf16 %v488
        %v521 = vunpack.c.l.bf16 %v489
        %v522 = vunpack.c.l.bf16 %v490
        %v523 = vunpack.c.l.bf16 %v491
        %v524 = vunpack.c.l.bf16 %v492
        %v525 = vunpack.c.l.bf16 %v493
        %v526 = vunpack.c.l.bf16 %v494
        %v527 = vunpack.c.l.bf16 %v495
        %v528 = vunpack.c.l.bf16 %v496
        %v529 = vunpack.c.l.bf16 %v497
        %530 = vst [vmem:[%s393 + $0x1] sm:$0xff] %v498
        %531 = vst [vmem:[%s393 + $0x9] sm:$0xff] %v499
        %532 = vst [vmem:[%s393 + $0x19] sm:$0xff] %v500
        %533 = vst [vmem:[%s393 + $0x21] sm:$0xff] %v501
        %534 = vst [vmem:[%s393 + $0x31] sm:$0xff] %v502
        %535 = vst [vmem:[%s393 + $0x39] sm:$0xff] %v503
        %536 = vst [vmem:[%s393 + $0x49] sm:$0xff] %v504
        %537 = vst [vmem:[%s393 + $0x51] sm:$0xff] %v505
        %538 = vst [vmem:[%s393 + $0x61] sm:$0xff] %v506
        %539 = vst [vmem:[%s393 + $0x69] sm:$0xff] %v507
        %540 = vst [vmem:[%s393 + $0x79] sm:$0xff] %v508
        %541 = vst [vmem:[%s393 + $0x81] sm:$0xff] %v509
        %542 = vst [vmem:[%s393 + $0x91] sm:$0xff] %v510
        %543 = vst [vmem:[%s393 + $0x99] sm:$0xff] %v511
        %544 = vst [vmem:[%s393 + $0xa9] sm:$0xff] %v512
        %545 = vst [vmem:[%s393 + $0xb1] sm:$0xff] %v513
        %546 = vst [vmem:[%s393 + $0xc1] sm:$0xff] %v514
        %547 = vst [vmem:[%s393 + $0xc9] sm:$0xff] %v515
        %548 = vst [vmem:[%s393 + $0xd9] sm:$0xff] %v516
        %549 = vst [vmem:[%s393 + $0xe1] sm:$0xff] %v517
        %550 = vst [vmem:[%s393 + $0xf1] sm:$0xff] %v518
        %551 = vst [vmem:[%s393 + $0xf9] sm:$0xff] %v519
        %552 = vst [vmem:[%s393 + $0x109] sm:$0xff] %v520
        %553 = vst [vmem:[%s393 + $0x111] sm:$0xff] %v521
        %554 = vst [vmem:[%s393 + $0x121] sm:$0xff] %v522
        %555 = vst [vmem:[%s393 + $0x129] sm:$0xff] %v523
        %556 = vst [vmem:[%s393 + $0x139] sm:$0xff] %v524
        %557 = vst [vmem:[%s393 + $0x141] sm:$0xff] %v525
        %558 = vst [vmem:[%s393 + $0x151] sm:$0xff] %v526
        %559 = vst [vmem:[%s393 + $0x159] sm:$0xff] %v527
        %560 = vst [vmem:[%s393 + $0x169] sm:$0xff] %v528
        %561 = vst [vmem:[%s393 + $0x171] sm:$0xff] %v529
        %v562 = vld [vmem:[#allocation2] sm:$0xff]
        %v563 = vld [vmem:[#allocation2 + $0x8] sm:$0xff]
        %v564 = vld [vmem:[#allocation2 + $0x10] sm:$0x3]
        %v565 = vld [vmem:[#allocation2 + $0x18] sm:$0xff]
        %v566 = vld [vmem:[#allocation2 + $0x20] sm:$0xff]
        %v567 = vld [vmem:[#allocation2 + $0x28] sm:$0x3]
        %v568 = vld [vmem:[#allocation2 + $0x30] sm:$0xff]
        %v569 = vld [vmem:[#allocation2 + $0x38] sm:$0xff]
        %v570 = vld [vmem:[#allocation2 + $0x40] sm:$0x3]
        %v571 = vld [vmem:[#allocation2 + $0x48] sm:$0xff]
        %v572 = vld [vmem:[#allocation2 + $0x50] sm:$0xff]
        %v573 = vld [vmem:[#allocation2 + $0x58] sm:$0x3]
        %v574 = vld [vmem:[#allocation2 + $0x60] sm:$0xff]
        %v575 = vld [vmem:[#allocation2 + $0x68] sm:$0xff]
        %v576 = vld [vmem:[#allocation2 + $0x70] sm:$0x3]
        %v577 = vld [vmem:[#allocation2 + $0x78] sm:$0xff]
        %v578 = vld [vmem:[#allocation2 + $0x80] sm:$0xff]
        %v579 = vld [vmem:[#allocation2 + $0x88] sm:$0x3]
        %v580 = vld [vmem:[#allocation2 + $0x90] sm:$0xff]
        %v581 = vld [vmem:[#allocation2 + $0x98] sm:$0xff]
        %v582 = vld [vmem:[#allocation2 + $0xa0] sm:$0x3]
        %v583 = vld [vmem:[#allocation2 + $0xa8] sm:$0xff]
        %v584 = vld [vmem:[#allocation2 + $0xb0] sm:$0xff]
        %v585 = vld [vmem:[#allocation2 + $0xb8] sm:$0x3]
        %v586 = vld [vmem:[#allocation2 + $0xc0] sm:$0xff]
        %v587 = vld [vmem:[#allocation2 + $0xc8] sm:$0xff]
        %v588 = vld [vmem:[#allocation2 + $0xd0] sm:$0x3]
        %v589 = vld [vmem:[#allocation2 + $0xd8] sm:$0xff]
        %v590 = vld [vmem:[#allocation2 + $0xe0] sm:$0xff]
        %v591 = vld [vmem:[#allocation2 + $0xe8] sm:$0x3]
        %v592 = vld [vmem:[#allocation2 + $0xf0] sm:$0xff]
        %v593 = vld [vmem:[#allocation2 + $0xf8] sm:$0xff]
        %v594 = vld [vmem:[#allocation2 + $0x100] sm:$0x3]
        %v595 = vld [vmem:[#allocation2 + $0x108] sm:$0xff]
        %v596 = vld [vmem:[#allocation2 + $0x110] sm:$0xff]
        %v597 = vld [vmem:[#allocation2 + $0x118] sm:$0x3]
        %v598 = vld [vmem:[#allocation2 + $0x120] sm:$0xff]
        %v599 = vld [vmem:[#allocation2 + $0x128] sm:$0xff]
        %v600 = vld [vmem:[#allocation2 + $0x130] sm:$0x3]
        %v601 = vld [vmem:[#allocation2 + $0x138] sm:$0xff]
        %v602 = vld [vmem:[#allocation2 + $0x140] sm:$0xff]
        %v603 = vld [vmem:[#allocation2 + $0x148] sm:$0x3]
        %v604 = vld [vmem:[#allocation2 + $0x150] sm:$0xff]
        %v605 = vld [vmem:[#allocation2 + $0x158] sm:$0xff]
        %v606 = vld [vmem:[#allocation2 + $0x160] sm:$0x3]
        %v607 = vld [vmem:[#allocation2 + $0x168] sm:$0xff]
        %v608 = vld [vmem:[#allocation2 + $0x170] sm:$0xff]
        %v609 = vld [vmem:[#allocation2 + $0x178] sm:$0x3]
        %v610 = vld [vmem:[#allocation2 + $0x180] sm:$0xff]
        %v611 = vld [vmem:[#allocation2 + $0x188] sm:$0xff]
        %v612 = vld [vmem:[#allocation2 + $0x190] sm:$0x3]
        %v613 = vld [vmem:[#allocation2 + $0x198] sm:$0xff]
        %v614 = vld [vmem:[#allocation2 + $0x1a0] sm:$0xff]
        %v615 = vld [vmem:[#allocation2 + $0x1a8] sm:$0x3]
        %v616 = vpack.c.bf16 %v562, %v562
        %v617 = vpack.c.bf16 %v563, %v563
        %v618 = vpack.c.bf16 %v565, %v565
        %v619 = vpack.c.bf16 %v566, %v566
        %v620 = vpack.c.bf16 %v568, %v568
        %v621 = vpack.c.bf16 %v569, %v569
        %v622 = vpack.c.bf16 %v571, %v571
        %v623 = vpack.c.bf16 %v572, %v572
        %v624 = vpack.c.bf16 %v574, %v574
        %v625 = vpack.c.bf16 %v575, %v575
        %v626 = vpack.c.bf16 %v577, %v577
        %v627 = vpack.c.bf16 %v578, %v578
        %v628 = vpack.c.bf16 %v580, %v580
        %v629 = vpack.c.bf16 %v581, %v581
        %v630 = vpack.c.bf16 %v583, %v583
        %v631 = vpack.c.bf16 %v584, %v584
        %v632 = vpack.c.bf16 %v586, %v586
        %v633 = vpack.c.bf16 %v587, %v587
        %v634 = vpack.c.bf16 %v589, %v589
        %v635 = vpack.c.bf16 %v590, %v590
        %v636 = vpack.c.bf16 %v592, %v592
        %v637 = vpack.c.bf16 %v593, %v593
        %v638 = vpack.c.bf16 %v595, %v595
        %v639 = vpack.c.bf16 %v596, %v596
        %v640 = vpack.c.bf16 %v598, %v598
        %v641 = vpack.c.bf16 %v599, %v599
        %v642 = vpack.c.bf16 %v601, %v601
        %v643 = vpack.c.bf16 %v602, %v602
        %v644 = vpack.c.bf16 %v604, %v604
        %v645 = vpack.c.bf16 %v605, %v605
        %v646 = vpack.c.bf16 %v607, %v607
        %v647 = vpack.c.bf16 %v608, %v608
        %648 = vst [vmem:[#allocation4] sm:$0xf] %v616
        %649 = vst [vmem:[#allocation4 + $0x24] sm:$0xf] %v617
        %650 = vst [vmem:[#allocation4 + $0x48] sm:$0xf] %v618
        %651 = vst [vmem:[#allocation4 + $0x6c] sm:$0xf] %v619
        %652 = vst [vmem:[#allocation4 + $0x90] sm:$0xf] %v620
        %653 = vst [vmem:[#allocation4 + $0xb4] sm:$0xf] %v621
        %654 = vst [vmem:[#allocation4 + $0xd8] sm:$0xf] %v622
        %655 = vst [vmem:[#allocation4 + $0xfc] sm:$0xf] %v623
        %656 = vst [vmem:[#allocation4 + $0x120] sm:$0xf] %v624
        %657 = vst [vmem:[#allocation4 + $0x144] sm:$0xf] %v625
        %658 = vst [vmem:[#allocation4 + $0x168] sm:$0xf] %v626
        %659 = vst [vmem:[#allocation4 + $0x18c] sm:$0xf] %v627
        %660 = vst [vmem:[#allocation4 + $0x1b0] sm:$0xf] %v628
        %661 = vst [vmem:[#allocation4 + $0x1d4] sm:$0xf] %v629
        %662 = vst [vmem:[#allocation4 + $0x1f8] sm:$0xf] %v630
        %663 = vst [vmem:[#allocation4 + $0x21c] sm:$0xf] %v631
        %664 = vst [vmem:[#allocation4 + $0x240] sm:$0xf] %v632
        %665 = vst [vmem:[#allocation4 + $0x264] sm:$0xf] %v633
        %666 = vst [vmem:[#allocation4 + $0x288] sm:$0xf] %v634
        %667 = vst [vmem:[#allocation4 + $0x2ac] sm:$0xf] %v635
        %668 = vst [vmem:[#allocation4 + $0x2d0] sm:$0xf] %v636
        %669 = vst [vmem:[#allocation4 + $0x2f4] sm:$0xf] %v637
        %670 = vst [vmem:[#allocation4 + $0x318] sm:$0xf] %v638
        %671 = vst [vmem:[#allocation4 + $0x33c] sm:$0xf] %v639
        %672 = vst [vmem:[#allocation4 + $0x360] sm:$0xf] %v640
        %673 = vst [vmem:[#allocation4 + $0x384] sm:$0xf] %v641
        %674 = vst [vmem:[#allocation4 + $0x3a8] sm:$0xf] %v642
        %675 = vst [vmem:[#allocation4 + $0x3cc] sm:$0xf] %v643
        %676 = vst [vmem:[#allocation4 + $0x3f0] sm:$0xf] %v644
        %677 = vst [vmem:[#allocation4 + $0x414] sm:$0xf] %v645
        %678 = vst [vmem:[#allocation4 + $0x438] sm:$0xf] %v646
        %679 = vst [vmem:[#allocation4 + $0x45c] sm:$0xf] %v647
        %vm728 = vcmask 1046528
        %v729 = vrot.slane %v562, 1
        %v730 = vrot.slane %v563, 1
        %v731 = vsel %vm728, %v729, %v730
        %v732 = vrot.slane %v564, 1
        %v733 = vsel %vm728, %v730, %v732
        %v734 = vrot.slane %v565, 1
        %v735 = vrot.slane %v566, 1
        %v736 = vsel %vm728, %v734, %v735
        %v737 = vrot.slane %v567, 1
        %v738 = vsel %vm728, %v735, %v737
        %v739 = vrot.slane %v568, 1
        %v740 = vrot.slane %v569, 1
        %v741 = vsel %vm728, %v739, %v740
        %v742 = vrot.slane %v570, 1
        %v743 = vsel %vm728, %v740, %v742
        %v744 = vrot.slane %v571, 1
        %v745 = vrot.slane %v572, 1
        %v746 = vsel %vm728, %v744, %v745
        %v747 = vrot.slane %v573, 1
        %v748 = vsel %vm728, %v745, %v747
        %v749 = vrot.slane %v574, 1
        %v750 = vrot.slane %v575, 1
        %v751 = vsel %vm728, %v749, %v750
        %v752 = vrot.slane %v576, 1
        %v753 = vsel %vm728, %v750, %v752
        %v754 = vrot.slane %v577, 1
        %v755 = vrot.slane %v578, 1
        %v756 = vsel %vm728, %v754, %v755
        %v757 = vrot.slane %v579, 1
        %v758 = vsel %vm728, %v755, %v757
        %v759 = vrot.slane %v580, 1
        %v760 = vrot.slane %v581, 1
        %v761 = vsel %vm728, %v759, %v760
        %v762 = vrot.slane %v582, 1
        %v763 = vsel %vm728, %v760, %v762
        %v764 = vrot.slane %v583, 1
        %v765 = vrot.slane %v584, 1
        %v766 = vsel %vm728, %v764, %v765
        %v767 = vrot.slane %v585, 1
        %v768 = vsel %vm728, %v765, %v767
        %v769 = vrot.slane %v586, 1
        %v770 = vrot.slane %v587, 1
        %v771 = vsel %vm728, %v769, %v770
        %v772 = vrot.slane %v588, 1
        %v773 = vsel %vm728, %v770, %v772
        %v774 = vrot.slane %v589, 1
        %v775 = vrot.slane %v590, 1
        %v776 = vsel %vm728, %v774, %v775
        %v777 = vrot.slane %v591, 1
        %v778 = vsel %vm728, %v775, %v777
        %v779 = vrot.slane %v592, 1
        %v780 = vrot.slane %v593, 1
        %v781 = vsel %vm728, %v779, %v780
        %v782 = vrot.slane %v594, 1
        %v783 = vsel %vm728, %v780, %v782
        %v784 = vrot.slane %v595, 1
        %v785 = vrot.slane %v596, 1
        %v786 = vsel %vm728, %v784, %v785
        %v787 = vrot.slane %v597, 1
        %v788 = vsel %vm728, %v785, %v787
        %v789 = vrot.slane %v598, 1
        %v790 = vrot.slane %v599, 1
        %v791 = vsel %vm728, %v789, %v790
        %v792 = vrot.slane %v600, 1
        %v793 = vsel %vm728, %v790, %v792
        %v794 = vrot.slane %v601, 1
        %v795 = vrot.slane %v602, 1
        %v796 = vsel %vm728, %v794, %v795
        %v797 = vrot.slane %v603, 1
        %v798 = vsel %vm728, %v795, %v797
        %v799 = vrot.slane %v604, 1
        %v800 = vrot.slane %v605, 1
        %v801 = vsel %vm728, %v799, %v800
        %v802 = vrot.slane %v606, 1
        %v803 = vsel %vm728, %v800, %v802
        %v804 = vrot.slane %v607, 1
        %v805 = vrot.slane %v608, 1
        %v806 = vsel %vm728, %v804, %v805
        %v807 = vrot.slane %v609, 1
        %v808 = vsel %vm728, %v805, %v807
        %v841 = vpack.c.bf16 %v731, %v731
        %v842 = vpack.c.bf16 %v733, %v733
        %v843 = vpack.c.bf16 %v736, %v736
        %v844 = vpack.c.bf16 %v738, %v738
        %v845 = vpack.c.bf16 %v741, %v741
        %v846 = vpack.c.bf16 %v743, %v743
        %v847 = vpack.c.bf16 %v746, %v746
        %v848 = vpack.c.bf16 %v748, %v748
        %v849 = vpack.c.bf16 %v751, %v751
        %v850 = vpack.c.bf16 %v753, %v753
        %v851 = vpack.c.bf16 %v756, %v756
        %v852 = vpack.c.bf16 %v758, %v758
        %v853 = vpack.c.bf16 %v761, %v761
        %v854 = vpack.c.bf16 %v763, %v763
        %v855 = vpack.c.bf16 %v766, %v766
        %v856 = vpack.c.bf16 %v768, %v768
        %v857 = vpack.c.bf16 %v771, %v771
        %v858 = vpack.c.bf16 %v773, %v773
        %v859 = vpack.c.bf16 %v776, %v776
        %v860 = vpack.c.bf16 %v778, %v778
        %v861 = vpack.c.bf16 %v781, %v781
        %v862 = vpack.c.bf16 %v783, %v783
        %v863 = vpack.c.bf16 %v786, %v786
        %v864 = vpack.c.bf16 %v788, %v788
        %v865 = vpack.c.bf16 %v791, %v791
        %v866 = vpack.c.bf16 %v793, %v793
        %v867 = vpack.c.bf16 %v796, %v796
        %v868 = vpack.c.bf16 %v798, %v798
        %v869 = vpack.c.bf16 %v801, %v801
        %v870 = vpack.c.bf16 %v803, %v803
        %v871 = vpack.c.bf16 %v806, %v806
        %v872 = vpack.c.bf16 %v808, %v808
        %873 = vst [vmem:[#allocation4 + $0x4] sm:$0xf] %v841
        %874 = vst [vmem:[#allocation4 + $0x28] sm:$0xf] %v842
        %875 = vst [vmem:[#allocation4 + $0x4c] sm:$0xf] %v843
        %876 = vst [vmem:[#allocation4 + $0x70] sm:$0xf] %v844
        %877 = vst [vmem:[#allocation4 + $0x94] sm:$0xf] %v845
        %878 = vst [vmem:[#allocation4 + $0xb8] sm:$0xf] %v846
        %879 = vst [vmem:[#allocation4 + $0xdc] sm:$0xf] %v847
        %880 = vst [vmem:[#allocation4 + $0x100] sm:$0xf] %v848
        %881 = vst [vmem:[#allocation4 + $0x124] sm:$0xf] %v849
        %882 = vst [vmem:[#allocation4 + $0x148] sm:$0xf] %v850
        %883 = vst [vmem:[#allocation4 + $0x16c] sm:$0xf] %v851
        %884 = vst [vmem:[#allocation4 + $0x190] sm:$0xf] %v852
        %885 = vst [vmem:[#allocation4 + $0x1b4] sm:$0xf] %v853
        %886 = vst [vmem:[#allocation4 + $0x1d8] sm:$0xf] %v854
        %887 = vst [vmem:[#allocation4 + $0x1fc] sm:$0xf] %v855
        %888 = vst [vmem:[#allocation4 + $0x220] sm:$0xf] %v856
        %889 = vst [vmem:[#allocation4 + $0x244] sm:$0xf] %v857
        %890 = vst [vmem:[#allocation4 + $0x268] sm:$0xf] %v858
        %891 = vst [vmem:[#allocation4 + $0x28c] sm:$0xf] %v859
        %892 = vst [vmem:[#allocation4 + $0x2b0] sm:$0xf] %v860
        %893 = vst [vmem:[#allocation4 + $0x2d4] sm:$0xf] %v861
        %894 = vst [vmem:[#allocation4 + $0x2f8] sm:$0xf] %v862
        %895 = vst [vmem:[#allocation4 + $0x31c] sm:$0xf] %v863
        %896 = vst [vmem:[#allocation4 + $0x340] sm:$0xf] %v864
        %897 = vst [vmem:[#allocation4 + $0x364] sm:$0xf] %v865
        %898 = vst [vmem:[#allocation4 + $0x388] sm:$0xf] %v866
        %899 = vst [vmem:[#allocation4 + $0x3ac] sm:$0xf] %v867
        %900 = vst [vmem:[#allocation4 + $0x3d0] sm:$0xf] %v868
        %901 = vst [vmem:[#allocation4 + $0x3f4] sm:$0xf] %v869
        %902 = vst [vmem:[#allocation4 + $0x418] sm:$0xf] %v870
        %903 = vst [vmem:[#allocation4 + $0x43c] sm:$0xf] %v871
        %904 = vst [vmem:[#allocation4 + $0x460] sm:$0xf] %v872
        %vm905 = vcmask 1045504
        %v906 = vrot.slane %v562, 2
        %v907 = vrot.slane %v563, 2
        %v908 = vsel %vm905, %v906, %v907
        %v909 = vrot.slane %v564, 2
        %v910 = vsel %vm905, %v907, %v909
        %v911 = vrot.slane %v565, 2
        %v912 = vrot.slane %v566, 2
        %v913 = vsel %vm905, %v911, %v912
        %v914 = vrot.slane %v567, 2
        %v915 = vsel %vm905, %v912, %v914
        %v916 = vrot.slane %v568, 2
        %v917 = vrot.slane %v569, 2
        %v918 = vsel %vm905, %v916, %v917
        %v919 = vrot.slane %v570, 2
        %v920 = vsel %vm905, %v917, %v919
        %v921 = vrot.slane %v571, 2
        %v922 = vrot.slane %v572, 2
        %v923 = vsel %vm905, %v921, %v922
        %v924 = vrot.slane %v573, 2
        %v925 = vsel %vm905, %v922, %v924
        %v926 = vrot.slane %v574, 2
        %v927 = vrot.slane %v575, 2
        %v928 = vsel %vm905, %v926, %v927
        %v929 = vrot.slane %v576, 2
        %v930 = vsel %vm905, %v927, %v929
        %v931 = vrot.slane %v577, 2
        %v932 = vrot.slane %v578, 2
        %v933 = vsel %vm905, %v931, %v932
        %v934 = vrot.slane %v579, 2
        %v935 = vsel %vm905, %v932, %v934
        %v936 = vrot.slane %v580, 2
        %v937 = vrot.slane %v581, 2
        %v938 = vsel %vm905, %v936, %v937
        %v939 = vrot.slane %v582, 2
        %v940 = vsel %vm905, %v937, %v939
        %v941 = vrot.slane %v583, 2
        %v942 = vrot.slane %v584, 2
        %v943 = vsel %vm905, %v941, %v942
        %v944 = vrot.slane %v585, 2
        %v945 = vsel %vm905, %v942, %v944
        %v946 = vrot.slane %v586, 2
        %v947 = vrot.slane %v587, 2
        %v948 = vsel %vm905, %v946, %v947
        %v949 = vrot.slane %v588, 2
        %v950 = vsel %vm905, %v947, %v949
        %v951 = vrot.slane %v589, 2
        %v952 = vrot.slane %v590, 2
        %v953 = vsel %vm905, %v951, %v952
        %v954 = vrot.slane %v591, 2
        %v955 = vsel %vm905, %v952, %v954
        %v956 = vrot.slane %v592, 2
        %v957 = vrot.slane %v593, 2
        %v958 = vsel %vm905, %v956, %v957
        %v959 = vrot.slane %v594, 2
        %v960 = vsel %vm905, %v957, %v959
        %v961 = vrot.slane %v595, 2
        %v962 = vrot.slane %v596, 2
        %v963 = vsel %vm905, %v961, %v962
        %v964 = vrot.slane %v597, 2
        %v965 = vsel %vm905, %v962, %v964
        %v966 = vrot.slane %v598, 2
        %v967 = vrot.slane %v599, 2
        %v968 = vsel %vm905, %v966, %v967
        %v969 = vrot.slane %v600, 2
        %v970 = vsel %vm905, %v967, %v969
        %v971 = vrot.slane %v601, 2
        %v972 = vrot.slane %v602, 2
        %v973 = vsel %vm905, %v971, %v972
        %v974 = vrot.slane %v603, 2
        %v975 = vsel %vm905, %v972, %v974
        %v976 = vrot.slane %v604, 2
        %v977 = vrot.slane %v605, 2
        %v978 = vsel %vm905, %v976, %v977
        %v979 = vrot.slane %v606, 2
        %v980 = vsel %vm905, %v977, %v979
        %v981 = vrot.slane %v607, 2
        %v982 = vrot.slane %v608, 2
        %v983 = vsel %vm905, %v981, %v982
        %v984 = vrot.slane %v609, 2
        %v985 = vsel %vm905, %v982, %v984
        %v1018 = vpack.c.bf16 %v908, %v908
        %v1019 = vpack.c.bf16 %v910, %v910
        %v1020 = vpack.c.bf16 %v913, %v913
        %v1021 = vpack.c.bf16 %v915, %v915
        %v1022 = vpack.c.bf16 %v918, %v918
        %v1023 = vpack.c.bf16 %v920, %v920
        %v1024 = vpack.c.bf16 %v923, %v923
        %v1025 = vpack.c.bf16 %v925, %v925
        %v1026 = vpack.c.bf16 %v928, %v928
        %v1027 = vpack.c.bf16 %v930, %v930
        %v1028 = vpack.c.bf16 %v933, %v933
        %v1029 = vpack.c.bf16 %v935, %v935
        %v1030 = vpack.c.bf16 %v938, %v938
        %v1031 = vpack.c.bf16 %v940, %v940
        %v1032 = vpack.c.bf16 %v943, %v943
        %v1033 = vpack.c.bf16 %v945, %v945
        %v1034 = vpack.c.bf16 %v948, %v948
        %v1035 = vpack.c.bf16 %v950, %v950
        %v1036 = vpack.c.bf16 %v953, %v953
        %v1037 = vpack.c.bf16 %v955, %v955
        %v1038 = vpack.c.bf16 %v958, %v958
        %v1039 = vpack.c.bf16 %v960, %v960
        %v1040 = vpack.c.bf16 %v963, %v963
        %v1041 = vpack.c.bf16 %v965, %v965
        %v1042 = vpack.c.bf16 %v968, %v968
        %v1043 = vpack.c.bf16 %v970, %v970
        %v1044 = vpack.c.bf16 %v973, %v973
        %v1045 = vpack.c.bf16 %v975, %v975
        %v1046 = vpack.c.bf16 %v978, %v978
        %v1047 = vpack.c.bf16 %v980, %v980
        %v1048 = vpack.c.bf16 %v983, %v983
        %v1049 = vpack.c.bf16 %v985, %v985
        %1050 = vst [vmem:[#allocation4 + $0x8] sm:$0xf] %v1018
        %1051 = vst [vmem:[#allocation4 + $0x2c] sm:$0xf] %v1019
        %1052 = vst [vmem:[#allocation4 + $0x50] sm:$0xf] %v1020
        %1053 = vst [vmem:[#allocation4 + $0x74] sm:$0xf] %v1021
        %1054 = vst [vmem:[#allocation4 + $0x98] sm:$0xf] %v1022
        %1055 = vst [vmem:[#allocation4 + $0xbc] sm:$0xf] %v1023
        %1056 = vst [vmem:[#allocation4 + $0xe0] sm:$0xf] %v1024
        %1057 = vst [vmem:[#allocation4 + $0x104] sm:$0xf] %v1025
        %1058 = vst [vmem:[#allocation4 + $0x128] sm:$0xf] %v1026
        %1059 = vst [vmem:[#allocation4 + $0x14c] sm:$0xf] %v1027
        %1060 = vst [vmem:[#allocation4 + $0x170] sm:$0xf] %v1028
        %1061 = vst [vmem:[#allocation4 + $0x194] sm:$0xf] %v1029
        %1062 = vst [vmem:[#allocation4 + $0x1b8] sm:$0xf] %v1030
        %1063 = vst [vmem:[#allocation4 + $0x1dc] sm:$0xf] %v1031
        %1064 = vst [vmem:[#allocation4 + $0x200] sm:$0xf] %v1032
        %1065 = vst [vmem:[#allocation4 + $0x224] sm:$0xf] %v1033
        %1066 = vst [vmem:[#allocation4 + $0x248] sm:$0xf] %v1034
        %1067 = vst [vmem:[#allocation4 + $0x26c] sm:$0xf] %v1035
        %1068 = vst [vmem:[#allocation4 + $0x290] sm:$0xf] %v1036
        %1069 = vst [vmem:[#allocation4 + $0x2b4] sm:$0xf] %v1037
        %1070 = vst [vmem:[#allocation4 + $0x2d8] sm:$0xf] %v1038
        %1071 = vst [vmem:[#allocation4 + $0x2fc] sm:$0xf] %v1039
        %1072 = vst [vmem:[#allocation4 + $0x320] sm:$0xf] %v1040
        %1073 = vst [vmem:[#allocation4 + $0x344] sm:$0xf] %v1041
        %1074 = vst [vmem:[#allocation4 + $0x368] sm:$0xf] %v1042
        %1075 = vst [vmem:[#allocation4 + $0x38c] sm:$0xf] %v1043
        %1076 = vst [vmem:[#allocation4 + $0x3b0] sm:$0xf] %v1044
        %1077 = vst [vmem:[#allocation4 + $0x3d4] sm:$0xf] %v1045
        %1078 = vst [vmem:[#allocation4 + $0x3f8] sm:$0xf] %v1046
        %1079 = vst [vmem:[#allocation4 + $0x41c] sm:$0xf] %v1047
        %1080 = vst [vmem:[#allocation4 + $0x440] sm:$0xf] %v1048
        %1081 = vst [vmem:[#allocation4 + $0x464] sm:$0xf] %v1049
        %v1082 = vpack.c.bf16 %v610, %v610
        %v1083 = vpack.c.bf16 %v611, %v611
        %1084 = vst [vmem:[#allocation4 + $0xc] sm:$0xf] %v618
        %1085 = vst [vmem:[#allocation4 + $0x30] sm:$0xf] %v619
        %1086 = vst [vmem:[#allocation4 + $0x54] sm:$0xf] %v620
        %1087 = vst [vmem:[#allocation4 + $0x78] sm:$0xf] %v621
        %1088 = vst [vmem:[#allocation4 + $0x9c] sm:$0xf] %v622
        %1089 = vst [vmem:[#allocation4 + $0xc0] sm:$0xf] %v623
        %1090 = vst [vmem:[#allocation4 + $0xe4] sm:$0xf] %v624
        %1091 = vst [vmem:[#allocation4 + $0x108] sm:$0xf] %v625
        %1092 = vst [vmem:[#allocation4 + $0x12c] sm:$0xf] %v626
        %1093 = vst [vmem:[#allocation4 + $0x150] sm:$0xf] %v627
        %1094 = vst [vmem:[#allocation4 + $0x174] sm:$0xf] %v628
        %1095 = vst [vmem:[#allocation4 + $0x198] sm:$0xf] %v629
        %1096 = vst [vmem:[#allocation4 + $0x1bc] sm:$0xf] %v630
        %1097 = vst [vmem:[#allocation4 + $0x1e0] sm:$0xf] %v631
        %1098 = vst [vmem:[#allocation4 + $0x204] sm:$0xf] %v632
        %1099 = vst [vmem:[#allocation4 + $0x228] sm:$0xf] %v633
        %1100 = vst [vmem:[#allocation4 + $0x24c] sm:$0xf] %v634
        %1101 = vst [vmem:[#allocation4 + $0x270] sm:$0xf] %v635
        %1102 = vst [vmem:[#allocation4 + $0x294] sm:$0xf] %v636
        %1103 = vst [vmem:[#allocation4 + $0x2b8] sm:$0xf] %v637
        %1104 = vst [vmem:[#allocation4 + $0x2dc] sm:$0xf] %v638
        %1105 = vst [vmem:[#allocation4 + $0x300] sm:$0xf] %v639
        %1106 = vst [vmem:[#allocation4 + $0x324] sm:$0xf] %v640
        %1107 = vst [vmem:[#allocation4 + $0x348] sm:$0xf] %v641
        %1108 = vst [vmem:[#allocation4 + $0x36c] sm:$0xf] %v642
        %1109 = vst [vmem:[#allocation4 + $0x390] sm:$0xf] %v643
        %1110 = vst [vmem:[#allocation4 + $0x3b4] sm:$0xf] %v644
        %1111 = vst [vmem:[#allocation4 + $0x3d8] sm:$0xf] %v645
        %1112 = vst [vmem:[#allocation4 + $0x3fc] sm:$0xf] %v646
        %1113 = vst [vmem:[#allocation4 + $0x420] sm:$0xf] %v647
        %1114 = vst [vmem:[#allocation4 + $0x444] sm:$0xf] %v1082
        %1115 = vst [vmem:[#allocation4 + $0x468] sm:$0xf] %v1083
        %v1119 = vrot.slane %v610, 1
        %v1120 = vrot.slane %v611, 1
        %v1121 = vsel %vm728, %v1119, %v1120
        %v1122 = vrot.slane %v612, 1
        %v1123 = vsel %vm728, %v1120, %v1122
        %v1126 = vpack.c.bf16 %v1121, %v1121
        %v1127 = vpack.c.bf16 %v1123, %v1123
        %1128 = vst [vmem:[#allocation4 + $0x10] sm:$0xf] %v843
        %1129 = vst [vmem:[#allocation4 + $0x34] sm:$0xf] %v844
        %1130 = vst [vmem:[#allocation4 + $0x58] sm:$0xf] %v845
        %1131 = vst [vmem:[#allocation4 + $0x7c] sm:$0xf] %v846
        %1132 = vst [vmem:[#allocation4 + $0xa0] sm:$0xf] %v847
        %1133 = vst [vmem:[#allocation4 + $0xc4] sm:$0xf] %v848
        %1134 = vst [vmem:[#allocation4 + $0xe8] sm:$0xf] %v849
        %1135 = vst [vmem:[#allocation4 + $0x10c] sm:$0xf] %v850
        %1136 = vst [vmem:[#allocation4 + $0x130] sm:$0xf] %v851
        %1137 = vst [vmem:[#allocation4 + $0x154] sm:$0xf] %v852
        %1138 = vst [vmem:[#allocation4 + $0x178] sm:$0xf] %v853
        %1139 = vst [vmem:[#allocation4 + $0x19c] sm:$0xf] %v854
        %1140 = vst [vmem:[#allocation4 + $0x1c0] sm:$0xf] %v855
        %1141 = vst [vmem:[#allocation4 + $0x1e4] sm:$0xf] %v856
        %1142 = vst [vmem:[#allocation4 + $0x208] sm:$0xf] %v857
        %1143 = vst [vmem:[#allocation4 + $0x22c] sm:$0xf] %v858
        %1144 = vst [vmem:[#allocation4 + $0x250] sm:$0xf] %v859
        %1145 = vst [vmem:[#allocation4 + $0x274] sm:$0xf] %v860
        %1146 = vst [vmem:[#allocation4 + $0x298] sm:$0xf] %v861
        %1147 = vst [vmem:[#allocation4 + $0x2bc] sm:$0xf] %v862
        %1148 = vst [vmem:[#allocation4 + $0x2e0] sm:$0xf] %v863
        %1149 = vst [vmem:[#allocation4 + $0x304] sm:$0xf] %v864
        %1150 = vst [vmem:[#allocation4 + $0x328] sm:$0xf] %v865
        %1151 = vst [vmem:[#allocation4 + $0x34c] sm:$0xf] %v866
        %1152 = vst [vmem:[#allocation4 + $0x370] sm:$0xf] %v867
        %1153 = vst [vmem:[#allocation4 + $0x394] sm:$0xf] %v868
        %1154 = vst [vmem:[#allocation4 + $0x3b8] sm:$0xf] %v869
        %1155 = vst [vmem:[#allocation4 + $0x3dc] sm:$0xf] %v870
        %1156 = vst [vmem:[#allocation4 + $0x400] sm:$0xf] %v871
        %1157 = vst [vmem:[#allocation4 + $0x424] sm:$0xf] %v872
        %1158 = vst [vmem:[#allocation4 + $0x448] sm:$0xf] %v1126
        %1159 = vst [vmem:[#allocation4 + $0x46c] sm:$0xf] %v1127
        %v1160 = vrot.slane %v610, 2
        %v1161 = vrot.slane %v611, 2
        %v1162 = vsel %vm905, %v1160, %v1161
        %v1163 = vrot.slane %v612, 2
        %v1164 = vsel %vm905, %v1161, %v1163
        %v1167 = vpack.c.bf16 %v1162, %v1162
        %v1168 = vpack.c.bf16 %v1164, %v1164
        %1169 = vst [vmem:[#allocation4 + $0x14] sm:$0xf] %v1020
        %1170 = vst [vmem:[#allocation4 + $0x38] sm:$0xf] %v1021
        %1171 = vst [vmem:[#allocation4 + $0x5c] sm:$0xf] %v1022
        %1172 = vst [vmem:[#allocation4 + $0x80] sm:$0xf] %v1023
        %1173 = vst [vmem:[#allocation4 + $0xa4] sm:$0xf] %v1024
        %1174 = vst [vmem:[#allocation4 + $0xc8] sm:$0xf] %v1025
        %1175 = vst [vmem:[#allocation4 + $0xec] sm:$0xf] %v1026
        %1176 = vst [vmem:[#allocation4 + $0x110] sm:$0xf] %v1027
        %1177 = vst [vmem:[#allocation4 + $0x134] sm:$0xf] %v1028
        %1178 = vst [vmem:[#allocation4 + $0x158] sm:$0xf] %v1029
        %1179 = vst [vmem:[#allocation4 + $0x17c] sm:$0xf] %v1030
        %1180 = vst [vmem:[#allocation4 + $0x1a0] sm:$0xf] %v1031
        %1181 = vst [vmem:[#allocation4 + $0x1c4] sm:$0xf] %v1032
        %1182 = vst [vmem:[#allocation4 + $0x1e8] sm:$0xf] %v1033
        %1183 = vst [vmem:[#allocation4 + $0x20c] sm:$0xf] %v1034
        %1184 = vst [vmem:[#allocation4 + $0x230] sm:$0xf] %v1035
        %1185 = vst [vmem:[#allocation4 + $0x254] sm:$0xf] %v1036
        %1186 = vst [vmem:[#allocation4 + $0x278] sm:$0xf] %v1037
        %1187 = vst [vmem:[#allocation4 + $0x29c] sm:$0xf] %v1038
        %1188 = vst [vmem:[#allocation4 + $0x2c0] sm:$0xf] %v1039
        %1189 = vst [vmem:[#allocation4 + $0x2e4] sm:$0xf] %v1040
        %1190 = vst [vmem:[#allocation4 + $0x308] sm:$0xf] %v1041
        %1191 = vst [vmem:[#allocation4 + $0x32c] sm:$0xf] %v1042
        %1192 = vst [vmem:[#allocation4 + $0x350] sm:$0xf] %v1043
        %1193 = vst [vmem:[#allocation4 + $0x374] sm:$0xf] %v1044
        %1194 = vst [vmem:[#allocation4 + $0x398] sm:$0xf] %v1045
        %1195 = vst [vmem:[#allocation4 + $0x3bc] sm:$0xf] %v1046
        %1196 = vst [vmem:[#allocation4 + $0x3e0] sm:$0xf] %v1047
        %1197 = vst [vmem:[#allocation4 + $0x404] sm:$0xf] %v1048
        %1198 = vst [vmem:[#allocation4 + $0x428] sm:$0xf] %v1049
        %1199 = vst [vmem:[#allocation4 + $0x44c] sm:$0xf] %v1167
        %1200 = vst [vmem:[#allocation4 + $0x470] sm:$0xf] %v1168
        %v1201 = vpack.c.bf16 %v613, %v613
        %v1202 = vpack.c.bf16 %v614, %v614
        %1203 = vst [vmem:[#allocation4 + $0x18] sm:$0xf] %v620
        %1204 = vst [vmem:[#allocation4 + $0x3c] sm:$0xf] %v621
        %1205 = vst [vmem:[#allocation4 + $0x60] sm:$0xf] %v622
        %1206 = vst [vmem:[#allocation4 + $0x84] sm:$0xf] %v623
        %1207 = vst [vmem:[#allocation4 + $0xa8] sm:$0xf] %v624
        %1208 = vst [vmem:[#allocation4 + $0xcc] sm:$0xf] %v625
        %1209 = vst [vmem:[#allocation4 + $0xf0] sm:$0xf] %v626
        %1210 = vst [vmem:[#allocation4 + $0x114] sm:$0xf] %v627
        %1211 = vst [vmem:[#allocation4 + $0x138] sm:$0xf] %v628
        %1212 = vst [vmem:[#allocation4 + $0x15c] sm:$0xf] %v629
        %1213 = vst [vmem:[#allocation4 + $0x180] sm:$0xf] %v630
        %1214 = vst [vmem:[#allocation4 + $0x1a4] sm:$0xf] %v631
        %1215 = vst [vmem:[#allocation4 + $0x1c8] sm:$0xf] %v632
        %1216 = vst [vmem:[#allocation4 + $0x1ec] sm:$0xf] %v633
        %1217 = vst [vmem:[#allocation4 + $0x210] sm:$0xf] %v634
        %1218 = vst [vmem:[#allocation4 + $0x234] sm:$0xf] %v635
        %1219 = vst [vmem:[#allocation4 + $0x258] sm:$0xf] %v636
        %1220 = vst [vmem:[#allocation4 + $0x27c] sm:$0xf] %v637
        %1221 = vst [vmem:[#allocation4 + $0x2a0] sm:$0xf] %v638
        %1222 = vst [vmem:[#allocation4 + $0x2c4] sm:$0xf] %v639
        %1223 = vst [vmem:[#allocation4 + $0x2e8] sm:$0xf] %v640
        %1224 = vst [vmem:[#allocation4 + $0x30c] sm:$0xf] %v641
        %1225 = vst [vmem:[#allocation4 + $0x330] sm:$0xf] %v642
        %1226 = vst [vmem:[#allocation4 + $0x354] sm:$0xf] %v643
        %1227 = vst [vmem:[#allocation4 + $0x378] sm:$0xf] %v644
        %1228 = vst [vmem:[#allocation4 + $0x39c] sm:$0xf] %v645
        %1229 = vst [vmem:[#allocation4 + $0x3c0] sm:$0xf] %v646
        %1230 = vst [vmem:[#allocation4 + $0x3e4] sm:$0xf] %v647
        %1231 = vst [vmem:[#allocation4 + $0x408] sm:$0xf] %v1082
        %1232 = vst [vmem:[#allocation4 + $0x42c] sm:$0xf] %v1083
        %1233 = vst [vmem:[#allocation4 + $0x450] sm:$0xf] %v1201
        %1234 = vst [vmem:[#allocation4 + $0x474] sm:$0xf] %v1202
        %v1238 = vrot.slane %v613, 1
        %v1239 = vrot.slane %v614, 1
        %v1240 = vsel %vm728, %v1238, %v1239
        %v1241 = vrot.slane %v615, 1
        %v1242 = vsel %vm728, %v1239, %v1241
        %v1245 = vpack.c.bf16 %v1240, %v1240
        %v1246 = vpack.c.bf16 %v1242, %v1242
        %1247 = vst [vmem:[#allocation4 + $0x1c] sm:$0xf] %v845
        %1248 = vst [vmem:[#allocation4 + $0x40] sm:$0xf] %v846
        %1249 = vst [vmem:[#allocation4 + $0x64] sm:$0xf] %v847
        %1250 = vst [vmem:[#allocation4 + $0x88] sm:$0xf] %v848
        %1251 = vst [vmem:[#allocation4 + $0xac] sm:$0xf] %v849
        %1252 = vst [vmem:[#allocation4 + $0xd0] sm:$0xf] %v850
        %1253 = vst [vmem:[#allocation4 + $0xf4] sm:$0xf] %v851
        %1254 = vst [vmem:[#allocation4 + $0x118] sm:$0xf] %v852
        %1255 = vst [vmem:[#allocation4 + $0x13c] sm:$0xf] %v853
        %1256 = vst [vmem:[#allocation4 + $0x160] sm:$0xf] %v854
        %1257 = vst [vmem:[#allocation4 + $0x184] sm:$0xf] %v855
        %1258 = vst [vmem:[#allocation4 + $0x1a8] sm:$0xf] %v856
        %1259 = vst [vmem:[#allocation4 + $0x1cc] sm:$0xf] %v857
        %1260 = vst [vmem:[#allocation4 + $0x1f0] sm:$0xf] %v858
        %1261 = vst [vmem:[#allocation4 + $0x214] sm:$0xf] %v859
        %1262 = vst [vmem:[#allocation4 + $0x238] sm:$0xf] %v860
        %1263 = vst [vmem:[#allocation4 + $0x25c] sm:$0xf] %v861
        %1264 = vst [vmem:[#allocation4 + $0x280] sm:$0xf] %v862
        %1265 = vst [vmem:[#allocation4 + $0x2a4] sm:$0xf] %v863
        %1266 = vst [vmem:[#allocation4 + $0x2c8] sm:$0xf] %v864
        %1267 = vst [vmem:[#allocation4 + $0x2ec] sm:$0xf] %v865
        %1268 = vst [vmem:[#allocation4 + $0x310] sm:$0xf] %v866
        %1269 = vst [vmem:[#allocation4 + $0x334] sm:$0xf] %v867
        %1270 = vst [vmem:[#allocation4 + $0x358] sm:$0xf] %v868
        %1271 = vst [vmem:[#allocation4 + $0x37c] sm:$0xf] %v869
        %1272 = vst [vmem:[#allocation4 + $0x3a0] sm:$0xf] %v870
        %1273 = vst [vmem:[#allocation4 + $0x3c4] sm:$0xf] %v871
        %1274 = vst [vmem:[#allocation4 + $0x3e8] sm:$0xf] %v872
        %1275 = vst [vmem:[#allocation4 + $0x40c] sm:$0xf] %v1126
        %1276 = vst [vmem:[#allocation4 + $0x430] sm:$0xf] %v1127
        %1277 = vst [vmem:[#allocation4 + $0x454] sm:$0xf] %v1245
        %1278 = vst [vmem:[#allocation4 + $0x478] sm:$0xf] %v1246
        %v1279 = vrot.slane %v613, 2
        %v1280 = vrot.slane %v614, 2
        %v1281 = vsel %vm905, %v1279, %v1280
        %v1282 = vrot.slane %v615, 2
        %v1283 = vsel %vm905, %v1280, %v1282
        %v1286 = vpack.c.bf16 %v1281, %v1281
        %v1287 = vpack.c.bf16 %v1283, %v1283
        %1288 = vst [vmem:[#allocation4 + $0x20] sm:$0xf] %v1022
        %1289 = vst [vmem:[#allocation4 + $0x44] sm:$0xf] %v1023
        %1290 = vst [vmem:[#allocation4 + $0x68] sm:$0xf] %v1024
        %1291 = vst [vmem:[#allocation4 + $0x8c] sm:$0xf] %v1025
        %1292 = vst [vmem:[#allocation4 + $0xb0] sm:$0xf] %v1026
        %1293 = vst [vmem:[#allocation4 + $0xd4] sm:$0xf] %v1027
        %1294 = vst [vmem:[#allocation4 + $0xf8] sm:$0xf] %v1028
        %1295 = vst [vmem:[#allocation4 + $0x11c] sm:$0xf] %v1029
        %1296 = vst [vmem:[#allocation4 + $0x140] sm:$0xf] %v1030
        %1297 = vst [vmem:[#allocation4 + $0x164] sm:$0xf] %v1031
        %1298 = vst [vmem:[#allocation4 + $0x188] sm:$0xf] %v1032
        %1299 = vst [vmem:[#allocation4 + $0x1ac] sm:$0xf] %v1033
        %1300 = vst [vmem:[#allocation4 + $0x1d0] sm:$0xf] %v1034
        %1301 = vst [vmem:[#allocation4 + $0x1f4] sm:$0xf] %v1035
        %1302 = vst [vmem:[#allocation4 + $0x218] sm:$0xf] %v1036
        %1303 = vst [vmem:[#allocation4 + $0x23c] sm:$0xf] %v1037
        %1304 = vst [vmem:[#allocation4 + $0x260] sm:$0xf] %v1038
        %1305 = vst [vmem:[#allocation4 + $0x284] sm:$0xf] %v1039
        %1306 = vst [vmem:[#allocation4 + $0x2a8] sm:$0xf] %v1040
        %1307 = vst [vmem:[#allocation4 + $0x2cc] sm:$0xf] %v1041
        %1308 = vst [vmem:[#allocation4 + $0x2f0] sm:$0xf] %v1042
        %1309 = vst [vmem:[#allocation4 + $0x314] sm:$0xf] %v1043
        %1310 = vst [vmem:[#allocation4 + $0x338] sm:$0xf] %v1044
        %1311 = vst [vmem:[#allocation4 + $0x35c] sm:$0xf] %v1045
        %1312 = vst [vmem:[#allocation4 + $0x380] sm:$0xf] %v1046
        %1313 = vst [vmem:[#allocation4 + $0x3a4] sm:$0xf] %v1047
        %1314 = vst [vmem:[#allocation4 + $0x3c8] sm:$0xf] %v1048
        %1315 = vst [vmem:[#allocation4 + $0x3ec] sm:$0xf] %v1049
        %1316 = vst [vmem:[#allocation4 + $0x410] sm:$0xf] %v1167
        %1317 = vst [vmem:[#allocation4 + $0x434] sm:$0xf] %v1168
        %1318 = vst [vmem:[#allocation4 + $0x458] sm:$0xf] %v1286
        %1319 = vst [vmem:[#allocation4 + $0x47c] sm:$0xf] %v1287
        %v1320 = vld [vmem:[#allocation4] sm:$0xff]
        %v1321 = vld [vmem:[#allocation4 + $0x8] sm:$0xff]
        %v1322 = vld [vmem:[#allocation4 + $0x10] sm:$0xff]
        %v1323 = vld [vmem:[#allocation4 + $0x18] sm:$0xff]
        %v1324 = vld [vmem:[#allocation4 + $0x20] sm:$0xf]
        %v1325 = vld [vmem:[#allocation4 + $0x24] sm:$0xff]
        %v1326 = vld [vmem:[#allocation4 + $0x2c] sm:$0xff]
        %v1327 = vld [vmem:[#allocation4 + $0x34] sm:$0xff]
        %v1328 = vld [vmem:[#allocation4 + $0x3c] sm:$0xff]
        %v1329 = vld [vmem:[#allocation4 + $0x44] sm:$0xf]
        %v1330 = vld [vmem:[#allocation4 + $0x48] sm:$0xff]
        %v1331 = vld [vmem:[#allocation4 + $0x50] sm:$0xff]
        %v1332 = vld [vmem:[#allocation4 + $0x58] sm:$0xff]
        %v1333 = vld [vmem:[#allocation4 + $0x60] sm:$0xff]
        %v1334 = vld [vmem:[#allocation4 + $0x68] sm:$0xf]
        %v1335 = vld [vmem:[#allocation4 + $0x6c] sm:$0xff]
        %v1336 = vld [vmem:[#allocation4 + $0x74] sm:$0xff]
        %v1337 = vld [vmem:[#allocation4 + $0x7c] sm:$0xff]
        %v1338 = vld [vmem:[#allocation4 + $0x84] sm:$0xff]
        %v1339 = vld [vmem:[#allocation4 + $0x8c] sm:$0xf]
        %v1340 = vld [vmem:[#allocation4 + $0x90] sm:$0xff]
        %v1341 = vld [vmem:[#allocation4 + $0x98] sm:$0xff]
        %v1342 = vld [vmem:[#allocation4 + $0xa0] sm:$0xff]
        %v1343 = vld [vmem:[#allocation4 + $0xa8] sm:$0xff]
        %v1344 = vld [vmem:[#allocation4 + $0xb0] sm:$0xf]
        %v1345 = vld [vmem:[#allocation4 + $0xb4] sm:$0xff]
        %v1346 = vld [vmem:[#allocation4 + $0xbc] sm:$0xff]
        %v1347 = vld [vmem:[#allocation4 + $0xc4] sm:$0xff]
        %v1348 = vld [vmem:[#allocation4 + $0xcc] sm:$0xff]
        %v1349 = vld [vmem:[#allocation4 + $0xd4] sm:$0xf]
        %v1350 = vld [vmem:[#allocation4 + $0xd8] sm:$0xff]
        %v1351 = vld [vmem:[#allocation4 + $0xe0] sm:$0xff]
        %v1352 = vld [vmem:[#allocation4 + $0xe8] sm:$0xff]
        %v1353 = vld [vmem:[#allocation4 + $0xf0] sm:$0xff]
        %v1354 = vld [vmem:[#allocation4 + $0xf8] sm:$0xf]
        %v1355 = vld [vmem:[#allocation4 + $0xfc] sm:$0xff]
        %v1356 = vld [vmem:[#allocation4 + $0x104] sm:$0xff]
        %v1357 = vld [vmem:[#allocation4 + $0x10c] sm:$0xff]
        %v1358 = vld [vmem:[#allocation4 + $0x114] sm:$0xff]
        %v1359 = vld [vmem:[#allocation4 + $0x11c] sm:$0xf]
        %v1360 = vld [vmem:[#allocation4 + $0x120] sm:$0xff]
        %v1361 = vld [vmem:[#allocation4 + $0x128] sm:$0xff]
        %v1362 = vld [vmem:[#allocation4 + $0x130] sm:$0xff]
        %v1363 = vld [vmem:[#allocation4 + $0x138] sm:$0xff]
        %v1364 = vld [vmem:[#allocation4 + $0x140] sm:$0xf]
        %v1365 = vld [vmem:[#allocation4 + $0x144] sm:$0xff]
        %v1366 = vld [vmem:[#allocation4 + $0x14c] sm:$0xff]
        %v1367 = vld [vmem:[#allocation4 + $0x154] sm:$0xff]
        %v1368 = vld [vmem:[#allocation4 + $0x15c] sm:$0xff]
        %v1369 = vld [vmem:[#allocation4 + $0x164] sm:$0xf]
        %v1370 = vld [vmem:[#allocation4 + $0x168] sm:$0xff]
        %v1371 = vld [vmem:[#allocation4 + $0x170] sm:$0xff]
        %v1372 = vld [vmem:[#allocation4 + $0x178] sm:$0xff]
        %v1373 = vld [vmem:[#allocation4 + $0x180] sm:$0xff]
        %v1374 = vld [vmem:[#allocation4 + $0x188] sm:$0xf]
        %v1375 = vld [vmem:[#allocation4 + $0x18c] sm:$0xff]
        %v1376 = vld [vmem:[#allocation4 + $0x194] sm:$0xff]
        %v1377 = vld [vmem:[#allocation4 + $0x19c] sm:$0xff]
        %v1378 = vld [vmem:[#allocation4 + $0x1a4] sm:$0xff]
        %v1379 = vld [vmem:[#allocation4 + $0x1ac] sm:$0xf]
        %v1380 = vld [vmem:[#allocation4 + $0x1b0] sm:$0xff]
        %v1381 = vld [vmem:[#allocation4 + $0x1b8] sm:$0xff]
        %v1382 = vld [vmem:[#allocation4 + $0x1c0] sm:$0xff]
        %v1383 = vld [vmem:[#allocation4 + $0x1c8] sm:$0xff]
        %v1384 = vld [vmem:[#allocation4 + $0x1d0] sm:$0xf]
        %v1385 = vld [vmem:[#allocation4 + $0x1d4] sm:$0xff]
        %v1386 = vld [vmem:[#allocation4 + $0x1dc] sm:$0xff]
        %v1387 = vld [vmem:[#allocation4 + $0x1e4] sm:$0xff]
        %v1388 = vld [vmem:[#allocation4 + $0x1ec] sm:$0xff]
        %v1389 = vld [vmem:[#allocation4 + $0x1f4] sm:$0xf]
        %v1390 = vld [vmem:[#allocation4 + $0x1f8] sm:$0xff]
        %v1391 = vld [vmem:[#allocation4 + $0x200] sm:$0xff]
        %v1392 = vld [vmem:[#allocation4 + $0x208] sm:$0xff]
        %v1393 = vld [vmem:[#allocation4 + $0x210] sm:$0xff]
        %v1394 = vld [vmem:[#allocation4 + $0x218] sm:$0xf]
        %v1395 = vld [vmem:[#allocation4 + $0x21c] sm:$0xff]
        %v1396 = vld [vmem:[#allocation4 + $0x224] sm:$0xff]
        %v1397 = vld [vmem:[#allocation4 + $0x22c] sm:$0xff]
        %v1398 = vld [vmem:[#allocation4 + $0x234] sm:$0xff]
        %v1399 = vld [vmem:[#allocation4 + $0x23c] sm:$0xf]
        %v1400 = vld [vmem:[#allocation4 + $0x240] sm:$0xff]
        %v1401 = vld [vmem:[#allocation4 + $0x248] sm:$0xff]
        %v1402 = vld [vmem:[#allocation4 + $0x250] sm:$0xff]
        %v1403 = vld [vmem:[#allocation4 + $0x258] sm:$0xff]
        %v1404 = vld [vmem:[#allocation4 + $0x260] sm:$0xf]
        %v1405 = vld [vmem:[#allocation4 + $0x264] sm:$0xff]
        %v1406 = vld [vmem:[#allocation4 + $0x26c] sm:$0xff]
        %v1407 = vld [vmem:[#allocation4 + $0x274] sm:$0xff]
        %v1408 = vld [vmem:[#allocation4 + $0x27c] sm:$0xff]
        %v1409 = vld [vmem:[#allocation4 + $0x284] sm:$0xf]
        %v1410 = vld [vmem:[#allocation4 + $0x288] sm:$0xff]
        %v1411 = vld [vmem:[#allocation4 + $0x290] sm:$0xff]
        %v1412 = vld [vmem:[#allocation4 + $0x298] sm:$0xff]
        %v1413 = vld [vmem:[#allocation4 + $0x2a0] sm:$0xff]
        %v1414 = vld [vmem:[#allocation4 + $0x2a8] sm:$0xf]
        %v1415 = vld [vmem:[#allocation4 + $0x2ac] sm:$0xff]
        %v1416 = vld [vmem:[#allocation4 + $0x2b4] sm:$0xff]
        %v1417 = vld [vmem:[#allocation4 + $0x2bc] sm:$0xff]
        %v1418 = vld [vmem:[#allocation4 + $0x2c4] sm:$0xff]
        %v1419 = vld [vmem:[#allocation4 + $0x2cc] sm:$0xf]
        %v1420 = vld [vmem:[#allocation4 + $0x2d0] sm:$0xff]
        %v1421 = vld [vmem:[#allocation4 + $0x2d8] sm:$0xff]
        %v1422 = vld [vmem:[#allocation4 + $0x2e0] sm:$0xff]
        %v1423 = vld [vmem:[#allocation4 + $0x2e8] sm:$0xff]
        %v1424 = vld [vmem:[#allocation4 + $0x2f0] sm:$0xf]
        %v1425 = vld [vmem:[#allocation4 + $0x2f4] sm:$0xff]
        %v1426 = vld [vmem:[#allocation4 + $0x2fc] sm:$0xff]
        %v1427 = vld [vmem:[#allocation4 + $0x304] sm:$0xff]
        %v1428 = vld [vmem:[#allocation4 + $0x30c] sm:$0xff]
        %v1429 = vld [vmem:[#allocation4 + $0x314] sm:$0xf]
        %v1430 = vld [vmem:[#allocation4 + $0x318] sm:$0xff]
        %v1431 = vld [vmem:[#allocation4 + $0x320] sm:$0xff]
        %v1432 = vld [vmem:[#allocation4 + $0x328] sm:$0xff]
        %v1433 = vld [vmem:[#allocation4 + $0x330] sm:$0xff]
        %v1434 = vld [vmem:[#allocation4 + $0x338] sm:$0xf]
        %v1435 = vld [vmem:[#allocation4 + $0x33c] sm:$0xff]
        %v1436 = vld [vmem:[#allocation4 + $0x344] sm:$0xff]
        %v1437 = vld [vmem:[#allocation4 + $0x34c] sm:$0xff]
        %v1438 = vld [vmem:[#allocation4 + $0x354] sm:$0xff]
        %v1439 = vld [vmem:[#allocation4 + $0x35c] sm:$0xf]
        %v1440 = vld [vmem:[#allocation4 + $0x360] sm:$0xff]
        %v1441 = vld [vmem:[#allocation4 + $0x368] sm:$0xff]
        %v1442 = vld [vmem:[#allocation4 + $0x370] sm:$0xff]
        %v1443 = vld [vmem:[#allocation4 + $0x378] sm:$0xff]
        %v1444 = vld [vmem:[#allocation4 + $0x380] sm:$0xf]
        %v1445 = vld [vmem:[#allocation4 + $0x384] sm:$0xff]
        %v1446 = vld [vmem:[#allocation4 + $0x38c] sm:$0xff]
        %v1447 = vld [vmem:[#allocation4 + $0x394] sm:$0xff]
        %v1448 = vld [vmem:[#allocation4 + $0x39c] sm:$0xff]
        %v1449 = vld [vmem:[#allocation4 + $0x3a4] sm:$0xf]
        %v1450 = vld [vmem:[#allocation4 + $0x3a8] sm:$0xff]
        %v1451 = vld [vmem:[#allocation4 + $0x3b0] sm:$0xff]
        %v1452 = vld [vmem:[#allocation4 + $0x3b8] sm:$0xff]
        %v1453 = vld [vmem:[#allocation4 + $0x3c0] sm:$0xff]
        %v1454 = vld [vmem:[#allocation4 + $0x3c8] sm:$0xf]
        %v1455 = vld [vmem:[#allocation4 + $0x3cc] sm:$0xff]
        %v1456 = vld [vmem:[#allocation4 + $0x3d4] sm:$0xff]
        %v1457 = vld [vmem:[#allocation4 + $0x3dc] sm:$0xff]
        %v1458 = vld [vmem:[#allocation4 + $0x3e4] sm:$0xff]
        %v1459 = vld [vmem:[#allocation4 + $0x3ec] sm:$0xf]
        %v1460 = vld [vmem:[#allocation4 + $0x3f0] sm:$0xff]
        %v1461 = vld [vmem:[#allocation4 + $0x3f8] sm:$0xff]
        %v1462 = vld [vmem:[#allocation4 + $0x400] sm:$0xff]
        %v1463 = vld [vmem:[#allocation4 + $0x408] sm:$0xff]
        %v1464 = vld [vmem:[#allocation4 + $0x410] sm:$0xf]
        %v1465 = vld [vmem:[#allocation4 + $0x414] sm:$0xff]
        %v1466 = vld [vmem:[#allocation4 + $0x41c] sm:$0xff]
        %v1467 = vld [vmem:[#allocation4 + $0x424] sm:$0xff]
        %v1468 = vld [vmem:[#allocation4 + $0x42c] sm:$0xff]
        %v1469 = vld [vmem:[#allocation4 + $0x434] sm:$0xf]
        %v1470 = vld [vmem:[#allocation4 + $0x438] sm:$0xff]
        %v1471 = vld [vmem:[#allocation4 + $0x440] sm:$0xff]
        %v1472 = vld [vmem:[#allocation4 + $0x448] sm:$0xff]
        %v1473 = vld [vmem:[#allocation4 + $0x450] sm:$0xff]
        %v1474 = vld [vmem:[#allocation4 + $0x458] sm:$0xf]
        %v1475 = vld [vmem:[#allocation4 + $0x45c] sm:$0xff]
        %v1476 = vld [vmem:[#allocation4 + $0x464] sm:$0xff]
        %v1477 = vld [vmem:[#allocation4 + $0x46c] sm:$0xff]
        %v1478 = vld [vmem:[#allocation4 + $0x474] sm:$0xff]
        %v1479 = vld [vmem:[#allocation4 + $0x47c] sm:$0xf]
        %v1480 = vld [vmem:[#allocation9] sm:$0xf]
        %v1481 = vld [vmem:[#allocation9 + $0x4] sm:$0xf]
        %v1482 = vld [vmem:[#allocation9 + $0x8] sm:$0xf]
        %v1483 = vld [vmem:[#allocation9 + $0xc] sm:$0xf]
        %v1484 = vld [vmem:[#allocation9 + $0x10] sm:$0xf]
        %v1485 = vld [vmem:[#allocation9 + $0x14] sm:$0xf]
        %v1486 = vld [vmem:[#allocation9 + $0x18] sm:$0xf]
        %v1487 = vld [vmem:[#allocation9 + $0x1c] sm:$0xf]
        %v1488 = vld [vmem:[#allocation9 + $0x20] sm:$0xf]
        %v1489 = vld [vmem:[#allocation9 + $0x24] sm:$0xf]
        %v1490 = vld [vmem:[#allocation9 + $0x28] sm:$0xf]
        %v1491 = vld [vmem:[#allocation9 + $0x2c] sm:$0xf]
        %v1492 = vld [vmem:[#allocation9 + $0x30] sm:$0xf]
        %v1493 = vld [vmem:[#allocation9 + $0x34] sm:$0xf]
        %v1494 = vld [vmem:[#allocation9 + $0x38] sm:$0xf]
        %v1495 = vld [vmem:[#allocation9 + $0x3c] sm:$0xf]
        %v1496 = vld [vmem:[#allocation9 + $0x40] sm:$0xf]
        %v1497 = vld [vmem:[#allocation9 + $0x44] sm:$0xf]
        %v1498 = vld [vmem:[#allocation9 + $0x48] sm:$0xf]
        %v1499 = vld [vmem:[#allocation9 + $0x4c] sm:$0xf]
        %v1500 = vld [vmem:[#allocation9 + $0x50] sm:$0xf]
        %v1501 = vld [vmem:[#allocation9 + $0x54] sm:$0xf]
        %v1502 = vld [vmem:[#allocation9 + $0x58] sm:$0xf]
        %v1503 = vld [vmem:[#allocation9 + $0x5c] sm:$0xf]
        %v1504 = vld [vmem:[#allocation9 + $0x60] sm:$0xf]
        %v1505 = vld [vmem:[#allocation9 + $0x64] sm:$0xf]
        %v1506 = vld [vmem:[#allocation9 + $0x68] sm:$0xf]
        %v1507 = vld [vmem:[#allocation9 + $0x6c] sm:$0xf]
        %v1508 = vld [vmem:[#allocation9 + $0x70] sm:$0xf]
        %v1509 = vld [vmem:[#allocation9 + $0x74] sm:$0xf]
        %v1510 = vld [vmem:[#allocation9 + $0x78] sm:$0xf]
        %v1511 = vld [vmem:[#allocation9 + $0x7c] sm:$0xf]
        %v1512 = vld [vmem:[#allocation9 + $0x80] sm:$0xf]
        %v1513 = vld [vmem:[#allocation9 + $0x84] sm:$0xf]
        %v1514 = vld [vmem:[#allocation9 + $0x88] sm:$0xf]
        %v1515 = vld [vmem:[#allocation9 + $0x8c] sm:$0xf]
        %v1516 = vld [vmem:[#allocation9 + $0x90] sm:$0xf]
        %v1517 = vld [vmem:[#allocation9 + $0x94] sm:$0xf]
        %v1518 = vld [vmem:[#allocation9 + $0x98] sm:$0xf]
        %v1519 = vld [vmem:[#allocation9 + $0x9c] sm:$0xf]
        %v1520 = vld [vmem:[#allocation9 + $0xa0] sm:$0xf]
        %v1521 = vld [vmem:[#allocation9 + $0xa4] sm:$0xf]
        %v1522 = vld [vmem:[#allocation9 + $0xa8] sm:$0xf]
        %v1523 = vld [vmem:[#allocation9 + $0xac] sm:$0xf]
        %v1524 = vld [vmem:[#allocation9 + $0xb0] sm:$0xf]
        %v1525 = vld [vmem:[#allocation9 + $0xb4] sm:$0xf]
        %v1526 = vld [vmem:[#allocation9 + $0xb8] sm:$0xf]
        %v1527 = vld [vmem:[#allocation9 + $0xbc] sm:$0xf]
        %v1528 = vld [vmem:[#allocation9 + $0xc0] sm:$0xf]
        %v1529 = vld [vmem:[#allocation9 + $0xc4] sm:$0xf]
        %v1530 = vld [vmem:[#allocation9 + $0xc8] sm:$0xf]
        %v1531 = vld [vmem:[#allocation9 + $0xcc] sm:$0xf]
        %v1532 = vld [vmem:[#allocation9 + $0xd0] sm:$0xf]
        %v1533 = vld [vmem:[#allocation9 + $0xd4] sm:$0xf]
        %v1534 = vld [vmem:[#allocation9 + $0xd8] sm:$0xf]
        %v1535 = vld [vmem:[#allocation9 + $0xdc] sm:$0xf]
        %v1536 = vld [vmem:[#allocation9 + $0xe0] sm:$0xf]
        %v1537 = vld [vmem:[#allocation9 + $0xe4] sm:$0xf]
        %v1538 = vld [vmem:[#allocation9 + $0xe8] sm:$0xf]
        %v1539 = vld [vmem:[#allocation9 + $0xec] sm:$0xf]
        %v1540 = vld [vmem:[#allocation9 + $0xf0] sm:$0xf]
        %v1541 = vld [vmem:[#allocation9 + $0xf4] sm:$0xf]
        %v1542 = vld [vmem:[#allocation9 + $0xf8] sm:$0xf]
        %v1543 = vld [vmem:[#allocation9 + $0xfc] sm:$0xf]
        %v1544 = vld [vmem:[#allocation9 + $0x100] sm:$0xf]
        %v1545 = vld [vmem:[#allocation9 + $0x104] sm:$0xf]
        %v1546 = vld [vmem:[#allocation9 + $0x108] sm:$0xf]
        %v1547 = vld [vmem:[#allocation9 + $0x10c] sm:$0xf]
        %v1548 = vld [vmem:[#allocation9 + $0x110] sm:$0xf]
        %v1549 = vld [vmem:[#allocation9 + $0x114] sm:$0xf]
        %v1550 = vld [vmem:[#allocation9 + $0x118] sm:$0xf]
        %v1551 = vld [vmem:[#allocation9 + $0x11c] sm:$0xf]
        %v1552 = vld [vmem:[#allocation9 + $0x120] sm:$0xf]
        %v1553 = vld [vmem:[#allocation9 + $0x124] sm:$0xf]
        %v1554 = vld [vmem:[#allocation9 + $0x128] sm:$0xf]
        %v1555 = vld [vmem:[#allocation9 + $0x12c] sm:$0xf]
        %v1556 = vld [vmem:[#allocation9 + $0x130] sm:$0xf]
        %v1557 = vld [vmem:[#allocation9 + $0x134] sm:$0xf]
        %v1558 = vld [vmem:[#allocation9 + $0x138] sm:$0xf]
        %v1559 = vld [vmem:[#allocation9 + $0x13c] sm:$0xf]
        %v1560 = vld [vmem:[#allocation9 + $0x140] sm:$0xf]
        %v1561 = vld [vmem:[#allocation9 + $0x144] sm:$0xf]
        %v1562 = vld [vmem:[#allocation9 + $0x148] sm:$0xf]
        %v1563 = vld [vmem:[#allocation9 + $0x14c] sm:$0xf]
        %v1564 = vld [vmem:[#allocation9 + $0x150] sm:$0xf]
        %v1565 = vld [vmem:[#allocation9 + $0x154] sm:$0xf]
        %v1566 = vld [vmem:[#allocation9 + $0x158] sm:$0xf]
        %v1567 = vld [vmem:[#allocation9 + $0x15c] sm:$0xf]
        %v1568 = vld [vmem:[#allocation9 + $0x160] sm:$0xf]
        %v1569 = vld [vmem:[#allocation9 + $0x164] sm:$0xf]
        %v1570 = vld [vmem:[#allocation9 + $0x168] sm:$0xf]
        %v1571 = vld [vmem:[#allocation9 + $0x16c] sm:$0xf]
        %v1572 = vld [vmem:[#allocation9 + $0x170] sm:$0xf]
        %v1573 = vld [vmem:[#allocation9 + $0x174] sm:$0xf]
        %v1574 = vld [vmem:[#allocation9 + $0x178] sm:$0xf]
        %v1575 = vld [vmem:[#allocation9 + $0x17c] sm:$0xf]
        %v1576 = vld [vmem:[#allocation9 + $0x180] sm:$0xf]
        %v1577 = vld [vmem:[#allocation9 + $0x184] sm:$0xf]
        %v1578 = vld [vmem:[#allocation9 + $0x188] sm:$0xf]
        %v1579 = vld [vmem:[#allocation9 + $0x18c] sm:$0xf]
        %v1580 = vld [vmem:[#allocation9 + $0x190] sm:$0xf]
        %v1581 = vld [vmem:[#allocation9 + $0x194] sm:$0xf]
        %v1582 = vld [vmem:[#allocation9 + $0x198] sm:$0xf]
        %v1583 = vld [vmem:[#allocation9 + $0x19c] sm:$0xf]
        %v1584 = vld [vmem:[#allocation9 + $0x1a0] sm:$0xf]
        %v1585 = vld [vmem:[#allocation9 + $0x1a4] sm:$0xf]
        %v1586 = vld [vmem:[#allocation9 + $0x1a8] sm:$0xf]
        %v1587 = vld [vmem:[#allocation9 + $0x1ac] sm:$0xf]
        %v1588 = vld [vmem:[#allocation9 + $0x1b0] sm:$0xf]
        %v1589 = vld [vmem:[#allocation9 + $0x1b4] sm:$0xf]
        %v1590 = vld [vmem:[#allocation9 + $0x1b8] sm:$0xf]
        %v1591 = vld [vmem:[#allocation9 + $0x1bc] sm:$0xf]
        %v1592 = vld [vmem:[#allocation9 + $0x1c0] sm:$0xf]
        %v1593 = vld [vmem:[#allocation9 + $0x1c4] sm:$0xf]
        %v1594 = vld [vmem:[#allocation9 + $0x1c8] sm:$0xf]
        %v1595 = vld [vmem:[#allocation9 + $0x1cc] sm:$0xf]
        %v1596 = vld [vmem:[#allocation9 + $0x1d0] sm:$0xf]
        %v1597 = vld [vmem:[#allocation9 + $0x1d4] sm:$0xf]
        %v1598 = vld [vmem:[#allocation9 + $0x1d8] sm:$0xf]
        %v1599 = vld [vmem:[#allocation9 + $0x1dc] sm:$0xf]
        %v1600 = vld [vmem:[#allocation9 + $0x1e0] sm:$0xf]
        %v1601 = vld [vmem:[#allocation9 + $0x1e4] sm:$0xf]
        %v1602 = vld [vmem:[#allocation9 + $0x1e8] sm:$0xf]
        %v1603 = vld [vmem:[#allocation9 + $0x1ec] sm:$0xf]
        %v1604 = vld [vmem:[#allocation9 + $0x1f0] sm:$0xf]
        %v1605 = vld [vmem:[#allocation9 + $0x1f4] sm:$0xf]
        %v1606 = vld [vmem:[#allocation9 + $0x1f8] sm:$0xf]
        %v1607 = vld [vmem:[#allocation9 + $0x1fc] sm:$0xf]
        %v1608 = vld [vmem:[#allocation9 + $0x200] sm:$0xf]
        %v1609 = vld [vmem:[#allocation9 + $0x204] sm:$0xf]
        %v1610 = vld [vmem:[#allocation9 + $0x208] sm:$0xf]
        %v1611 = vld [vmem:[#allocation9 + $0x20c] sm:$0xf]
        %v1612 = vld [vmem:[#allocation9 + $0x210] sm:$0xf]
        %v1613 = vld [vmem:[#allocation9 + $0x214] sm:$0xf]
        %v1614 = vld [vmem:[#allocation9 + $0x218] sm:$0xf]
        %v1615 = vld [vmem:[#allocation9 + $0x21c] sm:$0xf]
        %v1616 = vld [vmem:[#allocation9 + $0x220] sm:$0xf]
        %v1617 = vld [vmem:[#allocation9 + $0x224] sm:$0xf]
        %v1618 = vld [vmem:[#allocation9 + $0x228] sm:$0xf]
        %v1619 = vld [vmem:[#allocation9 + $0x22c] sm:$0xf]
        %v1620 = vld [vmem:[#allocation9 + $0x230] sm:$0xf]
        %v1621 = vld [vmem:[#allocation9 + $0x234] sm:$0xf]
        %v1622 = vld [vmem:[#allocation9 + $0x238] sm:$0xf]
        %v1623 = vld [vmem:[#allocation9 + $0x23c] sm:$0xf]
        %v1624 = vld [vmem:[%s2] sm:$0x1]
        %v1626 = vperm.slane %v1624, 0
        %v1788 = vunpack.c.l.b16 %v1320
        %v1789 = vunpack.c.h.b16 %v1320
        %v1790 = vunpack.c.l.b16 %v1321
        %v1791 = vunpack.c.h.b16 %v1321
        %v1792 = vunpack.c.l.b16 %v1322
        %v1793 = vunpack.c.h.b16 %v1322
        %v1794 = vunpack.c.l.b16 %v1323
        %v1795 = vunpack.c.h.b16 %v1323
        %v1796 = vunpack.c.l.b16 %v1324
        %v1797 = vunpack.c.l.b16 %v1325
        %v1798 = vunpack.c.h.b16 %v1325
        %v1799 = vunpack.c.l.b16 %v1326
        %v1800 = vunpack.c.h.b16 %v1326
        %v1801 = vunpack.c.l.b16 %v1327
        %v1802 = vunpack.c.h.b16 %v1327
        %v1803 = vunpack.c.l.b16 %v1328
        %v1804 = vunpack.c.h.b16 %v1328
        %v1805 = vunpack.c.l.b16 %v1329
        %v1806 = vunpack.c.l.b16 %v1330
        %v1807 = vunpack.c.h.b16 %v1330
        %v1808 = vunpack.c.l.b16 %v1331
        %v1809 = vunpack.c.h.b16 %v1331
        %v1810 = vunpack.c.l.b16 %v1332
        %v1811 = vunpack.c.h.b16 %v1332
        %v1812 = vunpack.c.l.b16 %v1333
        %v1813 = vunpack.c.h.b16 %v1333
        %v1814 = vunpack.c.l.b16 %v1334
        %v1815 = vunpack.c.l.b16 %v1335
        %v1816 = vunpack.c.h.b16 %v1335
        %v1817 = vunpack.c.l.b16 %v1336
        %v1818 = vunpack.c.h.b16 %v1336
        %v1819 = vunpack.c.l.b16 %v1337
        %v1820 = vunpack.c.h.b16 %v1337
        %v1821 = vunpack.c.l.b16 %v1338
        %v1822 = vunpack.c.h.b16 %v1338
        %v1823 = vunpack.c.l.b16 %v1339
        %v1824 = vunpack.c.l.b16 %v1340
        %v1825 = vunpack.c.h.b16 %v1340
        %v1826 = vunpack.c.l.b16 %v1341
        %v1827 = vunpack.c.h.b16 %v1341
        %v1828 = vunpack.c.l.b16 %v1342
        %v1829 = vunpack.c.h.b16 %v1342
        %v1830 = vunpack.c.l.b16 %v1343
        %v1831 = vunpack.c.h.b16 %v1343
        %v1832 = vunpack.c.l.b16 %v1344
        %v1833 = vunpack.c.l.b16 %v1345
        %v1834 = vunpack.c.h.b16 %v1345
        %v1835 = vunpack.c.l.b16 %v1346
        %v1836 = vunpack.c.h.b16 %v1346
        %v1837 = vunpack.c.l.b16 %v1347
        %v1838 = vunpack.c.h.b16 %v1347
        %v1839 = vunpack.c.l.b16 %v1348
        %v1840 = vunpack.c.h.b16 %v1348
        %v1841 = vunpack.c.l.b16 %v1349
        %v1842 = vunpack.c.l.b16 %v1350
        %v1843 = vunpack.c.h.b16 %v1350
        %v1844 = vunpack.c.l.b16 %v1351
        %v1845 = vunpack.c.h.b16 %v1351
        %v1846 = vunpack.c.l.b16 %v1352
        %v1847 = vunpack.c.h.b16 %v1352
        %v1848 = vunpack.c.l.b16 %v1353
        %v1849 = vunpack.c.h.b16 %v1353
        %v1850 = vunpack.c.l.b16 %v1354
        %v1851 = vunpack.c.l.b16 %v1355
        %v1852 = vunpack.c.h.b16 %v1355
        %v1853 = vunpack.c.l.b16 %v1356
        %v1854 = vunpack.c.h.b16 %v1356
        %v1855 = vunpack.c.l.b16 %v1357
        %v1856 = vunpack.c.h.b16 %v1357
        %v1857 = vunpack.c.l.b16 %v1358
        %v1858 = vunpack.c.h.b16 %v1358
        %v1859 = vunpack.c.l.b16 %v1359
        %v1860 = vunpack.c.l.b16 %v1360
        %v1861 = vunpack.c.h.b16 %v1360
        %v1862 = vunpack.c.l.b16 %v1361
        %v1863 = vunpack.c.h.b16 %v1361
        %v1864 = vunpack.c.l.b16 %v1362
        %v1865 = vunpack.c.h.b16 %v1362
        %v1866 = vunpack.c.l.b16 %v1363
        %v1867 = vunpack.c.h.b16 %v1363
        %v1868 = vunpack.c.l.b16 %v1364
        %v1869 = vunpack.c.l.b16 %v1365
        %v1870 = vunpack.c.h.b16 %v1365
        %v1871 = vunpack.c.l.b16 %v1366
        %v1872 = vunpack.c.h.b16 %v1366
        %v1873 = vunpack.c.l.b16 %v1367
        %v1874 = vunpack.c.h.b16 %v1367
        %v1875 = vunpack.c.l.b16 %v1368
        %v1876 = vunpack.c.h.b16 %v1368
        %v1877 = vunpack.c.l.b16 %v1369
        %v1878 = vunpack.c.l.b16 %v1370
        %v1879 = vunpack.c.h.b16 %v1370
        %v1880 = vunpack.c.l.b16 %v1371
        %v1881 = vunpack.c.h.b16 %v1371
        %v1882 = vunpack.c.l.b16 %v1372
        %v1883 = vunpack.c.h.b16 %v1372
        %v1884 = vunpack.c.l.b16 %v1373
        %v1885 = vunpack.c.h.b16 %v1373
        %v1886 = vunpack.c.l.b16 %v1374
        %v1887 = vunpack.c.l.b16 %v1375
        %v1888 = vunpack.c.h.b16 %v1375
        %v1889 = vunpack.c.l.b16 %v1376
        %v1890 = vunpack.c.h.b16 %v1376
        %v1891 = vunpack.c.l.b16 %v1377
        %v1892 = vunpack.c.h.b16 %v1377
        %v1893 = vunpack.c.l.b16 %v1378
        %v1894 = vunpack.c.h.b16 %v1378
        %v1895 = vunpack.c.l.b16 %v1379
        %v1896 = vunpack.c.l.b16 %v1380
        %v1897 = vunpack.c.h.b16 %v1380
        %v1898 = vunpack.c.l.b16 %v1381
        %v1899 = vunpack.c.h.b16 %v1381
        %v1900 = vunpack.c.l.b16 %v1382
        %v1901 = vunpack.c.h.b16 %v1382
        %v1902 = vunpack.c.l.b16 %v1383
        %v1903 = vunpack.c.h.b16 %v1383
        %v1904 = vunpack.c.l.b16 %v1384
        %v1905 = vunpack.c.l.b16 %v1385
        %v1906 = vunpack.c.h.b16 %v1385
        %v1907 = vunpack.c.l.b16 %v1386
        %v1908 = vunpack.c.h.b16 %v1386
        %v1909 = vunpack.c.l.b16 %v1387
        %v1910 = vunpack.c.h.b16 %v1387
        %v1911 = vunpack.c.l.b16 %v1388
        %v1912 = vunpack.c.h.b16 %v1388
        %v1913 = vunpack.c.l.b16 %v1389
        %v1914 = vunpack.c.l.b16 %v1390
        %v1915 = vunpack.c.h.b16 %v1390
        %v1916 = vunpack.c.l.b16 %v1391
        %v1917 = vunpack.c.h.b16 %v1391
        %v1918 = vunpack.c.l.b16 %v1392
        %v1919 = vunpack.c.h.b16 %v1392
        %v1920 = vunpack.c.l.b16 %v1393
        %v1921 = vunpack.c.h.b16 %v1393
        %v1922 = vunpack.c.l.b16 %v1394
        %v1923 = vunpack.c.l.b16 %v1395
        %v1924 = vunpack.c.h.b16 %v1395
        %v1925 = vunpack.c.l.b16 %v1396
        %v1926 = vunpack.c.h.b16 %v1396
        %v1927 = vunpack.c.l.b16 %v1397
        %v1928 = vunpack.c.h.b16 %v1397
        %v1929 = vunpack.c.l.b16 %v1398
        %v1930 = vunpack.c.h.b16 %v1398
        %v1931 = vunpack.c.l.b16 %v1399
        %v1932 = vunpack.c.l.b16 %v1400
        %v1933 = vunpack.c.h.b16 %v1400
        %v1934 = vunpack.c.l.b16 %v1401
        %v1935 = vunpack.c.h.b16 %v1401
        %v1936 = vunpack.c.l.b16 %v1402
        %v1937 = vunpack.c.h.b16 %v1402
        %v1938 = vunpack.c.l.b16 %v1403
        %v1939 = vunpack.c.h.b16 %v1403
        %v1940 = vunpack.c.l.b16 %v1404
        %v1941 = vunpack.c.l.b16 %v1405
        %v1942 = vunpack.c.h.b16 %v1405
        %v1943 = vunpack.c.l.b16 %v1406
        %v1944 = vunpack.c.h.b16 %v1406
        %v1945 = vunpack.c.l.b16 %v1407
        %v1946 = vunpack.c.h.b16 %v1407
        %v1947 = vunpack.c.l.b16 %v1408
        %v1948 = vunpack.c.h.b16 %v1408
        %v1949 = vunpack.c.l.b16 %v1409
        %v1950 = vunpack.c.l.b16 %v1410
        %v1951 = vunpack.c.h.b16 %v1410
        %v1952 = vunpack.c.l.b16 %v1411
        %v1953 = vunpack.c.h.b16 %v1411
        %v1954 = vunpack.c.l.b16 %v1412
        %v1955 = vunpack.c.h.b16 %v1412
        %v1956 = vunpack.c.l.b16 %v1413
        %v1957 = vunpack.c.h.b16 %v1413
        %v1958 = vunpack.c.l.b16 %v1414
        %v1959 = vunpack.c.l.b16 %v1415
        %v1960 = vunpack.c.h.b16 %v1415
        %v1961 = vunpack.c.l.b16 %v1416
        %v1962 = vunpack.c.h.b16 %v1416
        %v1963 = vunpack.c.l.b16 %v1417
        %v1964 = vunpack.c.h.b16 %v1417
        %v1965 = vunpack.c.l.b16 %v1418
        %v1966 = vunpack.c.h.b16 %v1418
        %v1967 = vunpack.c.l.b16 %v1419
        %v1968 = vunpack.c.l.b16 %v1420
        %v1969 = vunpack.c.h.b16 %v1420
        %v1970 = vunpack.c.l.b16 %v1421
        %v1971 = vunpack.c.h.b16 %v1421
        %v1972 = vunpack.c.l.b16 %v1422
        %v1973 = vunpack.c.h.b16 %v1422
        %v1974 = vunpack.c.l.b16 %v1423
        %v1975 = vunpack.c.h.b16 %v1423
        %v1976 = vunpack.c.l.b16 %v1424
        %v1977 = vunpack.c.l.b16 %v1425
        %v1978 = vunpack.c.h.b16 %v1425
        %v1979 = vunpack.c.l.b16 %v1426
        %v1980 = vunpack.c.h.b16 %v1426
        %v1981 = vunpack.c.l.b16 %v1427
        %v1982 = vunpack.c.h.b16 %v1427
        %v1983 = vunpack.c.l.b16 %v1428
        %v1984 = vunpack.c.h.b16 %v1428
        %v1985 = vunpack.c.l.b16 %v1429
        %v1986 = vunpack.c.l.b16 %v1430
        %v1987 = vunpack.c.h.b16 %v1430
        %v1988 = vunpack.c.l.b16 %v1431
        %v1989 = vunpack.c.h.b16 %v1431
        %v1990 = vunpack.c.l.b16 %v1432
        %v1991 = vunpack.c.h.b16 %v1432
        %v1992 = vunpack.c.l.b16 %v1433
        %v1993 = vunpack.c.h.b16 %v1433
        %v1994 = vunpack.c.l.b16 %v1434
        %v1995 = vunpack.c.l.b16 %v1435
        %v1996 = vunpack.c.h.b16 %v1435
        %v1997 = vunpack.c.l.b16 %v1436
        %v1998 = vunpack.c.h.b16 %v1436
        %v1999 = vunpack.c.l.b16 %v1437
        %v2000 = vunpack.c.h.b16 %v1437
        %v2001 = vunpack.c.l.b16 %v1438
        %v2002 = vunpack.c.h.b16 %v1438
        %v2003 = vunpack.c.l.b16 %v1439
        %v2004 = vunpack.c.l.b16 %v1440
        %v2005 = vunpack.c.h.b16 %v1440
        %v2006 = vunpack.c.l.b16 %v1441
        %v2007 = vunpack.c.h.b16 %v1441
        %v2008 = vunpack.c.l.b16 %v1442
        %v2009 = vunpack.c.h.b16 %v1442
        %v2010 = vunpack.c.l.b16 %v1443
        %v2011 = vunpack.c.h.b16 %v1443
        %v2012 = vunpack.c.l.b16 %v1444
        %v2013 = vunpack.c.l.b16 %v1445
        %v2014 = vunpack.c.h.b16 %v1445
        %v2015 = vunpack.c.l.b16 %v1446
        %v2016 = vunpack.c.h.b16 %v1446
        %v2017 = vunpack.c.l.b16 %v1447
        %v2018 = vunpack.c.h.b16 %v1447
        %v2019 = vunpack.c.l.b16 %v1448
        %v2020 = vunpack.c.h.b16 %v1448
        %v2021 = vunpack.c.l.b16 %v1449
        %v2022 = vunpack.c.l.b16 %v1450
        %v2023 = vunpack.c.h.b16 %v1450
        %v2024 = vunpack.c.l.b16 %v1451
        %v2025 = vunpack.c.h.b16 %v1451
        %v2026 = vunpack.c.l.b16 %v1452
        %v2027 = vunpack.c.h.b16 %v1452
        %v2028 = vunpack.c.l.b16 %v1453
        %v2029 = vunpack.c.h.b16 %v1453
        %v2030 = vunpack.c.l.b16 %v1454
        %v2031 = vunpack.c.l.b16 %v1455
        %v2032 = vunpack.c.h.b16 %v1455
        %v2033 = vunpack.c.l.b16 %v1456
        %v2034 = vunpack.c.h.b16 %v1456
        %v2035 = vunpack.c.l.b16 %v1457
        %v2036 = vunpack.c.h.b16 %v1457
        %v2037 = vunpack.c.l.b16 %v1458
        %v2038 = vunpack.c.h.b16 %v1458
        %v2039 = vunpack.c.l.b16 %v1459
        %v2040 = vunpack.c.l.b16 %v1460
        %v2041 = vunpack.c.h.b16 %v1460
        %v2042 = vunpack.c.l.b16 %v1461
        %v2043 = vunpack.c.h.b16 %v1461
        %v2044 = vunpack.c.l.b16 %v1462
        %v2045 = vunpack.c.h.b16 %v1462
        %v2046 = vunpack.c.l.b16 %v1463
        %v2047 = vunpack.c.h.b16 %v1463
        %v2048 = vunpack.c.l.b16 %v1464
        %v2049 = vunpack.c.l.b16 %v1465
        %v2050 = vunpack.c.h.b16 %v1465
        %v2051 = vunpack.c.l.b16 %v1466
        %v2052 = vunpack.c.h.b16 %v1466
        %v2053 = vunpack.c.l.b16 %v1467
        %v2054 = vunpack.c.h.b16 %v1467
        %v2055 = vunpack.c.l.b16 %v1468
        %v2056 = vunpack.c.h.b16 %v1468
        %v2057 = vunpack.c.l.b16 %v1469
        %v2058 = vunpack.c.l.b16 %v1470
        %v2059 = vunpack.c.h.b16 %v1470
        %v2060 = vunpack.c.l.b16 %v1471
        %v2061 = vunpack.c.h.b16 %v1471
        %v2062 = vunpack.c.l.b16 %v1472
        %v2063 = vunpack.c.h.b16 %v1472
        %v2064 = vunpack.c.l.b16 %v1473
        %v2065 = vunpack.c.h.b16 %v1473
        %v2066 = vunpack.c.l.b16 %v1474
        %v2067 = vunpack.c.l.b16 %v1475
        %v2068 = vunpack.c.h.b16 %v1475
        %v2069 = vunpack.c.l.b16 %v1476
        %v2070 = vunpack.c.h.b16 %v1476
        %v2071 = vunpack.c.l.b16 %v1477
        %v2072 = vunpack.c.h.b16 %v1477
        %v2073 = vunpack.c.l.b16 %v1478
        %v2074 = vunpack.c.h.b16 %v1478
        %v2075 = vunpack.c.l.b16 %v1479
        %v2076 = vpack.c.b16 %v1797, %v1788
        %v2077 = vpack.c.b16 %v1798, %v1789
        %v2078 = vpack.c.b16 %v1799, %v1790
        %v2079 = vpack.c.b16 %v1800, %v1791
        %v2080 = vpack.c.b16 %v1801, %v1792
        %v2081 = vpack.c.b16 %v1802, %v1793
        %v2082 = vpack.c.b16 %v1803, %v1794
        %v2083 = vpack.c.b16 %v1804, %v1795
        %v2084 = vpack.c.b16 %v1805, %v1796
        %v2085 = vpack.c.b16 %v1815, %v1806
        %v2086 = vpack.c.b16 %v1816, %v1807
        %v2087 = vpack.c.b16 %v1817, %v1808
        %v2088 = vpack.c.b16 %v1818, %v1809
        %v2089 = vpack.c.b16 %v1819, %v1810
        %v2090 = vpack.c.b16 %v1820, %v1811
        %v2091 = vpack.c.b16 %v1821, %v1812
        %v2092 = vpack.c.b16 %v1822, %v1813
        %v2093 = vpack.c.b16 %v1823, %v1814
        %v2094 = vpack.c.b16 %v1833, %v1824
        %v2095 = vpack.c.b16 %v1834, %v1825
        %v2096 = vpack.c.b16 %v1835, %v1826
        %v2097 = vpack.c.b16 %v1836, %v1827
        %v2098 = vpack.c.b16 %v1837, %v1828
        %v2099 = vpack.c.b16 %v1838, %v1829
        %v2100 = vpack.c.b16 %v1839, %v1830
        %v2101 = vpack.c.b16 %v1840, %v1831
        %v2102 = vpack.c.b16 %v1841, %v1832
        %v2103 = vpack.c.b16 %v1851, %v1842
        %v2104 = vpack.c.b16 %v1852, %v1843
        %v2105 = vpack.c.b16 %v1853, %v1844
        %v2106 = vpack.c.b16 %v1854, %v1845
        %v2107 = vpack.c.b16 %v1855, %v1846
        %v2108 = vpack.c.b16 %v1856, %v1847
        %v2109 = vpack.c.b16 %v1857, %v1848
        %v2110 = vpack.c.b16 %v1858, %v1849
        %v2111 = vpack.c.b16 %v1859, %v1850
        %v2112 = vpack.c.b16 %v1869, %v1860
        %v2113 = vpack.c.b16 %v1870, %v1861
        %v2114 = vpack.c.b16 %v1871, %v1862
        %v2115 = vpack.c.b16 %v1872, %v1863
        %v2116 = vpack.c.b16 %v1873, %v1864
        %v2117 = vpack.c.b16 %v1874, %v1865
        %v2118 = vpack.c.b16 %v1875, %v1866
        %v2119 = vpack.c.b16 %v1876, %v1867
        %v2120 = vpack.c.b16 %v1877, %v1868
        %v2121 = vpack.c.b16 %v1887, %v1878
        %v2122 = vpack.c.b16 %v1888, %v1879
        %v2123 = vpack.c.b16 %v1889, %v1880
        %v2124 = vpack.c.b16 %v1890, %v1881
        %v2125 = vpack.c.b16 %v1891, %v1882
        %v2126 = vpack.c.b16 %v1892, %v1883
        %v2127 = vpack.c.b16 %v1893, %v1884
        %v2128 = vpack.c.b16 %v1894, %v1885
        %v2129 = vpack.c.b16 %v1895, %v1886
        %v2130 = vpack.c.b16 %v1905, %v1896
        %v2131 = vpack.c.b16 %v1906, %v1897
        %v2132 = vpack.c.b16 %v1907, %v1898
        %v2133 = vpack.c.b16 %v1908, %v1899
        %v2134 = vpack.c.b16 %v1909, %v1900
        %v2135 = vpack.c.b16 %v1910, %v1901
        %v2136 = vpack.c.b16 %v1911, %v1902
        %v2137 = vpack.c.b16 %v1912, %v1903
        %v2138 = vpack.c.b16 %v1913, %v1904
        %v2139 = vpack.c.b16 %v1923, %v1914
        %v2140 = vpack.c.b16 %v1924, %v1915
        %v2141 = vpack.c.b16 %v1925, %v1916
        %v2142 = vpack.c.b16 %v1926, %v1917
        %v2143 = vpack.c.b16 %v1927, %v1918
        %v2144 = vpack.c.b16 %v1928, %v1919
        %v2145 = vpack.c.b16 %v1929, %v1920
        %v2146 = vpack.c.b16 %v1930, %v1921
        %v2147 = vpack.c.b16 %v1931, %v1922
        %v2148 = vpack.c.b16 %v1941, %v1932
        %v2149 = vpack.c.b16 %v1942, %v1933
        %v2150 = vpack.c.b16 %v1943, %v1934
        %v2151 = vpack.c.b16 %v1944, %v1935
        %v2152 = vpack.c.b16 %v1945, %v1936
        %v2153 = vpack.c.b16 %v1946, %v1937
        %v2154 = vpack.c.b16 %v1947, %v1938
        %v2155 = vpack.c.b16 %v1948, %v1939
        %v2156 = vpack.c.b16 %v1949, %v1940
        %v2157 = vpack.c.b16 %v1959, %v1950
        %v2158 = vpack.c.b16 %v1960, %v1951
        %v2159 = vpack.c.b16 %v1961, %v1952
        %v2160 = vpack.c.b16 %v1962, %v1953
        %v2161 = vpack.c.b16 %v1963, %v1954
        %v2162 = vpack.c.b16 %v1964, %v1955
        %v2163 = vpack.c.b16 %v1965, %v1956
        %v2164 = vpack.c.b16 %v1966, %v1957
        %v2165 = vpack.c.b16 %v1967, %v1958
        %v2166 = vpack.c.b16 %v1977, %v1968
        %v2167 = vpack.c.b16 %v1978, %v1969
        %v2168 = vpack.c.b16 %v1979, %v1970
        %v2169 = vpack.c.b16 %v1980, %v1971
        %v2170 = vpack.c.b16 %v1981, %v1972
        %v2171 = vpack.c.b16 %v1982, %v1973
        %v2172 = vpack.c.b16 %v1983, %v1974
        %v2173 = vpack.c.b16 %v1984, %v1975
        %v2174 = vpack.c.b16 %v1985, %v1976
        %v2175 = vpack.c.b16 %v1995, %v1986
        %v2176 = vpack.c.b16 %v1996, %v1987
        %v2177 = vpack.c.b16 %v1997, %v1988
        %v2178 = vpack.c.b16 %v1998, %v1989
        %v2179 = vpack.c.b16 %v1999, %v1990
        %v2180 = vpack.c.b16 %v2000, %v1991
        %v2181 = vpack.c.b16 %v2001, %v1992
        %v2182 = vpack.c.b16 %v2002, %v1993
        %v2183 = vpack.c.b16 %v2003, %v1994
        %v2184 = vpack.c.b16 %v2013, %v2004
        %v2185 = vpack.c.b16 %v2014, %v2005
        %v2186 = vpack.c.b16 %v2015, %v2006
        %v2187 = vpack.c.b16 %v2016, %v2007
        %v2188 = vpack.c.b16 %v2017, %v2008
        %v2189 = vpack.c.b16 %v2018, %v2009
        %v2190 = vpack.c.b16 %v2019, %v2010
        %v2191 = vpack.c.b16 %v2020, %v2011
        %v2192 = vpack.c.b16 %v2021, %v2012
        %v2193 = vpack.c.b16 %v2031, %v2022
        %v2194 = vpack.c.b16 %v2032, %v2023
        %v2195 = vpack.c.b16 %v2033, %v2024
        %v2196 = vpack.c.b16 %v2034, %v2025
        %v2197 = vpack.c.b16 %v2035, %v2026
        %v2198 = vpack.c.b16 %v2036, %v2027
        %v2199 = vpack.c.b16 %v2037, %v2028
        %v2200 = vpack.c.b16 %v2038, %v2029
        %v2201 = vpack.c.b16 %v2039, %v2030
        %v2202 = vpack.c.b16 %v2049, %v2040
        %v2203 = vpack.c.b16 %v2050, %v2041
        %v2204 = vpack.c.b16 %v2051, %v2042
        %v2205 = vpack.c.b16 %v2052, %v2043
        %v2206 = vpack.c.b16 %v2053, %v2044
        %v2207 = vpack.c.b16 %v2054, %v2045
        %v2208 = vpack.c.b16 %v2055, %v2046
        %v2209 = vpack.c.b16 %v2056, %v2047
        %v2210 = vpack.c.b16 %v2057, %v2048
        %v2211 = vpack.c.b16 %v2067, %v2058
        %v2212 = vpack.c.b16 %v2068, %v2059
        %v2213 = vpack.c.b16 %v2069, %v2060
        %v2214 = vpack.c.b16 %v2070, %v2061
        %v2215 = vpack.c.b16 %v2071, %v2062
        %v2216 = vpack.c.b16 %v2072, %v2063
        %v2217 = vpack.c.b16 %v2073, %v2064
        %v2218 = vpack.c.b16 %v2074, %v2065
        %v2219 = vpack.c.b16 %v2075, %v2066
        %v2508 = vunpack.c.l.b16 %v1480
        %v2509 = vunpack.c.l.b16 %v1481
        %v2510 = vunpack.c.l.b16 %v1482
        %v2511 = vunpack.c.l.b16 %v1483
        %v2512 = vunpack.c.l.b16 %v1484
        %v2513 = vunpack.c.l.b16 %v1485
        %v2514 = vunpack.c.l.b16 %v1486
        %v2515 = vunpack.c.l.b16 %v1487
        %v2516 = vunpack.c.l.b16 %v1488
        %v2517 = vunpack.c.l.b16 %v1489
        %v2518 = vunpack.c.l.b16 %v1490
        %v2519 = vunpack.c.l.b16 %v1491
        %v2520 = vunpack.c.l.b16 %v1492
        %v2521 = vunpack.c.l.b16 %v1493
        %v2522 = vunpack.c.l.b16 %v1494
        %v2523 = vunpack.c.l.b16 %v1495
        %v2524 = vunpack.c.l.b16 %v1496
        %v2525 = vunpack.c.l.b16 %v1497
        %v2526 = vunpack.c.l.b16 %v1498
        %v2527 = vunpack.c.l.b16 %v1499
        %v2528 = vunpack.c.l.b16 %v1500
        %v2529 = vunpack.c.l.b16 %v1501
        %v2530 = vunpack.c.l.b16 %v1502
        %v2531 = vunpack.c.l.b16 %v1503
        %v2532 = vunpack.c.l.b16 %v1504
        %v2533 = vunpack.c.l.b16 %v1505
        %v2534 = vunpack.c.l.b16 %v1506
        %v2535 = vunpack.c.l.b16 %v1507
        %v2536 = vunpack.c.l.b16 %v1508
        %v2537 = vunpack.c.l.b16 %v1509
        %v2538 = vunpack.c.l.b16 %v1510
        %v2539 = vunpack.c.l.b16 %v1511
        %v2540 = vunpack.c.l.b16 %v1512
        %v2541 = vunpack.c.l.b16 %v1513
        %v2542 = vunpack.c.l.b16 %v1514
        %v2543 = vunpack.c.l.b16 %v1515
        %v2544 = vunpack.c.l.b16 %v1516
        %v2545 = vunpack.c.l.b16 %v1517
        %v2546 = vunpack.c.l.b16 %v1518
        %v2547 = vunpack.c.l.b16 %v1519
        %v2548 = vunpack.c.l.b16 %v1520
        %v2549 = vunpack.c.l.b16 %v1521
        %v2550 = vunpack.c.l.b16 %v1522
        %v2551 = vunpack.c.l.b16 %v1523
        %v2552 = vunpack.c.l.b16 %v1524
        %v2553 = vunpack.c.l.b16 %v1525
        %v2554 = vunpack.c.l.b16 %v1526
        %v2555 = vunpack.c.l.b16 %v1527
        %v2556 = vunpack.c.l.b16 %v1528
        %v2557 = vunpack.c.l.b16 %v1529
        %v2558 = vunpack.c.l.b16 %v1530
        %v2559 = vunpack.c.l.b16 %v1531
        %v2560 = vunpack.c.l.b16 %v1532
        %v2561 = vunpack.c.l.b16 %v1533
        %v2562 = vunpack.c.l.b16 %v1534
        %v2563 = vunpack.c.l.b16 %v1535
        %v2564 = vunpack.c.l.b16 %v1536
        %v2565 = vunpack.c.l.b16 %v1537
        %v2566 = vunpack.c.l.b16 %v1538
        %v2567 = vunpack.c.l.b16 %v1539
        %v2568 = vunpack.c.l.b16 %v1540
        %v2569 = vunpack.c.l.b16 %v1541
        %v2570 = vunpack.c.l.b16 %v1542
        %v2571 = vunpack.c.l.b16 %v1543
        %v2572 = vunpack.c.l.b16 %v1544
        %v2573 = vunpack.c.l.b16 %v1545
        %v2574 = vunpack.c.l.b16 %v1546
        %v2575 = vunpack.c.l.b16 %v1547
        %v2576 = vunpack.c.l.b16 %v1548
        %v2577 = vunpack.c.l.b16 %v1549
        %v2578 = vunpack.c.l.b16 %v1550
        %v2579 = vunpack.c.l.b16 %v1551
        %v2580 = vunpack.c.l.b16 %v1552
        %v2581 = vunpack.c.l.b16 %v1553
        %v2582 = vunpack.c.l.b16 %v1554
        %v2583 = vunpack.c.l.b16 %v1555
        %v2584 = vunpack.c.l.b16 %v1556
        %v2585 = vunpack.c.l.b16 %v1557
        %v2586 = vunpack.c.l.b16 %v1558
        %v2587 = vunpack.c.l.b16 %v1559
        %v2588 = vunpack.c.l.b16 %v1560
        %v2589 = vunpack.c.l.b16 %v1561
        %v2590 = vunpack.c.l.b16 %v1562
        %v2591 = vunpack.c.l.b16 %v1563
        %v2592 = vunpack.c.l.b16 %v1564
        %v2593 = vunpack.c.l.b16 %v1565
        %v2594 = vunpack.c.l.b16 %v1566
        %v2595 = vunpack.c.l.b16 %v1567
        %v2596 = vunpack.c.l.b16 %v1568
        %v2597 = vunpack.c.l.b16 %v1569
        %v2598 = vunpack.c.l.b16 %v1570
        %v2599 = vunpack.c.l.b16 %v1571
        %v2600 = vunpack.c.l.b16 %v1572
        %v2601 = vunpack.c.l.b16 %v1573
        %v2602 = vunpack.c.l.b16 %v1574
        %v2603 = vunpack.c.l.b16 %v1575
        %v2604 = vunpack.c.l.b16 %v1576
        %v2605 = vunpack.c.l.b16 %v1577
        %v2606 = vunpack.c.l.b16 %v1578
        %v2607 = vunpack.c.l.b16 %v1579
        %v2608 = vunpack.c.l.b16 %v1580
        %v2609 = vunpack.c.l.b16 %v1581
        %v2610 = vunpack.c.l.b16 %v1582
        %v2611 = vunpack.c.l.b16 %v1583
        %v2612 = vunpack.c.l.b16 %v1584
        %v2613 = vunpack.c.l.b16 %v1585
        %v2614 = vunpack.c.l.b16 %v1586
        %v2615 = vunpack.c.l.b16 %v1587
        %v2616 = vunpack.c.l.b16 %v1588
        %v2617 = vunpack.c.l.b16 %v1589
        %v2618 = vunpack.c.l.b16 %v1590
        %v2619 = vunpack.c.l.b16 %v1591
        %v2620 = vunpack.c.l.b16 %v1592
        %v2621 = vunpack.c.l.b16 %v1593
        %v2622 = vunpack.c.l.b16 %v1594
        %v2623 = vunpack.c.l.b16 %v1595
        %v2624 = vunpack.c.l.b16 %v1596
        %v2625 = vunpack.c.l.b16 %v1597
        %v2626 = vunpack.c.l.b16 %v1598
        %v2627 = vunpack.c.l.b16 %v1599
        %v2628 = vunpack.c.l.b16 %v1600
        %v2629 = vunpack.c.l.b16 %v1601
        %v2630 = vunpack.c.l.b16 %v1602
        %v2631 = vunpack.c.l.b16 %v1603
        %v2632 = vunpack.c.l.b16 %v1604
        %v2633 = vunpack.c.l.b16 %v1605
        %v2634 = vunpack.c.l.b16 %v1606
        %v2635 = vunpack.c.l.b16 %v1607
        %v2636 = vunpack.c.l.b16 %v1608
        %v2637 = vunpack.c.l.b16 %v1609
        %v2638 = vunpack.c.l.b16 %v1610
        %v2639 = vunpack.c.l.b16 %v1611
        %v2640 = vunpack.c.l.b16 %v1612
        %v2641 = vunpack.c.l.b16 %v1613
        %v2642 = vunpack.c.l.b16 %v1614
        %v2643 = vunpack.c.l.b16 %v1615
        %v2644 = vunpack.c.l.b16 %v1616
        %v2645 = vunpack.c.l.b16 %v1617
        %v2646 = vunpack.c.l.b16 %v1618
        %v2647 = vunpack.c.l.b16 %v1619
        %v2648 = vunpack.c.l.b16 %v1620
        %v2649 = vunpack.c.l.b16 %v1621
        %v2650 = vunpack.c.l.b16 %v1622
        %v2651 = vunpack.c.l.b16 %v1623
        %v2652 = vpack.c.b16 %v2509, %v2508
        %v2653 = vpack.c.b16 %v2511, %v2510
        %v2654 = vpack.c.b16 %v2513, %v2512
        %v2655 = vpack.c.b16 %v2515, %v2514
        %v2656 = vpack.c.b16 %v2517, %v2516
        %v2657 = vpack.c.b16 %v2519, %v2518
        %v2658 = vpack.c.b16 %v2521, %v2520
        %v2659 = vpack.c.b16 %v2523, %v2522
        %v2660 = vpack.c.b16 %v2525, %v2524
        %v2661 = vpack.c.b16 %v2527, %v2526
        %v2662 = vpack.c.b16 %v2529, %v2528
        %v2663 = vpack.c.b16 %v2531, %v2530
        %v2664 = vpack.c.b16 %v2533, %v2532
        %v2665 = vpack.c.b16 %v2535, %v2534
        %v2666 = vpack.c.b16 %v2537, %v2536
        %v2667 = vpack.c.b16 %v2539, %v2538
        %v2668 = vpack.c.b16 %v2541, %v2540
        %v2669 = vpack.c.b16 %v2543, %v2542
        %v2670 = vpack.c.b16 %v2545, %v2544
        %v2671 = vpack.c.b16 %v2547, %v2546
        %v2672 = vpack.c.b16 %v2549, %v2548
        %v2673 = vpack.c.b16 %v2551, %v2550
        %v2674 = vpack.c.b16 %v2553, %v2552
        %v2675 = vpack.c.b16 %v2555, %v2554
        %v2676 = vpack.c.b16 %v2557, %v2556
        %v2677 = vpack.c.b16 %v2559, %v2558
        %v2678 = vpack.c.b16 %v2561, %v2560
        %v2679 = vpack.c.b16 %v2563, %v2562
        %v2680 = vpack.c.b16 %v2565, %v2564
        %v2681 = vpack.c.b16 %v2567, %v2566
        %v2682 = vpack.c.b16 %v2569, %v2568
        %v2683 = vpack.c.b16 %v2571, %v2570
        %v2684 = vpack.c.b16 %v2573, %v2572
        %v2685 = vpack.c.b16 %v2575, %v2574
        %v2686 = vpack.c.b16 %v2577, %v2576
        %v2687 = vpack.c.b16 %v2579, %v2578
        %v2688 = vpack.c.b16 %v2581, %v2580
        %v2689 = vpack.c.b16 %v2583, %v2582
        %v2690 = vpack.c.b16 %v2585, %v2584
        %v2691 = vpack.c.b16 %v2587, %v2586
        %v2692 = vpack.c.b16 %v2589, %v2588
        %v2693 = vpack.c.b16 %v2591, %v2590
        %v2694 = vpack.c.b16 %v2593, %v2592
        %v2695 = vpack.c.b16 %v2595, %v2594
        %v2696 = vpack.c.b16 %v2597, %v2596
        %v2697 = vpack.c.b16 %v2599, %v2598
        %v2698 = vpack.c.b16 %v2601, %v2600
        %v2699 = vpack.c.b16 %v2603, %v2602
        %v2700 = vpack.c.b16 %v2605, %v2604
        %v2701 = vpack.c.b16 %v2607, %v2606
        %v2702 = vpack.c.b16 %v2609, %v2608
        %v2703 = vpack.c.b16 %v2611, %v2610
        %v2704 = vpack.c.b16 %v2613, %v2612
        %v2705 = vpack.c.b16 %v2615, %v2614
        %v2706 = vpack.c.b16 %v2617, %v2616
        %v2707 = vpack.c.b16 %v2619, %v2618
        %v2708 = vpack.c.b16 %v2621, %v2620
        %v2709 = vpack.c.b16 %v2623, %v2622
        %v2710 = vpack.c.b16 %v2625, %v2624
        %v2711 = vpack.c.b16 %v2627, %v2626
        %v2712 = vpack.c.b16 %v2629, %v2628
        %v2713 = vpack.c.b16 %v2631, %v2630
        %v2714 = vpack.c.b16 %v2633, %v2632
        %v2715 = vpack.c.b16 %v2635, %v2634
        %v2716 = vpack.c.b16 %v2637, %v2636
        %v2717 = vpack.c.b16 %v2639, %v2638
        %v2718 = vpack.c.b16 %v2641, %v2640
        %v2719 = vpack.c.b16 %v2643, %v2642
        %v2720 = vpack.c.b16 %v2645, %v2644
        %v2721 = vpack.c.b16 %v2647, %v2646
        %v2722 = vpack.c.b16 %v2649, %v2648
        %v2723 = vpack.c.b16 %v2651, %v2650
        %2796 = vmatpush.bf16.msra.mxu0 %v2659
        %2797 = vmatpush.bf16.msra.mxu0 %v2658
        %2798 = vmatpush.bf16.msra.mxu0 %v2657
        %2799 = vmatpush.bf16.msra.mxu0 %v2656
        %2800 = vmatpush.bf16.msra.mxu0 %v2655
        %2801 = vmatpush.bf16.msra.mxu0 %v2654
        %2802 = vmatpush.bf16.msra.mxu0 %v2653
        %2803 = vmatpush.bf16.msra.mxu0 %v2652
        %2804 = vmatmul.bf16.gmra.mxu0 %v2076
        %v2805 = vpop.f32.mrf.mxu0
        %v2806 = vadd.f32 %v1626, %v2805
        %v2807 = vpop.f32.mrf.mxu0
        %v2808 = vadd.f32 %v1626, %v2807
        %2809 = vmatmul.bf16.gmra.mxu0 %v2085
        %v2810 = vpop.f32.mrf.mxu0
        %v2811 = vadd.f32 %v1626, %v2810
        %v2812 = vpop.f32.mrf.mxu0
        %v2813 = vadd.f32 %v1626, %v2812
        %2814 = vmatmul.bf16.gmra.mxu0 %v2094
        %v2815 = vpop.f32.mrf.mxu0
        %v2816 = vadd.f32 %v1626, %v2815
        %v2817 = vpop.f32.mrf.mxu0
        %v2818 = vadd.f32 %v1626, %v2817
        %2819 = vmatmul.bf16.gmra.mxu0 %v2103
        %v2820 = vpop.f32.mrf.mxu0
        %v2821 = vadd.f32 %v1626, %v2820
        %v2822 = vpop.f32.mrf.mxu0
        %v2823 = vadd.f32 %v1626, %v2822
        %2824 = vmatmul.bf16.gmra.mxu0 %v2112
        %v2825 = vpop.f32.mrf.mxu0
        %v2826 = vadd.f32 %v1626, %v2825
        %v2827 = vpop.f32.mrf.mxu0
        %v2828 = vadd.f32 %v1626, %v2827
        %2829 = vmatmul.bf16.gmra.mxu0 %v2121
        %v2830 = vpop.f32.mrf.mxu0
        %v2831 = vadd.f32 %v1626, %v2830
        %v2832 = vpop.f32.mrf.mxu0
        %v2833 = vadd.f32 %v1626, %v2832
        %2834 = vmatmul.bf16.gmra.mxu0 %v2130
        %v2835 = vpop.f32.mrf.mxu0
        %v2836 = vadd.f32 %v1626, %v2835
        %v2837 = vpop.f32.mrf.mxu0
        %v2838 = vadd.f32 %v1626, %v2837
        %2839 = vmatmul.bf16.gmra.mxu0 %v2139
        %v2840 = vpop.f32.mrf.mxu0
        %v2841 = vadd.f32 %v1626, %v2840
        %v2842 = vpop.f32.mrf.mxu0
        %v2843 = vadd.f32 %v1626, %v2842
        %2844 = vmatmul.bf16.gmra.mxu0 %v2148
        %v2845 = vpop.f32.mrf.mxu0
        %v2846 = vadd.f32 %v1626, %v2845
        %v2847 = vpop.f32.mrf.mxu0
        %v2848 = vadd.f32 %v1626, %v2847
        %2849 = vmatmul.bf16.gmra.mxu0 %v2157
        %v2850 = vpop.f32.mrf.mxu0
        %v2851 = vadd.f32 %v1626, %v2850
        %v2852 = vpop.f32.mrf.mxu0
        %v2853 = vadd.f32 %v1626, %v2852
        %2854 = vmatmul.bf16.gmra.mxu0 %v2166
        %v2855 = vpop.f32.mrf.mxu0
        %v2856 = vadd.f32 %v1626, %v2855
        %v2857 = vpop.f32.mrf.mxu0
        %v2858 = vadd.f32 %v1626, %v2857
        %2859 = vmatmul.bf16.gmra.mxu0 %v2175
        %v2860 = vpop.f32.mrf.mxu0
        %v2861 = vadd.f32 %v1626, %v2860
        %v2862 = vpop.f32.mrf.mxu0
        %v2863 = vadd.f32 %v1626, %v2862
        %2864 = vmatmul.bf16.gmra.mxu0 %v2184
        %v2865 = vpop.f32.mrf.mxu0
        %v2866 = vadd.f32 %v1626, %v2865
        %v2867 = vpop.f32.mrf.mxu0
        %v2868 = vadd.f32 %v1626, %v2867
        %2869 = vmatmul.bf16.gmra.mxu0 %v2193
        %v2870 = vpop.f32.mrf.mxu0
        %v2871 = vadd.f32 %v1626, %v2870
        %v2872 = vpop.f32.mrf.mxu0
        %v2873 = vadd.f32 %v1626, %v2872
        %2874 = vmatmul.bf16.gmra.mxu0 %v2202
        %v2875 = vpop.f32.mrf.mxu0
        %v2876 = vadd.f32 %v1626, %v2875
        %v2877 = vpop.f32.mrf.mxu0
        %v2878 = vadd.f32 %v1626, %v2877
        %2879 = vmatmul.bf16.gmra.mxu0 %v2211
        %v2880 = vpop.f32.mrf.mxu0
        %v2881 = vadd.f32 %v1626, %v2880
        %v2882 = vpop.f32.mrf.mxu0
        %v2883 = vadd.f32 %v1626, %v2882
        %2884 = vdwg.mxu0
        %2885 = vmatpush.bf16.msra.mxu0 %v2667
        %2886 = vmatpush.bf16.msra.mxu0 %v2666
        %2887 = vmatpush.bf16.msra.mxu0 %v2665
        %2888 = vmatpush.bf16.msra.mxu0 %v2664
        %2889 = vmatpush.bf16.msra.mxu0 %v2663
        %2890 = vmatpush.bf16.msra.mxu0 %v2662
        %2891 = vmatpush.bf16.msra.mxu0 %v2661
        %2892 = vmatpush.bf16.msra.mxu0 %v2660
        %2893 = vmatmul.bf16.gmra.mxu0 %v2077
        %v2894 = vpop.f32.mrf.mxu0
        %v2895 = vadd.f32 %v2806, %v2894
        %v2896 = vpop.f32.mrf.mxu0
        %v2897 = vadd.f32 %v2808, %v2896
        %2898 = vmatmul.bf16.gmra.mxu0 %v2086
        %v2899 = vpop.f32.mrf.mxu0
        %v2900 = vadd.f32 %v2811, %v2899
        %v2901 = vpop.f32.mrf.mxu0
        %v2902 = vadd.f32 %v2813, %v2901
        %2903 = vmatmul.bf16.gmra.mxu0 %v2095
        %v2904 = vpop.f32.mrf.mxu0
        %v2905 = vadd.f32 %v2816, %v2904
        %v2906 = vpop.f32.mrf.mxu0
        %v2907 = vadd.f32 %v2818, %v2906
        %2908 = vmatmul.bf16.gmra.mxu0 %v2104
        %v2909 = vpop.f32.mrf.mxu0
        %v2910 = vadd.f32 %v2821, %v2909
        %v2911 = vpop.f32.mrf.mxu0
        %v2912 = vadd.f32 %v2823, %v2911
        %2913 = vmatmul.bf16.gmra.mxu0 %v2113
        %v2914 = vpop.f32.mrf.mxu0
        %v2915 = vadd.f32 %v2826, %v2914
        %v2916 = vpop.f32.mrf.mxu0
        %v2917 = vadd.f32 %v2828, %v2916
        %2918 = vmatmul.bf16.gmra.mxu0 %v2122
        %v2919 = vpop.f32.mrf.mxu0
        %v2920 = vadd.f32 %v2831, %v2919
        %v2921 = vpop.f32.mrf.mxu0
        %v2922 = vadd.f32 %v2833, %v2921
        %2923 = vmatmul.bf16.gmra.mxu0 %v2131
        %v2924 = vpop.f32.mrf.mxu0
        %v2925 = vadd.f32 %v2836, %v2924
        %v2926 = vpop.f32.mrf.mxu0
        %v2927 = vadd.f32 %v2838, %v2926
        %2928 = vmatmul.bf16.gmra.mxu0 %v2140
        %v2929 = vpop.f32.mrf.mxu0
        %v2930 = vadd.f32 %v2841, %v2929
        %v2931 = vpop.f32.mrf.mxu0
        %v2932 = vadd.f32 %v2843, %v2931
        %2933 = vmatmul.bf16.gmra.mxu0 %v2149
        %v2934 = vpop.f32.mrf.mxu0
        %v2935 = vadd.f32 %v2846, %v2934
        %v2936 = vpop.f32.mrf.mxu0
        %v2937 = vadd.f32 %v2848, %v2936
        %2938 = vmatmul.bf16.gmra.mxu0 %v2158
        %v2939 = vpop.f32.mrf.mxu0
        %v2940 = vadd.f32 %v2851, %v2939
        %v2941 = vpop.f32.mrf.mxu0
        %v2942 = vadd.f32 %v2853, %v2941
        %2943 = vmatmul.bf16.gmra.mxu0 %v2167
        %v2944 = vpop.f32.mrf.mxu0
        %v2945 = vadd.f32 %v2856, %v2944
        %v2946 = vpop.f32.mrf.mxu0
        %v2947 = vadd.f32 %v2858, %v2946
        %2948 = vmatmul.bf16.gmra.mxu0 %v2176
        %v2949 = vpop.f32.mrf.mxu0
        %v2950 = vadd.f32 %v2861, %v2949
        %v2951 = vpop.f32.mrf.mxu0
        %v2952 = vadd.f32 %v2863, %v2951
        %2953 = vmatmul.bf16.gmra.mxu0 %v2185
        %v2954 = vpop.f32.mrf.mxu0
        %v2955 = vadd.f32 %v2866, %v2954
        %v2956 = vpop.f32.mrf.mxu0
        %v2957 = vadd.f32 %v2868, %v2956
        %2958 = vmatmul.bf16.gmra.mxu0 %v2194
        %v2959 = vpop.f32.mrf.mxu0
        %v2960 = vadd.f32 %v2871, %v2959
        %v2961 = vpop.f32.mrf.mxu0
        %v2962 = vadd.f32 %v2873, %v2961
        %2963 = vmatmul.bf16.gmra.mxu0 %v2203
        %v2964 = vpop.f32.mrf.mxu0
        %v2965 = vadd.f32 %v2876, %v2964
        %v2966 = vpop.f32.mrf.mxu0
        %v2967 = vadd.f32 %v2878, %v2966
        %2968 = vmatmul.bf16.gmra.mxu0 %v2212
        %v2969 = vpop.f32.mrf.mxu0
        %v2970 = vadd.f32 %v2881, %v2969
        %v2971 = vpop.f32.mrf.mxu0
        %v2972 = vadd.f32 %v2883, %v2971
        %2973 = vdwg.mxu0
        %2974 = vmatpush.bf16.msra.mxu0 %v2675
        %2975 = vmatpush.bf16.msra.mxu0 %v2674
        %2976 = vmatpush.bf16.msra.mxu0 %v2673
        %2977 = vmatpush.bf16.msra.mxu0 %v2672
        %2978 = vmatpush.bf16.msra.mxu0 %v2671
        %2979 = vmatpush.bf16.msra.mxu0 %v2670
        %2980 = vmatpush.bf16.msra.mxu0 %v2669
        %2981 = vmatpush.bf16.msra.mxu0 %v2668
        %2982 = vmatmul.bf16.gmra.mxu0 %v2078
        %v2983 = vpop.f32.mrf.mxu0
        %v2984 = vadd.f32 %v2895, %v2983
        %v2985 = vpop.f32.mrf.mxu0
        %v2986 = vadd.f32 %v2897, %v2985
        %2987 = vmatmul.bf16.gmra.mxu0 %v2087
        %v2988 = vpop.f32.mrf.mxu0
        %v2989 = vadd.f32 %v2900, %v2988
        %v2990 = vpop.f32.mrf.mxu0
        %v2991 = vadd.f32 %v2902, %v2990
        %2992 = vmatmul.bf16.gmra.mxu0 %v2096
        %v2993 = vpop.f32.mrf.mxu0
        %v2994 = vadd.f32 %v2905, %v2993
        %v2995 = vpop.f32.mrf.mxu0
        %v2996 = vadd.f32 %v2907, %v2995
        %2997 = vmatmul.bf16.gmra.mxu0 %v2105
        %v2998 = vpop.f32.mrf.mxu0
        %v2999 = vadd.f32 %v2910, %v2998
        %v3000 = vpop.f32.mrf.mxu0
        %v3001 = vadd.f32 %v2912, %v3000
        %3002 = vmatmul.bf16.gmra.mxu0 %v2114
        %v3003 = vpop.f32.mrf.mxu0
        %v3004 = vadd.f32 %v2915, %v3003
        %v3005 = vpop.f32.mrf.mxu0
        %v3006 = vadd.f32 %v2917, %v3005
        %3007 = vmatmul.bf16.gmra.mxu0 %v2123
        %v3008 = vpop.f32.mrf.mxu0
        %v3009 = vadd.f32 %v2920, %v3008
        %v3010 = vpop.f32.mrf.mxu0
        %v3011 = vadd.f32 %v2922, %v3010
        %3012 = vmatmul.bf16.gmra.mxu0 %v2132
        %v3013 = vpop.f32.mrf.mxu0
        %v3014 = vadd.f32 %v2925, %v3013
        %v3015 = vpop.f32.mrf.mxu0
        %v3016 = vadd.f32 %v2927, %v3015
        %3017 = vmatmul.bf16.gmra.mxu0 %v2141
        %v3018 = vpop.f32.mrf.mxu0
        %v3019 = vadd.f32 %v2930, %v3018
        %v3020 = vpop.f32.mrf.mxu0
        %v3021 = vadd.f32 %v2932, %v3020
        %3022 = vmatmul.bf16.gmra.mxu0 %v2150
        %v3023 = vpop.f32.mrf.mxu0
        %v3024 = vadd.f32 %v2935, %v3023
        %v3025 = vpop.f32.mrf.mxu0
        %v3026 = vadd.f32 %v2937, %v3025
        %3027 = vmatmul.bf16.gmra.mxu0 %v2159
        %v3028 = vpop.f32.mrf.mxu0
        %v3029 = vadd.f32 %v2940, %v3028
        %v3030 = vpop.f32.mrf.mxu0
        %v3031 = vadd.f32 %v2942, %v3030
        %3032 = vmatmul.bf16.gmra.mxu0 %v2168
        %v3033 = vpop.f32.mrf.mxu0
        %v3034 = vadd.f32 %v2945, %v3033
        %v3035 = vpop.f32.mrf.mxu0
        %v3036 = vadd.f32 %v2947, %v3035
        %3037 = vmatmul.bf16.gmra.mxu0 %v2177
        %v3038 = vpop.f32.mrf.mxu0
        %v3039 = vadd.f32 %v2950, %v3038
        %v3040 = vpop.f32.mrf.mxu0
        %v3041 = vadd.f32 %v2952, %v3040
        %3042 = vmatmul.bf16.gmra.mxu0 %v2186
        %v3043 = vpop.f32.mrf.mxu0
        %v3044 = vadd.f32 %v2955, %v3043
        %v3045 = vpop.f32.mrf.mxu0
        %v3046 = vadd.f32 %v2957, %v3045
        %3047 = vmatmul.bf16.gmra.mxu0 %v2195
        %v3048 = vpop.f32.mrf.mxu0
        %v3049 = vadd.f32 %v2960, %v3048
        %v3050 = vpop.f32.mrf.mxu0
        %v3051 = vadd.f32 %v2962, %v3050
        %3052 = vmatmul.bf16.gmra.mxu0 %v2204
        %v3053 = vpop.f32.mrf.mxu0
        %v3054 = vadd.f32 %v2965, %v3053
        %v3055 = vpop.f32.mrf.mxu0
        %v3056 = vadd.f32 %v2967, %v3055
        %3057 = vmatmul.bf16.gmra.mxu0 %v2213
        %v3058 = vpop.f32.mrf.mxu0
        %v3059 = vadd.f32 %v2970, %v3058
        %v3060 = vpop.f32.mrf.mxu0
        %v3061 = vadd.f32 %v2972, %v3060
        %3062 = vdwg.mxu0
        %3063 = vmatpush.bf16.msra.mxu0 %v2683
        %3064 = vmatpush.bf16.msra.mxu0 %v2682
        %3065 = vmatpush.bf16.msra.mxu0 %v2681
        %3066 = vmatpush.bf16.msra.mxu0 %v2680
        %3067 = vmatpush.bf16.msra.mxu0 %v2679
        %3068 = vmatpush.bf16.msra.mxu0 %v2678
        %3069 = vmatpush.bf16.msra.mxu0 %v2677
        %3070 = vmatpush.bf16.msra.mxu0 %v2676
        %3071 = vmatmul.bf16.gmra.mxu0 %v2079
        %v3072 = vpop.f32.mrf.mxu0
        %v3073 = vadd.f32 %v2984, %v3072
        %v3074 = vpop.f32.mrf.mxu0
        %v3075 = vadd.f32 %v2986, %v3074
        %3076 = vmatmul.bf16.gmra.mxu0 %v2088
        %v3077 = vpop.f32.mrf.mxu0
        %v3078 = vadd.f32 %v2989, %v3077
        %v3079 = vpop.f32.mrf.mxu0
        %v3080 = vadd.f32 %v2991, %v3079
        %3081 = vmatmul.bf16.gmra.mxu0 %v2097
        %v3082 = vpop.f32.mrf.mxu0
        %v3083 = vadd.f32 %v2994, %v3082
        %v3084 = vpop.f32.mrf.mxu0
        %v3085 = vadd.f32 %v2996, %v3084
        %3086 = vmatmul.bf16.gmra.mxu0 %v2106
        %v3087 = vpop.f32.mrf.mxu0
        %v3088 = vadd.f32 %v2999, %v3087
        %v3089 = vpop.f32.mrf.mxu0
        %v3090 = vadd.f32 %v3001, %v3089
        %3091 = vmatmul.bf16.gmra.mxu0 %v2115
        %v3092 = vpop.f32.mrf.mxu0
        %v3093 = vadd.f32 %v3004, %v3092
        %v3094 = vpop.f32.mrf.mxu0
        %v3095 = vadd.f32 %v3006, %v3094
        %3096 = vmatmul.bf16.gmra.mxu0 %v2124
        %v3097 = vpop.f32.mrf.mxu0
        %v3098 = vadd.f32 %v3009, %v3097
        %v3099 = vpop.f32.mrf.mxu0
        %v3100 = vadd.f32 %v3011, %v3099
        %3101 = vmatmul.bf16.gmra.mxu0 %v2133
        %v3102 = vpop.f32.mrf.mxu0
        %v3103 = vadd.f32 %v3014, %v3102
        %v3104 = vpop.f32.mrf.mxu0
        %v3105 = vadd.f32 %v3016, %v3104
        %3106 = vmatmul.bf16.gmra.mxu0 %v2142
        %v3107 = vpop.f32.mrf.mxu0
        %v3108 = vadd.f32 %v3019, %v3107
        %v3109 = vpop.f32.mrf.mxu0
        %v3110 = vadd.f32 %v3021, %v3109
        %3111 = vmatmul.bf16.gmra.mxu0 %v2151
        %v3112 = vpop.f32.mrf.mxu0
        %v3113 = vadd.f32 %v3024, %v3112
        %v3114 = vpop.f32.mrf.mxu0
        %v3115 = vadd.f32 %v3026, %v3114
        %3116 = vmatmul.bf16.gmra.mxu0 %v2160
        %v3117 = vpop.f32.mrf.mxu0
        %v3118 = vadd.f32 %v3029, %v3117
        %v3119 = vpop.f32.mrf.mxu0
        %v3120 = vadd.f32 %v3031, %v3119
        %3121 = vmatmul.bf16.gmra.mxu0 %v2169
        %v3122 = vpop.f32.mrf.mxu0
        %v3123 = vadd.f32 %v3034, %v3122
        %v3124 = vpop.f32.mrf.mxu0
        %v3125 = vadd.f32 %v3036, %v3124
        %3126 = vmatmul.bf16.gmra.mxu0 %v2178
        %v3127 = vpop.f32.mrf.mxu0
        %v3128 = vadd.f32 %v3039, %v3127
        %v3129 = vpop.f32.mrf.mxu0
        %v3130 = vadd.f32 %v3041, %v3129
        %3131 = vmatmul.bf16.gmra.mxu0 %v2187
        %v3132 = vpop.f32.mrf.mxu0
        %v3133 = vadd.f32 %v3044, %v3132
        %v3134 = vpop.f32.mrf.mxu0
        %v3135 = vadd.f32 %v3046, %v3134
        %3136 = vmatmul.bf16.gmra.mxu0 %v2196
        %v3137 = vpop.f32.mrf.mxu0
        %v3138 = vadd.f32 %v3049, %v3137
        %v3139 = vpop.f32.mrf.mxu0
        %v3140 = vadd.f32 %v3051, %v3139
        %3141 = vmatmul.bf16.gmra.mxu0 %v2205
        %v3142 = vpop.f32.mrf.mxu0
        %v3143 = vadd.f32 %v3054, %v3142
        %v3144 = vpop.f32.mrf.mxu0
        %v3145 = vadd.f32 %v3056, %v3144
        %3146 = vmatmul.bf16.gmra.mxu0 %v2214
        %v3147 = vpop.f32.mrf.mxu0
        %v3148 = vadd.f32 %v3059, %v3147
        %v3149 = vpop.f32.mrf.mxu0
        %v3150 = vadd.f32 %v3061, %v3149
        %3151 = vdwg.mxu0
        %3152 = vmatpush.bf16.msra.mxu0 %v2691
        %3153 = vmatpush.bf16.msra.mxu0 %v2690
        %3154 = vmatpush.bf16.msra.mxu0 %v2689
        %3155 = vmatpush.bf16.msra.mxu0 %v2688
        %3156 = vmatpush.bf16.msra.mxu0 %v2687
        %3157 = vmatpush.bf16.msra.mxu0 %v2686
        %3158 = vmatpush.bf16.msra.mxu0 %v2685
        %3159 = vmatpush.bf16.msra.mxu0 %v2684
        %3160 = vmatmul.bf16.gmra.mxu0 %v2080
        %v3161 = vpop.f32.mrf.mxu0
        %v3162 = vadd.f32 %v3073, %v3161
        %v3163 = vpop.f32.mrf.mxu0
        %v3164 = vadd.f32 %v3075, %v3163
        %3165 = vmatmul.bf16.gmra.mxu0 %v2089
        %v3166 = vpop.f32.mrf.mxu0
        %v3167 = vadd.f32 %v3078, %v3166
        %v3168 = vpop.f32.mrf.mxu0
        %v3169 = vadd.f32 %v3080, %v3168
        %3170 = vmatmul.bf16.gmra.mxu0 %v2098
        %v3171 = vpop.f32.mrf.mxu0
        %v3172 = vadd.f32 %v3083, %v3171
        %v3173 = vpop.f32.mrf.mxu0
        %v3174 = vadd.f32 %v3085, %v3173
        %3175 = vmatmul.bf16.gmra.mxu0 %v2107
        %v3176 = vpop.f32.mrf.mxu0
        %v3177 = vadd.f32 %v3088, %v3176
        %v3178 = vpop.f32.mrf.mxu0
        %v3179 = vadd.f32 %v3090, %v3178
        %3180 = vmatmul.bf16.gmra.mxu0 %v2116
        %v3181 = vpop.f32.mrf.mxu0
        %v3182 = vadd.f32 %v3093, %v3181
        %v3183 = vpop.f32.mrf.mxu0
        %v3184 = vadd.f32 %v3095, %v3183
        %3185 = vmatmul.bf16.gmra.mxu0 %v2125
        %v3186 = vpop.f32.mrf.mxu0
        %v3187 = vadd.f32 %v3098, %v3186
        %v3188 = vpop.f32.mrf.mxu0
        %v3189 = vadd.f32 %v3100, %v3188
        %3190 = vmatmul.bf16.gmra.mxu0 %v2134
        %v3191 = vpop.f32.mrf.mxu0
        %v3192 = vadd.f32 %v3103, %v3191
        %v3193 = vpop.f32.mrf.mxu0
        %v3194 = vadd.f32 %v3105, %v3193
        %3195 = vmatmul.bf16.gmra.mxu0 %v2143
        %v3196 = vpop.f32.mrf.mxu0
        %v3197 = vadd.f32 %v3108, %v3196
        %v3198 = vpop.f32.mrf.mxu0
        %v3199 = vadd.f32 %v3110, %v3198
        %3200 = vmatmul.bf16.gmra.mxu0 %v2152
        %v3201 = vpop.f32.mrf.mxu0
        %v3202 = vadd.f32 %v3113, %v3201
        %v3203 = vpop.f32.mrf.mxu0
        %v3204 = vadd.f32 %v3115, %v3203
        %3205 = vmatmul.bf16.gmra.mxu0 %v2161
        %v3206 = vpop.f32.mrf.mxu0
        %v3207 = vadd.f32 %v3118, %v3206
        %v3208 = vpop.f32.mrf.mxu0
        %v3209 = vadd.f32 %v3120, %v3208
        %3210 = vmatmul.bf16.gmra.mxu0 %v2170
        %v3211 = vpop.f32.mrf.mxu0
        %v3212 = vadd.f32 %v3123, %v3211
        %v3213 = vpop.f32.mrf.mxu0
        %v3214 = vadd.f32 %v3125, %v3213
        %3215 = vmatmul.bf16.gmra.mxu0 %v2179
        %v3216 = vpop.f32.mrf.mxu0
        %v3217 = vadd.f32 %v3128, %v3216
        %v3218 = vpop.f32.mrf.mxu0
        %v3219 = vadd.f32 %v3130, %v3218
        %3220 = vmatmul.bf16.gmra.mxu0 %v2188
        %v3221 = vpop.f32.mrf.mxu0
        %v3222 = vadd.f32 %v3133, %v3221
        %v3223 = vpop.f32.mrf.mxu0
        %v3224 = vadd.f32 %v3135, %v3223
        %3225 = vmatmul.bf16.gmra.mxu0 %v2197
        %v3226 = vpop.f32.mrf.mxu0
        %v3227 = vadd.f32 %v3138, %v3226
        %v3228 = vpop.f32.mrf.mxu0
        %v3229 = vadd.f32 %v3140, %v3228
        %3230 = vmatmul.bf16.gmra.mxu0 %v2206
        %v3231 = vpop.f32.mrf.mxu0
        %v3232 = vadd.f32 %v3143, %v3231
        %v3233 = vpop.f32.mrf.mxu0
        %v3234 = vadd.f32 %v3145, %v3233
        %3235 = vmatmul.bf16.gmra.mxu0 %v2215
        %v3236 = vpop.f32.mrf.mxu0
        %v3237 = vadd.f32 %v3148, %v3236
        %v3238 = vpop.f32.mrf.mxu0
        %v3239 = vadd.f32 %v3150, %v3238
        %3240 = vdwg.mxu0
        %3241 = vmatpush.bf16.msra.mxu0 %v2699
        %3242 = vmatpush.bf16.msra.mxu0 %v2698
        %3243 = vmatpush.bf16.msra.mxu0 %v2697
        %3244 = vmatpush.bf16.msra.mxu0 %v2696
        %3245 = vmatpush.bf16.msra.mxu0 %v2695
        %3246 = vmatpush.bf16.msra.mxu0 %v2694
        %3247 = vmatpush.bf16.msra.mxu0 %v2693
        %3248 = vmatpush.bf16.msra.mxu0 %v2692
        %3249 = vmatmul.bf16.gmra.mxu0 %v2081
        %v3250 = vpop.f32.mrf.mxu0
        %v3251 = vadd.f32 %v3162, %v3250
        %v3252 = vpop.f32.mrf.mxu0
        %v3253 = vadd.f32 %v3164, %v3252
        %3254 = vmatmul.bf16.gmra.mxu0 %v2090
        %v3255 = vpop.f32.mrf.mxu0
        %v3256 = vadd.f32 %v3167, %v3255
        %v3257 = vpop.f32.mrf.mxu0
        %v3258 = vadd.f32 %v3169, %v3257
        %3259 = vmatmul.bf16.gmra.mxu0 %v2099
        %v3260 = vpop.f32.mrf.mxu0
        %v3261 = vadd.f32 %v3172, %v3260
        %v3262 = vpop.f32.mrf.mxu0
        %v3263 = vadd.f32 %v3174, %v3262
        %3264 = vmatmul.bf16.gmra.mxu0 %v2108
        %v3265 = vpop.f32.mrf.mxu0
        %v3266 = vadd.f32 %v3177, %v3265
        %v3267 = vpop.f32.mrf.mxu0
        %v3268 = vadd.f32 %v3179, %v3267
        %3269 = vmatmul.bf16.gmra.mxu0 %v2117
        %v3270 = vpop.f32.mrf.mxu0
        %v3271 = vadd.f32 %v3182, %v3270
        %v3272 = vpop.f32.mrf.mxu0
        %v3273 = vadd.f32 %v3184, %v3272
        %3274 = vmatmul.bf16.gmra.mxu0 %v2126
        %v3275 = vpop.f32.mrf.mxu0
        %v3276 = vadd.f32 %v3187, %v3275
        %v3277 = vpop.f32.mrf.mxu0
        %v3278 = vadd.f32 %v3189, %v3277
        %3279 = vmatmul.bf16.gmra.mxu0 %v2135
        %v3280 = vpop.f32.mrf.mxu0
        %v3281 = vadd.f32 %v3192, %v3280
        %v3282 = vpop.f32.mrf.mxu0
        %v3283 = vadd.f32 %v3194, %v3282
        %3284 = vmatmul.bf16.gmra.mxu0 %v2144
        %v3285 = vpop.f32.mrf.mxu0
        %v3286 = vadd.f32 %v3197, %v3285
        %v3287 = vpop.f32.mrf.mxu0
        %v3288 = vadd.f32 %v3199, %v3287
        %3289 = vmatmul.bf16.gmra.mxu0 %v2153
        %v3290 = vpop.f32.mrf.mxu0
        %v3291 = vadd.f32 %v3202, %v3290
        %v3292 = vpop.f32.mrf.mxu0
        %v3293 = vadd.f32 %v3204, %v3292
        %3294 = vmatmul.bf16.gmra.mxu0 %v2162
        %v3295 = vpop.f32.mrf.mxu0
        %v3296 = vadd.f32 %v3207, %v3295
        %v3297 = vpop.f32.mrf.mxu0
        %v3298 = vadd.f32 %v3209, %v3297
        %3299 = vmatmul.bf16.gmra.mxu0 %v2171
        %v3300 = vpop.f32.mrf.mxu0
        %v3301 = vadd.f32 %v3212, %v3300
        %v3302 = vpop.f32.mrf.mxu0
        %v3303 = vadd.f32 %v3214, %v3302
        %3304 = vmatmul.bf16.gmra.mxu0 %v2180
        %v3305 = vpop.f32.mrf.mxu0
        %v3306 = vadd.f32 %v3217, %v3305
        %v3307 = vpop.f32.mrf.mxu0
        %v3308 = vadd.f32 %v3219, %v3307
        %3309 = vmatmul.bf16.gmra.mxu0 %v2189
        %v3310 = vpop.f32.mrf.mxu0
        %v3311 = vadd.f32 %v3222, %v3310
        %v3312 = vpop.f32.mrf.mxu0
        %v3313 = vadd.f32 %v3224, %v3312
        %3314 = vmatmul.bf16.gmra.mxu0 %v2198
        %v3315 = vpop.f32.mrf.mxu0
        %v3316 = vadd.f32 %v3227, %v3315
        %v3317 = vpop.f32.mrf.mxu0
        %v3318 = vadd.f32 %v3229, %v3317
        %3319 = vmatmul.bf16.gmra.mxu0 %v2207
        %v3320 = vpop.f32.mrf.mxu0
        %v3321 = vadd.f32 %v3232, %v3320
        %v3322 = vpop.f32.mrf.mxu0
        %v3323 = vadd.f32 %v3234, %v3322
        %3324 = vmatmul.bf16.gmra.mxu0 %v2216
        %v3325 = vpop.f32.mrf.mxu0
        %v3326 = vadd.f32 %v3237, %v3325
        %v3327 = vpop.f32.mrf.mxu0
        %v3328 = vadd.f32 %v3239, %v3327
        %3329 = vdwg.mxu0
        %3330 = vmatpush.bf16.msra.mxu0 %v2707
        %3331 = vmatpush.bf16.msra.mxu0 %v2706
        %3332 = vmatpush.bf16.msra.mxu0 %v2705
        %3333 = vmatpush.bf16.msra.mxu0 %v2704
        %3334 = vmatpush.bf16.msra.mxu0 %v2703
        %3335 = vmatpush.bf16.msra.mxu0 %v2702
        %3336 = vmatpush.bf16.msra.mxu0 %v2701
        %3337 = vmatpush.bf16.msra.mxu0 %v2700
        %3338 = vmatmul.bf16.gmra.mxu0 %v2082
        %v3339 = vpop.f32.mrf.mxu0
        %v3340 = vadd.f32 %v3251, %v3339
        %v3341 = vpop.f32.mrf.mxu0
        %v3342 = vadd.f32 %v3253, %v3341
        %3343 = vmatmul.bf16.gmra.mxu0 %v2091
        %v3344 = vpop.f32.mrf.mxu0
        %v3345 = vadd.f32 %v3256, %v3344
        %v3346 = vpop.f32.mrf.mxu0
        %v3347 = vadd.f32 %v3258, %v3346
        %3348 = vmatmul.bf16.gmra.mxu0 %v2100
        %v3349 = vpop.f32.mrf.mxu0
        %v3350 = vadd.f32 %v3261, %v3349
        %v3351 = vpop.f32.mrf.mxu0
        %v3352 = vadd.f32 %v3263, %v3351
        %3353 = vmatmul.bf16.gmra.mxu0 %v2109
        %v3354 = vpop.f32.mrf.mxu0
        %v3355 = vadd.f32 %v3266, %v3354
        %v3356 = vpop.f32.mrf.mxu0
        %v3357 = vadd.f32 %v3268, %v3356
        %3358 = vmatmul.bf16.gmra.mxu0 %v2118
        %v3359 = vpop.f32.mrf.mxu0
        %v3360 = vadd.f32 %v3271, %v3359
        %v3361 = vpop.f32.mrf.mxu0
        %v3362 = vadd.f32 %v3273, %v3361
        %3363 = vmatmul.bf16.gmra.mxu0 %v2127
        %v3364 = vpop.f32.mrf.mxu0
        %v3365 = vadd.f32 %v3276, %v3364
        %v3366 = vpop.f32.mrf.mxu0
        %v3367 = vadd.f32 %v3278, %v3366
        %3368 = vmatmul.bf16.gmra.mxu0 %v2136
        %v3369 = vpop.f32.mrf.mxu0
        %v3370 = vadd.f32 %v3281, %v3369
        %v3371 = vpop.f32.mrf.mxu0
        %v3372 = vadd.f32 %v3283, %v3371
        %3373 = vmatmul.bf16.gmra.mxu0 %v2145
        %v3374 = vpop.f32.mrf.mxu0
        %v3375 = vadd.f32 %v3286, %v3374
        %v3376 = vpop.f32.mrf.mxu0
        %v3377 = vadd.f32 %v3288, %v3376
        %3378 = vmatmul.bf16.gmra.mxu0 %v2154
        %v3379 = vpop.f32.mrf.mxu0
        %v3380 = vadd.f32 %v3291, %v3379
        %v3381 = vpop.f32.mrf.mxu0
        %v3382 = vadd.f32 %v3293, %v3381
        %3383 = vmatmul.bf16.gmra.mxu0 %v2163
        %v3384 = vpop.f32.mrf.mxu0
        %v3385 = vadd.f32 %v3296, %v3384
        %v3386 = vpop.f32.mrf.mxu0
        %v3387 = vadd.f32 %v3298, %v3386
        %3388 = vmatmul.bf16.gmra.mxu0 %v2172
        %v3389 = vpop.f32.mrf.mxu0
        %v3390 = vadd.f32 %v3301, %v3389
        %v3391 = vpop.f32.mrf.mxu0
        %v3392 = vadd.f32 %v3303, %v3391
        %3393 = vmatmul.bf16.gmra.mxu0 %v2181
        %v3394 = vpop.f32.mrf.mxu0
        %v3395 = vadd.f32 %v3306, %v3394
        %v3396 = vpop.f32.mrf.mxu0
        %v3397 = vadd.f32 %v3308, %v3396
        %3398 = vmatmul.bf16.gmra.mxu0 %v2190
        %v3399 = vpop.f32.mrf.mxu0
        %v3400 = vadd.f32 %v3311, %v3399
        %v3401 = vpop.f32.mrf.mxu0
        %v3402 = vadd.f32 %v3313, %v3401
        %3403 = vmatmul.bf16.gmra.mxu0 %v2199
        %v3404 = vpop.f32.mrf.mxu0
        %v3405 = vadd.f32 %v3316, %v3404
        %v3406 = vpop.f32.mrf.mxu0
        %v3407 = vadd.f32 %v3318, %v3406
        %3408 = vmatmul.bf16.gmra.mxu0 %v2208
        %v3409 = vpop.f32.mrf.mxu0
        %v3410 = vadd.f32 %v3321, %v3409
        %v3411 = vpop.f32.mrf.mxu0
        %v3412 = vadd.f32 %v3323, %v3411
        %3413 = vmatmul.bf16.gmra.mxu0 %v2217
        %v3414 = vpop.f32.mrf.mxu0
        %v3415 = vadd.f32 %v3326, %v3414
        %v3416 = vpop.f32.mrf.mxu0
        %v3417 = vadd.f32 %v3328, %v3416
        %3418 = vdwg.mxu0
        %3419 = vmatpush.bf16.msra.mxu0 %v2715
        %3420 = vmatpush.bf16.msra.mxu0 %v2714
        %3421 = vmatpush.bf16.msra.mxu0 %v2713
        %3422 = vmatpush.bf16.msra.mxu0 %v2712
        %3423 = vmatpush.bf16.msra.mxu0 %v2711
        %3424 = vmatpush.bf16.msra.mxu0 %v2710
        %3425 = vmatpush.bf16.msra.mxu0 %v2709
        %3426 = vmatpush.bf16.msra.mxu0 %v2708
        %3427 = vmatmul.bf16.gmra.mxu0 %v2083
        %v3428 = vpop.f32.mrf.mxu0
        %v3429 = vadd.f32 %v3340, %v3428
        %v3430 = vpop.f32.mrf.mxu0
        %v3431 = vadd.f32 %v3342, %v3430
        %3432 = vmatmul.bf16.gmra.mxu0 %v2092
        %v3433 = vpop.f32.mrf.mxu0
        %v3434 = vadd.f32 %v3345, %v3433
        %v3435 = vpop.f32.mrf.mxu0
        %v3436 = vadd.f32 %v3347, %v3435
        %3437 = vmatmul.bf16.gmra.mxu0 %v2101
        %v3438 = vpop.f32.mrf.mxu0
        %v3439 = vadd.f32 %v3350, %v3438
        %v3440 = vpop.f32.mrf.mxu0
        %v3441 = vadd.f32 %v3352, %v3440
        %3442 = vmatmul.bf16.gmra.mxu0 %v2110
        %v3443 = vpop.f32.mrf.mxu0
        %v3444 = vadd.f32 %v3355, %v3443
        %v3445 = vpop.f32.mrf.mxu0
        %v3446 = vadd.f32 %v3357, %v3445
        %3447 = vmatmul.bf16.gmra.mxu0 %v2119
        %v3448 = vpop.f32.mrf.mxu0
        %v3449 = vadd.f32 %v3360, %v3448
        %v3450 = vpop.f32.mrf.mxu0
        %v3451 = vadd.f32 %v3362, %v3450
        %3452 = vmatmul.bf16.gmra.mxu0 %v2128
        %v3453 = vpop.f32.mrf.mxu0
        %v3454 = vadd.f32 %v3365, %v3453
        %v3455 = vpop.f32.mrf.mxu0
        %v3456 = vadd.f32 %v3367, %v3455
        %3457 = vmatmul.bf16.gmra.mxu0 %v2137
        %v3458 = vpop.f32.mrf.mxu0
        %v3459 = vadd.f32 %v3370, %v3458
        %v3460 = vpop.f32.mrf.mxu0
        %v3461 = vadd.f32 %v3372, %v3460
        %3462 = vmatmul.bf16.gmra.mxu0 %v2146
        %v3463 = vpop.f32.mrf.mxu0
        %v3464 = vadd.f32 %v3375, %v3463
        %v3465 = vpop.f32.mrf.mxu0
        %v3466 = vadd.f32 %v3377, %v3465
        %3467 = vmatmul.bf16.gmra.mxu0 %v2155
        %v3468 = vpop.f32.mrf.mxu0
        %v3469 = vadd.f32 %v3380, %v3468
        %v3470 = vpop.f32.mrf.mxu0
        %v3471 = vadd.f32 %v3382, %v3470
        %3472 = vmatmul.bf16.gmra.mxu0 %v2164
        %v3473 = vpop.f32.mrf.mxu0
        %v3474 = vadd.f32 %v3385, %v3473
        %v3475 = vpop.f32.mrf.mxu0
        %v3476 = vadd.f32 %v3387, %v3475
        %3477 = vmatmul.bf16.gmra.mxu0 %v2173
        %v3478 = vpop.f32.mrf.mxu0
        %v3479 = vadd.f32 %v3390, %v3478
        %v3480 = vpop.f32.mrf.mxu0
        %v3481 = vadd.f32 %v3392, %v3480
        %3482 = vmatmul.bf16.gmra.mxu0 %v2182
        %v3483 = vpop.f32.mrf.mxu0
        %v3484 = vadd.f32 %v3395, %v3483
        %v3485 = vpop.f32.mrf.mxu0
        %v3486 = vadd.f32 %v3397, %v3485
        %3487 = vmatmul.bf16.gmra.mxu0 %v2191
        %v3488 = vpop.f32.mrf.mxu0
        %v3489 = vadd.f32 %v3400, %v3488
        %v3490 = vpop.f32.mrf.mxu0
        %v3491 = vadd.f32 %v3402, %v3490
        %3492 = vmatmul.bf16.gmra.mxu0 %v2200
        %v3493 = vpop.f32.mrf.mxu0
        %v3494 = vadd.f32 %v3405, %v3493
        %v3495 = vpop.f32.mrf.mxu0
        %v3496 = vadd.f32 %v3407, %v3495
        %3497 = vmatmul.bf16.gmra.mxu0 %v2209
        %v3498 = vpop.f32.mrf.mxu0
        %v3499 = vadd.f32 %v3410, %v3498
        %v3500 = vpop.f32.mrf.mxu0
        %v3501 = vadd.f32 %v3412, %v3500
        %3502 = vmatmul.bf16.gmra.mxu0 %v2218
        %v3503 = vpop.f32.mrf.mxu0
        %v3504 = vadd.f32 %v3415, %v3503
        %v3505 = vpop.f32.mrf.mxu0
        %v3506 = vadd.f32 %v3417, %v3505
        %3507 = vdwg.mxu0
        %3508 = vmatpush.bf16.msra.mxu0 %v2723
        %3509 = vmatpush.bf16.msra.mxu0 %v2722
        %3510 = vmatpush.bf16.msra.mxu0 %v2721
        %3511 = vmatpush.bf16.msra.mxu0 %v2720
        %3512 = vmatpush.bf16.msra.mxu0 %v2719
        %3513 = vmatpush.bf16.msra.mxu0 %v2718
        %3514 = vmatpush.bf16.msra.mxu0 %v2717
        %3515 = vmatpush.bf16.msra.mxu0 %v2716
        %3516 = vmatmul.bf16.gmra.mxu0 %v2084
        %v3517 = vpop.f32.mrf.mxu0
        %v3518 = vadd.f32 %v3429, %v3517
        %v3519 = vpop.f32.mrf.mxu0
        %v3520 = vadd.f32 %v3431, %v3519
        %3521 = vmatmul.bf16.gmra.mxu0 %v2093
        %v3522 = vpop.f32.mrf.mxu0
        %v3523 = vadd.f32 %v3434, %v3522
        %v3524 = vpop.f32.mrf.mxu0
        %v3525 = vadd.f32 %v3436, %v3524
        %3526 = vmatmul.bf16.gmra.mxu0 %v2102
        %v3527 = vpop.f32.mrf.mxu0
        %v3528 = vadd.f32 %v3439, %v3527
        %v3529 = vpop.f32.mrf.mxu0
        %v3530 = vadd.f32 %v3441, %v3529
        %3531 = vmatmul.bf16.gmra.mxu0 %v2111
        %v3532 = vpop.f32.mrf.mxu0
        %v3533 = vadd.f32 %v3444, %v3532
        %v3534 = vpop.f32.mrf.mxu0
        %v3535 = vadd.f32 %v3446, %v3534
        %3536 = vmatmul.bf16.gmra.mxu0 %v2120
        %v3537 = vpop.f32.mrf.mxu0
        %v3538 = vadd.f32 %v3449, %v3537
        %v3539 = vpop.f32.mrf.mxu0
        %v3540 = vadd.f32 %v3451, %v3539
        %3541 = vmatmul.bf16.gmra.mxu0 %v2129
        %v3542 = vpop.f32.mrf.mxu0
        %v3543 = vadd.f32 %v3454, %v3542
        %v3544 = vpop.f32.mrf.mxu0
        %v3545 = vadd.f32 %v3456, %v3544
        %3546 = vmatmul.bf16.gmra.mxu0 %v2138
        %v3547 = vpop.f32.mrf.mxu0
        %v3548 = vadd.f32 %v3459, %v3547
        %v3549 = vpop.f32.mrf.mxu0
        %v3550 = vadd.f32 %v3461, %v3549
        %3551 = vmatmul.bf16.gmra.mxu0 %v2147
        %v3552 = vpop.f32.mrf.mxu0
        %v3553 = vadd.f32 %v3464, %v3552
        %v3554 = vpop.f32.mrf.mxu0
        %v3555 = vadd.f32 %v3466, %v3554
        %3556 = vmatmul.bf16.gmra.mxu0 %v2156
        %v3557 = vpop.f32.mrf.mxu0
        %v3558 = vadd.f32 %v3469, %v3557
        %v3559 = vpop.f32.mrf.mxu0
        %v3560 = vadd.f32 %v3471, %v3559
        %3561 = vmatmul.bf16.gmra.mxu0 %v2165
        %v3562 = vpop.f32.mrf.mxu0
        %v3563 = vadd.f32 %v3474, %v3562
        %v3564 = vpop.f32.mrf.mxu0
        %v3565 = vadd.f32 %v3476, %v3564
        %3566 = vmatmul.bf16.gmra.mxu0 %v2174
        %v3567 = vpop.f32.mrf.mxu0
        %v3568 = vadd.f32 %v3479, %v3567
        %v3569 = vpop.f32.mrf.mxu0
        %v3570 = vadd.f32 %v3481, %v3569
        %3571 = vmatmul.bf16.gmra.mxu0 %v2183
        %v3572 = vpop.f32.mrf.mxu0
        %v3573 = vadd.f32 %v3484, %v3572
        %v3574 = vpop.f32.mrf.mxu0
        %v3575 = vadd.f32 %v3486, %v3574
        %3576 = vmatmul.bf16.gmra.mxu0 %v2192
        %v3577 = vpop.f32.mrf.mxu0
        %v3578 = vadd.f32 %v3489, %v3577
        %v3579 = vpop.f32.mrf.mxu0
        %v3580 = vadd.f32 %v3491, %v3579
        %3581 = vmatmul.bf16.gmra.mxu0 %v2201
        %v3582 = vpop.f32.mrf.mxu0
        %v3583 = vadd.f32 %v3494, %v3582
        %v3584 = vpop.f32.mrf.mxu0
        %v3585 = vadd.f32 %v3496, %v3584
        %3586 = vmatmul.bf16.gmra.mxu0 %v2210
        %v3587 = vpop.f32.mrf.mxu0
        %v3588 = vadd.f32 %v3499, %v3587
        %v3589 = vpop.f32.mrf.mxu0
        %v3590 = vadd.f32 %v3501, %v3589
        %3591 = vmatmul.bf16.gmra.mxu0 %v2219
        %v3592 = vpop.f32.mrf.mxu0
        %v3593 = vadd.f32 %v3504, %v3592
        %v3594 = vpop.f32.mrf.mxu0
        %v3595 = vadd.f32 %v3506, %v3594
        %3596 = vdwg.mxu0
        %v3597 = vadd.f32 %v3518, %v3520
        %v3598 = vadd.f32 %v3597, %v3523
        %v3599 = vadd.f32 %v3598, %v3525
        %v3600 = vadd.f32 %v3599, %v3528
        %v3601 = vadd.f32 %v3600, %v3530
        %v3602 = vadd.f32 %v3601, %v3533
        %v3603 = vadd.f32 %v3602, %v3535
        %v3604 = vadd.f32 %v3603, %v3538
        %v3605 = vadd.f32 %v3604, %v3540
        %v3606 = vadd.f32 %v3605, %v3543
        %v3607 = vadd.f32 %v3606, %v3545
        %v3608 = vadd.f32 %v3607, %v3548
        %v3609 = vadd.f32 %v3608, %v3550
        %v3610 = vadd.f32 %v3609, %v3553
        %v3611 = vadd.f32 %v3610, %v3555
        %v3612 = vadd.f32 %v3611, %v3558
        %v3613 = vadd.f32 %v3612, %v3560
        %v3614 = vadd.f32 %v3613, %v3563
        %v3615 = vadd.f32 %v3614, %v3565
        %v3616 = vadd.f32 %v3615, %v3568
        %v3617 = vadd.f32 %v3616, %v3570
        %v3618 = vadd.f32 %v3617, %v3573
        %v3619 = vadd.f32 %v3618, %v3575
        %v3620 = vadd.f32 %v3619, %v3578
        %v3621 = vadd.f32 %v3620, %v3580
        %v3622 = vadd.f32 %v3621, %v3583
        %v3623 = vadd.f32 %v3622, %v3585
        %v3624 = vadd.f32 %v3623, %v3588
        %v3625 = vadd.f32 %v3624, %v3590
        %v3626 = vadd.f32 %v3625, %v3593
        %v3627 = vadd.f32 %v3626, %v3595
        %3628 = vadd.xlane.f32.xlu0 %v3627
        %v3629 = vpop.xlane.xlu0 %3628
        %v3630 = vrot.slane %v3629, 4
        %v3631 = vadd.f32 %v3629, %v3630
        %v3632 = vrot.slane %v3631, 2
        %v3633 = vadd.f32 %v3631, %v3632
        %v3634 = vrot.slane %v3633, 1
        %v3635 = vadd.f32 %v3633, %v3634
        %s3636 = vtos %v3635
        %s3637 = smul.f32 %s3636, 0.00048828125
        %v3638 = vmul.f32 %v3518, %v3518
        %v3639 = vmul.f32 %v3520, %v3520
        %v3640 = vmul.f32 %v3523, %v3523
        %v3641 = vmul.f32 %v3525, %v3525
        %v3642 = vmul.f32 %v3528, %v3528
        %v3643 = vmul.f32 %v3530, %v3530
        %v3644 = vmul.f32 %v3533, %v3533
        %v3645 = vmul.f32 %v3535, %v3535
        %v3646 = vmul.f32 %v3538, %v3538
        %v3647 = vmul.f32 %v3540, %v3540
        %v3648 = vmul.f32 %v3543, %v3543
        %v3649 = vmul.f32 %v3545, %v3545
        %v3650 = vmul.f32 %v3548, %v3548
        %v3651 = vmul.f32 %v3550, %v3550
        %v3652 = vmul.f32 %v3553, %v3553
        %v3653 = vmul.f32 %v3555, %v3555
        %v3654 = vmul.f32 %v3558, %v3558
        %v3655 = vmul.f32 %v3560, %v3560
        %v3656 = vmul.f32 %v3563, %v3563
        %v3657 = vmul.f32 %v3565, %v3565
        %v3658 = vmul.f32 %v3568, %v3568
        %v3659 = vmul.f32 %v3570, %v3570
        %v3660 = vmul.f32 %v3573, %v3573
        %v3661 = vmul.f32 %v3575, %v3575
        %v3662 = vmul.f32 %v3578, %v3578
        %v3663 = vmul.f32 %v3580, %v3580
        %v3664 = vmul.f32 %v3583, %v3583
        %v3665 = vmul.f32 %v3585, %v3585
        %v3666 = vmul.f32 %v3588, %v3588
        %v3667 = vmul.f32 %v3590, %v3590
        %v3668 = vmul.f32 %v3593, %v3593
        %v3669 = vmul.f32 %v3595, %v3595
        %v3670 = vadd.f32 %v3638, %v3639
        %v3671 = vadd.f32 %v3670, %v3640
        %v3672 = vadd.f32 %v3671, %v3641
        %v3673 = vadd.f32 %v3672, %v3642
        %v3674 = vadd.f32 %v3673, %v3643
        %v3675 = vadd.f32 %v3674, %v3644
        %v3676 = vadd.f32 %v3675, %v3645
        %v3677 = vadd.f32 %v3676, %v3646
        %v3678 = vadd.f32 %v3677, %v3647
        %v3679 = vadd.f32 %v3678, %v3648
        %v3680 = vadd.f32 %v3679, %v3649
        %v3681 = vadd.f32 %v3680, %v3650
        %v3682 = vadd.f32 %v3681, %v3651
        %v3683 = vadd.f32 %v3682, %v3652
        %v3684 = vadd.f32 %v3683, %v3653
        %v3685 = vadd.f32 %v3684, %v3654
        %v3686 = vadd.f32 %v3685, %v3655
        %v3687 = vadd.f32 %v3686, %v3656
        %v3688 = vadd.f32 %v3687, %v3657
        %v3689 = vadd.f32 %v3688, %v3658
        %v3690 = vadd.f32 %v3689, %v3659
        %v3691 = vadd.f32 %v3690, %v3660
        %v3692 = vadd.f32 %v3691, %v3661
        %v3693 = vadd.f32 %v3692, %v3662
        %v3694 = vadd.f32 %v3693, %v3663
        %v3695 = vadd.f32 %v3694, %v3664
        %v3696 = vadd.f32 %v3695, %v3665
        %v3697 = vadd.f32 %v3696, %v3666
        %v3698 = vadd.f32 %v3697, %v3667
        %v3699 = vadd.f32 %v3698, %v3668
        %v3700 = vadd.f32 %v3699, %v3669
        %3701 = vadd.xlane.f32.xlu0 %v3700
        %v3702 = vpop.xlane.xlu0 %3701
        %v3703 = vrot.slane %v3702, 4
        %v3704 = vadd.f32 %v3702, %v3703
        %v3705 = vrot.slane %v3704, 2
        %v3706 = vadd.f32 %v3704, %v3705
        %v3707 = vrot.slane %v3706, 1
        %v3708 = vadd.f32 %v3706, %v3707
        %s3709 = vtos %v3708
        %s3710 = smul.f32 %s3709, 0.00048828125
        %s3711 = smul.f32 %s3637, %s3637
        %s3712 = ssub.f32 %s3710, %s3711
        %s3713 = smax.f32 %s3712, 0.0
        %s3714 = sadd.f32 %s3713, 1e-05
        %v3715 = vstv %s3714
        %v3716 = vrsqrt.pop %v3715
        %v3717 = vmul.f32 %v3716, %v3715
        %v3718 = vmul.f32 %v3717, %v3716
        %v3719 = vmul.f32 0.5, %v3718
        %v3720 = vsub.f32 1.5, %v3719
        %v3721 = vmul.f32 %v3716, %v3720
        %vm3722 = vweird.f32 %v3715
        %vm3723 = vweird.f32 %v3716
        %vm3724 = vmor %vm3722, %vm3723
        %v3725 = vsel %vm3724, %v3716, %v3721
        %s3726 = vtos %v3725
        %v3727 = vld [vmem:[%s3] sm:$0x1]
        %v3728 = vstv %s3726
        %v3729 = vmul.f32 %v3727, %v3728
        %v3730 = vld [vmem:[%s4] sm:$0x1]
        %v3731 = vstv %s3637
        %v3732 = vmul.f32 %v3731, %v3729
        %v3733 = vsub.f32 %v3730, %v3732
        %v3735 = vperm.slane %v3729, 0
        %v3737 = vmul.f32 %v3518, %v3735
        %v3738 = vmul.f32 %v3520, %v3735
        %v3739 = vmul.f32 %v3523, %v3735
        %v3740 = vmul.f32 %v3525, %v3735
        %v3741 = vmul.f32 %v3528, %v3735
        %v3742 = vmul.f32 %v3530, %v3735
        %v3743 = vmul.f32 %v3533, %v3735
        %v3744 = vmul.f32 %v3535, %v3735
        %v3745 = vmul.f32 %v3538, %v3735
        %v3746 = vmul.f32 %v3540, %v3735
        %v3747 = vmul.f32 %v3543, %v3735
        %v3748 = vmul.f32 %v3545, %v3735
        %v3749 = vmul.f32 %v3548, %v3735
        %v3750 = vmul.f32 %v3550, %v3735
        %v3751 = vmul.f32 %v3553, %v3735
        %v3752 = vmul.f32 %v3555, %v3735
        %v3753 = vmul.f32 %v3558, %v3735
        %v3754 = vmul.f32 %v3560, %v3735
        %v3755 = vmul.f32 %v3563, %v3735
        %v3756 = vmul.f32 %v3565, %v3735
        %v3757 = vmul.f32 %v3568, %v3735
        %v3758 = vmul.f32 %v3570, %v3735
        %v3759 = vmul.f32 %v3573, %v3735
        %v3760 = vmul.f32 %v3575, %v3735
        %v3761 = vmul.f32 %v3578, %v3735
        %v3762 = vmul.f32 %v3580, %v3735
        %v3763 = vmul.f32 %v3583, %v3735
        %v3764 = vmul.f32 %v3585, %v3735
        %v3765 = vmul.f32 %v3588, %v3735
        %v3766 = vmul.f32 %v3590, %v3735
        %v3767 = vmul.f32 %v3593, %v3735
        %v3768 = vmul.f32 %v3595, %v3735
        %v3770 = vperm.slane %v3733, 0
        %v3772 = vadd.f32 %v3737, %v3770
        %v3773 = vadd.f32 %v3738, %v3770
        %v3774 = vadd.f32 %v3739, %v3770
        %v3775 = vadd.f32 %v3740, %v3770
        %v3776 = vadd.f32 %v3741, %v3770
        %v3777 = vadd.f32 %v3742, %v3770
        %v3778 = vadd.f32 %v3743, %v3770
        %v3779 = vadd.f32 %v3744, %v3770
        %v3780 = vadd.f32 %v3745, %v3770
        %v3781 = vadd.f32 %v3746, %v3770
        %v3782 = vadd.f32 %v3747, %v3770
        %v3783 = vadd.f32 %v3748, %v3770
        %v3784 = vadd.f32 %v3749, %v3770
        %v3785 = vadd.f32 %v3750, %v3770
        %v3786 = vadd.f32 %v3751, %v3770
        %v3787 = vadd.f32 %v3752, %v3770
        %v3788 = vadd.f32 %v3753, %v3770
        %v3789 = vadd.f32 %v3754, %v3770
        %v3790 = vadd.f32 %v3755, %v3770
        %v3791 = vadd.f32 %v3756, %v3770
        %v3792 = vadd.f32 %v3757, %v3770
        %v3793 = vadd.f32 %v3758, %v3770
        %v3794 = vadd.f32 %v3759, %v3770
        %v3795 = vadd.f32 %v3760, %v3770
        %v3796 = vadd.f32 %v3761, %v3770
        %v3797 = vadd.f32 %v3762, %v3770
        %v3798 = vadd.f32 %v3763, %v3770
        %v3799 = vadd.f32 %v3764, %v3770
        %v3800 = vadd.f32 %v3765, %v3770
        %v3801 = vadd.f32 %v3766, %v3770
        %v3802 = vadd.f32 %v3767, %v3770
        %v3803 = vadd.f32 %v3768, %v3770
        %v3804 = vmax.f32 %v3772, 0.0
        %v3805 = vmax.f32 %v3773, 0.0
        %v3806 = vmax.f32 %v3774, 0.0
        %v3807 = vmax.f32 %v3775, 0.0
        %v3808 = vmax.f32 %v3776, 0.0
        %v3809 = vmax.f32 %v3777, 0.0
        %v3810 = vmax.f32 %v3778, 0.0
        %v3811 = vmax.f32 %v3779, 0.0
        %v3812 = vmax.f32 %v3780, 0.0
        %v3813 = vmax.f32 %v3781, 0.0
        %v3814 = vmax.f32 %v3782, 0.0
        %v3815 = vmax.f32 %v3783, 0.0
        %v3816 = vmax.f32 %v3784, 0.0
        %v3817 = vmax.f32 %v3785, 0.0
        %v3818 = vmax.f32 %v3786, 0.0
        %v3819 = vmax.f32 %v3787, 0.0
        %v3820 = vmax.f32 %v3788, 0.0
        %v3821 = vmax.f32 %v3789, 0.0
        %v3822 = vmax.f32 %v3790, 0.0
        %v3823 = vmax.f32 %v3791, 0.0
        %v3824 = vmax.f32 %v3792, 0.0
        %v3825 = vmax.f32 %v3793, 0.0
        %v3826 = vmax.f32 %v3794, 0.0
        %v3827 = vmax.f32 %v3795, 0.0
        %v3828 = vmax.f32 %v3796, 0.0
        %v3829 = vmax.f32 %v3797, 0.0
        %v3830 = vmax.f32 %v3798, 0.0
        %v3831 = vmax.f32 %v3799, 0.0
        %v3832 = vmax.f32 %v3800, 0.0
        %v3833 = vmax.f32 %v3801, 0.0
        %v3834 = vmax.f32 %v3802, 0.0
        %v3835 = vmax.f32 %v3803, 0.0
        %3836 = vst [vmem:[%s433 + $0x1] sm:$0xff] %v3804
        %3837 = vst [vmem:[%s433 + $0x9] sm:$0xff] %v3805
        %3838 = vst [vmem:[%s433 + $0x19] sm:$0xff] %v3806
        %3839 = vst [vmem:[%s433 + $0x21] sm:$0xff] %v3807
        %3840 = vst [vmem:[%s433 + $0x31] sm:$0xff] %v3808
        %3841 = vst [vmem:[%s433 + $0x39] sm:$0xff] %v3809
        %3842 = vst [vmem:[%s433 + $0x49] sm:$0xff] %v3810
        %3843 = vst [vmem:[%s433 + $0x51] sm:$0xff] %v3811
        %3844 = vst [vmem:[%s433 + $0x61] sm:$0xff] %v3812
        %3845 = vst [vmem:[%s433 + $0x69] sm:$0xff] %v3813
        %3846 = vst [vmem:[%s433 + $0x79] sm:$0xff] %v3814
        %3847 = vst [vmem:[%s433 + $0x81] sm:$0xff] %v3815
        %3848 = vst [vmem:[%s433 + $0x91] sm:$0xff] %v3816
        %3849 = vst [vmem:[%s433 + $0x99] sm:$0xff] %v3817
        %3850 = vst [vmem:[%s433 + $0xa9] sm:$0xff] %v3818
        %3851 = vst [vmem:[%s433 + $0xb1] sm:$0xff] %v3819
        %3852 = vst [vmem:[%s433 + $0xc1] sm:$0xff] %v3820
        %3853 = vst [vmem:[%s433 + $0xc9] sm:$0xff] %v3821
        %3854 = vst [vmem:[%s433 + $0xd9] sm:$0xff] %v3822
        %3855 = vst [vmem:[%s433 + $0xe1] sm:$0xff] %v3823
        %3856 = vst [vmem:[%s433 + $0xf1] sm:$0xff] %v3824
        %3857 = vst [vmem:[%s433 + $0xf9] sm:$0xff] %v3825
        %3858 = vst [vmem:[%s433 + $0x109] sm:$0xff] %v3826
        %3859 = vst [vmem:[%s433 + $0x111] sm:$0xff] %v3827
        %3860 = vst [vmem:[%s433 + $0x121] sm:$0xff] %v3828
        %3861 = vst [vmem:[%s433 + $0x129] sm:$0xff] %v3829
        %3862 = vst [vmem:[%s433 + $0x139] sm:$0xff] %v3830
        %3863 = vst [vmem:[%s433 + $0x141] sm:$0xff] %v3831
        %3864 = vst [vmem:[%s433 + $0x151] sm:$0xff] %v3832
        %3865 = vst [vmem:[%s433 + $0x159] sm:$0xff] %v3833
        %3866 = vst [vmem:[%s433 + $0x169] sm:$0xff] %v3834
        %3867 = vst [vmem:[%s433 + $0x171] sm:$0xff] %v3835
        %v3868 = vld [vmem:[#allocation3] sm:$0xff]
        %v3869 = vld [vmem:[#allocation3 + $0x8] sm:$0xff]
        %v3870 = vld [vmem:[#allocation3 + $0x10] sm:$0x3]
        %v3871 = vld [vmem:[#allocation3 + $0x18] sm:$0xff]
        %v3872 = vld [vmem:[#allocation3 + $0x20] sm:$0xff]
        %v3873 = vld [vmem:[#allocation3 + $0x28] sm:$0x3]
        %v3874 = vld [vmem:[#allocation3 + $0x30] sm:$0xff]
        %v3875 = vld [vmem:[#allocation3 + $0x38] sm:$0xff]
        %v3876 = vld [vmem:[#allocation3 + $0x40] sm:$0x3]
        %v3877 = vld [vmem:[#allocation3 + $0x48] sm:$0xff]
        %v3878 = vld [vmem:[#allocation3 + $0x50] sm:$0xff]
        %v3879 = vld [vmem:[#allocation3 + $0x58] sm:$0x3]
        %v3880 = vld [vmem:[#allocation3 + $0x60] sm:$0xff]
        %v3881 = vld [vmem:[#allocation3 + $0x68] sm:$0xff]
        %v3882 = vld [vmem:[#allocation3 + $0x70] sm:$0x3]
        %v3883 = vld [vmem:[#allocation3 + $0x78] sm:$0xff]
        %v3884 = vld [vmem:[#allocation3 + $0x80] sm:$0xff]
        %v3885 = vld [vmem:[#allocation3 + $0x88] sm:$0x3]
        %v3886 = vld [vmem:[#allocation3 + $0x90] sm:$0xff]
        %v3887 = vld [vmem:[#allocation3 + $0x98] sm:$0xff]
        %v3888 = vld [vmem:[#allocation3 + $0xa0] sm:$0x3]
        %v3889 = vld [vmem:[#allocation3 + $0xa8] sm:$0xff]
        %v3890 = vld [vmem:[#allocation3 + $0xb0] sm:$0xff]
        %v3891 = vld [vmem:[#allocation3 + $0xb8] sm:$0x3]
        %v3892 = vld [vmem:[#allocation3 + $0xc0] sm:$0xff]
        %v3893 = vld [vmem:[#allocation3 + $0xc8] sm:$0xff]
        %v3894 = vld [vmem:[#allocation3 + $0xd0] sm:$0x3]
        %v3895 = vld [vmem:[#allocation3 + $0xd8] sm:$0xff]
        %v3896 = vld [vmem:[#allocation3 + $0xe0] sm:$0xff]
        %v3897 = vld [vmem:[#allocation3 + $0xe8] sm:$0x3]
        %v3898 = vld [vmem:[#allocation3 + $0xf0] sm:$0xff]
        %v3899 = vld [vmem:[#allocation3 + $0xf8] sm:$0xff]
        %v3900 = vld [vmem:[#allocation3 + $0x100] sm:$0x3]
        %v3901 = vld [vmem:[#allocation3 + $0x108] sm:$0xff]
        %v3902 = vld [vmem:[#allocation3 + $0x110] sm:$0xff]
        %v3903 = vld [vmem:[#allocation3 + $0x118] sm:$0x3]
        %v3904 = vld [vmem:[#allocation3 + $0x120] sm:$0xff]
        %v3905 = vld [vmem:[#allocation3 + $0x128] sm:$0xff]
        %v3906 = vld [vmem:[#allocation3 + $0x130] sm:$0x3]
        %v3907 = vld [vmem:[#allocation3 + $0x138] sm:$0xff]
        %v3908 = vld [vmem:[#allocation3 + $0x140] sm:$0xff]
        %v3909 = vld [vmem:[#allocation3 + $0x148] sm:$0x3]
        %v3910 = vld [vmem:[#allocation3 + $0x150] sm:$0xff]
        %v3911 = vld [vmem:[#allocation3 + $0x158] sm:$0xff]
        %v3912 = vld [vmem:[#allocation3 + $0x160] sm:$0x3]
        %v3913 = vld [vmem:[#allocation3 + $0x168] sm:$0xff]
        %v3914 = vld [vmem:[#allocation3 + $0x170] sm:$0xff]
        %v3915 = vld [vmem:[#allocation3 + $0x178] sm:$0x3]
        %v3916 = vld [vmem:[#allocation3 + $0x180] sm:$0xff]
        %v3917 = vld [vmem:[#allocation3 + $0x188] sm:$0xff]
        %v3918 = vld [vmem:[#allocation3 + $0x190] sm:$0x3]
        %v3919 = vld [vmem:[#allocation3 + $0x198] sm:$0xff]
        %v3920 = vld [vmem:[#allocation3 + $0x1a0] sm:$0xff]
        %v3921 = vld [vmem:[#allocation3 + $0x1a8] sm:$0x3]
        %v3922 = vpack.c.bf16 %v3868, %v3868
        %v3923 = vpack.c.bf16 %v3869, %v3869
        %v3924 = vpack.c.bf16 %v3871, %v3871
        %v3925 = vpack.c.bf16 %v3872, %v3872
        %v3926 = vpack.c.bf16 %v3874, %v3874
        %v3927 = vpack.c.bf16 %v3875, %v3875
        %v3928 = vpack.c.bf16 %v3877, %v3877
        %v3929 = vpack.c.bf16 %v3878, %v3878
        %v3930 = vpack.c.bf16 %v3880, %v3880
        %v3931 = vpack.c.bf16 %v3881, %v3881
        %v3932 = vpack.c.bf16 %v3883, %v3883
        %v3933 = vpack.c.bf16 %v3884, %v3884
        %v3934 = vpack.c.bf16 %v3886, %v3886
        %v3935 = vpack.c.bf16 %v3887, %v3887
        %v3936 = vpack.c.bf16 %v3889, %v3889
        %v3937 = vpack.c.bf16 %v3890, %v3890
        %v3938 = vpack.c.bf16 %v3892, %v3892
        %v3939 = vpack.c.bf16 %v3893, %v3893
        %v3940 = vpack.c.bf16 %v3895, %v3895
        %v3941 = vpack.c.bf16 %v3896, %v3896
        %v3942 = vpack.c.bf16 %v3898, %v3898
        %v3943 = vpack.c.bf16 %v3899, %v3899
        %v3944 = vpack.c.bf16 %v3901, %v3901
        %v3945 = vpack.c.bf16 %v3902, %v3902
        %v3946 = vpack.c.bf16 %v3904, %v3904
        %v3947 = vpack.c.bf16 %v3905, %v3905
        %v3948 = vpack.c.bf16 %v3907, %v3907
        %v3949 = vpack.c.bf16 %v3908, %v3908
        %v3950 = vpack.c.bf16 %v3910, %v3910
        %v3951 = vpack.c.bf16 %v3911, %v3911
        %v3952 = vpack.c.bf16 %v3913, %v3913
        %v3953 = vpack.c.bf16 %v3914, %v3914
        %3954 = vst [vmem:[#allocation5] sm:$0xf] %v3922
        %3955 = vst [vmem:[#allocation5 + $0x24] sm:$0xf] %v3923
        %3956 = vst [vmem:[#allocation5 + $0x48] sm:$0xf] %v3924
        %3957 = vst [vmem:[#allocation5 + $0x6c] sm:$0xf] %v3925
        %3958 = vst [vmem:[#allocation5 + $0x90] sm:$0xf] %v3926
        %3959 = vst [vmem:[#allocation5 + $0xb4] sm:$0xf] %v3927
        %3960 = vst [vmem:[#allocation5 + $0xd8] sm:$0xf] %v3928
        %3961 = vst [vmem:[#allocation5 + $0xfc] sm:$0xf] %v3929
        %3962 = vst [vmem:[#allocation5 + $0x120] sm:$0xf] %v3930
        %3963 = vst [vmem:[#allocation5 + $0x144] sm:$0xf] %v3931
        %3964 = vst [vmem:[#allocation5 + $0x168] sm:$0xf] %v3932
        %3965 = vst [vmem:[#allocation5 + $0x18c] sm:$0xf] %v3933
        %3966 = vst [vmem:[#allocation5 + $0x1b0] sm:$0xf] %v3934
        %3967 = vst [vmem:[#allocation5 + $0x1d4] sm:$0xf] %v3935
        %3968 = vst [vmem:[#allocation5 + $0x1f8] sm:$0xf] %v3936
        %3969 = vst [vmem:[#allocation5 + $0x21c] sm:$0xf] %v3937
        %3970 = vst [vmem:[#allocation5 + $0x240] sm:$0xf] %v3938
        %3971 = vst [vmem:[#allocation5 + $0x264] sm:$0xf] %v3939
        %3972 = vst [vmem:[#allocation5 + $0x288] sm:$0xf] %v3940
        %3973 = vst [vmem:[#allocation5 + $0x2ac] sm:$0xf] %v3941
        %3974 = vst [vmem:[#allocation5 + $0x2d0] sm:$0xf] %v3942
        %3975 = vst [vmem:[#allocation5 + $0x2f4] sm:$0xf] %v3943
        %3976 = vst [vmem:[#allocation5 + $0x318] sm:$0xf] %v3944
        %3977 = vst [vmem:[#allocation5 + $0x33c] sm:$0xf] %v3945
        %3978 = vst [vmem:[#allocation5 + $0x360] sm:$0xf] %v3946
        %3979 = vst [vmem:[#allocation5 + $0x384] sm:$0xf] %v3947
        %3980 = vst [vmem:[#allocation5 + $0x3a8] sm:$0xf] %v3948
        %3981 = vst [vmem:[#allocation5 + $0x3cc] sm:$0xf] %v3949
        %3982 = vst [vmem:[#allocation5 + $0x3f0] sm:$0xf] %v3950
        %3983 = vst [vmem:[#allocation5 + $0x414] sm:$0xf] %v3951
        %3984 = vst [vmem:[#allocation5 + $0x438] sm:$0xf] %v3952
        %3985 = vst [vmem:[#allocation5 + $0x45c] sm:$0xf] %v3953
        %v4034 = vrot.slane %v3868, 1
        %v4035 = vrot.slane %v3869, 1
        %v4036 = vsel %vm728, %v4034, %v4035
        %v4037 = vrot.slane %v3870, 1
        %v4038 = vsel %vm728, %v4035, %v4037
        %v4039 = vrot.slane %v3871, 1
        %v4040 = vrot.slane %v3872, 1
        %v4041 = vsel %vm728, %v4039, %v4040
        %v4042 = vrot.slane %v3873, 1
        %v4043 = vsel %vm728, %v4040, %v4042
        %v4044 = vrot.slane %v3874, 1
        %v4045 = vrot.slane %v3875, 1
        %v4046 = vsel %vm728, %v4044, %v4045
        %v4047 = vrot.slane %v3876, 1
        %v4048 = vsel %vm728, %v4045, %v4047
        %v4049 = vrot.slane %v3877, 1
        %v4050 = vrot.slane %v3878, 1
        %v4051 = vsel %vm728, %v4049, %v4050
        %v4052 = vrot.slane %v3879, 1
        %v4053 = vsel %vm728, %v4050, %v4052
        %v4054 = vrot.slane %v3880, 1
        %v4055 = vrot.slane %v3881, 1
        %v4056 = vsel %vm728, %v4054, %v4055
        %v4057 = vrot.slane %v3882, 1
        %v4058 = vsel %vm728, %v4055, %v4057
        %v4059 = vrot.slane %v3883, 1
        %v4060 = vrot.slane %v3884, 1
        %v4061 = vsel %vm728, %v4059, %v4060
        %v4062 = vrot.slane %v3885, 1
        %v4063 = vsel %vm728, %v4060, %v4062
        %v4064 = vrot.slane %v3886, 1
        %v4065 = vrot.slane %v3887, 1
        %v4066 = vsel %vm728, %v4064, %v4065
        %v4067 = vrot.slane %v3888, 1
        %v4068 = vsel %vm728, %v4065, %v4067
        %v4069 = vrot.slane %v3889, 1
        %v4070 = vrot.slane %v3890, 1
        %v4071 = vsel %vm728, %v4069, %v4070
        %v4072 = vrot.slane %v3891, 1
        %v4073 = vsel %vm728, %v4070, %v4072
        %v4074 = vrot.slane %v3892, 1
        %v4075 = vrot.slane %v3893, 1
        %v4076 = vsel %vm728, %v4074, %v4075
        %v4077 = vrot.slane %v3894, 1
        %v4078 = vsel %vm728, %v4075, %v4077
        %v4079 = vrot.slane %v3895, 1
        %v4080 = vrot.slane %v3896, 1
        %v4081 = vsel %vm728, %v4079, %v4080
        %v4082 = vrot.slane %v3897, 1
        %v4083 = vsel %vm728, %v4080, %v4082
        %v4084 = vrot.slane %v3898, 1
        %v4085 = vrot.slane %v3899, 1
        %v4086 = vsel %vm728, %v4084, %v4085
        %v4087 = vrot.slane %v3900, 1
        %v4088 = vsel %vm728, %v4085, %v4087
        %v4089 = vrot.slane %v3901, 1
        %v4090 = vrot.slane %v3902, 1
        %v4091 = vsel %vm728, %v4089, %v4090
        %v4092 = vrot.slane %v3903, 1
        %v4093 = vsel %vm728, %v4090, %v4092
        %v4094 = vrot.slane %v3904, 1
        %v4095 = vrot.slane %v3905, 1
        %v4096 = vsel %vm728, %v4094, %v4095
        %v4097 = vrot.slane %v3906, 1
        %v4098 = vsel %vm728, %v4095, %v4097
        %v4099 = vrot.slane %v3907, 1
        %v4100 = vrot.slane %v3908, 1
        %v4101 = vsel %vm728, %v4099, %v4100
        %v4102 = vrot.slane %v3909, 1
        %v4103 = vsel %vm728, %v4100, %v4102
        %v4104 = vrot.slane %v3910, 1
        %v4105 = vrot.slane %v3911, 1
        %v4106 = vsel %vm728, %v4104, %v4105
        %v4107 = vrot.slane %v3912, 1
        %v4108 = vsel %vm728, %v4105, %v4107
        %v4109 = vrot.slane %v3913, 1
        %v4110 = vrot.slane %v3914, 1
        %v4111 = vsel %vm728, %v4109, %v4110
        %v4112 = vrot.slane %v3915, 1
        %v4113 = vsel %vm728, %v4110, %v4112
        %v4146 = vpack.c.bf16 %v4036, %v4036
        %v4147 = vpack.c.bf16 %v4038, %v4038
        %v4148 = vpack.c.bf16 %v4041, %v4041
        %v4149 = vpack.c.bf16 %v4043, %v4043
        %v4150 = vpack.c.bf16 %v4046, %v4046
        %v4151 = vpack.c.bf16 %v4048, %v4048
        %v4152 = vpack.c.bf16 %v4051, %v4051
        %v4153 = vpack.c.bf16 %v4053, %v4053
        %v4154 = vpack.c.bf16 %v4056, %v4056
        %v4155 = vpack.c.bf16 %v4058, %v4058
        %v4156 = vpack.c.bf16 %v4061, %v4061
        %v4157 = vpack.c.bf16 %v4063, %v4063
        %v4158 = vpack.c.bf16 %v4066, %v4066
        %v4159 = vpack.c.bf16 %v4068, %v4068
        %v4160 = vpack.c.bf16 %v4071, %v4071
        %v4161 = vpack.c.bf16 %v4073, %v4073
        %v4162 = vpack.c.bf16 %v4076, %v4076
        %v4163 = vpack.c.bf16 %v4078, %v4078
        %v4164 = vpack.c.bf16 %v4081, %v4081
        %v4165 = vpack.c.bf16 %v4083, %v4083
        %v4166 = vpack.c.bf16 %v4086, %v4086
        %v4167 = vpack.c.bf16 %v4088, %v4088
        %v4168 = vpack.c.bf16 %v4091, %v4091
        %v4169 = vpack.c.bf16 %v4093, %v4093
        %v4170 = vpack.c.bf16 %v4096, %v4096
        %v4171 = vpack.c.bf16 %v4098, %v4098
        %v4172 = vpack.c.bf16 %v4101, %v4101
        %v4173 = vpack.c.bf16 %v4103, %v4103
        %v4174 = vpack.c.bf16 %v4106, %v4106
        %v4175 = vpack.c.bf16 %v4108, %v4108
        %v4176 = vpack.c.bf16 %v4111, %v4111
        %v4177 = vpack.c.bf16 %v4113, %v4113
        %4178 = vst [vmem:[#allocation5 + $0x4] sm:$0xf] %v4146
        %4179 = vst [vmem:[#allocation5 + $0x28] sm:$0xf] %v4147
        %4180 = vst [vmem:[#allocation5 + $0x4c] sm:$0xf] %v4148
        %4181 = vst [vmem:[#allocation5 + $0x70] sm:$0xf] %v4149
        %4182 = vst [vmem:[#allocation5 + $0x94] sm:$0xf] %v4150
        %4183 = vst [vmem:[#allocation5 + $0xb8] sm:$0xf] %v4151
        %4184 = vst [vmem:[#allocation5 + $0xdc] sm:$0xf] %v4152
        %4185 = vst [vmem:[#allocation5 + $0x100] sm:$0xf] %v4153
        %4186 = vst [vmem:[#allocation5 + $0x124] sm:$0xf] %v4154
        %4187 = vst [vmem:[#allocation5 + $0x148] sm:$0xf] %v4155
        %4188 = vst [vmem:[#allocation5 + $0x16c] sm:$0xf] %v4156
        %4189 = vst [vmem:[#allocation5 + $0x190] sm:$0xf] %v4157
        %4190 = vst [vmem:[#allocation5 + $0x1b4] sm:$0xf] %v4158
        %4191 = vst [vmem:[#allocation5 + $0x1d8] sm:$0xf] %v4159
        %4192 = vst [vmem:[#allocation5 + $0x1fc] sm:$0xf] %v4160
        %4193 = vst [vmem:[#allocation5 + $0x220] sm:$0xf] %v4161
        %4194 = vst [vmem:[#allocation5 + $0x244] sm:$0xf] %v4162
        %4195 = vst [vmem:[#allocation5 + $0x268] sm:$0xf] %v4163
        %4196 = vst [vmem:[#allocation5 + $0x28c] sm:$0xf] %v4164
        %4197 = vst [vmem:[#allocation5 + $0x2b0] sm:$0xf] %v4165
        %4198 = vst [vmem:[#allocation5 + $0x2d4] sm:$0xf] %v4166
        %4199 = vst [vmem:[#allocation5 + $0x2f8] sm:$0xf] %v4167
        %4200 = vst [vmem:[#allocation5 + $0x31c] sm:$0xf] %v4168
        %4201 = vst [vmem:[#allocation5 + $0x340] sm:$0xf] %v4169
        %4202 = vst [vmem:[#allocation5 + $0x364] sm:$0xf] %v4170
        %4203 = vst [vmem:[#allocation5 + $0x388] sm:$0xf] %v4171
        %4204 = vst [vmem:[#allocation5 + $0x3ac] sm:$0xf] %v4172
        %4205 = vst [vmem:[#allocation5 + $0x3d0] sm:$0xf] %v4173
        %4206 = vst [vmem:[#allocation5 + $0x3f4] sm:$0xf] %v4174
        %4207 = vst [vmem:[#allocation5 + $0x418] sm:$0xf] %v4175
        %4208 = vst [vmem:[#allocation5 + $0x43c] sm:$0xf] %v4176
        %4209 = vst [vmem:[#allocation5 + $0x460] sm:$0xf] %v4177
        %v4210 = vrot.slane %v3868, 2
        %v4211 = vrot.slane %v3869, 2
        %v4212 = vsel %vm905, %v4210, %v4211
        %v4213 = vrot.slane %v3870, 2
        %v4214 = vsel %vm905, %v4211, %v4213
        %v4215 = vrot.slane %v3871, 2
        %v4216 = vrot.slane %v3872, 2
        %v4217 = vsel %vm905, %v4215, %v4216
        %v4218 = vrot.slane %v3873, 2
        %v4219 = vsel %vm905, %v4216, %v4218
        %v4220 = vrot.slane %v3874, 2
        %v4221 = vrot.slane %v3875, 2
        %v4222 = vsel %vm905, %v4220, %v4221
        %v4223 = vrot.slane %v3876, 2
        %v4224 = vsel %vm905, %v4221, %v4223
        %v4225 = vrot.slane %v3877, 2
        %v4226 = vrot.slane %v3878, 2
        %v4227 = vsel %vm905, %v4225, %v4226
        %v4228 = vrot.slane %v3879, 2
        %v4229 = vsel %vm905, %v4226, %v4228
        %v4230 = vrot.slane %v3880, 2
        %v4231 = vrot.slane %v3881, 2
        %v4232 = vsel %vm905, %v4230, %v4231
        %v4233 = vrot.slane %v3882, 2
        %v4234 = vsel %vm905, %v4231, %v4233
        %v4235 = vrot.slane %v3883, 2
        %v4236 = vrot.slane %v3884, 2
        %v4237 = vsel %vm905, %v4235, %v4236
        %v4238 = vrot.slane %v3885, 2
        %v4239 = vsel %vm905, %v4236, %v4238
        %v4240 = vrot.slane %v3886, 2
        %v4241 = vrot.slane %v3887, 2
        %v4242 = vsel %vm905, %v4240, %v4241
        %v4243 = vrot.slane %v3888, 2
        %v4244 = vsel %vm905, %v4241, %v4243
        %v4245 = vrot.slane %v3889, 2
        %v4246 = vrot.slane %v3890, 2
        %v4247 = vsel %vm905, %v4245, %v4246
        %v4248 = vrot.slane %v3891, 2
        %v4249 = vsel %vm905, %v4246, %v4248
        %v4250 = vrot.slane %v3892, 2
        %v4251 = vrot.slane %v3893, 2
        %v4252 = vsel %vm905, %v4250, %v4251
        %v4253 = vrot.slane %v3894, 2
        %v4254 = vsel %vm905, %v4251, %v4253
        %v4255 = vrot.slane %v3895, 2
        %v4256 = vrot.slane %v3896, 2
        %v4257 = vsel %vm905, %v4255, %v4256
        %v4258 = vrot.slane %v3897, 2
        %v4259 = vsel %vm905, %v4256, %v4258
        %v4260 = vrot.slane %v3898, 2
        %v4261 = vrot.slane %v3899, 2
        %v4262 = vsel %vm905, %v4260, %v4261
        %v4263 = vrot.slane %v3900, 2
        %v4264 = vsel %vm905, %v4261, %v4263
        %v4265 = vrot.slane %v3901, 2
        %v4266 = vrot.slane %v3902, 2
        %v4267 = vsel %vm905, %v4265, %v4266
        %v4268 = vrot.slane %v3903, 2
        %v4269 = vsel %vm905, %v4266, %v4268
        %v4270 = vrot.slane %v3904, 2
        %v4271 = vrot.slane %v3905, 2
        %v4272 = vsel %vm905, %v4270, %v4271
        %v4273 = vrot.slane %v3906, 2
        %v4274 = vsel %vm905, %v4271, %v4273
        %v4275 = vrot.slane %v3907, 2
        %v4276 = vrot.slane %v3908, 2
        %v4277 = vsel %vm905, %v4275, %v4276
        %v4278 = vrot.slane %v3909, 2
        %v4279 = vsel %vm905, %v4276, %v4278
        %v4280 = vrot.slane %v3910, 2
        %v4281 = vrot.slane %v3911, 2
        %v4282 = vsel %vm905, %v4280, %v4281
        %v4283 = vrot.slane %v3912, 2
        %v4284 = vsel %vm905, %v4281, %v4283
        %v4285 = vrot.slane %v3913, 2
        %v4286 = vrot.slane %v3914, 2
        %v4287 = vsel %vm905, %v4285, %v4286
        %v4288 = vrot.slane %v3915, 2
        %v4289 = vsel %vm905, %v4286, %v4288
        %v4322 = vpack.c.bf16 %v4212, %v4212
        %v4323 = vpack.c.bf16 %v4214, %v4214
        %v4324 = vpack.c.bf16 %v4217, %v4217
        %v4325 = vpack.c.bf16 %v4219, %v4219
        %v4326 = vpack.c.bf16 %v4222, %v4222
        %v4327 = vpack.c.bf16 %v4224, %v4224
        %v4328 = vpack.c.bf16 %v4227, %v4227
        %v4329 = vpack.c.bf16 %v4229, %v4229
        %v4330 = vpack.c.bf16 %v4232, %v4232
        %v4331 = vpack.c.bf16 %v4234, %v4234
        %v4332 = vpack.c.bf16 %v4237, %v4237
        %v4333 = vpack.c.bf16 %v4239, %v4239
        %v4334 = vpack.c.bf16 %v4242, %v4242
        %v4335 = vpack.c.bf16 %v4244, %v4244
        %v4336 = vpack.c.bf16 %v4247, %v4247
        %v4337 = vpack.c.bf16 %v4249, %v4249
        %v4338 = vpack.c.bf16 %v4252, %v4252
        %v4339 = vpack.c.bf16 %v4254, %v4254
        %v4340 = vpack.c.bf16 %v4257, %v4257
        %v4341 = vpack.c.bf16 %v4259, %v4259
        %v4342 = vpack.c.bf16 %v4262, %v4262
        %v4343 = vpack.c.bf16 %v4264, %v4264
        %v4344 = vpack.c.bf16 %v4267, %v4267
        %v4345 = vpack.c.bf16 %v4269, %v4269
        %v4346 = vpack.c.bf16 %v4272, %v4272
        %v4347 = vpack.c.bf16 %v4274, %v4274
        %v4348 = vpack.c.bf16 %v4277, %v4277
        %v4349 = vpack.c.bf16 %v4279, %v4279
        %v4350 = vpack.c.bf16 %v4282, %v4282
        %v4351 = vpack.c.bf16 %v4284, %v4284
        %v4352 = vpack.c.bf16 %v4287, %v4287
        %v4353 = vpack.c.bf16 %v4289, %v4289
        %4354 = vst [vmem:[#allocation5 + $0x8] sm:$0xf] %v4322
        %4355 = vst [vmem:[#allocation5 + $0x2c] sm:$0xf] %v4323
        %4356 = vst [vmem:[#allocation5 + $0x50] sm:$0xf] %v4324
        %4357 = vst [vmem:[#allocation5 + $0x74] sm:$0xf] %v4325
        %4358 = vst [vmem:[#allocation5 + $0x98] sm:$0xf] %v4326
        %4359 = vst [vmem:[#allocation5 + $0xbc] sm:$0xf] %v4327
        %4360 = vst [vmem:[#allocation5 + $0xe0] sm:$0xf] %v4328
        %4361 = vst [vmem:[#allocation5 + $0x104] sm:$0xf] %v4329
        %4362 = vst [vmem:[#allocation5 + $0x128] sm:$0xf] %v4330
        %4363 = vst [vmem:[#allocation5 + $0x14c] sm:$0xf] %v4331
        %4364 = vst [vmem:[#allocation5 + $0x170] sm:$0xf] %v4332
        %4365 = vst [vmem:[#allocation5 + $0x194] sm:$0xf] %v4333
        %4366 = vst [vmem:[#allocation5 + $0x1b8] sm:$0xf] %v4334
        %4367 = vst [vmem:[#allocation5 + $0x1dc] sm:$0xf] %v4335
        %4368 = vst [vmem:[#allocation5 + $0x200] sm:$0xf] %v4336
        %4369 = vst [vmem:[#allocation5 + $0x224] sm:$0xf] %v4337
        %4370 = vst [vmem:[#allocation5 + $0x248] sm:$0xf] %v4338
        %4371 = vst [vmem:[#allocation5 + $0x26c] sm:$0xf] %v4339
        %4372 = vst [vmem:[#allocation5 + $0x290] sm:$0xf] %v4340
        %4373 = vst [vmem:[#allocation5 + $0x2b4] sm:$0xf] %v4341
        %4374 = vst [vmem:[#allocation5 + $0x2d8] sm:$0xf] %v4342
        %4375 = vst [vmem:[#allocation5 + $0x2fc] sm:$0xf] %v4343
        %4376 = vst [vmem:[#allocation5 + $0x320] sm:$0xf] %v4344
        %4377 = vst [vmem:[#allocation5 + $0x344] sm:$0xf] %v4345
        %4378 = vst [vmem:[#allocation5 + $0x368] sm:$0xf] %v4346
        %4379 = vst [vmem:[#allocation5 + $0x38c] sm:$0xf] %v4347
        %4380 = vst [vmem:[#allocation5 + $0x3b0] sm:$0xf] %v4348
        %4381 = vst [vmem:[#allocation5 + $0x3d4] sm:$0xf] %v4349
        %4382 = vst [vmem:[#allocation5 + $0x3f8] sm:$0xf] %v4350
        %4383 = vst [vmem:[#allocation5 + $0x41c] sm:$0xf] %v4351
        %4384 = vst [vmem:[#allocation5 + $0x440] sm:$0xf] %v4352
        %4385 = vst [vmem:[#allocation5 + $0x464] sm:$0xf] %v4353
        %v4386 = vpack.c.bf16 %v3916, %v3916
        %v4387 = vpack.c.bf16 %v3917, %v3917
        %4388 = vst [vmem:[#allocation5 + $0xc] sm:$0xf] %v3924
        %4389 = vst [vmem:[#allocation5 + $0x30] sm:$0xf] %v3925
        %4390 = vst [vmem:[#allocation5 + $0x54] sm:$0xf] %v3926
        %4391 = vst [vmem:[#allocation5 + $0x78] sm:$0xf] %v3927
        %4392 = vst [vmem:[#allocation5 + $0x9c] sm:$0xf] %v3928
        %4393 = vst [vmem:[#allocation5 + $0xc0] sm:$0xf] %v3929
        %4394 = vst [vmem:[#allocation5 + $0xe4] sm:$0xf] %v3930
        %4395 = vst [vmem:[#allocation5 + $0x108] sm:$0xf] %v3931
        %4396 = vst [vmem:[#allocation5 + $0x12c] sm:$0xf] %v3932
        %4397 = vst [vmem:[#allocation5 + $0x150] sm:$0xf] %v3933
        %4398 = vst [vmem:[#allocation5 + $0x174] sm:$0xf] %v3934
        %4399 = vst [vmem:[#allocation5 + $0x198] sm:$0xf] %v3935
        %4400 = vst [vmem:[#allocation5 + $0x1bc] sm:$0xf] %v3936
        %4401 = vst [vmem:[#allocation5 + $0x1e0] sm:$0xf] %v3937
        %4402 = vst [vmem:[#allocation5 + $0x204] sm:$0xf] %v3938
        %4403 = vst [vmem:[#allocation5 + $0x228] sm:$0xf] %v3939
        %4404 = vst [vmem:[#allocation5 + $0x24c] sm:$0xf] %v3940
        %4405 = vst [vmem:[#allocation5 + $0x270] sm:$0xf] %v3941
        %4406 = vst [vmem:[#allocation5 + $0x294] sm:$0xf] %v3942
        %4407 = vst [vmem:[#allocation5 + $0x2b8] sm:$0xf] %v3943
        %4408 = vst [vmem:[#allocation5 + $0x2dc] sm:$0xf] %v3944
        %4409 = vst [vmem:[#allocation5 + $0x300] sm:$0xf] %v3945
        %4410 = vst [vmem:[#allocation5 + $0x324] sm:$0xf] %v3946
        %4411 = vst [vmem:[#allocation5 + $0x348] sm:$0xf] %v3947
        %4412 = vst [vmem:[#allocation5 + $0x36c] sm:$0xf] %v3948
        %4413 = vst [vmem:[#allocation5 + $0x390] sm:$0xf] %v3949
        %4414 = vst [vmem:[#allocation5 + $0x3b4] sm:$0xf] %v3950
        %4415 = vst [vmem:[#allocation5 + $0x3d8] sm:$0xf] %v3951
        %4416 = vst [vmem:[#allocation5 + $0x3fc] sm:$0xf] %v3952
        %4417 = vst [vmem:[#allocation5 + $0x420] sm:$0xf] %v3953
        %4418 = vst [vmem:[#allocation5 + $0x444] sm:$0xf] %v4386
        %4419 = vst [vmem:[#allocation5 + $0x468] sm:$0xf] %v4387
        %v4423 = vrot.slane %v3916, 1
        %v4424 = vrot.slane %v3917, 1
        %v4425 = vsel %vm728, %v4423, %v4424
        %v4426 = vrot.slane %v3918, 1
        %v4427 = vsel %vm728, %v4424, %v4426
        %v4430 = vpack.c.bf16 %v4425, %v4425
        %v4431 = vpack.c.bf16 %v4427, %v4427
        %4432 = vst [vmem:[#allocation5 + $0x10] sm:$0xf] %v4148
        %4433 = vst [vmem:[#allocation5 + $0x34] sm:$0xf] %v4149
        %4434 = vst [vmem:[#allocation5 + $0x58] sm:$0xf] %v4150
        %4435 = vst [vmem:[#allocation5 + $0x7c] sm:$0xf] %v4151
        %4436 = vst [vmem:[#allocation5 + $0xa0] sm:$0xf] %v4152
        %4437 = vst [vmem:[#allocation5 + $0xc4] sm:$0xf] %v4153
        %4438 = vst [vmem:[#allocation5 + $0xe8] sm:$0xf] %v4154
        %4439 = vst [vmem:[#allocation5 + $0x10c] sm:$0xf] %v4155
        %4440 = vst [vmem:[#allocation5 + $0x130] sm:$0xf] %v4156
        %4441 = vst [vmem:[#allocation5 + $0x154] sm:$0xf] %v4157
        %4442 = vst [vmem:[#allocation5 + $0x178] sm:$0xf] %v4158
        %4443 = vst [vmem:[#allocation5 + $0x19c] sm:$0xf] %v4159
        %4444 = vst [vmem:[#allocation5 + $0x1c0] sm:$0xf] %v4160
        %4445 = vst [vmem:[#allocation5 + $0x1e4] sm:$0xf] %v4161
        %4446 = vst [vmem:[#allocation5 + $0x208] sm:$0xf] %v4162
        %4447 = vst [vmem:[#allocation5 + $0x22c] sm:$0xf] %v4163
        %4448 = vst [vmem:[#allocation5 + $0x250] sm:$0xf] %v4164
        %4449 = vst [vmem:[#allocation5 + $0x274] sm:$0xf] %v4165
        %4450 = vst [vmem:[#allocation5 + $0x298] sm:$0xf] %v4166
        %4451 = vst [vmem:[#allocation5 + $0x2bc] sm:$0xf] %v4167
        %4452 = vst [vmem:[#allocation5 + $0x2e0] sm:$0xf] %v4168
        %4453 = vst [vmem:[#allocation5 + $0x304] sm:$0xf] %v4169
        %4454 = vst [vmem:[#allocation5 + $0x328] sm:$0xf] %v4170
        %4455 = vst [vmem:[#allocation5 + $0x34c] sm:$0xf] %v4171
        %4456 = vst [vmem:[#allocation5 + $0x370] sm:$0xf] %v4172
        %4457 = vst [vmem:[#allocation5 + $0x394] sm:$0xf] %v4173
        %4458 = vst [vmem:[#allocation5 + $0x3b8] sm:$0xf] %v4174
        %4459 = vst [vmem:[#allocation5 + $0x3dc] sm:$0xf] %v4175
        %4460 = vst [vmem:[#allocation5 + $0x400] sm:$0xf] %v4176
        %4461 = vst [vmem:[#allocation5 + $0x424] sm:$0xf] %v4177
        %4462 = vst [vmem:[#allocation5 + $0x448] sm:$0xf] %v4430
        %4463 = vst [vmem:[#allocation5 + $0x46c] sm:$0xf] %v4431
        %v4464 = vrot.slane %v3916, 2
        %v4465 = vrot.slane %v3917, 2
        %v4466 = vsel %vm905, %v4464, %v4465
        %v4467 = vrot.slane %v3918, 2
        %v4468 = vsel %vm905, %v4465, %v4467
        %v4471 = vpack.c.bf16 %v4466, %v4466
        %v4472 = vpack.c.bf16 %v4468, %v4468
        %4473 = vst [vmem:[#allocation5 + $0x14] sm:$0xf] %v4324
        %4474 = vst [vmem:[#allocation5 + $0x38] sm:$0xf] %v4325
        %4475 = vst [vmem:[#allocation5 + $0x5c] sm:$0xf] %v4326
        %4476 = vst [vmem:[#allocation5 + $0x80] sm:$0xf] %v4327
        %4477 = vst [vmem:[#allocation5 + $0xa4] sm:$0xf] %v4328
        %4478 = vst [vmem:[#allocation5 + $0xc8] sm:$0xf] %v4329
        %4479 = vst [vmem:[#allocation5 + $0xec] sm:$0xf] %v4330
        %4480 = vst [vmem:[#allocation5 + $0x110] sm:$0xf] %v4331
        %4481 = vst [vmem:[#allocation5 + $0x134] sm:$0xf] %v4332
        %4482 = vst [vmem:[#allocation5 + $0x158] sm:$0xf] %v4333
        %4483 = vst [vmem:[#allocation5 + $0x17c] sm:$0xf] %v4334
        %4484 = vst [vmem:[#allocation5 + $0x1a0] sm:$0xf] %v4335
        %4485 = vst [vmem:[#allocation5 + $0x1c4] sm:$0xf] %v4336
        %4486 = vst [vmem:[#allocation5 + $0x1e8] sm:$0xf] %v4337
        %4487 = vst [vmem:[#allocation5 + $0x20c] sm:$0xf] %v4338
        %4488 = vst [vmem:[#allocation5 + $0x230] sm:$0xf] %v4339
        %4489 = vst [vmem:[#allocation5 + $0x254] sm:$0xf] %v4340
        %4490 = vst [vmem:[#allocation5 + $0x278] sm:$0xf] %v4341
        %4491 = vst [vmem:[#allocation5 + $0x29c] sm:$0xf] %v4342
        %4492 = vst [vmem:[#allocation5 + $0x2c0] sm:$0xf] %v4343
        %4493 = vst [vmem:[#allocation5 + $0x2e4] sm:$0xf] %v4344
        %4494 = vst [vmem:[#allocation5 + $0x308] sm:$0xf] %v4345
        %4495 = vst [vmem:[#allocation5 + $0x32c] sm:$0xf] %v4346
        %4496 = vst [vmem:[#allocation5 + $0x350] sm:$0xf] %v4347
        %4497 = vst [vmem:[#allocation5 + $0x374] sm:$0xf] %v4348
        %4498 = vst [vmem:[#allocation5 + $0x398] sm:$0xf] %v4349
        %4499 = vst [vmem:[#allocation5 + $0x3bc] sm:$0xf] %v4350
        %4500 = vst [vmem:[#allocation5 + $0x3e0] sm:$0xf] %v4351
        %4501 = vst [vmem:[#allocation5 + $0x404] sm:$0xf] %v4352
        %4502 = vst [vmem:[#allocation5 + $0x428] sm:$0xf] %v4353
        %4503 = vst [vmem:[#allocation5 + $0x44c] sm:$0xf] %v4471
        %4504 = vst [vmem:[#allocation5 + $0x470] sm:$0xf] %v4472
        %v4505 = vpack.c.bf16 %v3919, %v3919
        %v4506 = vpack.c.bf16 %v3920, %v3920
        %4507 = vst [vmem:[#allocation5 + $0x18] sm:$0xf] %v3926
        %4508 = vst [vmem:[#allocation5 + $0x3c] sm:$0xf] %v3927
        %4509 = vst [vmem:[#allocation5 + $0x60] sm:$0xf] %v3928
        %4510 = vst [vmem:[#allocation5 + $0x84] sm:$0xf] %v3929
        %4511 = vst [vmem:[#allocation5 + $0xa8] sm:$0xf] %v3930
        %4512 = vst [vmem:[#allocation5 + $0xcc] sm:$0xf] %v3931
        %4513 = vst [vmem:[#allocation5 + $0xf0] sm:$0xf] %v3932
        %4514 = vst [vmem:[#allocation5 + $0x114] sm:$0xf] %v3933
        %4515 = vst [vmem:[#allocation5 + $0x138] sm:$0xf] %v3934
        %4516 = vst [vmem:[#allocation5 + $0x15c] sm:$0xf] %v3935
        %4517 = vst [vmem:[#allocation5 + $0x180] sm:$0xf] %v3936
        %4518 = vst [vmem:[#allocation5 + $0x1a4] sm:$0xf] %v3937
        %4519 = vst [vmem:[#allocation5 + $0x1c8] sm:$0xf] %v3938
        %4520 = vst [vmem:[#allocation5 + $0x1ec] sm:$0xf] %v3939
        %4521 = vst [vmem:[#allocation5 + $0x210] sm:$0xf] %v3940
        %4522 = vst [vmem:[#allocation5 + $0x234] sm:$0xf] %v3941
        %4523 = vst [vmem:[#allocation5 + $0x258] sm:$0xf] %v3942
        %4524 = vst [vmem:[#allocation5 + $0x27c] sm:$0xf] %v3943
        %4525 = vst [vmem:[#allocation5 + $0x2a0] sm:$0xf] %v3944
        %4526 = vst [vmem:[#allocation5 + $0x2c4] sm:$0xf] %v3945
        %4527 = vst [vmem:[#allocation5 + $0x2e8] sm:$0xf] %v3946
        %4528 = vst [vmem:[#allocation5 + $0x30c] sm:$0xf] %v3947
        %4529 = vst [vmem:[#allocation5 + $0x330] sm:$0xf] %v3948
        %4530 = vst [vmem:[#allocation5 + $0x354] sm:$0xf] %v3949
        %4531 = vst [vmem:[#allocation5 + $0x378] sm:$0xf] %v3950
        %4532 = vst [vmem:[#allocation5 + $0x39c] sm:$0xf] %v3951
        %4533 = vst [vmem:[#allocation5 + $0x3c0] sm:$0xf] %v3952
        %4534 = vst [vmem:[#allocation5 + $0x3e4] sm:$0xf] %v3953
        %4535 = vst [vmem:[#allocation5 + $0x408] sm:$0xf] %v4386
        %4536 = vst [vmem:[#allocation5 + $0x42c] sm:$0xf] %v4387
        %4537 = vst [vmem:[#allocation5 + $0x450] sm:$0xf] %v4505
        %4538 = vst [vmem:[#allocation5 + $0x474] sm:$0xf] %v4506
        %v4542 = vrot.slane %v3919, 1
        %v4543 = vrot.slane %v3920, 1
        %v4544 = vsel %vm728, %v4542, %v4543
        %v4545 = vrot.slane %v3921, 1
        %v4546 = vsel %vm728, %v4543, %v4545
        %v4549 = vpack.c.bf16 %v4544, %v4544
        %v4550 = vpack.c.bf16 %v4546, %v4546
        %4551 = vst [vmem:[#allocation5 + $0x1c] sm:$0xf] %v4150
        %4552 = vst [vmem:[#allocation5 + $0x40] sm:$0xf] %v4151
        %4553 = vst [vmem:[#allocation5 + $0x64] sm:$0xf] %v4152
        %4554 = vst [vmem:[#allocation5 + $0x88] sm:$0xf] %v4153
        %4555 = vst [vmem:[#allocation5 + $0xac] sm:$0xf] %v4154
        %4556 = vst [vmem:[#allocation5 + $0xd0] sm:$0xf] %v4155
        %4557 = vst [vmem:[#allocation5 + $0xf4] sm:$0xf] %v4156
        %4558 = vst [vmem:[#allocation5 + $0x118] sm:$0xf] %v4157
        %4559 = vst [vmem:[#allocation5 + $0x13c] sm:$0xf] %v4158
        %4560 = vst [vmem:[#allocation5 + $0x160] sm:$0xf] %v4159
        %4561 = vst [vmem:[#allocation5 + $0x184] sm:$0xf] %v4160
        %4562 = vst [vmem:[#allocation5 + $0x1a8] sm:$0xf] %v4161
        %4563 = vst [vmem:[#allocation5 + $0x1cc] sm:$0xf] %v4162
        %4564 = vst [vmem:[#allocation5 + $0x1f0] sm:$0xf] %v4163
        %4565 = vst [vmem:[#allocation5 + $0x214] sm:$0xf] %v4164
        %4566 = vst [vmem:[#allocation5 + $0x238] sm:$0xf] %v4165
        %4567 = vst [vmem:[#allocation5 + $0x25c] sm:$0xf] %v4166
        %4568 = vst [vmem:[#allocation5 + $0x280] sm:$0xf] %v4167
        %4569 = vst [vmem:[#allocation5 + $0x2a4] sm:$0xf] %v4168
        %4570 = vst [vmem:[#allocation5 + $0x2c8] sm:$0xf] %v4169
        %4571 = vst [vmem:[#allocation5 + $0x2ec] sm:$0xf] %v4170
        %4572 = vst [vmem:[#allocation5 + $0x310] sm:$0xf] %v4171
        %4573 = vst [vmem:[#allocation5 + $0x334] sm:$0xf] %v4172
        %4574 = vst [vmem:[#allocation5 + $0x358] sm:$0xf] %v4173
        %4575 = vst [vmem:[#allocation5 + $0x37c] sm:$0xf] %v4174
        %4576 = vst [vmem:[#allocation5 + $0x3a0] sm:$0xf] %v4175
        %4577 = vst [vmem:[#allocation5 + $0x3c4] sm:$0xf] %v4176
        %4578 = vst [vmem:[#allocation5 + $0x3e8] sm:$0xf] %v4177
        %4579 = vst [vmem:[#allocation5 + $0x40c] sm:$0xf] %v4430
        %4580 = vst [vmem:[#allocation5 + $0x430] sm:$0xf] %v4431
        %4581 = vst [vmem:[#allocation5 + $0x454] sm:$0xf] %v4549
        %4582 = vst [vmem:[#allocation5 + $0x478] sm:$0xf] %v4550
        %v4583 = vrot.slane %v3919, 2
        %v4584 = vrot.slane %v3920, 2
        %v4585 = vsel %vm905, %v4583, %v4584
        %v4586 = vrot.slane %v3921, 2
        %v4587 = vsel %vm905, %v4584, %v4586
        %v4590 = vpack.c.bf16 %v4585, %v4585
        %v4591 = vpack.c.bf16 %v4587, %v4587
        %4592 = vst [vmem:[#allocation5 + $0x20] sm:$0xf] %v4326
        %4593 = vst [vmem:[#allocation5 + $0x44] sm:$0xf] %v4327
        %4594 = vst [vmem:[#allocation5 + $0x68] sm:$0xf] %v4328
        %4595 = vst [vmem:[#allocation5 + $0x8c] sm:$0xf] %v4329
        %4596 = vst [vmem:[#allocation5 + $0xb0] sm:$0xf] %v4330
        %4597 = vst [vmem:[#allocation5 + $0xd4] sm:$0xf] %v4331
        %4598 = vst [vmem:[#allocation5 + $0xf8] sm:$0xf] %v4332
        %4599 = vst [vmem:[#allocation5 + $0x11c] sm:$0xf] %v4333
        %4600 = vst [vmem:[#allocation5 + $0x140] sm:$0xf] %v4334
        %4601 = vst [vmem:[#allocation5 + $0x164] sm:$0xf] %v4335
        %4602 = vst [vmem:[#allocation5 + $0x188] sm:$0xf] %v4336
        %4603 = vst [vmem:[#allocation5 + $0x1ac] sm:$0xf] %v4337
        %4604 = vst [vmem:[#allocation5 + $0x1d0] sm:$0xf] %v4338
        %4605 = vst [vmem:[#allocation5 + $0x1f4] sm:$0xf] %v4339
        %4606 = vst [vmem:[#allocation5 + $0x218] sm:$0xf] %v4340
        %4607 = vst [vmem:[#allocation5 + $0x23c] sm:$0xf] %v4341
        %4608 = vst [vmem:[#allocation5 + $0x260] sm:$0xf] %v4342
        %4609 = vst [vmem:[#allocation5 + $0x284] sm:$0xf] %v4343
        %4610 = vst [vmem:[#allocation5 + $0x2a8] sm:$0xf] %v4344
        %4611 = vst [vmem:[#allocation5 + $0x2cc] sm:$0xf] %v4345
        %4612 = vst [vmem:[#allocation5 + $0x2f0] sm:$0xf] %v4346
        %4613 = vst [vmem:[#allocation5 + $0x314] sm:$0xf] %v4347
        %4614 = vst [vmem:[#allocation5 + $0x338] sm:$0xf] %v4348
        %4615 = vst [vmem:[#allocation5 + $0x35c] sm:$0xf] %v4349
        %4616 = vst [vmem:[#allocation5 + $0x380] sm:$0xf] %v4350
        %4617 = vst [vmem:[#allocation5 + $0x3a4] sm:$0xf] %v4351
        %4618 = vst [vmem:[#allocation5 + $0x3c8] sm:$0xf] %v4352
        %4619 = vst [vmem:[#allocation5 + $0x3ec] sm:$0xf] %v4353
        %4620 = vst [vmem:[#allocation5 + $0x410] sm:$0xf] %v4471
        %4621 = vst [vmem:[#allocation5 + $0x434] sm:$0xf] %v4472
        %4622 = vst [vmem:[#allocation5 + $0x458] sm:$0xf] %v4590
        %4623 = vst [vmem:[#allocation5 + $0x47c] sm:$0xf] %v4591
        %v4624 = vld [vmem:[#allocation5] sm:$0xff]
        %v4625 = vld [vmem:[#allocation5 + $0x8] sm:$0xff]
        %v4626 = vld [vmem:[#allocation5 + $0x10] sm:$0xff]
        %v4627 = vld [vmem:[#allocation5 + $0x18] sm:$0xff]
        %v4628 = vld [vmem:[#allocation5 + $0x20] sm:$0xf]
        %v4629 = vld [vmem:[#allocation5 + $0x24] sm:$0xff]
        %v4630 = vld [vmem:[#allocation5 + $0x2c] sm:$0xff]
        %v4631 = vld [vmem:[#allocation5 + $0x34] sm:$0xff]
        %v4632 = vld [vmem:[#allocation5 + $0x3c] sm:$0xff]
        %v4633 = vld [vmem:[#allocation5 + $0x44] sm:$0xf]
        %v4634 = vld [vmem:[#allocation5 + $0x48] sm:$0xff]
        %v4635 = vld [vmem:[#allocation5 + $0x50] sm:$0xff]
        %v4636 = vld [vmem:[#allocation5 + $0x58] sm:$0xff]
        %v4637 = vld [vmem:[#allocation5 + $0x60] sm:$0xff]
        %v4638 = vld [vmem:[#allocation5 + $0x68] sm:$0xf]
        %v4639 = vld [vmem:[#allocation5 + $0x6c] sm:$0xff]
        %v4640 = vld [vmem:[#allocation5 + $0x74] sm:$0xff]
        %v4641 = vld [vmem:[#allocation5 + $0x7c] sm:$0xff]
        %v4642 = vld [vmem:[#allocation5 + $0x84] sm:$0xff]
        %v4643 = vld [vmem:[#allocation5 + $0x8c] sm:$0xf]
        %v4644 = vld [vmem:[#allocation5 + $0x90] sm:$0xff]
        %v4645 = vld [vmem:[#allocation5 + $0x98] sm:$0xff]
        %v4646 = vld [vmem:[#allocation5 + $0xa0] sm:$0xff]
        %v4647 = vld [vmem:[#allocation5 + $0xa8] sm:$0xff]
        %v4648 = vld [vmem:[#allocation5 + $0xb0] sm:$0xf]
        %v4649 = vld [vmem:[#allocation5 + $0xb4] sm:$0xff]
        %v4650 = vld [vmem:[#allocation5 + $0xbc] sm:$0xff]
        %v4651 = vld [vmem:[#allocation5 + $0xc4] sm:$0xff]
        %v4652 = vld [vmem:[#allocation5 + $0xcc] sm:$0xff]
        %v4653 = vld [vmem:[#allocation5 + $0xd4] sm:$0xf]
        %v4654 = vld [vmem:[#allocation5 + $0xd8] sm:$0xff]
        %v4655 = vld [vmem:[#allocation5 + $0xe0] sm:$0xff]
        %v4656 = vld [vmem:[#allocation5 + $0xe8] sm:$0xff]
        %v4657 = vld [vmem:[#allocation5 + $0xf0] sm:$0xff]
        %v4658 = vld [vmem:[#allocation5 + $0xf8] sm:$0xf]
        %v4659 = vld [vmem:[#allocation5 + $0xfc] sm:$0xff]
        %v4660 = vld [vmem:[#allocation5 + $0x104] sm:$0xff]
        %v4661 = vld [vmem:[#allocation5 + $0x10c] sm:$0xff]
        %v4662 = vld [vmem:[#allocation5 + $0x114] sm:$0xff]
        %v4663 = vld [vmem:[#allocation5 + $0x11c] sm:$0xf]
        %v4664 = vld [vmem:[#allocation5 + $0x120] sm:$0xff]
        %v4665 = vld [vmem:[#allocation5 + $0x128] sm:$0xff]
        %v4666 = vld [vmem:[#allocation5 + $0x130] sm:$0xff]
        %v4667 = vld [vmem:[#allocation5 + $0x138] sm:$0xff]
        %v4668 = vld [vmem:[#allocation5 + $0x140] sm:$0xf]
        %v4669 = vld [vmem:[#allocation5 + $0x144] sm:$0xff]
        %v4670 = vld [vmem:[#allocation5 + $0x14c] sm:$0xff]
        %v4671 = vld [vmem:[#allocation5 + $0x154] sm:$0xff]
        %v4672 = vld [vmem:[#allocation5 + $0x15c] sm:$0xff]
        %v4673 = vld [vmem:[#allocation5 + $0x164] sm:$0xf]
        %v4674 = vld [vmem:[#allocation5 + $0x168] sm:$0xff]
        %v4675 = vld [vmem:[#allocation5 + $0x170] sm:$0xff]
        %v4676 = vld [vmem:[#allocation5 + $0x178] sm:$0xff]
        %v4677 = vld [vmem:[#allocation5 + $0x180] sm:$0xff]
        %v4678 = vld [vmem:[#allocation5 + $0x188] sm:$0xf]
        %v4679 = vld [vmem:[#allocation5 + $0x18c] sm:$0xff]
        %v4680 = vld [vmem:[#allocation5 + $0x194] sm:$0xff]
        %v4681 = vld [vmem:[#allocation5 + $0x19c] sm:$0xff]
        %v4682 = vld [vmem:[#allocation5 + $0x1a4] sm:$0xff]
        %v4683 = vld [vmem:[#allocation5 + $0x1ac] sm:$0xf]
        %v4684 = vld [vmem:[#allocation5 + $0x1b0] sm:$0xff]
        %v4685 = vld [vmem:[#allocation5 + $0x1b8] sm:$0xff]
        %v4686 = vld [vmem:[#allocation5 + $0x1c0] sm:$0xff]
        %v4687 = vld [vmem:[#allocation5 + $0x1c8] sm:$0xff]
        %v4688 = vld [vmem:[#allocation5 + $0x1d0] sm:$0xf]
        %v4689 = vld [vmem:[#allocation5 + $0x1d4] sm:$0xff]
        %v4690 = vld [vmem:[#allocation5 + $0x1dc] sm:$0xff]
        %v4691 = vld [vmem:[#allocation5 + $0x1e4] sm:$0xff]
        %v4692 = vld [vmem:[#allocation5 + $0x1ec] sm:$0xff]
        %v4693 = vld [vmem:[#allocation5 + $0x1f4] sm:$0xf]
        %v4694 = vld [vmem:[#allocation5 + $0x1f8] sm:$0xff]
        %v4695 = vld [vmem:[#allocation5 + $0x200] sm:$0xff]
        %v4696 = vld [vmem:[#allocation5 + $0x208] sm:$0xff]
        %v4697 = vld [vmem:[#allocation5 + $0x210] sm:$0xff]
        %v4698 = vld [vmem:[#allocation5 + $0x218] sm:$0xf]
        %v4699 = vld [vmem:[#allocation5 + $0x21c] sm:$0xff]
        %v4700 = vld [vmem:[#allocation5 + $0x224] sm:$0xff]
        %v4701 = vld [vmem:[#allocation5 + $0x22c] sm:$0xff]
        %v4702 = vld [vmem:[#allocation5 + $0x234] sm:$0xff]
        %v4703 = vld [vmem:[#allocation5 + $0x23c] sm:$0xf]
        %v4704 = vld [vmem:[#allocation5 + $0x240] sm:$0xff]
        %v4705 = vld [vmem:[#allocation5 + $0x248] sm:$0xff]
        %v4706 = vld [vmem:[#allocation5 + $0x250] sm:$0xff]
        %v4707 = vld [vmem:[#allocation5 + $0x258] sm:$0xff]
        %v4708 = vld [vmem:[#allocation5 + $0x260] sm:$0xf]
        %v4709 = vld [vmem:[#allocation5 + $0x264] sm:$0xff]
        %v4710 = vld [vmem:[#allocation5 + $0x26c] sm:$0xff]
        %v4711 = vld [vmem:[#allocation5 + $0x274] sm:$0xff]
        %v4712 = vld [vmem:[#allocation5 + $0x27c] sm:$0xff]
        %v4713 = vld [vmem:[#allocation5 + $0x284] sm:$0xf]
        %v4714 = vld [vmem:[#allocation5 + $0x288] sm:$0xff]
        %v4715 = vld [vmem:[#allocation5 + $0x290] sm:$0xff]
        %v4716 = vld [vmem:[#allocation5 + $0x298] sm:$0xff]
        %v4717 = vld [vmem:[#allocation5 + $0x2a0] sm:$0xff]
        %v4718 = vld [vmem:[#allocation5 + $0x2a8] sm:$0xf]
        %v4719 = vld [vmem:[#allocation5 + $0x2ac] sm:$0xff]
        %v4720 = vld [vmem:[#allocation5 + $0x2b4] sm:$0xff]
        %v4721 = vld [vmem:[#allocation5 + $0x2bc] sm:$0xff]
        %v4722 = vld [vmem:[#allocation5 + $0x2c4] sm:$0xff]
        %v4723 = vld [vmem:[#allocation5 + $0x2cc] sm:$0xf]
        %v4724 = vld [vmem:[#allocation5 + $0x2d0] sm:$0xff]
        %v4725 = vld [vmem:[#allocation5 + $0x2d8] sm:$0xff]
        %v4726 = vld [vmem:[#allocation5 + $0x2e0] sm:$0xff]
        %v4727 = vld [vmem:[#allocation5 + $0x2e8] sm:$0xff]
        %v4728 = vld [vmem:[#allocation5 + $0x2f0] sm:$0xf]
        %v4729 = vld [vmem:[#allocation5 + $0x2f4] sm:$0xff]
        %v4730 = vld [vmem:[#allocation5 + $0x2fc] sm:$0xff]
        %v4731 = vld [vmem:[#allocation5 + $0x304] sm:$0xff]
        %v4732 = vld [vmem:[#allocation5 + $0x30c] sm:$0xff]
        %v4733 = vld [vmem:[#allocation5 + $0x314] sm:$0xf]
        %v4734 = vld [vmem:[#allocation5 + $0x318] sm:$0xff]
        %v4735 = vld [vmem:[#allocation5 + $0x320] sm:$0xff]
        %v4736 = vld [vmem:[#allocation5 + $0x328] sm:$0xff]
        %v4737 = vld [vmem:[#allocation5 + $0x330] sm:$0xff]
        %v4738 = vld [vmem:[#allocation5 + $0x338] sm:$0xf]
        %v4739 = vld [vmem:[#allocation5 + $0x33c] sm:$0xff]
        %v4740 = vld [vmem:[#allocation5 + $0x344] sm:$0xff]
        %v4741 = vld [vmem:[#allocation5 + $0x34c] sm:$0xff]
        %v4742 = vld [vmem:[#allocation5 + $0x354] sm:$0xff]
        %v4743 = vld [vmem:[#allocation5 + $0x35c] sm:$0xf]
        %v4744 = vld [vmem:[#allocation5 + $0x360] sm:$0xff]
        %v4745 = vld [vmem:[#allocation5 + $0x368] sm:$0xff]
        %v4746 = vld [vmem:[#allocation5 + $0x370] sm:$0xff]
        %v4747 = vld [vmem:[#allocation5 + $0x378] sm:$0xff]
        %v4748 = vld [vmem:[#allocation5 + $0x380] sm:$0xf]
        %v4749 = vld [vmem:[#allocation5 + $0x384] sm:$0xff]
        %v4750 = vld [vmem:[#allocation5 + $0x38c] sm:$0xff]
        %v4751 = vld [vmem:[#allocation5 + $0x394] sm:$0xff]
        %v4752 = vld [vmem:[#allocation5 + $0x39c] sm:$0xff]
        %v4753 = vld [vmem:[#allocation5 + $0x3a4] sm:$0xf]
        %v4754 = vld [vmem:[#allocation5 + $0x3a8] sm:$0xff]
        %v4755 = vld [vmem:[#allocation5 + $0x3b0] sm:$0xff]
        %v4756 = vld [vmem:[#allocation5 + $0x3b8] sm:$0xff]
        %v4757 = vld [vmem:[#allocation5 + $0x3c0] sm:$0xff]
        %v4758 = vld [vmem:[#allocation5 + $0x3c8] sm:$0xf]
        %v4759 = vld [vmem:[#allocation5 + $0x3cc] sm:$0xff]
        %v4760 = vld [vmem:[#allocation5 + $0x3d4] sm:$0xff]
        %v4761 = vld [vmem:[#allocation5 + $0x3dc] sm:$0xff]
        %v4762 = vld [vmem:[#allocation5 + $0x3e4] sm:$0xff]
        %v4763 = vld [vmem:[#allocation5 + $0x3ec] sm:$0xf]
        %v4764 = vld [vmem:[#allocation5 + $0x3f0] sm:$0xff]
        %v4765 = vld [vmem:[#allocation5 + $0x3f8] sm:$0xff]
        %v4766 = vld [vmem:[#allocation5 + $0x400] sm:$0xff]
        %v4767 = vld [vmem:[#allocation5 + $0x408] sm:$0xff]
        %v4768 = vld [vmem:[#allocation5 + $0x410] sm:$0xf]
        %v4769 = vld [vmem:[#allocation5 + $0x414] sm:$0xff]
        %v4770 = vld [vmem:[#allocation5 + $0x41c] sm:$0xff]
        %v4771 = vld [vmem:[#allocation5 + $0x424] sm:$0xff]
        %v4772 = vld [vmem:[#allocation5 + $0x42c] sm:$0xff]
        %v4773 = vld [vmem:[#allocation5 + $0x434] sm:$0xf]
        %v4774 = vld [vmem:[#allocation5 + $0x438] sm:$0xff]
        %v4775 = vld [vmem:[#allocation5 + $0x440] sm:$0xff]
        %v4776 = vld [vmem:[#allocation5 + $0x448] sm:$0xff]
        %v4777 = vld [vmem:[#allocation5 + $0x450] sm:$0xff]
        %v4778 = vld [vmem:[#allocation5 + $0x458] sm:$0xf]
        %v4779 = vld [vmem:[#allocation5 + $0x45c] sm:$0xff]
        %v4780 = vld [vmem:[#allocation5 + $0x464] sm:$0xff]
        %v4781 = vld [vmem:[#allocation5 + $0x46c] sm:$0xff]
        %v4782 = vld [vmem:[#allocation5 + $0x474] sm:$0xff]
        %v4783 = vld [vmem:[#allocation5 + $0x47c] sm:$0xf]
        %v4784 = vld [vmem:[#allocation11] sm:$0xf]
        %v4785 = vld [vmem:[#allocation11 + $0x4] sm:$0xf]
        %v4786 = vld [vmem:[#allocation11 + $0x8] sm:$0xf]
        %v4787 = vld [vmem:[#allocation11 + $0xc] sm:$0xf]
        %v4788 = vld [vmem:[#allocation11 + $0x10] sm:$0xf]
        %v4789 = vld [vmem:[#allocation11 + $0x14] sm:$0xf]
        %v4790 = vld [vmem:[#allocation11 + $0x18] sm:$0xf]
        %v4791 = vld [vmem:[#allocation11 + $0x1c] sm:$0xf]
        %v4792 = vld [vmem:[#allocation11 + $0x20] sm:$0xf]
        %v4793 = vld [vmem:[#allocation11 + $0x24] sm:$0xf]
        %v4794 = vld [vmem:[#allocation11 + $0x28] sm:$0xf]
        %v4795 = vld [vmem:[#allocation11 + $0x2c] sm:$0xf]
        %v4796 = vld [vmem:[#allocation11 + $0x30] sm:$0xf]
        %v4797 = vld [vmem:[#allocation11 + $0x34] sm:$0xf]
        %v4798 = vld [vmem:[#allocation11 + $0x38] sm:$0xf]
        %v4799 = vld [vmem:[#allocation11 + $0x3c] sm:$0xf]
        %v4800 = vld [vmem:[#allocation11 + $0x40] sm:$0xf]
        %v4801 = vld [vmem:[#allocation11 + $0x44] sm:$0xf]
        %v4802 = vld [vmem:[#allocation11 + $0x48] sm:$0xf]
        %v4803 = vld [vmem:[#allocation11 + $0x4c] sm:$0xf]
        %v4804 = vld [vmem:[#allocation11 + $0x50] sm:$0xf]
        %v4805 = vld [vmem:[#allocation11 + $0x54] sm:$0xf]
        %v4806 = vld [vmem:[#allocation11 + $0x58] sm:$0xf]
        %v4807 = vld [vmem:[#allocation11 + $0x5c] sm:$0xf]
        %v4808 = vld [vmem:[#allocation11 + $0x60] sm:$0xf]
        %v4809 = vld [vmem:[#allocation11 + $0x64] sm:$0xf]
        %v4810 = vld [vmem:[#allocation11 + $0x68] sm:$0xf]
        %v4811 = vld [vmem:[#allocation11 + $0x6c] sm:$0xf]
        %v4812 = vld [vmem:[#allocation11 + $0x70] sm:$0xf]
        %v4813 = vld [vmem:[#allocation11 + $0x74] sm:$0xf]
        %v4814 = vld [vmem:[#allocation11 + $0x78] sm:$0xf]
        %v4815 = vld [vmem:[#allocation11 + $0x7c] sm:$0xf]
        %v4816 = vld [vmem:[#allocation11 + $0x80] sm:$0xf]
        %v4817 = vld [vmem:[#allocation11 + $0x84] sm:$0xf]
        %v4818 = vld [vmem:[#allocation11 + $0x88] sm:$0xf]
        %v4819 = vld [vmem:[#allocation11 + $0x8c] sm:$0xf]
        %v4820 = vld [vmem:[#allocation11 + $0x90] sm:$0xf]
        %v4821 = vld [vmem:[#allocation11 + $0x94] sm:$0xf]
        %v4822 = vld [vmem:[#allocation11 + $0x98] sm:$0xf]
        %v4823 = vld [vmem:[#allocation11 + $0x9c] sm:$0xf]
        %v4824 = vld [vmem:[#allocation11 + $0xa0] sm:$0xf]
        %v4825 = vld [vmem:[#allocation11 + $0xa4] sm:$0xf]
        %v4826 = vld [vmem:[#allocation11 + $0xa8] sm:$0xf]
        %v4827 = vld [vmem:[#allocation11 + $0xac] sm:$0xf]
        %v4828 = vld [vmem:[#allocation11 + $0xb0] sm:$0xf]
        %v4829 = vld [vmem:[#allocation11 + $0xb4] sm:$0xf]
        %v4830 = vld [vmem:[#allocation11 + $0xb8] sm:$0xf]
        %v4831 = vld [vmem:[#allocation11 + $0xbc] sm:$0xf]
        %v4832 = vld [vmem:[#allocation11 + $0xc0] sm:$0xf]
        %v4833 = vld [vmem:[#allocation11 + $0xc4] sm:$0xf]
        %v4834 = vld [vmem:[#allocation11 + $0xc8] sm:$0xf]
        %v4835 = vld [vmem:[#allocation11 + $0xcc] sm:$0xf]
        %v4836 = vld [vmem:[#allocation11 + $0xd0] sm:$0xf]
        %v4837 = vld [vmem:[#allocation11 + $0xd4] sm:$0xf]
        %v4838 = vld [vmem:[#allocation11 + $0xd8] sm:$0xf]
        %v4839 = vld [vmem:[#allocation11 + $0xdc] sm:$0xf]
        %v4840 = vld [vmem:[#allocation11 + $0xe0] sm:$0xf]
        %v4841 = vld [vmem:[#allocation11 + $0xe4] sm:$0xf]
        %v4842 = vld [vmem:[#allocation11 + $0xe8] sm:$0xf]
        %v4843 = vld [vmem:[#allocation11 + $0xec] sm:$0xf]
        %v4844 = vld [vmem:[#allocation11 + $0xf0] sm:$0xf]
        %v4845 = vld [vmem:[#allocation11 + $0xf4] sm:$0xf]
        %v4846 = vld [vmem:[#allocation11 + $0xf8] sm:$0xf]
        %v4847 = vld [vmem:[#allocation11 + $0xfc] sm:$0xf]
        %v4848 = vld [vmem:[#allocation11 + $0x100] sm:$0xf]
        %v4849 = vld [vmem:[#allocation11 + $0x104] sm:$0xf]
        %v4850 = vld [vmem:[#allocation11 + $0x108] sm:$0xf]
        %v4851 = vld [vmem:[#allocation11 + $0x10c] sm:$0xf]
        %v4852 = vld [vmem:[#allocation11 + $0x110] sm:$0xf]
        %v4853 = vld [vmem:[#allocation11 + $0x114] sm:$0xf]
        %v4854 = vld [vmem:[#allocation11 + $0x118] sm:$0xf]
        %v4855 = vld [vmem:[#allocation11 + $0x11c] sm:$0xf]
        %v4856 = vld [vmem:[#allocation11 + $0x120] sm:$0xf]
        %v4857 = vld [vmem:[#allocation11 + $0x124] sm:$0xf]
        %v4858 = vld [vmem:[#allocation11 + $0x128] sm:$0xf]
        %v4859 = vld [vmem:[#allocation11 + $0x12c] sm:$0xf]
        %v4860 = vld [vmem:[#allocation11 + $0x130] sm:$0xf]
        %v4861 = vld [vmem:[#allocation11 + $0x134] sm:$0xf]
        %v4862 = vld [vmem:[#allocation11 + $0x138] sm:$0xf]
        %v4863 = vld [vmem:[#allocation11 + $0x13c] sm:$0xf]
        %v4864 = vld [vmem:[#allocation11 + $0x140] sm:$0xf]
        %v4865 = vld [vmem:[#allocation11 + $0x144] sm:$0xf]
        %v4866 = vld [vmem:[#allocation11 + $0x148] sm:$0xf]
        %v4867 = vld [vmem:[#allocation11 + $0x14c] sm:$0xf]
        %v4868 = vld [vmem:[#allocation11 + $0x150] sm:$0xf]
        %v4869 = vld [vmem:[#allocation11 + $0x154] sm:$0xf]
        %v4870 = vld [vmem:[#allocation11 + $0x158] sm:$0xf]
        %v4871 = vld [vmem:[#allocation11 + $0x15c] sm:$0xf]
        %v4872 = vld [vmem:[#allocation11 + $0x160] sm:$0xf]
        %v4873 = vld [vmem:[#allocation11 + $0x164] sm:$0xf]
        %v4874 = vld [vmem:[#allocation11 + $0x168] sm:$0xf]
        %v4875 = vld [vmem:[#allocation11 + $0x16c] sm:$0xf]
        %v4876 = vld [vmem:[#allocation11 + $0x170] sm:$0xf]
        %v4877 = vld [vmem:[#allocation11 + $0x174] sm:$0xf]
        %v4878 = vld [vmem:[#allocation11 + $0x178] sm:$0xf]
        %v4879 = vld [vmem:[#allocation11 + $0x17c] sm:$0xf]
        %v4880 = vld [vmem:[#allocation11 + $0x180] sm:$0xf]
        %v4881 = vld [vmem:[#allocation11 + $0x184] sm:$0xf]
        %v4882 = vld [vmem:[#allocation11 + $0x188] sm:$0xf]
        %v4883 = vld [vmem:[#allocation11 + $0x18c] sm:$0xf]
        %v4884 = vld [vmem:[#allocation11 + $0x190] sm:$0xf]
        %v4885 = vld [vmem:[#allocation11 + $0x194] sm:$0xf]
        %v4886 = vld [vmem:[#allocation11 + $0x198] sm:$0xf]
        %v4887 = vld [vmem:[#allocation11 + $0x19c] sm:$0xf]
        %v4888 = vld [vmem:[#allocation11 + $0x1a0] sm:$0xf]
        %v4889 = vld [vmem:[#allocation11 + $0x1a4] sm:$0xf]
        %v4890 = vld [vmem:[#allocation11 + $0x1a8] sm:$0xf]
        %v4891 = vld [vmem:[#allocation11 + $0x1ac] sm:$0xf]
        %v4892 = vld [vmem:[#allocation11 + $0x1b0] sm:$0xf]
        %v4893 = vld [vmem:[#allocation11 + $0x1b4] sm:$0xf]
        %v4894 = vld [vmem:[#allocation11 + $0x1b8] sm:$0xf]
        %v4895 = vld [vmem:[#allocation11 + $0x1bc] sm:$0xf]
        %v4896 = vld [vmem:[#allocation11 + $0x1c0] sm:$0xf]
        %v4897 = vld [vmem:[#allocation11 + $0x1c4] sm:$0xf]
        %v4898 = vld [vmem:[#allocation11 + $0x1c8] sm:$0xf]
        %v4899 = vld [vmem:[#allocation11 + $0x1cc] sm:$0xf]
        %v4900 = vld [vmem:[#allocation11 + $0x1d0] sm:$0xf]
        %v4901 = vld [vmem:[#allocation11 + $0x1d4] sm:$0xf]
        %v4902 = vld [vmem:[#allocation11 + $0x1d8] sm:$0xf]
        %v4903 = vld [vmem:[#allocation11 + $0x1dc] sm:$0xf]
        %v4904 = vld [vmem:[#allocation11 + $0x1e0] sm:$0xf]
        %v4905 = vld [vmem:[#allocation11 + $0x1e4] sm:$0xf]
        %v4906 = vld [vmem:[#allocation11 + $0x1e8] sm:$0xf]
        %v4907 = vld [vmem:[#allocation11 + $0x1ec] sm:$0xf]
        %v4908 = vld [vmem:[#allocation11 + $0x1f0] sm:$0xf]
        %v4909 = vld [vmem:[#allocation11 + $0x1f4] sm:$0xf]
        %v4910 = vld [vmem:[#allocation11 + $0x1f8] sm:$0xf]
        %v4911 = vld [vmem:[#allocation11 + $0x1fc] sm:$0xf]
        %v4912 = vld [vmem:[#allocation11 + $0x200] sm:$0xf]
        %v4913 = vld [vmem:[#allocation11 + $0x204] sm:$0xf]
        %v4914 = vld [vmem:[#allocation11 + $0x208] sm:$0xf]
        %v4915 = vld [vmem:[#allocation11 + $0x20c] sm:$0xf]
        %v4916 = vld [vmem:[#allocation11 + $0x210] sm:$0xf]
        %v4917 = vld [vmem:[#allocation11 + $0x214] sm:$0xf]
        %v4918 = vld [vmem:[#allocation11 + $0x218] sm:$0xf]
        %v4919 = vld [vmem:[#allocation11 + $0x21c] sm:$0xf]
        %v4920 = vld [vmem:[#allocation11 + $0x220] sm:$0xf]
        %v4921 = vld [vmem:[#allocation11 + $0x224] sm:$0xf]
        %v4922 = vld [vmem:[#allocation11 + $0x228] sm:$0xf]
        %v4923 = vld [vmem:[#allocation11 + $0x22c] sm:$0xf]
        %v4924 = vld [vmem:[#allocation11 + $0x230] sm:$0xf]
        %v4925 = vld [vmem:[#allocation11 + $0x234] sm:$0xf]
        %v4926 = vld [vmem:[#allocation11 + $0x238] sm:$0xf]
        %v4927 = vld [vmem:[#allocation11 + $0x23c] sm:$0xf]
        %v4928 = vld [vmem:[%s6] sm:$0x1]
        %v4930 = vperm.slane %v4928, 0
        %v5092 = vunpack.c.l.b16 %v4624
        %v5093 = vunpack.c.h.b16 %v4624
        %v5094 = vunpack.c.l.b16 %v4625
        %v5095 = vunpack.c.h.b16 %v4625
        %v5096 = vunpack.c.l.b16 %v4626
        %v5097 = vunpack.c.h.b16 %v4626
        %v5098 = vunpack.c.l.b16 %v4627
        %v5099 = vunpack.c.h.b16 %v4627
        %v5100 = vunpack.c.l.b16 %v4628
        %v5101 = vunpack.c.l.b16 %v4629
        %v5102 = vunpack.c.h.b16 %v4629
        %v5103 = vunpack.c.l.b16 %v4630
        %v5104 = vunpack.c.h.b16 %v4630
        %v5105 = vunpack.c.l.b16 %v4631
        %v5106 = vunpack.c.h.b16 %v4631
        %v5107 = vunpack.c.l.b16 %v4632
        %v5108 = vunpack.c.h.b16 %v4632
        %v5109 = vunpack.c.l.b16 %v4633
        %v5110 = vunpack.c.l.b16 %v4634
        %v5111 = vunpack.c.h.b16 %v4634
        %v5112 = vunpack.c.l.b16 %v4635
        %v5113 = vunpack.c.h.b16 %v4635
        %v5114 = vunpack.c.l.b16 %v4636
        %v5115 = vunpack.c.h.b16 %v4636
        %v5116 = vunpack.c.l.b16 %v4637
        %v5117 = vunpack.c.h.b16 %v4637
        %v5118 = vunpack.c.l.b16 %v4638
        %v5119 = vunpack.c.l.b16 %v4639
        %v5120 = vunpack.c.h.b16 %v4639
        %v5121 = vunpack.c.l.b16 %v4640
        %v5122 = vunpack.c.h.b16 %v4640
        %v5123 = vunpack.c.l.b16 %v4641
        %v5124 = vunpack.c.h.b16 %v4641
        %v5125 = vunpack.c.l.b16 %v4642
        %v5126 = vunpack.c.h.b16 %v4642
        %v5127 = vunpack.c.l.b16 %v4643
        %v5128 = vunpack.c.l.b16 %v4644
        %v5129 = vunpack.c.h.b16 %v4644
        %v5130 = vunpack.c.l.b16 %v4645
        %v5131 = vunpack.c.h.b16 %v4645
        %v5132 = vunpack.c.l.b16 %v4646
        %v5133 = vunpack.c.h.b16 %v4646
        %v5134 = vunpack.c.l.b16 %v4647
        %v5135 = vunpack.c.h.b16 %v4647
        %v5136 = vunpack.c.l.b16 %v4648
        %v5137 = vunpack.c.l.b16 %v4649
        %v5138 = vunpack.c.h.b16 %v4649
        %v5139 = vunpack.c.l.b16 %v4650
        %v5140 = vunpack.c.h.b16 %v4650
        %v5141 = vunpack.c.l.b16 %v4651
        %v5142 = vunpack.c.h.b16 %v4651
        %v5143 = vunpack.c.l.b16 %v4652
        %v5144 = vunpack.c.h.b16 %v4652
        %v5145 = vunpack.c.l.b16 %v4653
        %v5146 = vunpack.c.l.b16 %v4654
        %v5147 = vunpack.c.h.b16 %v4654
        %v5148 = vunpack.c.l.b16 %v4655
        %v5149 = vunpack.c.h.b16 %v4655
        %v5150 = vunpack.c.l.b16 %v4656
        %v5151 = vunpack.c.h.b16 %v4656
        %v5152 = vunpack.c.l.b16 %v4657
        %v5153 = vunpack.c.h.b16 %v4657
        %v5154 = vunpack.c.l.b16 %v4658
        %v5155 = vunpack.c.l.b16 %v4659
        %v5156 = vunpack.c.h.b16 %v4659
        %v5157 = vunpack.c.l.b16 %v4660
        %v5158 = vunpack.c.h.b16 %v4660
        %v5159 = vunpack.c.l.b16 %v4661
        %v5160 = vunpack.c.h.b16 %v4661
        %v5161 = vunpack.c.l.b16 %v4662
        %v5162 = vunpack.c.h.b16 %v4662
        %v5163 = vunpack.c.l.b16 %v4663
        %v5164 = vunpack.c.l.b16 %v4664
        %v5165 = vunpack.c.h.b16 %v4664
        %v5166 = vunpack.c.l.b16 %v4665
        %v5167 = vunpack.c.h.b16 %v4665
        %v5168 = vunpack.c.l.b16 %v4666
        %v5169 = vunpack.c.h.b16 %v4666
        %v5170 = vunpack.c.l.b16 %v4667
        %v5171 = vunpack.c.h.b16 %v4667
        %v5172 = vunpack.c.l.b16 %v4668
        %v5173 = vunpack.c.l.b16 %v4669
        %v5174 = vunpack.c.h.b16 %v4669
        %v5175 = vunpack.c.l.b16 %v4670
        %v5176 = vunpack.c.h.b16 %v4670
        %v5177 = vunpack.c.l.b16 %v4671
        %v5178 = vunpack.c.h.b16 %v4671
        %v5179 = vunpack.c.l.b16 %v4672
        %v5180 = vunpack.c.h.b16 %v4672
        %v5181 = vunpack.c.l.b16 %v4673
        %v5182 = vunpack.c.l.b16 %v4674
        %v5183 = vunpack.c.h.b16 %v4674
        %v5184 = vunpack.c.l.b16 %v4675
        %v5185 = vunpack.c.h.b16 %v4675
        %v5186 = vunpack.c.l.b16 %v4676
        %v5187 = vunpack.c.h.b16 %v4676
        %v5188 = vunpack.c.l.b16 %v4677
        %v5189 = vunpack.c.h.b16 %v4677
        %v5190 = vunpack.c.l.b16 %v4678
        %v5191 = vunpack.c.l.b16 %v4679
        %v5192 = vunpack.c.h.b16 %v4679
        %v5193 = vunpack.c.l.b16 %v4680
        %v5194 = vunpack.c.h.b16 %v4680
        %v5195 = vunpack.c.l.b16 %v4681
        %v5196 = vunpack.c.h.b16 %v4681
        %v5197 = vunpack.c.l.b16 %v4682
        %v5198 = vunpack.c.h.b16 %v4682
        %v5199 = vunpack.c.l.b16 %v4683
        %v5200 = vunpack.c.l.b16 %v4684
        %v5201 = vunpack.c.h.b16 %v4684
        %v5202 = vunpack.c.l.b16 %v4685
        %v5203 = vunpack.c.h.b16 %v4685
        %v5204 = vunpack.c.l.b16 %v4686
        %v5205 = vunpack.c.h.b16 %v4686
        %v5206 = vunpack.c.l.b16 %v4687
        %v5207 = vunpack.c.h.b16 %v4687
        %v5208 = vunpack.c.l.b16 %v4688
        %v5209 = vunpack.c.l.b16 %v4689
        %v5210 = vunpack.c.h.b16 %v4689
        %v5211 = vunpack.c.l.b16 %v4690
        %v5212 = vunpack.c.h.b16 %v4690
        %v5213 = vunpack.c.l.b16 %v4691
        %v5214 = vunpack.c.h.b16 %v4691
        %v5215 = vunpack.c.l.b16 %v4692
        %v5216 = vunpack.c.h.b16 %v4692
        %v5217 = vunpack.c.l.b16 %v4693
        %v5218 = vunpack.c.l.b16 %v4694
        %v5219 = vunpack.c.h.b16 %v4694
        %v5220 = vunpack.c.l.b16 %v4695
        %v5221 = vunpack.c.h.b16 %v4695
        %v5222 = vunpack.c.l.b16 %v4696
        %v5223 = vunpack.c.h.b16 %v4696
        %v5224 = vunpack.c.l.b16 %v4697
        %v5225 = vunpack.c.h.b16 %v4697
        %v5226 = vunpack.c.l.b16 %v4698
        %v5227 = vunpack.c.l.b16 %v4699
        %v5228 = vunpack.c.h.b16 %v4699
        %v5229 = vunpack.c.l.b16 %v4700
        %v5230 = vunpack.c.h.b16 %v4700
        %v5231 = vunpack.c.l.b16 %v4701
        %v5232 = vunpack.c.h.b16 %v4701
        %v5233 = vunpack.c.l.b16 %v4702
        %v5234 = vunpack.c.h.b16 %v4702
        %v5235 = vunpack.c.l.b16 %v4703
        %v5236 = vunpack.c.l.b16 %v4704
        %v5237 = vunpack.c.h.b16 %v4704
        %v5238 = vunpack.c.l.b16 %v4705
        %v5239 = vunpack.c.h.b16 %v4705
        %v5240 = vunpack.c.l.b16 %v4706
        %v5241 = vunpack.c.h.b16 %v4706
        %v5242 = vunpack.c.l.b16 %v4707
        %v5243 = vunpack.c.h.b16 %v4707
        %v5244 = vunpack.c.l.b16 %v4708
        %v5245 = vunpack.c.l.b16 %v4709
        %v5246 = vunpack.c.h.b16 %v4709
        %v5247 = vunpack.c.l.b16 %v4710
        %v5248 = vunpack.c.h.b16 %v4710
        %v5249 = vunpack.c.l.b16 %v4711
        %v5250 = vunpack.c.h.b16 %v4711
        %v5251 = vunpack.c.l.b16 %v4712
        %v5252 = vunpack.c.h.b16 %v4712
        %v5253 = vunpack.c.l.b16 %v4713
        %v5254 = vunpack.c.l.b16 %v4714
        %v5255 = vunpack.c.h.b16 %v4714
        %v5256 = vunpack.c.l.b16 %v4715
        %v5257 = vunpack.c.h.b16 %v4715
        %v5258 = vunpack.c.l.b16 %v4716
        %v5259 = vunpack.c.h.b16 %v4716
        %v5260 = vunpack.c.l.b16 %v4717
        %v5261 = vunpack.c.h.b16 %v4717
        %v5262 = vunpack.c.l.b16 %v4718
        %v5263 = vunpack.c.l.b16 %v4719
        %v5264 = vunpack.c.h.b16 %v4719
        %v5265 = vunpack.c.l.b16 %v4720
        %v5266 = vunpack.c.h.b16 %v4720
        %v5267 = vunpack.c.l.b16 %v4721
        %v5268 = vunpack.c.h.b16 %v4721
        %v5269 = vunpack.c.l.b16 %v4722
        %v5270 = vunpack.c.h.b16 %v4722
        %v5271 = vunpack.c.l.b16 %v4723
        %v5272 = vunpack.c.l.b16 %v4724
        %v5273 = vunpack.c.h.b16 %v4724
        %v5274 = vunpack.c.l.b16 %v4725
        %v5275 = vunpack.c.h.b16 %v4725
        %v5276 = vunpack.c.l.b16 %v4726
        %v5277 = vunpack.c.h.b16 %v4726
        %v5278 = vunpack.c.l.b16 %v4727
        %v5279 = vunpack.c.h.b16 %v4727
        %v5280 = vunpack.c.l.b16 %v4728
        %v5281 = vunpack.c.l.b16 %v4729
        %v5282 = vunpack.c.h.b16 %v4729
        %v5283 = vunpack.c.l.b16 %v4730
        %v5284 = vunpack.c.h.b16 %v4730
        %v5285 = vunpack.c.l.b16 %v4731
        %v5286 = vunpack.c.h.b16 %v4731
        %v5287 = vunpack.c.l.b16 %v4732
        %v5288 = vunpack.c.h.b16 %v4732
        %v5289 = vunpack.c.l.b16 %v4733
        %v5290 = vunpack.c.l.b16 %v4734
        %v5291 = vunpack.c.h.b16 %v4734
        %v5292 = vunpack.c.l.b16 %v4735
        %v5293 = vunpack.c.h.b16 %v4735
        %v5294 = vunpack.c.l.b16 %v4736
        %v5295 = vunpack.c.h.b16 %v4736
        %v5296 = vunpack.c.l.b16 %v4737
        %v5297 = vunpack.c.h.b16 %v4737
        %v5298 = vunpack.c.l.b16 %v4738
        %v5299 = vunpack.c.l.b16 %v4739
        %v5300 = vunpack.c.h.b16 %v4739
        %v5301 = vunpack.c.l.b16 %v4740
        %v5302 = vunpack.c.h.b16 %v4740
        %v5303 = vunpack.c.l.b16 %v4741
        %v5304 = vunpack.c.h.b16 %v4741
        %v5305 = vunpack.c.l.b16 %v4742
        %v5306 = vunpack.c.h.b16 %v4742
        %v5307 = vunpack.c.l.b16 %v4743
        %v5308 = vunpack.c.l.b16 %v4744
        %v5309 = vunpack.c.h.b16 %v4744
        %v5310 = vunpack.c.l.b16 %v4745
        %v5311 = vunpack.c.h.b16 %v4745
        %v5312 = vunpack.c.l.b16 %v4746
        %v5313 = vunpack.c.h.b16 %v4746
        %v5314 = vunpack.c.l.b16 %v4747
        %v5315 = vunpack.c.h.b16 %v4747
        %v5316 = vunpack.c.l.b16 %v4748
        %v5317 = vunpack.c.l.b16 %v4749
        %v5318 = vunpack.c.h.b16 %v4749
        %v5319 = vunpack.c.l.b16 %v4750
        %v5320 = vunpack.c.h.b16 %v4750
        %v5321 = vunpack.c.l.b16 %v4751
        %v5322 = vunpack.c.h.b16 %v4751
        %v5323 = vunpack.c.l.b16 %v4752
        %v5324 = vunpack.c.h.b16 %v4752
        %v5325 = vunpack.c.l.b16 %v4753
        %v5326 = vunpack.c.l.b16 %v4754
        %v5327 = vunpack.c.h.b16 %v4754
        %v5328 = vunpack.c.l.b16 %v4755
        %v5329 = vunpack.c.h.b16 %v4755
        %v5330 = vunpack.c.l.b16 %v4756
        %v5331 = vunpack.c.h.b16 %v4756
        %v5332 = vunpack.c.l.b16 %v4757
        %v5333 = vunpack.c.h.b16 %v4757
        %v5334 = vunpack.c.l.b16 %v4758
        %v5335 = vunpack.c.l.b16 %v4759
        %v5336 = vunpack.c.h.b16 %v4759
        %v5337 = vunpack.c.l.b16 %v4760
        %v5338 = vunpack.c.h.b16 %v4760
        %v5339 = vunpack.c.l.b16 %v4761
        %v5340 = vunpack.c.h.b16 %v4761
        %v5341 = vunpack.c.l.b16 %v4762
        %v5342 = vunpack.c.h.b16 %v4762
        %v5343 = vunpack.c.l.b16 %v4763
        %v5344 = vunpack.c.l.b16 %v4764
        %v5345 = vunpack.c.h.b16 %v4764
        %v5346 = vunpack.c.l.b16 %v4765
        %v5347 = vunpack.c.h.b16 %v4765
        %v5348 = vunpack.c.l.b16 %v4766
        %v5349 = vunpack.c.h.b16 %v4766
        %v5350 = vunpack.c.l.b16 %v4767
        %v5351 = vunpack.c.h.b16 %v4767
        %v5352 = vunpack.c.l.b16 %v4768
        %v5353 = vunpack.c.l.b16 %v4769
        %v5354 = vunpack.c.h.b16 %v4769
        %v5355 = vunpack.c.l.b16 %v4770
        %v5356 = vunpack.c.h.b16 %v4770
        %v5357 = vunpack.c.l.b16 %v4771
        %v5358 = vunpack.c.h.b16 %v4771
        %v5359 = vunpack.c.l.b16 %v4772
        %v5360 = vunpack.c.h.b16 %v4772
        %v5361 = vunpack.c.l.b16 %v4773
        %v5362 = vunpack.c.l.b16 %v4774
        %v5363 = vunpack.c.h.b16 %v4774
        %v5364 = vunpack.c.l.b16 %v4775
        %v5365 = vunpack.c.h.b16 %v4775
        %v5366 = vunpack.c.l.b16 %v4776
        %v5367 = vunpack.c.h.b16 %v4776
        %v5368 = vunpack.c.l.b16 %v4777
        %v5369 = vunpack.c.h.b16 %v4777
        %v5370 = vunpack.c.l.b16 %v4778
        %v5371 = vunpack.c.l.b16 %v4779
        %v5372 = vunpack.c.h.b16 %v4779
        %v5373 = vunpack.c.l.b16 %v4780
        %v5374 = vunpack.c.h.b16 %v4780
        %v5375 = vunpack.c.l.b16 %v4781
        %v5376 = vunpack.c.h.b16 %v4781
        %v5377 = vunpack.c.l.b16 %v4782
        %v5378 = vunpack.c.h.b16 %v4782
        %v5379 = vunpack.c.l.b16 %v4783
        %v5380 = vpack.c.b16 %v5101, %v5092
        %v5381 = vpack.c.b16 %v5102, %v5093
        %v5382 = vpack.c.b16 %v5103, %v5094
        %v5383 = vpack.c.b16 %v5104, %v5095
        %v5384 = vpack.c.b16 %v5105, %v5096
        %v5385 = vpack.c.b16 %v5106, %v5097
        %v5386 = vpack.c.b16 %v5107, %v5098
        %v5387 = vpack.c.b16 %v5108, %v5099
        %v5388 = vpack.c.b16 %v5109, %v5100
        %v5389 = vpack.c.b16 %v5119, %v5110
        %v5390 = vpack.c.b16 %v5120, %v5111
        %v5391 = vpack.c.b16 %v5121, %v5112
        %v5392 = vpack.c.b16 %v5122, %v5113
        %v5393 = vpack.c.b16 %v5123, %v5114
        %v5394 = vpack.c.b16 %v5124, %v5115
        %v5395 = vpack.c.b16 %v5125, %v5116
        %v5396 = vpack.c.b16 %v5126, %v5117
        %v5397 = vpack.c.b16 %v5127, %v5118
        %v5398 = vpack.c.b16 %v5137, %v5128
        %v5399 = vpack.c.b16 %v5138, %v5129
        %v5400 = vpack.c.b16 %v5139, %v5130
        %v5401 = vpack.c.b16 %v5140, %v5131
        %v5402 = vpack.c.b16 %v5141, %v5132
        %v5403 = vpack.c.b16 %v5142, %v5133
        %v5404 = vpack.c.b16 %v5143, %v5134
        %v5405 = vpack.c.b16 %v5144, %v5135
        %v5406 = vpack.c.b16 %v5145, %v5136
        %v5407 = vpack.c.b16 %v5155, %v5146
        %v5408 = vpack.c.b16 %v5156, %v5147
        %v5409 = vpack.c.b16 %v5157, %v5148
        %v5410 = vpack.c.b16 %v5158, %v5149
        %v5411 = vpack.c.b16 %v5159, %v5150
        %v5412 = vpack.c.b16 %v5160, %v5151
        %v5413 = vpack.c.b16 %v5161, %v5152
        %v5414 = vpack.c.b16 %v5162, %v5153
        %v5415 = vpack.c.b16 %v5163, %v5154
        %v5416 = vpack.c.b16 %v5173, %v5164
        %v5417 = vpack.c.b16 %v5174, %v5165
        %v5418 = vpack.c.b16 %v5175, %v5166
        %v5419 = vpack.c.b16 %v5176, %v5167
        %v5420 = vpack.c.b16 %v5177, %v5168
        %v5421 = vpack.c.b16 %v5178, %v5169
        %v5422 = vpack.c.b16 %v5179, %v5170
        %v5423 = vpack.c.b16 %v5180, %v5171
        %v5424 = vpack.c.b16 %v5181, %v5172
        %v5425 = vpack.c.b16 %v5191, %v5182
        %v5426 = vpack.c.b16 %v5192, %v5183
        %v5427 = vpack.c.b16 %v5193, %v5184
        %v5428 = vpack.c.b16 %v5194, %v5185
        %v5429 = vpack.c.b16 %v5195, %v5186
        %v5430 = vpack.c.b16 %v5196, %v5187
        %v5431 = vpack.c.b16 %v5197, %v5188
        %v5432 = vpack.c.b16 %v5198, %v5189
        %v5433 = vpack.c.b16 %v5199, %v5190
        %v5434 = vpack.c.b16 %v5209, %v5200
        %v5435 = vpack.c.b16 %v5210, %v5201
        %v5436 = vpack.c.b16 %v5211, %v5202
        %v5437 = vpack.c.b16 %v5212, %v5203
        %v5438 = vpack.c.b16 %v5213, %v5204
        %v5439 = vpack.c.b16 %v5214, %v5205
        %v5440 = vpack.c.b16 %v5215, %v5206
        %v5441 = vpack.c.b16 %v5216, %v5207
        %v5442 = vpack.c.b16 %v5217, %v5208
        %v5443 = vpack.c.b16 %v5227, %v5218
        %v5444 = vpack.c.b16 %v5228, %v5219
        %v5445 = vpack.c.b16 %v5229, %v5220
        %v5446 = vpack.c.b16 %v5230, %v5221
        %v5447 = vpack.c.b16 %v5231, %v5222
        %v5448 = vpack.c.b16 %v5232, %v5223
        %v5449 = vpack.c.b16 %v5233, %v5224
        %v5450 = vpack.c.b16 %v5234, %v5225
        %v5451 = vpack.c.b16 %v5235, %v5226
        %v5452 = vpack.c.b16 %v5245, %v5236
        %v5453 = vpack.c.b16 %v5246, %v5237
        %v5454 = vpack.c.b16 %v5247, %v5238
        %v5455 = vpack.c.b16 %v5248, %v5239
        %v5456 = vpack.c.b16 %v5249, %v5240
        %v5457 = vpack.c.b16 %v5250, %v5241
        %v5458 = vpack.c.b16 %v5251, %v5242
        %v5459 = vpack.c.b16 %v5252, %v5243
        %v5460 = vpack.c.b16 %v5253, %v5244
        %v5461 = vpack.c.b16 %v5263, %v5254
        %v5462 = vpack.c.b16 %v5264, %v5255
        %v5463 = vpack.c.b16 %v5265, %v5256
        %v5464 = vpack.c.b16 %v5266, %v5257
        %v5465 = vpack.c.b16 %v5267, %v5258
        %v5466 = vpack.c.b16 %v5268, %v5259
        %v5467 = vpack.c.b16 %v5269, %v5260
        %v5468 = vpack.c.b16 %v5270, %v5261
        %v5469 = vpack.c.b16 %v5271, %v5262
        %v5470 = vpack.c.b16 %v5281, %v5272
        %v5471 = vpack.c.b16 %v5282, %v5273
        %v5472 = vpack.c.b16 %v5283, %v5274
        %v5473 = vpack.c.b16 %v5284, %v5275
        %v5474 = vpack.c.b16 %v5285, %v5276
        %v5475 = vpack.c.b16 %v5286, %v5277
        %v5476 = vpack.c.b16 %v5287, %v5278
        %v5477 = vpack.c.b16 %v5288, %v5279
        %v5478 = vpack.c.b16 %v5289, %v5280
        %v5479 = vpack.c.b16 %v5299, %v5290
        %v5480 = vpack.c.b16 %v5300, %v5291
        %v5481 = vpack.c.b16 %v5301, %v5292
        %v5482 = vpack.c.b16 %v5302, %v5293
        %v5483 = vpack.c.b16 %v5303, %v5294
        %v5484 = vpack.c.b16 %v5304, %v5295
        %v5485 = vpack.c.b16 %v5305, %v5296
        %v5486 = vpack.c.b16 %v5306, %v5297
        %v5487 = vpack.c.b16 %v5307, %v5298
        %v5488 = vpack.c.b16 %v5317, %v5308
        %v5489 = vpack.c.b16 %v5318, %v5309
        %v5490 = vpack.c.b16 %v5319, %v5310
        %v5491 = vpack.c.b16 %v5320, %v5311
        %v5492 = vpack.c.b16 %v5321, %v5312
        %v5493 = vpack.c.b16 %v5322, %v5313
        %v5494 = vpack.c.b16 %v5323, %v5314
        %v5495 = vpack.c.b16 %v5324, %v5315
        %v5496 = vpack.c.b16 %v5325, %v5316
        %v5497 = vpack.c.b16 %v5335, %v5326
        %v5498 = vpack.c.b16 %v5336, %v5327
        %v5499 = vpack.c.b16 %v5337, %v5328
        %v5500 = vpack.c.b16 %v5338, %v5329
        %v5501 = vpack.c.b16 %v5339, %v5330
        %v5502 = vpack.c.b16 %v5340, %v5331
        %v5503 = vpack.c.b16 %v5341, %v5332
        %v5504 = vpack.c.b16 %v5342, %v5333
        %v5505 = vpack.c.b16 %v5343, %v5334
        %v5506 = vpack.c.b16 %v5353, %v5344
        %v5507 = vpack.c.b16 %v5354, %v5345
        %v5508 = vpack.c.b16 %v5355, %v5346
        %v5509 = vpack.c.b16 %v5356, %v5347
        %v5510 = vpack.c.b16 %v5357, %v5348
        %v5511 = vpack.c.b16 %v5358, %v5349
        %v5512 = vpack.c.b16 %v5359, %v5350
        %v5513 = vpack.c.b16 %v5360, %v5351
        %v5514 = vpack.c.b16 %v5361, %v5352
        %v5515 = vpack.c.b16 %v5371, %v5362
        %v5516 = vpack.c.b16 %v5372, %v5363
        %v5517 = vpack.c.b16 %v5373, %v5364
        %v5518 = vpack.c.b16 %v5374, %v5365
        %v5519 = vpack.c.b16 %v5375, %v5366
        %v5520 = vpack.c.b16 %v5376, %v5367
        %v5521 = vpack.c.b16 %v5377, %v5368
        %v5522 = vpack.c.b16 %v5378, %v5369
        %v5523 = vpack.c.b16 %v5379, %v5370
        %v5812 = vunpack.c.l.b16 %v4784
        %v5813 = vunpack.c.l.b16 %v4785
        %v5814 = vunpack.c.l.b16 %v4786
        %v5815 = vunpack.c.l.b16 %v4787
        %v5816 = vunpack.c.l.b16 %v4788
        %v5817 = vunpack.c.l.b16 %v4789
        %v5818 = vunpack.c.l.b16 %v4790
        %v5819 = vunpack.c.l.b16 %v4791
        %v5820 = vunpack.c.l.b16 %v4792
        %v5821 = vunpack.c.l.b16 %v4793
        %v5822 = vunpack.c.l.b16 %v4794
        %v5823 = vunpack.c.l.b16 %v4795
        %v5824 = vunpack.c.l.b16 %v4796
        %v5825 = vunpack.c.l.b16 %v4797
        %v5826 = vunpack.c.l.b16 %v4798
        %v5827 = vunpack.c.l.b16 %v4799
        %v5828 = vunpack.c.l.b16 %v4800
        %v5829 = vunpack.c.l.b16 %v4801
        %v5830 = vunpack.c.l.b16 %v4802
        %v5831 = vunpack.c.l.b16 %v4803
        %v5832 = vunpack.c.l.b16 %v4804
        %v5833 = vunpack.c.l.b16 %v4805
        %v5834 = vunpack.c.l.b16 %v4806
        %v5835 = vunpack.c.l.b16 %v4807
        %v5836 = vunpack.c.l.b16 %v4808
        %v5837 = vunpack.c.l.b16 %v4809
        %v5838 = vunpack.c.l.b16 %v4810
        %v5839 = vunpack.c.l.b16 %v4811
        %v5840 = vunpack.c.l.b16 %v4812
        %v5841 = vunpack.c.l.b16 %v4813
        %v5842 = vunpack.c.l.b16 %v4814
        %v5843 = vunpack.c.l.b16 %v4815
        %v5844 = vunpack.c.l.b16 %v4816
        %v5845 = vunpack.c.l.b16 %v4817
        %v5846 = vunpack.c.l.b16 %v4818
        %v5847 = vunpack.c.l.b16 %v4819
        %v5848 = vunpack.c.l.b16 %v4820
        %v5849 = vunpack.c.l.b16 %v4821
        %v5850 = vunpack.c.l.b16 %v4822
        %v5851 = vunpack.c.l.b16 %v4823
        %v5852 = vunpack.c.l.b16 %v4824
        %v5853 = vunpack.c.l.b16 %v4825
        %v5854 = vunpack.c.l.b16 %v4826
        %v5855 = vunpack.c.l.b16 %v4827
        %v5856 = vunpack.c.l.b16 %v4828
        %v5857 = vunpack.c.l.b16 %v4829
        %v5858 = vunpack.c.l.b16 %v4830
        %v5859 = vunpack.c.l.b16 %v4831
        %v5860 = vunpack.c.l.b16 %v4832
        %v5861 = vunpack.c.l.b16 %v4833
        %v5862 = vunpack.c.l.b16 %v4834
        %v5863 = vunpack.c.l.b16 %v4835
        %v5864 = vunpack.c.l.b16 %v4836
        %v5865 = vunpack.c.l.b16 %v4837
        %v5866 = vunpack.c.l.b16 %v4838
        %v5867 = vunpack.c.l.b16 %v4839
        %v5868 = vunpack.c.l.b16 %v4840
        %v5869 = vunpack.c.l.b16 %v4841
        %v5870 = vunpack.c.l.b16 %v4842
        %v5871 = vunpack.c.l.b16 %v4843
        %v5872 = vunpack.c.l.b16 %v4844
        %v5873 = vunpack.c.l.b16 %v4845
        %v5874 = vunpack.c.l.b16 %v4846
        %v5875 = vunpack.c.l.b16 %v4847
        %v5876 = vunpack.c.l.b16 %v4848
        %v5877 = vunpack.c.l.b16 %v4849
        %v5878 = vunpack.c.l.b16 %v4850
        %v5879 = vunpack.c.l.b16 %v4851
        %v5880 = vunpack.c.l.b16 %v4852
        %v5881 = vunpack.c.l.b16 %v4853
        %v5882 = vunpack.c.l.b16 %v4854
        %v5883 = vunpack.c.l.b16 %v4855
        %v5884 = vunpack.c.l.b16 %v4856
        %v5885 = vunpack.c.l.b16 %v4857
        %v5886 = vunpack.c.l.b16 %v4858
        %v5887 = vunpack.c.l.b16 %v4859
        %v5888 = vunpack.c.l.b16 %v4860
        %v5889 = vunpack.c.l.b16 %v4861
        %v5890 = vunpack.c.l.b16 %v4862
        %v5891 = vunpack.c.l.b16 %v4863
        %v5892 = vunpack.c.l.b16 %v4864
        %v5893 = vunpack.c.l.b16 %v4865
        %v5894 = vunpack.c.l.b16 %v4866
        %v5895 = vunpack.c.l.b16 %v4867
        %v5896 = vunpack.c.l.b16 %v4868
        %v5897 = vunpack.c.l.b16 %v4869
        %v5898 = vunpack.c.l.b16 %v4870
        %v5899 = vunpack.c.l.b16 %v4871
        %v5900 = vunpack.c.l.b16 %v4872
        %v5901 = vunpack.c.l.b16 %v4873
        %v5902 = vunpack.c.l.b16 %v4874
        %v5903 = vunpack.c.l.b16 %v4875
        %v5904 = vunpack.c.l.b16 %v4876
        %v5905 = vunpack.c.l.b16 %v4877
        %v5906 = vunpack.c.l.b16 %v4878
        %v5907 = vunpack.c.l.b16 %v4879
        %v5908 = vunpack.c.l.b16 %v4880
        %v5909 = vunpack.c.l.b16 %v4881
        %v5910 = vunpack.c.l.b16 %v4882
        %v5911 = vunpack.c.l.b16 %v4883
        %v5912 = vunpack.c.l.b16 %v4884
        %v5913 = vunpack.c.l.b16 %v4885
        %v5914 = vunpack.c.l.b16 %v4886
        %v5915 = vunpack.c.l.b16 %v4887
        %v5916 = vunpack.c.l.b16 %v4888
        %v5917 = vunpack.c.l.b16 %v4889
        %v5918 = vunpack.c.l.b16 %v4890
        %v5919 = vunpack.c.l.b16 %v4891
        %v5920 = vunpack.c.l.b16 %v4892
        %v5921 = vunpack.c.l.b16 %v4893
        %v5922 = vunpack.c.l.b16 %v4894
        %v5923 = vunpack.c.l.b16 %v4895
        %v5924 = vunpack.c.l.b16 %v4896
        %v5925 = vunpack.c.l.b16 %v4897
        %v5926 = vunpack.c.l.b16 %v4898
        %v5927 = vunpack.c.l.b16 %v4899
        %v5928 = vunpack.c.l.b16 %v4900
        %v5929 = vunpack.c.l.b16 %v4901
        %v5930 = vunpack.c.l.b16 %v4902
        %v5931 = vunpack.c.l.b16 %v4903
        %v5932 = vunpack.c.l.b16 %v4904
        %v5933 = vunpack.c.l.b16 %v4905
        %v5934 = vunpack.c.l.b16 %v4906
        %v5935 = vunpack.c.l.b16 %v4907
        %v5936 = vunpack.c.l.b16 %v4908
        %v5937 = vunpack.c.l.b16 %v4909
        %v5938 = vunpack.c.l.b16 %v4910
        %v5939 = vunpack.c.l.b16 %v4911
        %v5940 = vunpack.c.l.b16 %v4912
        %v5941 = vunpack.c.l.b16 %v4913
        %v5942 = vunpack.c.l.b16 %v4914
        %v5943 = vunpack.c.l.b16 %v4915
        %v5944 = vunpack.c.l.b16 %v4916
        %v5945 = vunpack.c.l.b16 %v4917
        %v5946 = vunpack.c.l.b16 %v4918
        %v5947 = vunpack.c.l.b16 %v4919
        %v5948 = vunpack.c.l.b16 %v4920
        %v5949 = vunpack.c.l.b16 %v4921
        %v5950 = vunpack.c.l.b16 %v4922
        %v5951 = vunpack.c.l.b16 %v4923
        %v5952 = vunpack.c.l.b16 %v4924
        %v5953 = vunpack.c.l.b16 %v4925
        %v5954 = vunpack.c.l.b16 %v4926
        %v5955 = vunpack.c.l.b16 %v4927
        %v5956 = vpack.c.b16 %v5813, %v5812
        %v5957 = vpack.c.b16 %v5815, %v5814
        %v5958 = vpack.c.b16 %v5817, %v5816
        %v5959 = vpack.c.b16 %v5819, %v5818
        %v5960 = vpack.c.b16 %v5821, %v5820
        %v5961 = vpack.c.b16 %v5823, %v5822
        %v5962 = vpack.c.b16 %v5825, %v5824
        %v5963 = vpack.c.b16 %v5827, %v5826
        %v5964 = vpack.c.b16 %v5829, %v5828
        %v5965 = vpack.c.b16 %v5831, %v5830
        %v5966 = vpack.c.b16 %v5833, %v5832
        %v5967 = vpack.c.b16 %v5835, %v5834
        %v5968 = vpack.c.b16 %v5837, %v5836
        %v5969 = vpack.c.b16 %v5839, %v5838
        %v5970 = vpack.c.b16 %v5841, %v5840
        %v5971 = vpack.c.b16 %v5843, %v5842
        %v5972 = vpack.c.b16 %v5845, %v5844
        %v5973 = vpack.c.b16 %v5847, %v5846
        %v5974 = vpack.c.b16 %v5849, %v5848
        %v5975 = vpack.c.b16 %v5851, %v5850
        %v5976 = vpack.c.b16 %v5853, %v5852
        %v5977 = vpack.c.b16 %v5855, %v5854
        %v5978 = vpack.c.b16 %v5857, %v5856
        %v5979 = vpack.c.b16 %v5859, %v5858
        %v5980 = vpack.c.b16 %v5861, %v5860
        %v5981 = vpack.c.b16 %v5863, %v5862
        %v5982 = vpack.c.b16 %v5865, %v5864
        %v5983 = vpack.c.b16 %v5867, %v5866
        %v5984 = vpack.c.b16 %v5869, %v5868
        %v5985 = vpack.c.b16 %v5871, %v5870
        %v5986 = vpack.c.b16 %v5873, %v5872
        %v5987 = vpack.c.b16 %v5875, %v5874
        %v5988 = vpack.c.b16 %v5877, %v5876
        %v5989 = vpack.c.b16 %v5879, %v5878
        %v5990 = vpack.c.b16 %v5881, %v5880
        %v5991 = vpack.c.b16 %v5883, %v5882
        %v5992 = vpack.c.b16 %v5885, %v5884
        %v5993 = vpack.c.b16 %v5887, %v5886
        %v5994 = vpack.c.b16 %v5889, %v5888
        %v5995 = vpack.c.b16 %v5891, %v5890
        %v5996 = vpack.c.b16 %v5893, %v5892
        %v5997 = vpack.c.b16 %v5895, %v5894
        %v5998 = vpack.c.b16 %v5897, %v5896
        %v5999 = vpack.c.b16 %v5899, %v5898
        %v6000 = vpack.c.b16 %v5901, %v5900
        %v6001 = vpack.c.b16 %v5903, %v5902
        %v6002 = vpack.c.b16 %v5905, %v5904
        %v6003 = vpack.c.b16 %v5907, %v5906
        %v6004 = vpack.c.b16 %v5909, %v5908
        %v6005 = vpack.c.b16 %v5911, %v5910
        %v6006 = vpack.c.b16 %v5913, %v5912
        %v6007 = vpack.c.b16 %v5915, %v5914
        %v6008 = vpack.c.b16 %v5917, %v5916
        %v6009 = vpack.c.b16 %v5919, %v5918
        %v6010 = vpack.c.b16 %v5921, %v5920
        %v6011 = vpack.c.b16 %v5923, %v5922
        %v6012 = vpack.c.b16 %v5925, %v5924
        %v6013 = vpack.c.b16 %v5927, %v5926
        %v6014 = vpack.c.b16 %v5929, %v5928
        %v6015 = vpack.c.b16 %v5931, %v5930
        %v6016 = vpack.c.b16 %v5933, %v5932
        %v6017 = vpack.c.b16 %v5935, %v5934
        %v6018 = vpack.c.b16 %v5937, %v5936
        %v6019 = vpack.c.b16 %v5939, %v5938
        %v6020 = vpack.c.b16 %v5941, %v5940
        %v6021 = vpack.c.b16 %v5943, %v5942
        %v6022 = vpack.c.b16 %v5945, %v5944
        %v6023 = vpack.c.b16 %v5947, %v5946
        %v6024 = vpack.c.b16 %v5949, %v5948
        %v6025 = vpack.c.b16 %v5951, %v5950
        %v6026 = vpack.c.b16 %v5953, %v5952
        %v6027 = vpack.c.b16 %v5955, %v5954
        %6100 = vmatpush.bf16.msra.mxu0 %v5963
        %6101 = vmatpush.bf16.msra.mxu0 %v5962
        %6102 = vmatpush.bf16.msra.mxu0 %v5961
        %6103 = vmatpush.bf16.msra.mxu0 %v5960
        %6104 = vmatpush.bf16.msra.mxu0 %v5959
        %6105 = vmatpush.bf16.msra.mxu0 %v5958
        %6106 = vmatpush.bf16.msra.mxu0 %v5957
        %6107 = vmatpush.bf16.msra.mxu0 %v5956
        %6108 = vmatmul.bf16.gmra.mxu0 %v5380
        %v6109 = vpop.f32.mrf.mxu0
        %v6110 = vadd.f32 %v4930, %v6109
        %v6111 = vpop.f32.mrf.mxu0
        %v6112 = vadd.f32 %v4930, %v6111
        %6113 = vmatmul.bf16.gmra.mxu0 %v5389
        %v6114 = vpop.f32.mrf.mxu0
        %v6115 = vadd.f32 %v4930, %v6114
        %v6116 = vpop.f32.mrf.mxu0
        %v6117 = vadd.f32 %v4930, %v6116
        %6118 = vmatmul.bf16.gmra.mxu0 %v5398
        %v6119 = vpop.f32.mrf.mxu0
        %v6120 = vadd.f32 %v4930, %v6119
        %v6121 = vpop.f32.mrf.mxu0
        %v6122 = vadd.f32 %v4930, %v6121
        %6123 = vmatmul.bf16.gmra.mxu0 %v5407
        %v6124 = vpop.f32.mrf.mxu0
        %v6125 = vadd.f32 %v4930, %v6124
        %v6126 = vpop.f32.mrf.mxu0
        %v6127 = vadd.f32 %v4930, %v6126
        %6128 = vmatmul.bf16.gmra.mxu0 %v5416
        %v6129 = vpop.f32.mrf.mxu0
        %v6130 = vadd.f32 %v4930, %v6129
        %v6131 = vpop.f32.mrf.mxu0
        %v6132 = vadd.f32 %v4930, %v6131
        %6133 = vmatmul.bf16.gmra.mxu0 %v5425
        %v6134 = vpop.f32.mrf.mxu0
        %v6135 = vadd.f32 %v4930, %v6134
        %v6136 = vpop.f32.mrf.mxu0
        %v6137 = vadd.f32 %v4930, %v6136
        %6138 = vmatmul.bf16.gmra.mxu0 %v5434
        %v6139 = vpop.f32.mrf.mxu0
        %v6140 = vadd.f32 %v4930, %v6139
        %v6141 = vpop.f32.mrf.mxu0
        %v6142 = vadd.f32 %v4930, %v6141
        %6143 = vmatmul.bf16.gmra.mxu0 %v5443
        %v6144 = vpop.f32.mrf.mxu0
        %v6145 = vadd.f32 %v4930, %v6144
        %v6146 = vpop.f32.mrf.mxu0
        %v6147 = vadd.f32 %v4930, %v6146
        %6148 = vmatmul.bf16.gmra.mxu0 %v5452
        %v6149 = vpop.f32.mrf.mxu0
        %v6150 = vadd.f32 %v4930, %v6149
        %v6151 = vpop.f32.mrf.mxu0
        %v6152 = vadd.f32 %v4930, %v6151
        %6153 = vmatmul.bf16.gmra.mxu0 %v5461
        %v6154 = vpop.f32.mrf.mxu0
        %v6155 = vadd.f32 %v4930, %v6154
        %v6156 = vpop.f32.mrf.mxu0
        %v6157 = vadd.f32 %v4930, %v6156
        %6158 = vmatmul.bf16.gmra.mxu0 %v5470
        %v6159 = vpop.f32.mrf.mxu0
        %v6160 = vadd.f32 %v4930, %v6159
        %v6161 = vpop.f32.mrf.mxu0
        %v6162 = vadd.f32 %v4930, %v6161
        %6163 = vmatmul.bf16.gmra.mxu0 %v5479
        %v6164 = vpop.f32.mrf.mxu0
        %v6165 = vadd.f32 %v4930, %v6164
        %v6166 = vpop.f32.mrf.mxu0
        %v6167 = vadd.f32 %v4930, %v6166
        %6168 = vmatmul.bf16.gmra.mxu0 %v5488
        %v6169 = vpop.f32.mrf.mxu0
        %v6170 = vadd.f32 %v4930, %v6169
        %v6171 = vpop.f32.mrf.mxu0
        %v6172 = vadd.f32 %v4930, %v6171
        %6173 = vmatmul.bf16.gmra.mxu0 %v5497
        %v6174 = vpop.f32.mrf.mxu0
        %v6175 = vadd.f32 %v4930, %v6174
        %v6176 = vpop.f32.mrf.mxu0
        %v6177 = vadd.f32 %v4930, %v6176
        %6178 = vmatmul.bf16.gmra.mxu0 %v5506
        %v6179 = vpop.f32.mrf.mxu0
        %v6180 = vadd.f32 %v4930, %v6179
        %v6181 = vpop.f32.mrf.mxu0
        %v6182 = vadd.f32 %v4930, %v6181
        %6183 = vmatmul.bf16.gmra.mxu0 %v5515
        %v6184 = vpop.f32.mrf.mxu0
        %v6185 = vadd.f32 %v4930, %v6184
        %v6186 = vpop.f32.mrf.mxu0
        %v6187 = vadd.f32 %v4930, %v6186
        %6188 = vdwg.mxu0
        %6189 = vmatpush.bf16.msra.mxu0 %v5971
        %6190 = vmatpush.bf16.msra.mxu0 %v5970
        %6191 = vmatpush.bf16.msra.mxu0 %v5969
        %6192 = vmatpush.bf16.msra.mxu0 %v5968
        %6193 = vmatpush.bf16.msra.mxu0 %v5967
        %6194 = vmatpush.bf16.msra.mxu0 %v5966
        %6195 = vmatpush.bf16.msra.mxu0 %v5965
        %6196 = vmatpush.bf16.msra.mxu0 %v5964
        %6197 = vmatmul.bf16.gmra.mxu0 %v5381
        %v6198 = vpop.f32.mrf.mxu0
        %v6199 = vadd.f32 %v6110, %v6198
        %v6200 = vpop.f32.mrf.mxu0
        %v6201 = vadd.f32 %v6112, %v6200
        %6202 = vmatmul.bf16.gmra.mxu0 %v5390
        %v6203 = vpop.f32.mrf.mxu0
        %v6204 = vadd.f32 %v6115, %v6203
        %v6205 = vpop.f32.mrf.mxu0
        %v6206 = vadd.f32 %v6117, %v6205
        %6207 = vmatmul.bf16.gmra.mxu0 %v5399
        %v6208 = vpop.f32.mrf.mxu0
        %v6209 = vadd.f32 %v6120, %v6208
        %v6210 = vpop.f32.mrf.mxu0
        %v6211 = vadd.f32 %v6122, %v6210
        %6212 = vmatmul.bf16.gmra.mxu0 %v5408
        %v6213 = vpop.f32.mrf.mxu0
        %v6214 = vadd.f32 %v6125, %v6213
        %v6215 = vpop.f32.mrf.mxu0
        %v6216 = vadd.f32 %v6127, %v6215
        %6217 = vmatmul.bf16.gmra.mxu0 %v5417
        %v6218 = vpop.f32.mrf.mxu0
        %v6219 = vadd.f32 %v6130, %v6218
        %v6220 = vpop.f32.mrf.mxu0
        %v6221 = vadd.f32 %v6132, %v6220
        %6222 = vmatmul.bf16.gmra.mxu0 %v5426
        %v6223 = vpop.f32.mrf.mxu0
        %v6224 = vadd.f32 %v6135, %v6223
        %v6225 = vpop.f32.mrf.mxu0
        %v6226 = vadd.f32 %v6137, %v6225
        %6227 = vmatmul.bf16.gmra.mxu0 %v5435
        %v6228 = vpop.f32.mrf.mxu0
        %v6229 = vadd.f32 %v6140, %v6228
        %v6230 = vpop.f32.mrf.mxu0
        %v6231 = vadd.f32 %v6142, %v6230
        %6232 = vmatmul.bf16.gmra.mxu0 %v5444
        %v6233 = vpop.f32.mrf.mxu0
        %v6234 = vadd.f32 %v6145, %v6233
        %v6235 = vpop.f32.mrf.mxu0
        %v6236 = vadd.f32 %v6147, %v6235
        %6237 = vmatmul.bf16.gmra.mxu0 %v5453
        %v6238 = vpop.f32.mrf.mxu0
        %v6239 = vadd.f32 %v6150, %v6238
        %v6240 = vpop.f32.mrf.mxu0
        %v6241 = vadd.f32 %v6152, %v6240
        %6242 = vmatmul.bf16.gmra.mxu0 %v5462
        %v6243 = vpop.f32.mrf.mxu0
        %v6244 = vadd.f32 %v6155, %v6243
        %v6245 = vpop.f32.mrf.mxu0
        %v6246 = vadd.f32 %v6157, %v6245
        %6247 = vmatmul.bf16.gmra.mxu0 %v5471
        %v6248 = vpop.f32.mrf.mxu0
        %v6249 = vadd.f32 %v6160, %v6248
        %v6250 = vpop.f32.mrf.mxu0
        %v6251 = vadd.f32 %v6162, %v6250
        %6252 = vmatmul.bf16.gmra.mxu0 %v5480
        %v6253 = vpop.f32.mrf.mxu0
        %v6254 = vadd.f32 %v6165, %v6253
        %v6255 = vpop.f32.mrf.mxu0
        %v6256 = vadd.f32 %v6167, %v6255
        %6257 = vmatmul.bf16.gmra.mxu0 %v5489
        %v6258 = vpop.f32.mrf.mxu0
        %v6259 = vadd.f32 %v6170, %v6258
        %v6260 = vpop.f32.mrf.mxu0
        %v6261 = vadd.f32 %v6172, %v6260
        %6262 = vmatmul.bf16.gmra.mxu0 %v5498
        %v6263 = vpop.f32.mrf.mxu0
        %v6264 = vadd.f32 %v6175, %v6263
        %v6265 = vpop.f32.mrf.mxu0
        %v6266 = vadd.f32 %v6177, %v6265
        %6267 = vmatmul.bf16.gmra.mxu0 %v5507
        %v6268 = vpop.f32.mrf.mxu0
        %v6269 = vadd.f32 %v6180, %v6268
        %v6270 = vpop.f32.mrf.mxu0
        %v6271 = vadd.f32 %v6182, %v6270
        %6272 = vmatmul.bf16.gmra.mxu0 %v5516
        %v6273 = vpop.f32.mrf.mxu0
        %v6274 = vadd.f32 %v6185, %v6273
        %v6275 = vpop.f32.mrf.mxu0
        %v6276 = vadd.f32 %v6187, %v6275
        %6277 = vdwg.mxu0
        %6278 = vmatpush.bf16.msra.mxu0 %v5979
        %6279 = vmatpush.bf16.msra.mxu0 %v5978
        %6280 = vmatpush.bf16.msra.mxu0 %v5977
        %6281 = vmatpush.bf16.msra.mxu0 %v5976
        %6282 = vmatpush.bf16.msra.mxu0 %v5975
        %6283 = vmatpush.bf16.msra.mxu0 %v5974
        %6284 = vmatpush.bf16.msra.mxu0 %v5973
        %6285 = vmatpush.bf16.msra.mxu0 %v5972
        %6286 = vmatmul.bf16.gmra.mxu0 %v5382
        %v6287 = vpop.f32.mrf.mxu0
        %v6288 = vadd.f32 %v6199, %v6287
        %v6289 = vpop.f32.mrf.mxu0
        %v6290 = vadd.f32 %v6201, %v6289
        %6291 = vmatmul.bf16.gmra.mxu0 %v5391
        %v6292 = vpop.f32.mrf.mxu0
        %v6293 = vadd.f32 %v6204, %v6292
        %v6294 = vpop.f32.mrf.mxu0
        %v6295 = vadd.f32 %v6206, %v6294
        %6296 = vmatmul.bf16.gmra.mxu0 %v5400
        %v6297 = vpop.f32.mrf.mxu0
        %v6298 = vadd.f32 %v6209, %v6297
        %v6299 = vpop.f32.mrf.mxu0
        %v6300 = vadd.f32 %v6211, %v6299
        %6301 = vmatmul.bf16.gmra.mxu0 %v5409
        %v6302 = vpop.f32.mrf.mxu0
        %v6303 = vadd.f32 %v6214, %v6302
        %v6304 = vpop.f32.mrf.mxu0
        %v6305 = vadd.f32 %v6216, %v6304
        %6306 = vmatmul.bf16.gmra.mxu0 %v5418
        %v6307 = vpop.f32.mrf.mxu0
        %v6308 = vadd.f32 %v6219, %v6307
        %v6309 = vpop.f32.mrf.mxu0
        %v6310 = vadd.f32 %v6221, %v6309
        %6311 = vmatmul.bf16.gmra.mxu0 %v5427
        %v6312 = vpop.f32.mrf.mxu0
        %v6313 = vadd.f32 %v6224, %v6312
        %v6314 = vpop.f32.mrf.mxu0
        %v6315 = vadd.f32 %v6226, %v6314
        %6316 = vmatmul.bf16.gmra.mxu0 %v5436
        %v6317 = vpop.f32.mrf.mxu0
        %v6318 = vadd.f32 %v6229, %v6317
        %v6319 = vpop.f32.mrf.mxu0
        %v6320 = vadd.f32 %v6231, %v6319
        %6321 = vmatmul.bf16.gmra.mxu0 %v5445
        %v6322 = vpop.f32.mrf.mxu0
        %v6323 = vadd.f32 %v6234, %v6322
        %v6324 = vpop.f32.mrf.mxu0
        %v6325 = vadd.f32 %v6236, %v6324
        %6326 = vmatmul.bf16.gmra.mxu0 %v5454
        %v6327 = vpop.f32.mrf.mxu0
        %v6328 = vadd.f32 %v6239, %v6327
        %v6329 = vpop.f32.mrf.mxu0
        %v6330 = vadd.f32 %v6241, %v6329
        %6331 = vmatmul.bf16.gmra.mxu0 %v5463
        %v6332 = vpop.f32.mrf.mxu0
        %v6333 = vadd.f32 %v6244, %v6332
        %v6334 = vpop.f32.mrf.mxu0
        %v6335 = vadd.f32 %v6246, %v6334
        %6336 = vmatmul.bf16.gmra.mxu0 %v5472
        %v6337 = vpop.f32.mrf.mxu0
        %v6338 = vadd.f32 %v6249, %v6337
        %v6339 = vpop.f32.mrf.mxu0
        %v6340 = vadd.f32 %v6251, %v6339
        %6341 = vmatmul.bf16.gmra.mxu0 %v5481
        %v6342 = vpop.f32.mrf.mxu0
        %v6343 = vadd.f32 %v6254, %v6342
        %v6344 = vpop.f32.mrf.mxu0
        %v6345 = vadd.f32 %v6256, %v6344
        %6346 = vmatmul.bf16.gmra.mxu0 %v5490
        %v6347 = vpop.f32.mrf.mxu0
        %v6348 = vadd.f32 %v6259, %v6347
        %v6349 = vpop.f32.mrf.mxu0
        %v6350 = vadd.f32 %v6261, %v6349
        %6351 = vmatmul.bf16.gmra.mxu0 %v5499
        %v6352 = vpop.f32.mrf.mxu0
        %v6353 = vadd.f32 %v6264, %v6352
        %v6354 = vpop.f32.mrf.mxu0
        %v6355 = vadd.f32 %v6266, %v6354
        %6356 = vmatmul.bf16.gmra.mxu0 %v5508
        %v6357 = vpop.f32.mrf.mxu0
        %v6358 = vadd.f32 %v6269, %v6357
        %v6359 = vpop.f32.mrf.mxu0
        %v6360 = vadd.f32 %v6271, %v6359
        %6361 = vmatmul.bf16.gmra.mxu0 %v5517
        %v6362 = vpop.f32.mrf.mxu0
        %v6363 = vadd.f32 %v6274, %v6362
        %v6364 = vpop.f32.mrf.mxu0
        %v6365 = vadd.f32 %v6276, %v6364
        %6366 = vdwg.mxu0
        %6367 = vmatpush.bf16.msra.mxu0 %v5987
        %6368 = vmatpush.bf16.msra.mxu0 %v5986
        %6369 = vmatpush.bf16.msra.mxu0 %v5985
        %6370 = vmatpush.bf16.msra.mxu0 %v5984
        %6371 = vmatpush.bf16.msra.mxu0 %v5983
        %6372 = vmatpush.bf16.msra.mxu0 %v5982
        %6373 = vmatpush.bf16.msra.mxu0 %v5981
        %6374 = vmatpush.bf16.msra.mxu0 %v5980
        %6375 = vmatmul.bf16.gmra.mxu0 %v5383
        %v6376 = vpop.f32.mrf.mxu0
        %v6377 = vadd.f32 %v6288, %v6376
        %v6378 = vpop.f32.mrf.mxu0
        %v6379 = vadd.f32 %v6290, %v6378
        %6380 = vmatmul.bf16.gmra.mxu0 %v5392
        %v6381 = vpop.f32.mrf.mxu0
        %v6382 = vadd.f32 %v6293, %v6381
        %v6383 = vpop.f32.mrf.mxu0
        %v6384 = vadd.f32 %v6295, %v6383
        %6385 = vmatmul.bf16.gmra.mxu0 %v5401
        %v6386 = vpop.f32.mrf.mxu0
        %v6387 = vadd.f32 %v6298, %v6386
        %v6388 = vpop.f32.mrf.mxu0
        %v6389 = vadd.f32 %v6300, %v6388
        %6390 = vmatmul.bf16.gmra.mxu0 %v5410
        %v6391 = vpop.f32.mrf.mxu0
        %v6392 = vadd.f32 %v6303, %v6391
        %v6393 = vpop.f32.mrf.mxu0
        %v6394 = vadd.f32 %v6305, %v6393
        %6395 = vmatmul.bf16.gmra.mxu0 %v5419
        %v6396 = vpop.f32.mrf.mxu0
        %v6397 = vadd.f32 %v6308, %v6396
        %v6398 = vpop.f32.mrf.mxu0
        %v6399 = vadd.f32 %v6310, %v6398
        %6400 = vmatmul.bf16.gmra.mxu0 %v5428
        %v6401 = vpop.f32.mrf.mxu0
        %v6402 = vadd.f32 %v6313, %v6401
        %v6403 = vpop.f32.mrf.mxu0
        %v6404 = vadd.f32 %v6315, %v6403
        %6405 = vmatmul.bf16.gmra.mxu0 %v5437
        %v6406 = vpop.f32.mrf.mxu0
        %v6407 = vadd.f32 %v6318, %v6406
        %v6408 = vpop.f32.mrf.mxu0
        %v6409 = vadd.f32 %v6320, %v6408
        %6410 = vmatmul.bf16.gmra.mxu0 %v5446
        %v6411 = vpop.f32.mrf.mxu0
        %v6412 = vadd.f32 %v6323, %v6411
        %v6413 = vpop.f32.mrf.mxu0
        %v6414 = vadd.f32 %v6325, %v6413
        %6415 = vmatmul.bf16.gmra.mxu0 %v5455
        %v6416 = vpop.f32.mrf.mxu0
        %v6417 = vadd.f32 %v6328, %v6416
        %v6418 = vpop.f32.mrf.mxu0
        %v6419 = vadd.f32 %v6330, %v6418
        %6420 = vmatmul.bf16.gmra.mxu0 %v5464
        %v6421 = vpop.f32.mrf.mxu0
        %v6422 = vadd.f32 %v6333, %v6421
        %v6423 = vpop.f32.mrf.mxu0
        %v6424 = vadd.f32 %v6335, %v6423
        %6425 = vmatmul.bf16.gmra.mxu0 %v5473
        %v6426 = vpop.f32.mrf.mxu0
        %v6427 = vadd.f32 %v6338, %v6426
        %v6428 = vpop.f32.mrf.mxu0
        %v6429 = vadd.f32 %v6340, %v6428
        %6430 = vmatmul.bf16.gmra.mxu0 %v5482
        %v6431 = vpop.f32.mrf.mxu0
        %v6432 = vadd.f32 %v6343, %v6431
        %v6433 = vpop.f32.mrf.mxu0
        %v6434 = vadd.f32 %v6345, %v6433
        %6435 = vmatmul.bf16.gmra.mxu0 %v5491
        %v6436 = vpop.f32.mrf.mxu0
        %v6437 = vadd.f32 %v6348, %v6436
        %v6438 = vpop.f32.mrf.mxu0
        %v6439 = vadd.f32 %v6350, %v6438
        %6440 = vmatmul.bf16.gmra.mxu0 %v5500
        %v6441 = vpop.f32.mrf.mxu0
        %v6442 = vadd.f32 %v6353, %v6441
        %v6443 = vpop.f32.mrf.mxu0
        %v6444 = vadd.f32 %v6355, %v6443
        %6445 = vmatmul.bf16.gmra.mxu0 %v5509
        %v6446 = vpop.f32.mrf.mxu0
        %v6447 = vadd.f32 %v6358, %v6446
        %v6448 = vpop.f32.mrf.mxu0
        %v6449 = vadd.f32 %v6360, %v6448
        %6450 = vmatmul.bf16.gmra.mxu0 %v5518
        %v6451 = vpop.f32.mrf.mxu0
        %v6452 = vadd.f32 %v6363, %v6451
        %v6453 = vpop.f32.mrf.mxu0
        %v6454 = vadd.f32 %v6365, %v6453
        %6455 = vdwg.mxu0
        %6456 = vmatpush.bf16.msra.mxu0 %v5995
        %6457 = vmatpush.bf16.msra.mxu0 %v5994
        %6458 = vmatpush.bf16.msra.mxu0 %v5993
        %6459 = vmatpush.bf16.msra.mxu0 %v5992
        %6460 = vmatpush.bf16.msra.mxu0 %v5991
        %6461 = vmatpush.bf16.msra.mxu0 %v5990
        %6462 = vmatpush.bf16.msra.mxu0 %v5989
        %6463 = vmatpush.bf16.msra.mxu0 %v5988
        %6464 = vmatmul.bf16.gmra.mxu0 %v5384
        %v6465 = vpop.f32.mrf.mxu0
        %v6466 = vadd.f32 %v6377, %v6465
        %v6467 = vpop.f32.mrf.mxu0
        %v6468 = vadd.f32 %v6379, %v6467
        %6469 = vmatmul.bf16.gmra.mxu0 %v5393
        %v6470 = vpop.f32.mrf.mxu0
        %v6471 = vadd.f32 %v6382, %v6470
        %v6472 = vpop.f32.mrf.mxu0
        %v6473 = vadd.f32 %v6384, %v6472
        %6474 = vmatmul.bf16.gmra.mxu0 %v5402
        %v6475 = vpop.f32.mrf.mxu0
        %v6476 = vadd.f32 %v6387, %v6475
        %v6477 = vpop.f32.mrf.mxu0
        %v6478 = vadd.f32 %v6389, %v6477
        %6479 = vmatmul.bf16.gmra.mxu0 %v5411
        %v6480 = vpop.f32.mrf.mxu0
        %v6481 = vadd.f32 %v6392, %v6480
        %v6482 = vpop.f32.mrf.mxu0
        %v6483 = vadd.f32 %v6394, %v6482
        %6484 = vmatmul.bf16.gmra.mxu0 %v5420
        %v6485 = vpop.f32.mrf.mxu0
        %v6486 = vadd.f32 %v6397, %v6485
        %v6487 = vpop.f32.mrf.mxu0
        %v6488 = vadd.f32 %v6399, %v6487
        %6489 = vmatmul.bf16.gmra.mxu0 %v5429
        %v6490 = vpop.f32.mrf.mxu0
        %v6491 = vadd.f32 %v6402, %v6490
        %v6492 = vpop.f32.mrf.mxu0
        %v6493 = vadd.f32 %v6404, %v6492
        %6494 = vmatmul.bf16.gmra.mxu0 %v5438
        %v6495 = vpop.f32.mrf.mxu0
        %v6496 = vadd.f32 %v6407, %v6495
        %v6497 = vpop.f32.mrf.mxu0
        %v6498 = vadd.f32 %v6409, %v6497
        %6499 = vmatmul.bf16.gmra.mxu0 %v5447
        %v6500 = vpop.f32.mrf.mxu0
        %v6501 = vadd.f32 %v6412, %v6500
        %v6502 = vpop.f32.mrf.mxu0
        %v6503 = vadd.f32 %v6414, %v6502
        %6504 = vmatmul.bf16.gmra.mxu0 %v5456
        %v6505 = vpop.f32.mrf.mxu0
        %v6506 = vadd.f32 %v6417, %v6505
        %v6507 = vpop.f32.mrf.mxu0
        %v6508 = vadd.f32 %v6419, %v6507
        %6509 = vmatmul.bf16.gmra.mxu0 %v5465
        %v6510 = vpop.f32.mrf.mxu0
        %v6511 = vadd.f32 %v6422, %v6510
        %v6512 = vpop.f32.mrf.mxu0
        %v6513 = vadd.f32 %v6424, %v6512
        %6514 = vmatmul.bf16.gmra.mxu0 %v5474
        %v6515 = vpop.f32.mrf.mxu0
        %v6516 = vadd.f32 %v6427, %v6515
        %v6517 = vpop.f32.mrf.mxu0
        %v6518 = vadd.f32 %v6429, %v6517
        %6519 = vmatmul.bf16.gmra.mxu0 %v5483
        %v6520 = vpop.f32.mrf.mxu0
        %v6521 = vadd.f32 %v6432, %v6520
        %v6522 = vpop.f32.mrf.mxu0
        %v6523 = vadd.f32 %v6434, %v6522
        %6524 = vmatmul.bf16.gmra.mxu0 %v5492
        %v6525 = vpop.f32.mrf.mxu0
        %v6526 = vadd.f32 %v6437, %v6525
        %v6527 = vpop.f32.mrf.mxu0
        %v6528 = vadd.f32 %v6439, %v6527
        %6529 = vmatmul.bf16.gmra.mxu0 %v5501
        %v6530 = vpop.f32.mrf.mxu0
        %v6531 = vadd.f32 %v6442, %v6530
        %v6532 = vpop.f32.mrf.mxu0
        %v6533 = vadd.f32 %v6444, %v6532
        %6534 = vmatmul.bf16.gmra.mxu0 %v5510
        %v6535 = vpop.f32.mrf.mxu0
        %v6536 = vadd.f32 %v6447, %v6535
        %v6537 = vpop.f32.mrf.mxu0
        %v6538 = vadd.f32 %v6449, %v6537
        %6539 = vmatmul.bf16.gmra.mxu0 %v5519
        %v6540 = vpop.f32.mrf.mxu0
        %v6541 = vadd.f32 %v6452, %v6540
        %v6542 = vpop.f32.mrf.mxu0
        %v6543 = vadd.f32 %v6454, %v6542
        %6544 = vdwg.mxu0
        %6545 = vmatpush.bf16.msra.mxu0 %v6003
        %6546 = vmatpush.bf16.msra.mxu0 %v6002
        %6547 = vmatpush.bf16.msra.mxu0 %v6001
        %6548 = vmatpush.bf16.msra.mxu0 %v6000
        %6549 = vmatpush.bf16.msra.mxu0 %v5999
        %6550 = vmatpush.bf16.msra.mxu0 %v5998
        %6551 = vmatpush.bf16.msra.mxu0 %v5997
        %6552 = vmatpush.bf16.msra.mxu0 %v5996
        %6553 = vmatmul.bf16.gmra.mxu0 %v5385
        %v6554 = vpop.f32.mrf.mxu0
        %v6555 = vadd.f32 %v6466, %v6554
        %v6556 = vpop.f32.mrf.mxu0
        %v6557 = vadd.f32 %v6468, %v6556
        %6558 = vmatmul.bf16.gmra.mxu0 %v5394
        %v6559 = vpop.f32.mrf.mxu0
        %v6560 = vadd.f32 %v6471, %v6559
        %v6561 = vpop.f32.mrf.mxu0
        %v6562 = vadd.f32 %v6473, %v6561
        %6563 = vmatmul.bf16.gmra.mxu0 %v5403
        %v6564 = vpop.f32.mrf.mxu0
        %v6565 = vadd.f32 %v6476, %v6564
        %v6566 = vpop.f32.mrf.mxu0
        %v6567 = vadd.f32 %v6478, %v6566
        %6568 = vmatmul.bf16.gmra.mxu0 %v5412
        %v6569 = vpop.f32.mrf.mxu0
        %v6570 = vadd.f32 %v6481, %v6569
        %v6571 = vpop.f32.mrf.mxu0
        %v6572 = vadd.f32 %v6483, %v6571
        %6573 = vmatmul.bf16.gmra.mxu0 %v5421
        %v6574 = vpop.f32.mrf.mxu0
        %v6575 = vadd.f32 %v6486, %v6574
        %v6576 = vpop.f32.mrf.mxu0
        %v6577 = vadd.f32 %v6488, %v6576
        %6578 = vmatmul.bf16.gmra.mxu0 %v5430
        %v6579 = vpop.f32.mrf.mxu0
        %v6580 = vadd.f32 %v6491, %v6579
        %v6581 = vpop.f32.mrf.mxu0
        %v6582 = vadd.f32 %v6493, %v6581
        %6583 = vmatmul.bf16.gmra.mxu0 %v5439
        %v6584 = vpop.f32.mrf.mxu0
        %v6585 = vadd.f32 %v6496, %v6584
        %v6586 = vpop.f32.mrf.mxu0
        %v6587 = vadd.f32 %v6498, %v6586
        %6588 = vmatmul.bf16.gmra.mxu0 %v5448
        %v6589 = vpop.f32.mrf.mxu0
        %v6590 = vadd.f32 %v6501, %v6589
        %v6591 = vpop.f32.mrf.mxu0
        %v6592 = vadd.f32 %v6503, %v6591
        %6593 = vmatmul.bf16.gmra.mxu0 %v5457
        %v6594 = vpop.f32.mrf.mxu0
        %v6595 = vadd.f32 %v6506, %v6594
        %v6596 = vpop.f32.mrf.mxu0
        %v6597 = vadd.f32 %v6508, %v6596
        %6598 = vmatmul.bf16.gmra.mxu0 %v5466
        %v6599 = vpop.f32.mrf.mxu0
        %v6600 = vadd.f32 %v6511, %v6599
        %v6601 = vpop.f32.mrf.mxu0
        %v6602 = vadd.f32 %v6513, %v6601
        %6603 = vmatmul.bf16.gmra.mxu0 %v5475
        %v6604 = vpop.f32.mrf.mxu0
        %v6605 = vadd.f32 %v6516, %v6604
        %v6606 = vpop.f32.mrf.mxu0
        %v6607 = vadd.f32 %v6518, %v6606
        %6608 = vmatmul.bf16.gmra.mxu0 %v5484
        %v6609 = vpop.f32.mrf.mxu0
        %v6610 = vadd.f32 %v6521, %v6609
        %v6611 = vpop.f32.mrf.mxu0
        %v6612 = vadd.f32 %v6523, %v6611
        %6613 = vmatmul.bf16.gmra.mxu0 %v5493
        %v6614 = vpop.f32.mrf.mxu0
        %v6615 = vadd.f32 %v6526, %v6614
        %v6616 = vpop.f32.mrf.mxu0
        %v6617 = vadd.f32 %v6528, %v6616
        %6618 = vmatmul.bf16.gmra.mxu0 %v5502
        %v6619 = vpop.f32.mrf.mxu0
        %v6620 = vadd.f32 %v6531, %v6619
        %v6621 = vpop.f32.mrf.mxu0
        %v6622 = vadd.f32 %v6533, %v6621
        %6623 = vmatmul.bf16.gmra.mxu0 %v5511
        %v6624 = vpop.f32.mrf.mxu0
        %v6625 = vadd.f32 %v6536, %v6624
        %v6626 = vpop.f32.mrf.mxu0
        %v6627 = vadd.f32 %v6538, %v6626
        %6628 = vmatmul.bf16.gmra.mxu0 %v5520
        %v6629 = vpop.f32.mrf.mxu0
        %v6630 = vadd.f32 %v6541, %v6629
        %v6631 = vpop.f32.mrf.mxu0
        %v6632 = vadd.f32 %v6543, %v6631
        %6633 = vdwg.mxu0
        %6634 = vmatpush.bf16.msra.mxu0 %v6011
        %6635 = vmatpush.bf16.msra.mxu0 %v6010
        %6636 = vmatpush.bf16.msra.mxu0 %v6009
        %6637 = vmatpush.bf16.msra.mxu0 %v6008
        %6638 = vmatpush.bf16.msra.mxu0 %v6007
        %6639 = vmatpush.bf16.msra.mxu0 %v6006
        %6640 = vmatpush.bf16.msra.mxu0 %v6005
        %6641 = vmatpush.bf16.msra.mxu0 %v6004
        %6642 = vmatmul.bf16.gmra.mxu0 %v5386
        %v6643 = vpop.f32.mrf.mxu0
        %v6644 = vadd.f32 %v6555, %v6643
        %v6645 = vpop.f32.mrf.mxu0
        %v6646 = vadd.f32 %v6557, %v6645
        %6647 = vmatmul.bf16.gmra.mxu0 %v5395
        %v6648 = vpop.f32.mrf.mxu0
        %v6649 = vadd.f32 %v6560, %v6648
        %v6650 = vpop.f32.mrf.mxu0
        %v6651 = vadd.f32 %v6562, %v6650
        %6652 = vmatmul.bf16.gmra.mxu0 %v5404
        %v6653 = vpop.f32.mrf.mxu0
        %v6654 = vadd.f32 %v6565, %v6653
        %v6655 = vpop.f32.mrf.mxu0
        %v6656 = vadd.f32 %v6567, %v6655
        %6657 = vmatmul.bf16.gmra.mxu0 %v5413
        %v6658 = vpop.f32.mrf.mxu0
        %v6659 = vadd.f32 %v6570, %v6658
        %v6660 = vpop.f32.mrf.mxu0
        %v6661 = vadd.f32 %v6572, %v6660
        %6662 = vmatmul.bf16.gmra.mxu0 %v5422
        %v6663 = vpop.f32.mrf.mxu0
        %v6664 = vadd.f32 %v6575, %v6663
        %v6665 = vpop.f32.mrf.mxu0
        %v6666 = vadd.f32 %v6577, %v6665
        %6667 = vmatmul.bf16.gmra.mxu0 %v5431
        %v6668 = vpop.f32.mrf.mxu0
        %v6669 = vadd.f32 %v6580, %v6668
        %v6670 = vpop.f32.mrf.mxu0
        %v6671 = vadd.f32 %v6582, %v6670
        %6672 = vmatmul.bf16.gmra.mxu0 %v5440
        %v6673 = vpop.f32.mrf.mxu0
        %v6674 = vadd.f32 %v6585, %v6673
        %v6675 = vpop.f32.mrf.mxu0
        %v6676 = vadd.f32 %v6587, %v6675
        %6677 = vmatmul.bf16.gmra.mxu0 %v5449
        %v6678 = vpop.f32.mrf.mxu0
        %v6679 = vadd.f32 %v6590, %v6678
        %v6680 = vpop.f32.mrf.mxu0
        %v6681 = vadd.f32 %v6592, %v6680
        %6682 = vmatmul.bf16.gmra.mxu0 %v5458
        %v6683 = vpop.f32.mrf.mxu0
        %v6684 = vadd.f32 %v6595, %v6683
        %v6685 = vpop.f32.mrf.mxu0
        %v6686 = vadd.f32 %v6597, %v6685
        %6687 = vmatmul.bf16.gmra.mxu0 %v5467
        %v6688 = vpop.f32.mrf.mxu0
        %v6689 = vadd.f32 %v6600, %v6688
        %v6690 = vpop.f32.mrf.mxu0
        %v6691 = vadd.f32 %v6602, %v6690
        %6692 = vmatmul.bf16.gmra.mxu0 %v5476
        %v6693 = vpop.f32.mrf.mxu0
        %v6694 = vadd.f32 %v6605, %v6693
        %v6695 = vpop.f32.mrf.mxu0
        %v6696 = vadd.f32 %v6607, %v6695
        %6697 = vmatmul.bf16.gmra.mxu0 %v5485
        %v6698 = vpop.f32.mrf.mxu0
        %v6699 = vadd.f32 %v6610, %v6698
        %v6700 = vpop.f32.mrf.mxu0
        %v6701 = vadd.f32 %v6612, %v6700
        %6702 = vmatmul.bf16.gmra.mxu0 %v5494
        %v6703 = vpop.f32.mrf.mxu0
        %v6704 = vadd.f32 %v6615, %v6703
        %v6705 = vpop.f32.mrf.mxu0
        %v6706 = vadd.f32 %v6617, %v6705
        %6707 = vmatmul.bf16.gmra.mxu0 %v5503
        %v6708 = vpop.f32.mrf.mxu0
        %v6709 = vadd.f32 %v6620, %v6708
        %v6710 = vpop.f32.mrf.mxu0
        %v6711 = vadd.f32 %v6622, %v6710
        %6712 = vmatmul.bf16.gmra.mxu0 %v5512
        %v6713 = vpop.f32.mrf.mxu0
        %v6714 = vadd.f32 %v6625, %v6713
        %v6715 = vpop.f32.mrf.mxu0
        %v6716 = vadd.f32 %v6627, %v6715
        %6717 = vmatmul.bf16.gmra.mxu0 %v5521
        %v6718 = vpop.f32.mrf.mxu0
        %v6719 = vadd.f32 %v6630, %v6718
        %v6720 = vpop.f32.mrf.mxu0
        %v6721 = vadd.f32 %v6632, %v6720
        %6722 = vdwg.mxu0
        %6723 = vmatpush.bf16.msra.mxu0 %v6019
        %6724 = vmatpush.bf16.msra.mxu0 %v6018
        %6725 = vmatpush.bf16.msra.mxu0 %v6017
        %6726 = vmatpush.bf16.msra.mxu0 %v6016
        %6727 = vmatpush.bf16.msra.mxu0 %v6015
        %6728 = vmatpush.bf16.msra.mxu0 %v6014
        %6729 = vmatpush.bf16.msra.mxu0 %v6013
        %6730 = vmatpush.bf16.msra.mxu0 %v6012
        %6731 = vmatmul.bf16.gmra.mxu0 %v5387
        %v6732 = vpop.f32.mrf.mxu0
        %v6733 = vadd.f32 %v6644, %v6732
        %v6734 = vpop.f32.mrf.mxu0
        %v6735 = vadd.f32 %v6646, %v6734
        %6736 = vmatmul.bf16.gmra.mxu0 %v5396
        %v6737 = vpop.f32.mrf.mxu0
        %v6738 = vadd.f32 %v6649, %v6737
        %v6739 = vpop.f32.mrf.mxu0
        %v6740 = vadd.f32 %v6651, %v6739
        %6741 = vmatmul.bf16.gmra.mxu0 %v5405
        %v6742 = vpop.f32.mrf.mxu0
        %v6743 = vadd.f32 %v6654, %v6742
        %v6744 = vpop.f32.mrf.mxu0
        %v6745 = vadd.f32 %v6656, %v6744
        %6746 = vmatmul.bf16.gmra.mxu0 %v5414
        %v6747 = vpop.f32.mrf.mxu0
        %v6748 = vadd.f32 %v6659, %v6747
        %v6749 = vpop.f32.mrf.mxu0
        %v6750 = vadd.f32 %v6661, %v6749
        %6751 = vmatmul.bf16.gmra.mxu0 %v5423
        %v6752 = vpop.f32.mrf.mxu0
        %v6753 = vadd.f32 %v6664, %v6752
        %v6754 = vpop.f32.mrf.mxu0
        %v6755 = vadd.f32 %v6666, %v6754
        %6756 = vmatmul.bf16.gmra.mxu0 %v5432
        %v6757 = vpop.f32.mrf.mxu0
        %v6758 = vadd.f32 %v6669, %v6757
        %v6759 = vpop.f32.mrf.mxu0
        %v6760 = vadd.f32 %v6671, %v6759
        %6761 = vmatmul.bf16.gmra.mxu0 %v5441
        %v6762 = vpop.f32.mrf.mxu0
        %v6763 = vadd.f32 %v6674, %v6762
        %v6764 = vpop.f32.mrf.mxu0
        %v6765 = vadd.f32 %v6676, %v6764
        %6766 = vmatmul.bf16.gmra.mxu0 %v5450
        %v6767 = vpop.f32.mrf.mxu0
        %v6768 = vadd.f32 %v6679, %v6767
        %v6769 = vpop.f32.mrf.mxu0
        %v6770 = vadd.f32 %v6681, %v6769
        %6771 = vmatmul.bf16.gmra.mxu0 %v5459
        %v6772 = vpop.f32.mrf.mxu0
        %v6773 = vadd.f32 %v6684, %v6772
        %v6774 = vpop.f32.mrf.mxu0
        %v6775 = vadd.f32 %v6686, %v6774
        %6776 = vmatmul.bf16.gmra.mxu0 %v5468
        %v6777 = vpop.f32.mrf.mxu0
        %v6778 = vadd.f32 %v6689, %v6777
        %v6779 = vpop.f32.mrf.mxu0
        %v6780 = vadd.f32 %v6691, %v6779
        %6781 = vmatmul.bf16.gmra.mxu0 %v5477
        %v6782 = vpop.f32.mrf.mxu0
        %v6783 = vadd.f32 %v6694, %v6782
        %v6784 = vpop.f32.mrf.mxu0
        %v6785 = vadd.f32 %v6696, %v6784
        %6786 = vmatmul.bf16.gmra.mxu0 %v5486
        %v6787 = vpop.f32.mrf.mxu0
        %v6788 = vadd.f32 %v6699, %v6787
        %v6789 = vpop.f32.mrf.mxu0
        %v6790 = vadd.f32 %v6701, %v6789
        %6791 = vmatmul.bf16.gmra.mxu0 %v5495
        %v6792 = vpop.f32.mrf.mxu0
        %v6793 = vadd.f32 %v6704, %v6792
        %v6794 = vpop.f32.mrf.mxu0
        %v6795 = vadd.f32 %v6706, %v6794
        %6796 = vmatmul.bf16.gmra.mxu0 %v5504
        %v6797 = vpop.f32.mrf.mxu0
        %v6798 = vadd.f32 %v6709, %v6797
        %v6799 = vpop.f32.mrf.mxu0
        %v6800 = vadd.f32 %v6711, %v6799
        %6801 = vmatmul.bf16.gmra.mxu0 %v5513
        %v6802 = vpop.f32.mrf.mxu0
        %v6803 = vadd.f32 %v6714, %v6802
        %v6804 = vpop.f32.mrf.mxu0
        %v6805 = vadd.f32 %v6716, %v6804
        %6806 = vmatmul.bf16.gmra.mxu0 %v5522
        %v6807 = vpop.f32.mrf.mxu0
        %v6808 = vadd.f32 %v6719, %v6807
        %v6809 = vpop.f32.mrf.mxu0
        %v6810 = vadd.f32 %v6721, %v6809
        %6811 = vdwg.mxu0
        %6812 = vmatpush.bf16.msra.mxu0 %v6027
        %6813 = vmatpush.bf16.msra.mxu0 %v6026
        %6814 = vmatpush.bf16.msra.mxu0 %v6025
        %6815 = vmatpush.bf16.msra.mxu0 %v6024
        %6816 = vmatpush.bf16.msra.mxu0 %v6023
        %6817 = vmatpush.bf16.msra.mxu0 %v6022
        %6818 = vmatpush.bf16.msra.mxu0 %v6021
        %6819 = vmatpush.bf16.msra.mxu0 %v6020
        %6820 = vmatmul.bf16.gmra.mxu0 %v5388
        %v6821 = vpop.f32.mrf.mxu0
        %v6822 = vadd.f32 %v6733, %v6821
        %v6823 = vpop.f32.mrf.mxu0
        %v6824 = vadd.f32 %v6735, %v6823
        %6825 = vmatmul.bf16.gmra.mxu0 %v5397
        %v6826 = vpop.f32.mrf.mxu0
        %v6827 = vadd.f32 %v6738, %v6826
        %v6828 = vpop.f32.mrf.mxu0
        %v6829 = vadd.f32 %v6740, %v6828
        %6830 = vmatmul.bf16.gmra.mxu0 %v5406
        %v6831 = vpop.f32.mrf.mxu0
        %v6832 = vadd.f32 %v6743, %v6831
        %v6833 = vpop.f32.mrf.mxu0
        %v6834 = vadd.f32 %v6745, %v6833
        %6835 = vmatmul.bf16.gmra.mxu0 %v5415
        %v6836 = vpop.f32.mrf.mxu0
        %v6837 = vadd.f32 %v6748, %v6836
        %v6838 = vpop.f32.mrf.mxu0
        %v6839 = vadd.f32 %v6750, %v6838
        %6840 = vmatmul.bf16.gmra.mxu0 %v5424
        %v6841 = vpop.f32.mrf.mxu0
        %v6842 = vadd.f32 %v6753, %v6841
        %v6843 = vpop.f32.mrf.mxu0
        %v6844 = vadd.f32 %v6755, %v6843
        %6845 = vmatmul.bf16.gmra.mxu0 %v5433
        %v6846 = vpop.f32.mrf.mxu0
        %v6847 = vadd.f32 %v6758, %v6846
        %v6848 = vpop.f32.mrf.mxu0
        %v6849 = vadd.f32 %v6760, %v6848
        %6850 = vmatmul.bf16.gmra.mxu0 %v5442
        %v6851 = vpop.f32.mrf.mxu0
        %v6852 = vadd.f32 %v6763, %v6851
        %v6853 = vpop.f32.mrf.mxu0
        %v6854 = vadd.f32 %v6765, %v6853
        %6855 = vmatmul.bf16.gmra.mxu0 %v5451
        %v6856 = vpop.f32.mrf.mxu0
        %v6857 = vadd.f32 %v6768, %v6856
        %v6858 = vpop.f32.mrf.mxu0
        %v6859 = vadd.f32 %v6770, %v6858
        %6860 = vmatmul.bf16.gmra.mxu0 %v5460
        %v6861 = vpop.f32.mrf.mxu0
        %v6862 = vadd.f32 %v6773, %v6861
        %v6863 = vpop.f32.mrf.mxu0
        %v6864 = vadd.f32 %v6775, %v6863
        %6865 = vmatmul.bf16.gmra.mxu0 %v5469
        %v6866 = vpop.f32.mrf.mxu0
        %v6867 = vadd.f32 %v6778, %v6866
        %v6868 = vpop.f32.mrf.mxu0
        %v6869 = vadd.f32 %v6780, %v6868
        %6870 = vmatmul.bf16.gmra.mxu0 %v5478
        %v6871 = vpop.f32.mrf.mxu0
        %v6872 = vadd.f32 %v6783, %v6871
        %v6873 = vpop.f32.mrf.mxu0
        %v6874 = vadd.f32 %v6785, %v6873
        %6875 = vmatmul.bf16.gmra.mxu0 %v5487
        %v6876 = vpop.f32.mrf.mxu0
        %v6877 = vadd.f32 %v6788, %v6876
        %v6878 = vpop.f32.mrf.mxu0
        %v6879 = vadd.f32 %v6790, %v6878
        %6880 = vmatmul.bf16.gmra.mxu0 %v5496
        %v6881 = vpop.f32.mrf.mxu0
        %v6882 = vadd.f32 %v6793, %v6881
        %v6883 = vpop.f32.mrf.mxu0
        %v6884 = vadd.f32 %v6795, %v6883
        %6885 = vmatmul.bf16.gmra.mxu0 %v5505
        %v6886 = vpop.f32.mrf.mxu0
        %v6887 = vadd.f32 %v6798, %v6886
        %v6888 = vpop.f32.mrf.mxu0
        %v6889 = vadd.f32 %v6800, %v6888
        %6890 = vmatmul.bf16.gmra.mxu0 %v5514
        %v6891 = vpop.f32.mrf.mxu0
        %v6892 = vadd.f32 %v6803, %v6891
        %v6893 = vpop.f32.mrf.mxu0
        %v6894 = vadd.f32 %v6805, %v6893
        %6895 = vmatmul.bf16.gmra.mxu0 %v5523
        %v6896 = vpop.f32.mrf.mxu0
        %v6897 = vadd.f32 %v6808, %v6896
        %v6898 = vpop.f32.mrf.mxu0
        %v6899 = vadd.f32 %v6810, %v6898
        %6900 = vdwg.mxu0
        %v6901 = vadd.f32 %v6822, %v6824
        %v6902 = vadd.f32 %v6901, %v6827
        %v6903 = vadd.f32 %v6902, %v6829
        %v6904 = vadd.f32 %v6903, %v6832
        %v6905 = vadd.f32 %v6904, %v6834
        %v6906 = vadd.f32 %v6905, %v6837
        %v6907 = vadd.f32 %v6906, %v6839
        %v6908 = vadd.f32 %v6907, %v6842
        %v6909 = vadd.f32 %v6908, %v6844
        %v6910 = vadd.f32 %v6909, %v6847
        %v6911 = vadd.f32 %v6910, %v6849
        %v6912 = vadd.f32 %v6911, %v6852
        %v6913 = vadd.f32 %v6912, %v6854
        %v6914 = vadd.f32 %v6913, %v6857
        %v6915 = vadd.f32 %v6914, %v6859
        %v6916 = vadd.f32 %v6915, %v6862
        %v6917 = vadd.f32 %v6916, %v6864
        %v6918 = vadd.f32 %v6917, %v6867
        %v6919 = vadd.f32 %v6918, %v6869
        %v6920 = vadd.f32 %v6919, %v6872
        %v6921 = vadd.f32 %v6920, %v6874
        %v6922 = vadd.f32 %v6921, %v6877
        %v6923 = vadd.f32 %v6922, %v6879
        %v6924 = vadd.f32 %v6923, %v6882
        %v6925 = vadd.f32 %v6924, %v6884
        %v6926 = vadd.f32 %v6925, %v6887
        %v6927 = vadd.f32 %v6926, %v6889
        %v6928 = vadd.f32 %v6927, %v6892
        %v6929 = vadd.f32 %v6928, %v6894
        %v6930 = vadd.f32 %v6929, %v6897
        %v6931 = vadd.f32 %v6930, %v6899
        %6932 = vadd.xlane.f32.xlu0 %v6931
        %v6933 = vpop.xlane.xlu0 %6932
        %v6934 = vrot.slane %v6933, 4
        %v6935 = vadd.f32 %v6933, %v6934
        %v6936 = vrot.slane %v6935, 2
        %v6937 = vadd.f32 %v6935, %v6936
        %v6938 = vrot.slane %v6937, 1
        %v6939 = vadd.f32 %v6937, %v6938
        %s6940 = vtos %v6939
        %s6941 = smul.f32 %s6940, 0.00048828125
        %v6942 = vmul.f32 %v6822, %v6822
        %v6943 = vmul.f32 %v6824, %v6824
        %v6944 = vmul.f32 %v6827, %v6827
        %v6945 = vmul.f32 %v6829, %v6829
        %v6946 = vmul.f32 %v6832, %v6832
        %v6947 = vmul.f32 %v6834, %v6834
        %v6948 = vmul.f32 %v6837, %v6837
        %v6949 = vmul.f32 %v6839, %v6839
        %v6950 = vmul.f32 %v6842, %v6842
        %v6951 = vmul.f32 %v6844, %v6844
        %v6952 = vmul.f32 %v6847, %v6847
        %v6953 = vmul.f32 %v6849, %v6849
        %v6954 = vmul.f32 %v6852, %v6852
        %v6955 = vmul.f32 %v6854, %v6854
        %v6956 = vmul.f32 %v6857, %v6857
        %v6957 = vmul.f32 %v6859, %v6859
        %v6958 = vmul.f32 %v6862, %v6862
        %v6959 = vmul.f32 %v6864, %v6864
        %v6960 = vmul.f32 %v6867, %v6867
        %v6961 = vmul.f32 %v6869, %v6869
        %v6962 = vmul.f32 %v6872, %v6872
        %v6963 = vmul.f32 %v6874, %v6874
        %v6964 = vmul.f32 %v6877, %v6877
        %v6965 = vmul.f32 %v6879, %v6879
        %v6966 = vmul.f32 %v6882, %v6882
        %v6967 = vmul.f32 %v6884, %v6884
        %v6968 = vmul.f32 %v6887, %v6887
        %v6969 = vmul.f32 %v6889, %v6889
        %v6970 = vmul.f32 %v6892, %v6892
        %v6971 = vmul.f32 %v6894, %v6894
        %v6972 = vmul.f32 %v6897, %v6897
        %v6973 = vmul.f32 %v6899, %v6899
        %v6974 = vadd.f32 %v6942, %v6943
        %v6975 = vadd.f32 %v6974, %v6944
        %v6976 = vadd.f32 %v6975, %v6945
        %v6977 = vadd.f32 %v6976, %v6946
        %v6978 = vadd.f32 %v6977, %v6947
        %v6979 = vadd.f32 %v6978, %v6948
        %v6980 = vadd.f32 %v6979, %v6949
        %v6981 = vadd.f32 %v6980, %v6950
        %v6982 = vadd.f32 %v6981, %v6951
        %v6983 = vadd.f32 %v6982, %v6952
        %v6984 = vadd.f32 %v6983, %v6953
        %v6985 = vadd.f32 %v6984, %v6954
        %v6986 = vadd.f32 %v6985, %v6955
        %v6987 = vadd.f32 %v6986, %v6956
        %v6988 = vadd.f32 %v6987, %v6957
        %v6989 = vadd.f32 %v6988, %v6958
        %v6990 = vadd.f32 %v6989, %v6959
        %v6991 = vadd.f32 %v6990, %v6960
        %v6992 = vadd.f32 %v6991, %v6961
        %v6993 = vadd.f32 %v6992, %v6962
        %v6994 = vadd.f32 %v6993, %v6963
        %v6995 = vadd.f32 %v6994, %v6964
        %v6996 = vadd.f32 %v6995, %v6965
        %v6997 = vadd.f32 %v6996, %v6966
        %v6998 = vadd.f32 %v6997, %v6967
        %v6999 = vadd.f32 %v6998, %v6968
        %v7000 = vadd.f32 %v6999, %v6969
        %v7001 = vadd.f32 %v7000, %v6970
        %v7002 = vadd.f32 %v7001, %v6971
        %v7003 = vadd.f32 %v7002, %v6972
        %v7004 = vadd.f32 %v7003, %v6973
        %7005 = vadd.xlane.f32.xlu0 %v7004
        %v7006 = vpop.xlane.xlu0 %7005
        %v7007 = vrot.slane %v7006, 4
        %v7008 = vadd.f32 %v7006, %v7007
        %v7009 = vrot.slane %v7008, 2
        %v7010 = vadd.f32 %v7008, %v7009
        %v7011 = vrot.slane %v7010, 1
        %v7012 = vadd.f32 %v7010, %v7011
        %s7013 = vtos %v7012
        %s7014 = smul.f32 %s7013, 0.00048828125
        %s7015 = smul.f32 %s6941, %s6941
        %s7016 = ssub.f32 %s7014, %s7015
        %s7017 = smax.f32 %s7016, 0.0
        %s7018 = sadd.f32 %s7017, 1e-05
        %v7019 = vstv %s7018
        %v7020 = vrsqrt.pop %v7019
        %v7021 = vmul.f32 %v7020, %v7019
        %v7022 = vmul.f32 %v7021, %v7020
        %v7023 = vmul.f32 0.5, %v7022
        %v7024 = vsub.f32 1.5, %v7023
        %v7025 = vmul.f32 %v7020, %v7024
        %vm7026 = vweird.f32 %v7019
        %vm7027 = vweird.f32 %v7020
        %vm7028 = vmor %vm7026, %vm7027
        %v7029 = vsel %vm7028, %v7020, %v7025
        %s7030 = vtos %v7029
        %v7031 = vld [vmem:[%s7] sm:$0x1]
        %v7032 = vstv %s7030
        %v7033 = vmul.f32 %v7031, %v7032
        %v7034 = vld [vmem:[%s8] sm:$0x1]
        %v7035 = vstv %s6941
        %v7036 = vmul.f32 %v7035, %v7033
        %v7037 = vsub.f32 %v7034, %v7036
        %v7039 = vperm.slane %v7033, 0
        %v7041 = vmul.f32 %v6822, %v7039
        %v7042 = vmul.f32 %v6824, %v7039
        %v7043 = vmul.f32 %v6827, %v7039
        %v7044 = vmul.f32 %v6829, %v7039
        %v7045 = vmul.f32 %v6832, %v7039
        %v7046 = vmul.f32 %v6834, %v7039
        %v7047 = vmul.f32 %v6837, %v7039
        %v7048 = vmul.f32 %v6839, %v7039
        %v7049 = vmul.f32 %v6842, %v7039
        %v7050 = vmul.f32 %v6844, %v7039
        %v7051 = vmul.f32 %v6847, %v7039
        %v7052 = vmul.f32 %v6849, %v7039
        %v7053 = vmul.f32 %v6852, %v7039
        %v7054 = vmul.f32 %v6854, %v7039
        %v7055 = vmul.f32 %v6857, %v7039
        %v7056 = vmul.f32 %v6859, %v7039
        %v7057 = vmul.f32 %v6862, %v7039
        %v7058 = vmul.f32 %v6864, %v7039
        %v7059 = vmul.f32 %v6867, %v7039
        %v7060 = vmul.f32 %v6869, %v7039
        %v7061 = vmul.f32 %v6872, %v7039
        %v7062 = vmul.f32 %v6874, %v7039
        %v7063 = vmul.f32 %v6877, %v7039
        %v7064 = vmul.f32 %v6879, %v7039
        %v7065 = vmul.f32 %v6882, %v7039
        %v7066 = vmul.f32 %v6884, %v7039
        %v7067 = vmul.f32 %v6887, %v7039
        %v7068 = vmul.f32 %v6889, %v7039
        %v7069 = vmul.f32 %v6892, %v7039
        %v7070 = vmul.f32 %v6894, %v7039
        %v7071 = vmul.f32 %v6897, %v7039
        %v7072 = vmul.f32 %v6899, %v7039
        %v7074 = vperm.slane %v7037, 0
        %v7076 = vadd.f32 %v7041, %v7074
        %v7077 = vadd.f32 %v7042, %v7074
        %v7078 = vadd.f32 %v7043, %v7074
        %v7079 = vadd.f32 %v7044, %v7074
        %v7080 = vadd.f32 %v7045, %v7074
        %v7081 = vadd.f32 %v7046, %v7074
        %v7082 = vadd.f32 %v7047, %v7074
        %v7083 = vadd.f32 %v7048, %v7074
        %v7084 = vadd.f32 %v7049, %v7074
        %v7085 = vadd.f32 %v7050, %v7074
        %v7086 = vadd.f32 %v7051, %v7074
        %v7087 = vadd.f32 %v7052, %v7074
        %v7088 = vadd.f32 %v7053, %v7074
        %v7089 = vadd.f32 %v7054, %v7074
        %v7090 = vadd.f32 %v7055, %v7074
        %v7091 = vadd.f32 %v7056, %v7074
        %v7092 = vadd.f32 %v7057, %v7074
        %v7093 = vadd.f32 %v7058, %v7074
        %v7094 = vadd.f32 %v7059, %v7074
        %v7095 = vadd.f32 %v7060, %v7074
        %v7096 = vadd.f32 %v7061, %v7074
        %v7097 = vadd.f32 %v7062, %v7074
        %v7098 = vadd.f32 %v7063, %v7074
        %v7099 = vadd.f32 %v7064, %v7074
        %v7100 = vadd.f32 %v7065, %v7074
        %v7101 = vadd.f32 %v7066, %v7074
        %v7102 = vadd.f32 %v7067, %v7074
        %v7103 = vadd.f32 %v7068, %v7074
        %v7104 = vadd.f32 %v7069, %v7074
        %v7105 = vadd.f32 %v7070, %v7074
        %v7106 = vadd.f32 %v7071, %v7074
        %v7107 = vadd.f32 %v7072, %v7074
        %v7108 = vmax.f32 %v7076, 0.0
        %v7109 = vmax.f32 %v7077, 0.0
        %v7110 = vmax.f32 %v7078, 0.0
        %v7111 = vmax.f32 %v7079, 0.0
        %v7112 = vmax.f32 %v7080, 0.0
        %v7113 = vmax.f32 %v7081, 0.0
        %v7114 = vmax.f32 %v7082, 0.0
        %v7115 = vmax.f32 %v7083, 0.0
        %v7116 = vmax.f32 %v7084, 0.0
        %v7117 = vmax.f32 %v7085, 0.0
        %v7118 = vmax.f32 %v7086, 0.0
        %v7119 = vmax.f32 %v7087, 0.0
        %v7120 = vmax.f32 %v7088, 0.0
        %v7121 = vmax.f32 %v7089, 0.0
        %v7122 = vmax.f32 %v7090, 0.0
        %v7123 = vmax.f32 %v7091, 0.0
        %v7124 = vmax.f32 %v7092, 0.0
        %v7125 = vmax.f32 %v7093, 0.0
        %v7126 = vmax.f32 %v7094, 0.0
        %v7127 = vmax.f32 %v7095, 0.0
        %v7128 = vmax.f32 %v7096, 0.0
        %v7129 = vmax.f32 %v7097, 0.0
        %v7130 = vmax.f32 %v7098, 0.0
        %v7131 = vmax.f32 %v7099, 0.0
        %v7132 = vmax.f32 %v7100, 0.0
        %v7133 = vmax.f32 %v7101, 0.0
        %v7134 = vmax.f32 %v7102, 0.0
        %v7135 = vmax.f32 %v7103, 0.0
        %v7136 = vmax.f32 %v7104, 0.0
        %v7137 = vmax.f32 %v7105, 0.0
        %v7138 = vmax.f32 %v7106, 0.0
        %v7139 = vmax.f32 %v7107, 0.0
        %7140 = vst [vmem:[%s385] sm:$0xff] %v7108
        %7141 = vst [vmem:[%s385 + $0x8] sm:$0xff] %v7109
        %7142 = vst [vmem:[%s385 + $0x10] sm:$0xff] %v7110
        %7143 = vst [vmem:[%s385 + $0x18] sm:$0xff] %v7111
        %7144 = vst [vmem:[%s385 + $0x20] sm:$0xff] %v7112
        %7145 = vst [vmem:[%s385 + $0x28] sm:$0xff] %v7113
        %7146 = vst [vmem:[%s385 + $0x30] sm:$0xff] %v7114
        %7147 = vst [vmem:[%s385 + $0x38] sm:$0xff] %v7115
        %7148 = vst [vmem:[%s385 + $0x40] sm:$0xff] %v7116
        %7149 = vst [vmem:[%s385 + $0x48] sm:$0xff] %v7117
        %7150 = vst [vmem:[%s385 + $0x50] sm:$0xff] %v7118
        %7151 = vst [vmem:[%s385 + $0x58] sm:$0xff] %v7119
        %7152 = vst [vmem:[%s385 + $0x60] sm:$0xff] %v7120
        %7153 = vst [vmem:[%s385 + $0x68] sm:$0xff] %v7121
        %7154 = vst [vmem:[%s385 + $0x70] sm:$0xff] %v7122
        %7155 = vst [vmem:[%s385 + $0x78] sm:$0xff] %v7123
        %7156 = vst [vmem:[%s385 + $0x80] sm:$0xff] %v7124
        %7157 = vst [vmem:[%s385 + $0x88] sm:$0xff] %v7125
        %7158 = vst [vmem:[%s385 + $0x90] sm:$0xff] %v7126
        %7159 = vst [vmem:[%s385 + $0x98] sm:$0xff] %v7127
        %7160 = vst [vmem:[%s385 + $0xa0] sm:$0xff] %v7128
        %7161 = vst [vmem:[%s385 + $0xa8] sm:$0xff] %v7129
        %7162 = vst [vmem:[%s385 + $0xb0] sm:$0xff] %v7130
        %7163 = vst [vmem:[%s385 + $0xb8] sm:$0xff] %v7131
        %7164 = vst [vmem:[%s385 + $0xc0] sm:$0xff] %v7132
        %7165 = vst [vmem:[%s385 + $0xc8] sm:$0xff] %v7133
        %7166 = vst [vmem:[%s385 + $0xd0] sm:$0xff] %v7134
        %7167 = vst [vmem:[%s385 + $0xd8] sm:$0xff] %v7135
        %7168 = vst [vmem:[%s385 + $0xe0] sm:$0xff] %v7136
        %7169 = vst [vmem:[%s385 + $0xe8] sm:$0xff] %v7137
        %7170 = vst [vmem:[%s385 + $0xf0] sm:$0xff] %v7138
        %7171 = vst [vmem:[%s385 + $0xf8] sm:$0xff] %v7139
        %s7172 = sand.u32 %s229, 1
        %s7173 = scalar_lea.sflag [#allocation8], %s7172
        %s7174 = sand.u32 %s229, 1
        %s7175 = smul.addr %s7174, 256
        %s7176 = scalar_lea.vmem [#allocation12], %s7175
        // Predicated region
        $region69: #{tpu_custom_call.1} parent=55 // pred_check
          %p7177 = pneg %p239
        $region70: #{tpu_custom_call.1} parent=55 // pred_check_branch
          %7179 = sbr.rel (%p7177) target = $region72
        $region71: #{tpu_custom_call.1} parent=55 // pred_region
          %7181 = vsyncadd %s7173, 0
          %s7182 = smul.addr %s27, 32
          %s7183 = smul.addr %s7182, 8
          %s7184 = scalar_lea.hbm %s9, %s7183
          %s7185 = sshll.u32 %s7176, 4
          %s7186 = int_to_ptr.vmem [resolvable:$true] %s7185
          %s7187 = sshll.u32 %s7184, 4
          %s7188 = int_to_ptr.hbm [resolvable:$true] %s7187
          %7193 = dma.vmem_to_hbm [thread:$0]  %s7186, 4096, %s7188, %s7173, 128, 128, 8
        $region72: #{tpu_custom_call.1} parent=55 // pred_fallthru
          _
      $region56: #{tpu_custom_call.1} parent=5 // pred_fallthru
        _
      %p7194 = scmp.le.s32.totalorder 2, %s22
      // Predicated region
      $region73: #{tpu_custom_call.1} parent=5 // pred_check
        %p7195 = pneg %p7194
      $region74: #{tpu_custom_call.1} parent=5 // pred_check_branch
        %7197 = sbr.rel (%p7195) target = $region76
      $region75: #{tpu_custom_call.1} parent=5 // pred_region
        %s7198 = ssub.s32 %s22, 2
        // Predicated region
        $region77: #{tpu_custom_call.1} parent=75 // pred_check
          %p7199 = pneg %p245
        $region78: #{tpu_custom_call.1} parent=75 // pred_check_branch
          %7201 = sbr.rel (%p7199) target = $region80
        $region79: #{tpu_custom_call.1} parent=75 // pred_region
          %s7202 = sand.u32 %s230, 1
          %s7203 = scalar_lea.sflag [#allocation8], %s7202
          %s7204 = sand.u32 %s230, 1
          %s7205 = smul.addr %s7204, 256
          %s7206 = scalar_lea.vmem [#allocation12], %s7205
          %7208 = dma.done %s7203, 4096
        $region80: #{tpu_custom_call.1} parent=75 // pred_fallthru
          _
      $region76: #{tpu_custom_call.1} parent=5 // pred_fallthru
        _
    $region6: #{tpu_custom_call.1} parent=1 // loop_footer
      %s26 = sadd.s32 1, %s22
    $region7: #{tpu_custom_call.1} parent=1 // loop_footer_branch
      %21 = sbr.rel target = $region3
    $region8: #{tpu_custom_call.1} parent=1 // loop_exit
      _
    %7209 = vsyncpa [#allocation7], 1
    %s7210 = scalar_lea.sflag [#allocation7], 1
    %7211 = vsyncpa %s7210, 1
    %7212 = vsyncpa [#allocation10], 1
    %7213 = vsyncpa [#allocation8], 1
    %s7214 = scalar_lea.sflag [#allocation8], 1
    %7215 = vsyncpa %s7214, 1

</llo_original>
